<compile_context>
chip_gen: v7x
topology: tpu7x:2x2x1
jax: 0.10.0
libtpu: 0.0.40
codegen_flags: <defaults>
</compile_context>

<pallas_src>
import jax
import jax.numpy as jnp
from jax.experimental import pallas as pl
from jax.experimental.pallas import tpu as pltpu

BN_EPS = 1e-5


# ----------------------------------------------------------------------------
# Fused BasicBlock kernel (one image per grid step, flattened-padded layout)
# ----------------------------------------------------------------------------
def _basic_block_kernel(x_ref, mask_ref, w1_ref, b1_ref, w2_ref, b2_ref,
                        o_ref, acc1_ref, act_ref, acc2_ref):
    """Shapes (per grid step), with S=(H+2)*(W+2), P=W+3, M=H*(W+2)-2:
       x_ref   : (S+2P, Cin)   bf16  -- zero-halo-padded image, spatially
                                         flattened, plus P extra zero rows on
                                         each end so all tap slices are in-bounds
       mask_ref: (S, 1)        f32   -- 1.0 at interior rows, 0.0 at halo rows
       w1_ref  : (9, Cin, Cout)  bf16 -- conv1 weights, BN1 scale folded in
       b1_ref  : (1, Cout)       f32  -- folded BN1 bias
       w2_ref  : (9, Cout, Cout) bf16 -- conv2 weights, BN2 scale folded in
       b2_ref  : (1, Cout)       f32  -- folded BN2 bias
       o_ref   : (M, Cout)       f32  -- conv2+BN2+residual for the row range
                                          covering all interior pixels
       acc1_ref: (S, Cout) f32 scratch, act_ref: (S, Cout) bf16 scratch,
       acc2_ref: (M, Cout) f32 scratch.
    """
    S, Cout = acc1_ref.shape
    M = o_ref.shape[0]
    Sx = x_ref.shape[0]
    P = (Sx - S) // 2          # = W + 3
    Wp2 = P - 1                # = W + 2  (padded row stride)

    # Row shift of tap (dy, dx) in the flattened padded layout.  Flat-index
    # arithmetic is exact, so there is never any cross-row wraparound error.
    shifts = [(dy - 1) * Wp2 + (dx - 1) for dy in range(3) for dx in range(3)]

    # ---- conv1 + BN1(scale folded): 9 accumulating MXU matmuls over
    #      contiguous row-shifted slices of the padded input ---------------
    for k, s in enumerate(shifts):
        patch = x_ref[P + s: P + s + S, :]                       # (S, Cin) bf16
        contrib = jnp.dot(patch, w1_ref[k], preferred_element_type=jnp.float32)
        if k == 0:
            acc1_ref[...] = contrib
        else:
            acc1_ref[...] += contrib

    # BN1 bias + ReLU; zero the halo rows so conv2 sees proper zero padding.
    act_ref[...] = (jnp.maximum(acc1_ref[...] + b1_ref[...], 0.0)
                    * mask_ref[...]).astype(act_ref.dtype)

    # ---- conv2 + BN2(scale folded): 9 more matmuls, only over the M rows
    #      that cover every interior output pixel ---------------------------
    for k, s in enumerate(shifts):
        patch = act_ref[P + s: P + s + M, :]                     # (M, Cout) bf16
        contrib = jnp.dot(patch, w2_ref[k], preferred_element_type=jnp.float32)
        if k == 0:
            acc2_ref[...] = contrib
        else:
            acc2_ref[...] += contrib

    # ---- identity residual add (stride=1, downsample=None).
    #      NOTE: no ReLU after the add, exactly as in the reference forward.
    residual = x_ref[2 * P: 2 * P + M, :].astype(jnp.float32)    # interior x rows
    o_ref[...] = (acc2_ref[...] + b2_ref[...] + residual).astype(o_ref.dtype)


# ----------------------------------------------------------------------------
# Wrapper: BN folding, layout prep, pallas_call plumbing, crop back to NCHW
# ----------------------------------------------------------------------------
def _fold_bn_into_conv(w_hwio, bn):
    """Fold eval-mode BatchNorm into the conv: scale -> bf16 weights, bias f32."""
    scale = bn["gamma"] * jax.lax.rsqrt(bn["var"] + BN_EPS)          # (Cout,)
    bias = bn["beta"] - bn["mean"] * scale                           # (Cout,)
    kh, kw, cin, cout = w_hwio.shape
    w = (w_hwio * scale[None, None, None, :]).reshape(kh * kw, cin, cout)
    return w.astype(jnp.bfloat16), bias.reshape(1, cout).astype(jnp.float32)


@jax.jit
def basic_block_forward(params, x_nchw):
    """BasicBlock forward (stride=1, downsample=None). NCHW in / NCHW out."""
    # TODO(synk): the optional externally-injected `downsample` nn.Module and
    #             stride>1 are not implemented; identity shortcut only (the
    #             default BasicBlock configuration).
    x = jnp.transpose(x_nchw, (0, 2, 3, 1)).astype(jnp.float32)      # NCHW->NHWC
    N, H, W, Cin = x.shape
    Cout = params["conv2_w"].shape[-1]
    assert Cin == Cout, "identity shortcut requires Cin == Cout"

    Hp2, Wp2 = H + 2, W + 2
    S = Hp2 * Wp2               # flattened padded image rows
    P = W + 3                   # max |tap shift| in the flattened layout
    M = H * Wp2 - 2             # contiguous row range covering all interior px
    Sx = S + 2 * P

    w1, b1 = _fold_bn_into_conv(params["conv1_w"], params["bn1"])
    w2, b2 = _fold_bn_into_conv(params["conv2_w"], params["bn2"])

    # Zero 1-px halo, flatten spatial, add P zero rows top & bottom (bf16 for MXU).
    xp = jnp.pad(x, ((0, 0), (1, 1), (1, 1), (0, 0)))                # (N,H+2,W+2,C)
    x_flat = xp.reshape(N, S, Cin)
    x_ext = jnp.pad(x_flat, ((0, 0), (P, P), (0, 0))).astype(jnp.bfloat16)

    # Interior-row mask in the flattened padded layout.
    rid = jnp.arange(S) // Wp2
    cid = jnp.arange(S) % Wp2
    valid = (rid >= 1) & (rid <= H) & (cid >= 1) & (cid <= W)
    mask = valid.astype(jnp.float32).reshape(S, 1)

    out_flat = pl.pallas_call(
        _basic_block_kernel,
        out_shape=jax.ShapeDtypeStruct((N, M, Cout), jnp.float32),
        grid=(N,),   # one image per step; "parallel" feeds both v7x TCs
        in_specs=[
            pl.BlockSpec((None, Sx, Cin), lambda n: (n, 0, 0)),
            pl.BlockSpec((S, 1), lambda n: (0, 0)),
            pl.BlockSpec((9, Cin, Cout), lambda n: (0, 0, 0)),
            pl.BlockSpec((1, Cout), lambda n: (0, 0)),
            pl.BlockSpec((9, Cout, Cout), lambda n: (0, 0, 0)),
            pl.BlockSpec((1, Cout), lambda n: (0, 0)),
        ],
        out_specs=pl.BlockSpec((None, M, Cout), lambda n: (n, 0, 0)),
        scratch_shapes=[
            pltpu.VMEM((S, Cout), jnp.float32),    # conv1 accumulator
            pltpu.VMEM((S, Cout), jnp.bfloat16),   # conv1+BN1+ReLU activation
            pltpu.VMEM((M, Cout), jnp.float32),    # conv2 accumulator
        ],
        compiler_params=pltpu.CompilerParams(
            dimension_semantics=("parallel",)),
    )(x_ext, mask, w1, b1, w2, b2)

    # Crop the flattened padded rows back to the (H, W) interior (pure layout).
    out_pad = jnp.pad(out_flat, ((0, 0), (P, P), (0, 0)))            # (N, S, Cout)
    out_nhwc = out_pad.reshape(N, Hp2, Wp2, Cout)[:, 1:H + 1, 1:W + 1, :]
    return jnp.transpose(out_nhwc, (0, 3, 1, 2))                     # NHWC->NCHW


# ----------------------------------------------------------------------------
# Pure-JAX reference (numerical sanity check) and parameter init
# ----------------------------------------------------------------------------
def basic_block_reference(params, x_nchw):
    x = jnp.transpose(x_nchw, (0, 2, 3, 1)).astype(jnp.float32)

    def conv_bn(h, w_hwio, bn):
        y = jax.lax.conv_general_dilated(
            h, w_hwio, window_strides=(1, 1), padding="SAME",
            dimension_numbers=("NHWC", "HWIO", "NHWC"))
        scale = bn["gamma"] / jnp.sqrt(bn["var"] + BN_EPS)
        return y * scale + (bn["beta"] - bn["mean"] * scale)

    out = jnp.maximum(conv_bn(x, params["conv1_w"], params["bn1"]), 0.0)
    out = conv_bn(out, params["conv2_w"], params["bn2"])
    out = out + x                                   # identity shortcut, no ReLU
    return jnp.transpose(out, (0, 3, 1, 2))


def init_basic_block_params(key, cin, cout):
    ks = jax.random.split(key, 4)

    def conv_w(k, ci, co):
        std = (2.0 / (co * 9)) ** 0.5               # kaiming-style, HWIO layout
        return std * jax.random.normal(k, (3, 3, ci, co), jnp.float32)

    def bn_p(k, c):
        k1, k2, k3, k4 = jax.random.split(k, 4)
        return {
            "gamma": 1.0 + 0.1 * jax.random.normal(k1, (c,), jnp.float32),
            "beta": 0.1 * jax.random.normal(k2, (c,), jnp.float32),
            "mean": 0.1 * jax.random.normal(k3, (c,), jnp.float32),
            "var": 1.0 + 0.1 * jax.random.uniform(k4, (c,), jnp.float32),
        }

    return {
        "conv1_w": conv_w(ks[0], cin, cout),
        "bn1": bn_p(ks[1], cout),
        "conv2_w": conv_w(ks[2], cout, cout),
        "bn2": bn_p(ks[3], cout),
    }


if __name__ == "__main__":
    key = jax.random.PRNGKey(0)
    pkey, xkey = jax.random.split(key)

    # BasicBlock(in_channels=32, out_channels=32, stride=1, downsample=None)
    N, C, Hs, Ws = 2, 32, 16, 16
    params = init_basic_block_params(pkey, C, C)
    x = jax.random.normal(xkey, (N, C, Hs, Ws), jnp.float32)   # NCHW like PyTorch

    out = basic_block_forward(params, x)
    out = jax.block_until_ready(out)

    assert out.shape == (N, C, Hs, Ws), out.shape
    assert bool(jnp.all(jnp.isfinite(out)))

    # Loose check against a pure-XLA reference (kernel uses bf16 MXU operands).
    ref = basic_block_reference(params, x)
    max_err = float(jnp.max(jnp.abs(out - ref)))
    assert max_err < 0.25, f"max abs err too large: {max_err}"

    print("KERNEL_OK")
</pallas_src>

<mosaic_0001>
module attributes {stable_mosaic.version = 11 : i64} {
  func.func @_basic_block_kernel(%arg0: i32, %arg1: memref<1x362x32xbf16, #tpu.memory_space<vmem>>, %arg2: memref<324x1xf32, #tpu.memory_space<vmem>>, %arg3: memref<9x32x32xbf16, #tpu.memory_space<vmem>>, %arg4: memref<1x32xf32, #tpu.memory_space<vmem>>, %arg5: memref<9x32x32xbf16, #tpu.memory_space<vmem>>, %arg6: memref<1x32xf32, #tpu.memory_space<vmem>>, %arg7: memref<1x286x32xf32, #tpu.memory_space<vmem>>, %arg8: memref<324x32xf32, #tpu.memory_space<vmem>>, %arg9: memref<324x32xbf16, #tpu.memory_space<vmem>>, %arg10: memref<286x32xf32, #tpu.memory_space<vmem>>) attributes {dimension_semantics = [#tpu.dimension_semantics<parallel>], iteration_bounds = array<i64: 2>, scalar_prefetch = 0 : i64, scratch_operands = 3 : i64, tpu.core_type = #tpu.core_type<tc>, window_params = [{transform_indices = @transform_0, window_bounds = array<i64: 1, 362, 32>}, {pipeline_mode = #tpu.pipeline_mode<synchronous>, transform_indices = @transform_1, window_bounds = array<i64: 324, 1>}, {pipeline_mode = #tpu.pipeline_mode<synchronous>, transform_indices = @transform_2, window_bounds = array<i64: 9, 32, 32>}, {pipeline_mode = #tpu.pipeline_mode<synchronous>, transform_indices = @transform_3, window_bounds = array<i64: 1, 32>}, {pipeline_mode = #tpu.pipeline_mode<synchronous>, transform_indices = @transform_4, window_bounds = array<i64: 9, 32, 32>}, {pipeline_mode = #tpu.pipeline_mode<synchronous>, transform_indices = @transform_5, window_bounds = array<i64: 1, 32>}, {transform_indices = @transform_6, window_bounds = array<i64: 1, 286, 32>}]} {
    %c0 = arith.constant 0 : index
    %c0_0 = arith.constant 0 : index
    %c0_1 = arith.constant 0 : index
    %0 = vector.load %arg1[%c0, %c0_0, %c0_1] : memref<1x362x32xbf16, #tpu.memory_space<vmem>>, vector<1x324x32xbf16>
    %1 = vector.shape_cast %0 : vector<1x324x32xbf16> to vector<324x32xbf16>
    %c0_2 = arith.constant 0 : index
    %c0_3 = arith.constant 0 : index
    %c0_4 = arith.constant 0 : index
    %2 = vector.load %arg3[%c0_2, %c0_3, %c0_4] : memref<9x32x32xbf16, #tpu.memory_space<vmem>>, vector<1x32x32xbf16>
    %3 = vector.shape_cast %2 : vector<1x32x32xbf16> to vector<32x32xbf16>
    %cst = arith.constant dense<0.000000e+00> : vector<324x32xf32>
    %4 = tpu.matmul %1, %3, %cst {dimension_numbers = #tpu.dot_dimension_numbers<[1], [0], [0], [1], [0, 0, 1, 1], [], []>} : vector<324x32xbf16>, vector<32x32xbf16>, vector<324x32xf32> -> vector<324x32xf32>
    %c0_5 = arith.constant 0 : index
    %c0_6 = arith.constant 0 : index
    %5 = vector.load %arg8[%c0_5, %c0_6] : memref<324x32xf32, #tpu.memory_space<vmem>>, vector<324x32xf32>
    tpu.vector_store %arg8[%c0_5, %c0_6], %4 {strides = array<i32>} : memref<324x32xf32, #tpu.memory_space<vmem>>, vector<324x32xf32>,
    %c0_7 = arith.constant 0 : index
    %c1 = arith.constant 1 : index
    %c0_8 = arith.constant 0 : index
    %6 = vector.load %arg1[%c0_7, %c1, %c0_8] : memref<1x362x32xbf16, #tpu.memory_space<vmem>>, vector<1x324x32xbf16>
    %7 = vector.shape_cast %6 : vector<1x324x32xbf16> to vector<324x32xbf16>
    %c1_9 = arith.constant 1 : index
    %c0_10 = arith.constant 0 : index
    %c0_11 = arith.constant 0 : index
    %8 = vector.load %arg3[%c1_9, %c0_10, %c0_11] : memref<9x32x32xbf16, #tpu.memory_space<vmem>>, vector<1x32x32xbf16>
    %9 = vector.shape_cast %8 : vector<1x32x32xbf16> to vector<32x32xbf16>
    %cst_12 = arith.constant dense<0.000000e+00> : vector<324x32xf32>
    %10 = tpu.matmul %7, %9, %cst_12 {dimension_numbers = #tpu.dot_dimension_numbers<[1], [0], [0], [1], [0, 0, 1, 1], [], []>} : vector<324x32xbf16>, vector<32x32xbf16>, vector<324x32xf32> -> vector<324x32xf32>
    %c0_13 = arith.constant 0 : index
    %c0_14 = arith.constant 0 : index
    %11 = vector.load %arg8[%c0_13, %c0_14] : memref<324x32xf32, #tpu.memory_space<vmem>>, vector<324x32xf32>
    %12 = arith.addf %11, %10 : vector<324x32xf32>
    %c0_15 = arith.constant 0 : index
    %c0_16 = arith.constant 0 : index
    %13 = vector.load %arg8[%c0_15, %c0_16] : memref<324x32xf32, #tpu.memory_space<vmem>>, vector<324x32xf32>
    tpu.vector_store %arg8[%c0_15, %c0_16], %12 {strides = array<i32>} : memref<324x32xf32, #tpu.memory_space<vmem>>, vector<324x32xf32>,
    %c0_17 = arith.constant 0 : index
    %c2 = arith.constant 2 : index
    %c0_18 = arith.constant 0 : index
    %14 = vector.load %arg1[%c0_17, %c2, %c0_18] : memref<1x362x32xbf16, #tpu.memory_space<vmem>>, vector<1x324x32xbf16>
    %15 = vector.shape_cast %14 : vector<1x324x32xbf16> to vector<324x32xbf16>
    %c2_19 = arith.constant 2 : index
    %c0_20 = arith.constant 0 : index
    %c0_21 = arith.constant 0 : index
    %16 = vector.load %arg3[%c2_19, %c0_20, %c0_21] : memref<9x32x32xbf16, #tpu.memory_space<vmem>>, vector<1x32x32xbf16>
    %17 = vector.shape_cast %16 : vector<1x32x32xbf16> to vector<32x32xbf16>
    %cst_22 = arith.constant dense<0.000000e+00> : vector<324x32xf32>
    %18 = tpu.matmul %15, %17, %cst_22 {dimension_numbers = #tpu.dot_dimension_numbers<[1], [0], [0], [1], [0, 0, 1, 1], [], []>} : vector<324x32xbf16>, vector<32x32xbf16>, vector<324x32xf32> -> vector<324x32xf32>
    %c0_23 = arith.constant 0 : index
    %c0_24 = arith.constant 0 : index
    %19 = vector.load %arg8[%c0_23, %c0_24] : memref<324x32xf32, #tpu.memory_space<vmem>>, vector<324x32xf32>
    %20 = arith.addf %19, %18 : vector<324x32xf32>
    %c0_25 = arith.constant 0 : index
    %c0_26 = arith.constant 0 : index
    %21 = vector.load %arg8[%c0_25, %c0_26] : memref<324x32xf32, #tpu.memory_space<vmem>>, vector<324x32xf32>
    tpu.vector_store %arg8[%c0_25, %c0_26], %20 {strides = array<i32>} : memref<324x32xf32, #tpu.memory_space<vmem>>, vector<324x32xf32>,
    %c0_27 = arith.constant 0 : index
    %c18 = arith.constant 18 : index
    %c0_28 = arith.constant 0 : index
    %22 = vector.load %arg1[%c0_27, %c18, %c0_28] : memref<1x362x32xbf16, #tpu.memory_space<vmem>>, vector<1x324x32xbf16>
    %23 = vector.shape_cast %22 : vector<1x324x32xbf16> to vector<324x32xbf16>
    %c3 = arith.constant 3 : index
    %c0_29 = arith.constant 0 : index
    %c0_30 = arith.constant 0 : index
    %24 = vector.load %arg3[%c3, %c0_29, %c0_30] : memref<9x32x32xbf16, #tpu.memory_space<vmem>>, vector<1x32x32xbf16>
    %25 = vector.shape_cast %24 : vector<1x32x32xbf16> to vector<32x32xbf16>
    %cst_31 = arith.constant dense<0.000000e+00> : vector<324x32xf32>
    %26 = tpu.matmul %23, %25, %cst_31 {dimension_numbers = #tpu.dot_dimension_numbers<[1], [0], [0], [1], [0, 0, 1, 1], [], []>} : vector<324x32xbf16>, vector<32x32xbf16>, vector<324x32xf32> -> vector<324x32xf32>
    %c0_32 = arith.constant 0 : index
    %c0_33 = arith.constant 0 : index
    %27 = vector.load %arg8[%c0_32, %c0_33] : memref<324x32xf32, #tpu.memory_space<vmem>>, vector<324x32xf32>
    %28 = arith.addf %27, %26 : vector<324x32xf32>
    %c0_34 = arith.constant 0 : index
    %c0_35 = arith.constant 0 : index
    %29 = vector.load %arg8[%c0_34, %c0_35] : memref<324x32xf32, #tpu.memory_space<vmem>>, vector<324x32xf32>
    tpu.vector_store %arg8[%c0_34, %c0_35], %28 {strides = array<i32>} : memref<324x32xf32, #tpu.memory_space<vmem>>, vector<324x32xf32>,
    %c0_36 = arith.constant 0 : index
    %c19 = arith.constant 19 : index
    %c0_37 = arith.constant 0 : index
    %30 = vector.load %arg1[%c0_36, %c19, %c0_37] : memref<1x362x32xbf16, #tpu.memory_space<vmem>>, vector<1x324x32xbf16>
    %31 = vector.shape_cast %30 : vector<1x324x32xbf16> to vector<324x32xbf16>
    %c4 = arith.constant 4 : index
    %c0_38 = arith.constant 0 : index
    %c0_39 = arith.constant 0 : index
    %32 = vector.load %arg3[%c4, %c0_38, %c0_39] : memref<9x32x32xbf16, #tpu.memory_space<vmem>>, vector<1x32x32xbf16>
    %33 = vector.shape_cast %32 : vector<1x32x32xbf16> to vector<32x32xbf16>
    %cst_40 = arith.constant dense<0.000000e+00> : vector<324x32xf32>
    %34 = tpu.matmul %31, %33, %cst_40 {dimension_numbers = #tpu.dot_dimension_numbers<[1], [0], [0], [1], [0, 0, 1, 1], [], []>} : vector<324x32xbf16>, vector<32x32xbf16>, vector<324x32xf32> -> vector<324x32xf32>
    %c0_41 = arith.constant 0 : index
    %c0_42 = arith.constant 0 : index
    %35 = vector.load %arg8[%c0_41, %c0_42] : memref<324x32xf32, #tpu.memory_space<vmem>>, vector<324x32xf32>
    %36 = arith.addf %35, %34 : vector<324x32xf32>
    %c0_43 = arith.constant 0 : index
    %c0_44 = arith.constant 0 : index
    %37 = vector.load %arg8[%c0_43, %c0_44] : memref<324x32xf32, #tpu.memory_space<vmem>>, vector<324x32xf32>
    tpu.vector_store %arg8[%c0_43, %c0_44], %36 {strides = array<i32>} : memref<324x32xf32, #tpu.memory_space<vmem>>, vector<324x32xf32>,
    %c0_45 = arith.constant 0 : index
    %c20 = arith.constant 20 : index
    %c0_46 = arith.constant 0 : index
    %38 = vector.load %arg1[%c0_45, %c20, %c0_46] : memref<1x362x32xbf16, #tpu.memory_space<vmem>>, vector<1x324x32xbf16>
    %39 = vector.shape_cast %38 : vector<1x324x32xbf16> to vector<324x32xbf16>
    %c5 = arith.constant 5 : index
    %c0_47 = arith.constant 0 : index
    %c0_48 = arith.constant 0 : index
    %40 = vector.load %arg3[%c5, %c0_47, %c0_48] : memref<9x32x32xbf16, #tpu.memory_space<vmem>>, vector<1x32x32xbf16>
    %41 = vector.shape_cast %40 : vector<1x32x32xbf16> to vector<32x32xbf16>
    %cst_49 = arith.constant dense<0.000000e+00> : vector<324x32xf32>
    %42 = tpu.matmul %39, %41, %cst_49 {dimension_numbers = #tpu.dot_dimension_numbers<[1], [0], [0], [1], [0, 0, 1, 1], [], []>} : vector<324x32xbf16>, vector<32x32xbf16>, vector<324x32xf32> -> vector<324x32xf32>
    %c0_50 = arith.constant 0 : index
    %c0_51 = arith.constant 0 : index
    %43 = vector.load %arg8[%c0_50, %c0_51] : memref<324x32xf32, #tpu.memory_space<vmem>>, vector<324x32xf32>
    %44 = arith.addf %43, %42 : vector<324x32xf32>
    %c0_52 = arith.constant 0 : index
    %c0_53 = arith.constant 0 : index
    %45 = vector.load %arg8[%c0_52, %c0_53] : memref<324x32xf32, #tpu.memory_space<vmem>>, vector<324x32xf32>
    tpu.vector_store %arg8[%c0_52, %c0_53], %44 {strides = array<i32>} : memref<324x32xf32, #tpu.memory_space<vmem>>, vector<324x32xf32>,
    %c0_54 = arith.constant 0 : index
    %c36 = arith.constant 36 : index
    %c0_55 = arith.constant 0 : index
    %46 = vector.load %arg1[%c0_54, %c36, %c0_55] : memref<1x362x32xbf16, #tpu.memory_space<vmem>>, vector<1x324x32xbf16>
    %47 = vector.shape_cast %46 : vector<1x324x32xbf16> to vector<324x32xbf16>
    %c6 = arith.constant 6 : index
    %c0_56 = arith.constant 0 : index
    %c0_57 = arith.constant 0 : index
    %48 = vector.load %arg3[%c6, %c0_56, %c0_57] : memref<9x32x32xbf16, #tpu.memory_space<vmem>>, vector<1x32x32xbf16>
    %49 = vector.shape_cast %48 : vector<1x32x32xbf16> to vector<32x32xbf16>
    %cst_58 = arith.constant dense<0.000000e+00> : vector<324x32xf32>
    %50 = tpu.matmul %47, %49, %cst_58 {dimension_numbers = #tpu.dot_dimension_numbers<[1], [0], [0], [1], [0, 0, 1, 1], [], []>} : vector<324x32xbf16>, vector<32x32xbf16>, vector<324x32xf32> -> vector<324x32xf32>
    %c0_59 = arith.constant 0 : index
    %c0_60 = arith.constant 0 : index
    %51 = vector.load %arg8[%c0_59, %c0_60] : memref<324x32xf32, #tpu.memory_space<vmem>>, vector<324x32xf32>
    %52 = arith.addf %51, %50 : vector<324x32xf32>
    %c0_61 = arith.constant 0 : index
    %c0_62 = arith.constant 0 : index
    %53 = vector.load %arg8[%c0_61, %c0_62] : memref<324x32xf32, #tpu.memory_space<vmem>>, vector<324x32xf32>
    tpu.vector_store %arg8[%c0_61, %c0_62], %52 {strides = array<i32>} : memref<324x32xf32, #tpu.memory_space<vmem>>, vector<324x32xf32>,
    %c0_63 = arith.constant 0 : index
    %c37 = arith.constant 37 : index
    %c0_64 = arith.constant 0 : index
    %54 = vector.load %arg1[%c0_63, %c37, %c0_64] : memref<1x362x32xbf16, #tpu.memory_space<vmem>>, vector<1x324x32xbf16>
    %55 = vector.shape_cast %54 : vector<1x324x32xbf16> to vector<324x32xbf16>
    %c7 = arith.constant 7 : index
    %c0_65 = arith.constant 0 : index
    %c0_66 = arith.constant 0 : index
    %56 = vector.load %arg3[%c7, %c0_65, %c0_66] : memref<9x32x32xbf16, #tpu.memory_space<vmem>>, vector<1x32x32xbf16>
    %57 = vector.shape_cast %56 : vector<1x32x32xbf16> to vector<32x32xbf16>
    %cst_67 = arith.constant dense<0.000000e+00> : vector<324x32xf32>
    %58 = tpu.matmul %55, %57, %cst_67 {dimension_numbers = #tpu.dot_dimension_numbers<[1], [0], [0], [1], [0, 0, 1, 1], [], []>} : vector<324x32xbf16>, vector<32x32xbf16>, vector<324x32xf32> -> vector<324x32xf32>
    %c0_68 = arith.constant 0 : index
    %c0_69 = arith.constant 0 : index
    %59 = vector.load %arg8[%c0_68, %c0_69] : memref<324x32xf32, #tpu.memory_space<vmem>>, vector<324x32xf32>
    %60 = arith.addf %59, %58 : vector<324x32xf32>
    %c0_70 = arith.constant 0 : index
    %c0_71 = arith.constant 0 : index
    %61 = vector.load %arg8[%c0_70, %c0_71] : memref<324x32xf32, #tpu.memory_space<vmem>>, vector<324x32xf32>
    tpu.vector_store %arg8[%c0_70, %c0_71], %60 {strides = array<i32>} : memref<324x32xf32, #tpu.memory_space<vmem>>, vector<324x32xf32>,
    %c0_72 = arith.constant 0 : index
    %c38 = arith.constant 38 : index
    %c0_73 = arith.constant 0 : index
    %62 = vector.load %arg1[%c0_72, %c38, %c0_73] : memref<1x362x32xbf16, #tpu.memory_space<vmem>>, vector<1x324x32xbf16>
    %63 = vector.shape_cast %62 : vector<1x324x32xbf16> to vector<324x32xbf16>
    %c8 = arith.constant 8 : index
    %c0_74 = arith.constant 0 : index
    %c0_75 = arith.constant 0 : index
    %64 = vector.load %arg3[%c8, %c0_74, %c0_75] : memref<9x32x32xbf16, #tpu.memory_space<vmem>>, vector<1x32x32xbf16>
    %65 = vector.shape_cast %64 : vector<1x32x32xbf16> to vector<32x32xbf16>
    %cst_76 = arith.constant dense<0.000000e+00> : vector<324x32xf32>
    %66 = tpu.matmul %63, %65, %cst_76 {dimension_numbers = #tpu.dot_dimension_numbers<[1], [0], [0], [1], [0, 0, 1, 1], [], []>} : vector<324x32xbf16>, vector<32x32xbf16>, vector<324x32xf32> -> vector<324x32xf32>
    %c0_77 = arith.constant 0 : index
    %c0_78 = arith.constant 0 : index
    %67 = vector.load %arg8[%c0_77, %c0_78] : memref<324x32xf32, #tpu.memory_space<vmem>>, vector<324x32xf32>
    %68 = arith.addf %67, %66 : vector<324x32xf32>
    %c0_79 = arith.constant 0 : index
    %c0_80 = arith.constant 0 : index
    %69 = vector.load %arg8[%c0_79, %c0_80] : memref<324x32xf32, #tpu.memory_space<vmem>>, vector<324x32xf32>
    tpu.vector_store %arg8[%c0_79, %c0_80], %68 {strides = array<i32>} : memref<324x32xf32, #tpu.memory_space<vmem>>, vector<324x32xf32>,
    %c0_81 = arith.constant 0 : index
    %c0_82 = arith.constant 0 : index
    %70 = vector.load %arg8[%c0_81, %c0_82] : memref<324x32xf32, #tpu.memory_space<vmem>>, vector<324x32xf32>
    %c0_83 = arith.constant 0 : index
    %c0_84 = arith.constant 0 : index
    %71 = vector.load %arg4[%c0_83, %c0_84] : memref<1x32xf32, #tpu.memory_space<vmem>>, vector<1x32xf32>
    %72 = vector.broadcast %71 : vector<1x32xf32> to vector<324x32xf32>
    %73 = arith.addf %70, %72 : vector<324x32xf32>
    %cst_85 = arith.constant 0.000000e+00 : f32
    %74 = vector.broadcast %cst_85 : f32 to vector<324x32xf32>
    %75 = arith.maximumf %73, %74 : vector<324x32xf32>
    %c0_86 = arith.constant 0 : index
    %c0_87 = arith.constant 0 : index
    %76 = vector.load %arg2[%c0_86, %c0_87] : memref<324x1xf32, #tpu.memory_space<vmem>>, vector<324x1xf32>
    %77 = vector.broadcast %76 : vector<324x1xf32> to vector<324x32xf32>
    %78 = arith.mulf %75, %77 : vector<324x32xf32>
    %79 = arith.truncf %78 : vector<324x32xf32> to vector<324x32xbf16>
    %c0_88 = arith.constant 0 : index
    %c0_89 = arith.constant 0 : index
    %80 = vector.load %arg9[%c0_88, %c0_89] : memref<324x32xbf16, #tpu.memory_space<vmem>>, vector<324x32xbf16>
    tpu.vector_store %arg9[%c0_88, %c0_89], %79 {strides = array<i32>} : memref<324x32xbf16, #tpu.memory_space<vmem>>, vector<324x32xbf16>,
    %c0_90 = arith.constant 0 : index
    %c0_91 = arith.constant 0 : index
    %81 = vector.load %arg9[%c0_90, %c0_91] : memref<324x32xbf16, #tpu.memory_space<vmem>>, vector<286x32xbf16>
    %c0_92 = arith.constant 0 : index
    %c0_93 = arith.constant 0 : index
    %c0_94 = arith.constant 0 : index
    %82 = vector.load %arg5[%c0_92, %c0_93, %c0_94] : memref<9x32x32xbf16, #tpu.memory_space<vmem>>, vector<1x32x32xbf16>
    %83 = vector.shape_cast %82 : vector<1x32x32xbf16> to vector<32x32xbf16>
    %cst_95 = arith.constant dense<0.000000e+00> : vector<286x32xf32>
    %84 = tpu.matmul %81, %83, %cst_95 {dimension_numbers = #tpu.dot_dimension_numbers<[1], [0], [0], [1], [0, 0, 1, 1], [], []>} : vector<286x32xbf16>, vector<32x32xbf16>, vector<286x32xf32> -> vector<286x32xf32>
    %c0_96 = arith.constant 0 : index
    %c0_97 = arith.constant 0 : index
    %85 = vector.load %arg10[%c0_96, %c0_97] : memref<286x32xf32, #tpu.memory_space<vmem>>, vector<286x32xf32>
    tpu.vector_store %arg10[%c0_96, %c0_97], %84 {strides = array<i32>} : memref<286x32xf32, #tpu.memory_space<vmem>>, vector<286x32xf32>,
    %c1_98 = arith.constant 1 : index
    %c0_99 = arith.constant 0 : index
    %86 = vector.load %arg9[%c1_98, %c0_99] : memref<324x32xbf16, #tpu.memory_space<vmem>>, vector<286x32xbf16>
    %c1_100 = arith.constant 1 : index
    %c0_101 = arith.constant 0 : index
    %c0_102 = arith.constant 0 : index
    %87 = vector.load %arg5[%c1_100, %c0_101, %c0_102] : memref<9x32x32xbf16, #tpu.memory_space<vmem>>, vector<1x32x32xbf16>
    %88 = vector.shape_cast %87 : vector<1x32x32xbf16> to vector<32x32xbf16>
    %cst_103 = arith.constant dense<0.000000e+00> : vector<286x32xf32>
    %89 = tpu.matmul %86, %88, %cst_103 {dimension_numbers = #tpu.dot_dimension_numbers<[1], [0], [0], [1], [0, 0, 1, 1], [], []>} : vector<286x32xbf16>, vector<32x32xbf16>, vector<286x32xf32> -> vector<286x32xf32>
    %c0_104 = arith.constant 0 : index
    %c0_105 = arith.constant 0 : index
    %90 = vector.load %arg10[%c0_104, %c0_105] : memref<286x32xf32, #tpu.memory_space<vmem>>, vector<286x32xf32>
    %91 = arith.addf %90, %89 : vector<286x32xf32>
    %c0_106 = arith.constant 0 : index
    %c0_107 = arith.constant 0 : index
    %92 = vector.load %arg10[%c0_106, %c0_107] : memref<286x32xf32, #tpu.memory_space<vmem>>, vector<286x32xf32>
    tpu.vector_store %arg10[%c0_106, %c0_107], %91 {strides = array<i32>} : memref<286x32xf32, #tpu.memory_space<vmem>>, vector<286x32xf32>,
    %c2_108 = arith.constant 2 : index
    %c0_109 = arith.constant 0 : index
    %93 = vector.load %arg9[%c2_108, %c0_109] : memref<324x32xbf16, #tpu.memory_space<vmem>>, vector<286x32xbf16>
    %c2_110 = arith.constant 2 : index
    %c0_111 = arith.constant 0 : index
    %c0_112 = arith.constant 0 : index
    %94 = vector.load %arg5[%c2_110, %c0_111, %c0_112] : memref<9x32x32xbf16, #tpu.memory_space<vmem>>, vector<1x32x32xbf16>
    %95 = vector.shape_cast %94 : vector<1x32x32xbf16> to vector<32x32xbf16>
    %cst_113 = arith.constant dense<0.000000e+00> : vector<286x32xf32>
    %96 = tpu.matmul %93, %95, %cst_113 {dimension_numbers = #tpu.dot_dimension_numbers<[1], [0], [0], [1], [0, 0, 1, 1], [], []>} : vector<286x32xbf16>, vector<32x32xbf16>, vector<286x32xf32> -> vector<286x32xf32>
    %c0_114 = arith.constant 0 : index
    %c0_115 = arith.constant 0 : index
    %97 = vector.load %arg10[%c0_114, %c0_115] : memref<286x32xf32, #tpu.memory_space<vmem>>, vector<286x32xf32>
    %98 = arith.addf %97, %96 : vector<286x32xf32>
    %c0_116 = arith.constant 0 : index
    %c0_117 = arith.constant 0 : index
    %99 = vector.load %arg10[%c0_116, %c0_117] : memref<286x32xf32, #tpu.memory_space<vmem>>, vector<286x32xf32>
    tpu.vector_store %arg10[%c0_116, %c0_117], %98 {strides = array<i32>} : memref<286x32xf32, #tpu.memory_space<vmem>>, vector<286x32xf32>,
    %c18_118 = arith.constant 18 : index
    %c0_119 = arith.constant 0 : index
    %100 = vector.load %arg9[%c18_118, %c0_119] : memref<324x32xbf16, #tpu.memory_space<vmem>>, vector<286x32xbf16>
    %c3_120 = arith.constant 3 : index
    %c0_121 = arith.constant 0 : index
    %c0_122 = arith.constant 0 : index
    %101 = vector.load %arg5[%c3_120, %c0_121, %c0_122] : memref<9x32x32xbf16, #tpu.memory_space<vmem>>, vector<1x32x32xbf16>
    %102 = vector.shape_cast %101 : vector<1x32x32xbf16> to vector<32x32xbf16>
    %cst_123 = arith.constant dense<0.000000e+00> : vector<286x32xf32>
    %103 = tpu.matmul %100, %102, %cst_123 {dimension_numbers = #tpu.dot_dimension_numbers<[1], [0], [0], [1], [0, 0, 1, 1], [], []>} : vector<286x32xbf16>, vector<32x32xbf16>, vector<286x32xf32> -> vector<286x32xf32>
    %c0_124 = arith.constant 0 : index
    %c0_125 = arith.constant 0 : index
    %104 = vector.load %arg10[%c0_124, %c0_125] : memref<286x32xf32, #tpu.memory_space<vmem>>, vector<286x32xf32>
    %105 = arith.addf %104, %103 : vector<286x32xf32>
    %c0_126 = arith.constant 0 : index
    %c0_127 = arith.constant 0 : index
    %106 = vector.load %arg10[%c0_126, %c0_127] : memref<286x32xf32, #tpu.memory_space<vmem>>, vector<286x32xf32>
    tpu.vector_store %arg10[%c0_126, %c0_127], %105 {strides = array<i32>} : memref<286x32xf32, #tpu.memory_space<vmem>>, vector<286x32xf32>,
    %c19_128 = arith.constant 19 : index
    %c0_129 = arith.constant 0 : index
    %107 = vector.load %arg9[%c19_128, %c0_129] : memref<324x32xbf16, #tpu.memory_space<vmem>>, vector<286x32xbf16>
    %c4_130 = arith.constant 4 : index
    %c0_131 = arith.constant 0 : index
    %c0_132 = arith.constant 0 : index
    %108 = vector.load %arg5[%c4_130, %c0_131, %c0_132] : memref<9x32x32xbf16, #tpu.memory_space<vmem>>, vector<1x32x32xbf16>
    %109 = vector.shape_cast %108 : vector<1x32x32xbf16> to vector<32x32xbf16>
    %cst_133 = arith.constant dense<0.000000e+00> : vector<286x32xf32>
    %110 = tpu.matmul %107, %109, %cst_133 {dimension_numbers = #tpu.dot_dimension_numbers<[1], [0], [0], [1], [0, 0, 1, 1], [], []>} : vector<286x32xbf16>, vector<32x32xbf16>, vector<286x32xf32> -> vector<286x32xf32>
    %c0_134 = arith.constant 0 : index
    %c0_135 = arith.constant 0 : index
    %111 = vector.load %arg10[%c0_134, %c0_135] : memref<286x32xf32, #tpu.memory_space<vmem>>, vector<286x32xf32>
    %112 = arith.addf %111, %110 : vector<286x32xf32>
    %c0_136 = arith.constant 0 : index
    %c0_137 = arith.constant 0 : index
    %113 = vector.load %arg10[%c0_136, %c0_137] : memref<286x32xf32, #tpu.memory_space<vmem>>, vector<286x32xf32>
    tpu.vector_store %arg10[%c0_136, %c0_137], %112 {strides = array<i32>} : memref<286x32xf32, #tpu.memory_space<vmem>>, vector<286x32xf32>,
    %c20_138 = arith.constant 20 : index
    %c0_139 = arith.constant 0 : index
    %114 = vector.load %arg9[%c20_138, %c0_139] : memref<324x32xbf16, #tpu.memory_space<vmem>>, vector<286x32xbf16>
    %c5_140 = arith.constant 5 : index
    %c0_141 = arith.constant 0 : index
    %c0_142 = arith.constant 0 : index
    %115 = vector.load %arg5[%c5_140, %c0_141, %c0_142] : memref<9x32x32xbf16, #tpu.memory_space<vmem>>, vector<1x32x32xbf16>
    %116 = vector.shape_cast %115 : vector<1x32x32xbf16> to vector<32x32xbf16>
    %cst_143 = arith.constant dense<0.000000e+00> : vector<286x32xf32>
    %117 = tpu.matmul %114, %116, %cst_143 {dimension_numbers = #tpu.dot_dimension_numbers<[1], [0], [0], [1], [0, 0, 1, 1], [], []>} : vector<286x32xbf16>, vector<32x32xbf16>, vector<286x32xf32> -> vector<286x32xf32>
    %c0_144 = arith.constant 0 : index
    %c0_145 = arith.constant 0 : index
    %118 = vector.load %arg10[%c0_144, %c0_145] : memref<286x32xf32, #tpu.memory_space<vmem>>, vector<286x32xf32>
    %119 = arith.addf %118, %117 : vector<286x32xf32>
    %c0_146 = arith.constant 0 : index
    %c0_147 = arith.constant 0 : index
    %120 = vector.load %arg10[%c0_146, %c0_147] : memref<286x32xf32, #tpu.memory_space<vmem>>, vector<286x32xf32>
    tpu.vector_store %arg10[%c0_146, %c0_147], %119 {strides = array<i32>} : memref<286x32xf32, #tpu.memory_space<vmem>>, vector<286x32xf32>,
    %c36_148 = arith.constant 36 : index
    %c0_149 = arith.constant 0 : index
    %121 = vector.load %arg9[%c36_148, %c0_149] : memref<324x32xbf16, #tpu.memory_space<vmem>>, vector<286x32xbf16>
    %c6_150 = arith.constant 6 : index
    %c0_151 = arith.constant 0 : index
    %c0_152 = arith.constant 0 : index
    %122 = vector.load %arg5[%c6_150, %c0_151, %c0_152] : memref<9x32x32xbf16, #tpu.memory_space<vmem>>, vector<1x32x32xbf16>
    %123 = vector.shape_cast %122 : vector<1x32x32xbf16> to vector<32x32xbf16>
    %cst_153 = arith.constant dense<0.000000e+00> : vector<286x32xf32>
    %124 = tpu.matmul %121, %123, %cst_153 {dimension_numbers = #tpu.dot_dimension_numbers<[1], [0], [0], [1], [0, 0, 1, 1], [], []>} : vector<286x32xbf16>, vector<32x32xbf16>, vector<286x32xf32> -> vector<286x32xf32>
    %c0_154 = arith.constant 0 : index
    %c0_155 = arith.constant 0 : index
    %125 = vector.load %arg10[%c0_154, %c0_155] : memref<286x32xf32, #tpu.memory_space<vmem>>, vector<286x32xf32>
    %126 = arith.addf %125, %124 : vector<286x32xf32>
    %c0_156 = arith.constant 0 : index
    %c0_157 = arith.constant 0 : index
    %127 = vector.load %arg10[%c0_156, %c0_157] : memref<286x32xf32, #tpu.memory_space<vmem>>, vector<286x32xf32>
    tpu.vector_store %arg10[%c0_156, %c0_157], %126 {strides = array<i32>} : memref<286x32xf32, #tpu.memory_space<vmem>>, vector<286x32xf32>,
    %c37_158 = arith.constant 37 : index
    %c0_159 = arith.constant 0 : index
    %128 = vector.load %arg9[%c37_158, %c0_159] : memref<324x32xbf16, #tpu.memory_space<vmem>>, vector<286x32xbf16>
    %c7_160 = arith.constant 7 : index
    %c0_161 = arith.constant 0 : index
    %c0_162 = arith.constant 0 : index
    %129 = vector.load %arg5[%c7_160, %c0_161, %c0_162] : memref<9x32x32xbf16, #tpu.memory_space<vmem>>, vector<1x32x32xbf16>
    %130 = vector.shape_cast %129 : vector<1x32x32xbf16> to vector<32x32xbf16>
    %cst_163 = arith.constant dense<0.000000e+00> : vector<286x32xf32>
    %131 = tpu.matmul %128, %130, %cst_163 {dimension_numbers = #tpu.dot_dimension_numbers<[1], [0], [0], [1], [0, 0, 1, 1], [], []>} : vector<286x32xbf16>, vector<32x32xbf16>, vector<286x32xf32> -> vector<286x32xf32>
    %c0_164 = arith.constant 0 : index
    %c0_165 = arith.constant 0 : index
    %132 = vector.load %arg10[%c0_164, %c0_165] : memref<286x32xf32, #tpu.memory_space<vmem>>, vector<286x32xf32>
    %133 = arith.addf %132, %131 : vector<286x32xf32>
    %c0_166 = arith.constant 0 : index
    %c0_167 = arith.constant 0 : index
    %134 = vector.load %arg10[%c0_166, %c0_167] : memref<286x32xf32, #tpu.memory_space<vmem>>, vector<286x32xf32>
    tpu.vector_store %arg10[%c0_166, %c0_167], %133 {strides = array<i32>} : memref<286x32xf32, #tpu.memory_space<vmem>>, vector<286x32xf32>,
    %c38_168 = arith.constant 38 : index
    %c0_169 = arith.constant 0 : index
    %135 = vector.load %arg9[%c38_168, %c0_169] : memref<324x32xbf16, #tpu.memory_space<vmem>>, vector<286x32xbf16>
    %c8_170 = arith.constant 8 : index
    %c0_171 = arith.constant 0 : index
    %c0_172 = arith.constant 0 : index
    %136 = vector.load %arg5[%c8_170, %c0_171, %c0_172] : memref<9x32x32xbf16, #tpu.memory_space<vmem>>, vector<1x32x32xbf16>
    %137 = vector.shape_cast %136 : vector<1x32x32xbf16> to vector<32x32xbf16>
    %cst_173 = arith.constant dense<0.000000e+00> : vector<286x32xf32>
    %138 = tpu.matmul %135, %137, %cst_173 {dimension_numbers = #tpu.dot_dimension_numbers<[1], [0], [0], [1], [0, 0, 1, 1], [], []>} : vector<286x32xbf16>, vector<32x32xbf16>, vector<286x32xf32> -> vector<286x32xf32>
    %c0_174 = arith.constant 0 : index
    %c0_175 = arith.constant 0 : index
    %139 = vector.load %arg10[%c0_174, %c0_175] : memref<286x32xf32, #tpu.memory_space<vmem>>, vector<286x32xf32>
    %140 = arith.addf %139, %138 : vector<286x32xf32>
    %c0_176 = arith.constant 0 : index
    %c0_177 = arith.constant 0 : index
    %141 = vector.load %arg10[%c0_176, %c0_177] : memref<286x32xf32, #tpu.memory_space<vmem>>, vector<286x32xf32>
    tpu.vector_store %arg10[%c0_176, %c0_177], %140 {strides = array<i32>} : memref<286x32xf32, #tpu.memory_space<vmem>>, vector<286x32xf32>,
    %c0_178 = arith.constant 0 : index
    %c38_179 = arith.constant 38 : index
    %c0_180 = arith.constant 0 : index
    %142 = vector.load %arg1[%c0_178, %c38_179, %c0_180] : memref<1x362x32xbf16, #tpu.memory_space<vmem>>, vector<1x286x32xbf16>
    %143 = vector.shape_cast %142 : vector<1x286x32xbf16> to vector<286x32xbf16>
    %144 = arith.extf %143 : vector<286x32xbf16> to vector<286x32xf32>
    %c0_181 = arith.constant 0 : index
    %c0_182 = arith.constant 0 : index
    %145 = vector.load %arg10[%c0_181, %c0_182] : memref<286x32xf32, #tpu.memory_space<vmem>>, vector<286x32xf32>
    %c0_183 = arith.constant 0 : index
    %c0_184 = arith.constant 0 : index
    %146 = vector.load %arg6[%c0_183, %c0_184] : memref<1x32xf32, #tpu.memory_space<vmem>>, vector<1x32xf32>
    %147 = vector.broadcast %146 : vector<1x32xf32> to vector<286x32xf32>
    %148 = arith.addf %145, %147 : vector<286x32xf32>
    %149 = arith.addf %148, %144 : vector<286x32xf32>
    %c0_185 = arith.constant 0 : index
    %c0_186 = arith.constant 0 : index
    %c0_187 = arith.constant 0 : index
    %150 = vector.load %arg7[%c0_185, %c0_186, %c0_187] : memref<1x286x32xf32, #tpu.memory_space<vmem>>, vector<1x286x32xf32>
    %151 = vector.shape_cast %150 : vector<1x286x32xf32> to vector<286x32xf32>
    %152 = vector.shape_cast %149 : vector<286x32xf32> to vector<1x286x32xf32>
    tpu.vector_store %arg7[%c0_185, %c0_186, %c0_187], %152 {strides = array<i32>} : memref<1x286x32xf32, #tpu.memory_space<vmem>>, vector<1x286x32xf32>,
    return
  }
  func.func @transform_0(%arg0: i32) -> (i32, i32, i32) {
    %c0_i32 = arith.constant 0 : i32
    %c0_i32_0 = arith.constant 0 : i32
    %c0_i32_1 = arith.constant 0 : i32
    return %arg0, %c0_i32, %c0_i32_0 : i32, i32, i32
  }
  func.func @transform_1(%arg0: i32) -> (i32, i32) {
    %c0_i32 = arith.constant 0 : i32
    %c0_i32_0 = arith.constant 0 : i32
    %c0_i32_1 = arith.constant 0 : i32
    return %c0_i32, %c0_i32_0 : i32, i32
  }
  func.func @transform_2(%arg0: i32) -> (i32, i32, i32) {
    %c0_i32 = arith.constant 0 : i32
    %c0_i32_0 = arith.constant 0 : i32
    %c0_i32_1 = arith.constant 0 : i32
    %c0_i32_2 = arith.constant 0 : i32
    return %c0_i32, %c0_i32_0, %c0_i32_1 : i32, i32, i32
  }
  func.func @transform_3(%arg0: i32) -> (i32, i32) {
    %c0_i32 = arith.constant 0 : i32
    %c0_i32_0 = arith.constant 0 : i32
    %c0_i32_1 = arith.constant 0 : i32
    return %c0_i32, %c0_i32_0 : i32, i32
  }
  func.func @transform_4(%arg0: i32) -> (i32, i32, i32) {
    %c0_i32 = arith.constant 0 : i32
    %c0_i32_0 = arith.constant 0 : i32
    %c0_i32_1 = arith.constant 0 : i32
    %c0_i32_2 = arith.constant 0 : i32
    return %c0_i32, %c0_i32_0, %c0_i32_1 : i32, i32, i32
  }
  func.func @transform_5(%arg0: i32) -> (i32, i32) {
    %c0_i32 = arith.constant 0 : i32
    %c0_i32_0 = arith.constant 0 : i32
    %c0_i32_1 = arith.constant 0 : i32
    return %c0_i32, %c0_i32_0 : i32, i32
  }
  func.func @transform_6(%arg0: i32) -> (i32, i32, i32) {
    %c0_i32 = arith.constant 0 : i32
    %c0_i32_0 = arith.constant 0 : i32
    %c0_i32_1 = arith.constant 0 : i32
    return %arg0, %c0_i32, %c0_i32_0 : i32, i32, i32
  }
}

</mosaic_0001>

<llo_original>
// kernel: basic_block_forward.1
$region0: #{basic_block_forward.1}
  #allocation0 [shape = 'u32[]', space=smem, size = 0x4, offset = 0x4, fixed_abs, tag = 'smem constant byte address 0x4 - core index']
  #allocation1 [shape = 'u32[144,128]{1,0:T(1,128)}', space=vmem, size = 0x12000, scoped, tag = 'internal scratch']
  #allocation2 [shape = 'f32[324,32]{1,0:T(8,128)}', space=vmem, size = 0x29000, scoped, tag = 'scratch operand']
  #allocation3 [shape = 'bf16[324,32]{1,0:T(8,128)(2,1)}', space=vmem, size = 0x14800, scoped, tag = 'scratch operand']
  #allocation4 [shape = 'f32[286,32]{1,0:T(8,128)}', space=vmem, size = 0x24000, scoped, tag = 'scratch operand']
  %s0 = inlined_call_operand.vmem [shape: bf16[2,362,32], index: 0, kind: input, shape index: {}]
  %s1 = inlined_call_operand.vmem [shape: f32[324,1], index: 1, kind: input, shape index: {}]
  %s2 = inlined_call_operand.vmem [shape: bf16[9,32,32], index: 2, kind: input, shape index: {}]
  %s3 = inlined_call_operand.vmem [shape: f32[1,32], index: 3, kind: input, shape index: {}]
  %s4 = inlined_call_operand.vmem [shape: bf16[9,32,32], index: 4, kind: input, shape index: {}]
  %s5 = inlined_call_operand.vmem [shape: f32[1,32], index: 5, kind: input, shape index: {}]
  %s6 = inlined_call_operand.vmem [shape: f32[2,286,32], index: 6, kind: output, shape index: {}]
  %s7 = sld [smem:[#allocation0]]
  $region57: #{basic_block_forward.1} parent=0
    _
  %s9 = ssub.s32 1, %s7
  %s10 = scalar_select 0, %s9, %s7
  loop: start=0, step=1, limit=4
  $region2: #{basic_block_forward.1} parent=0 // loop_pre_header
    _
  $region3: #{basic_block_forward.1} parent=0 // loop_header
    %s12 = sphi 0, %s16
    %p13 = scmp.ge.s32.totalorder %s12, 4
    %s22 = sphi 0, %s24
    %s25 = sphi 0, %s22
    %s26 = sphi 0, %s25
    %s42 = sphi 0, %s26
    %s46 = sphi 0, %s46
    %s48 = sphi 0, %s46
    %s49 = sphi 0, %s48
    %s63 = sphi 0, %s49
    %s67 = sphi 0, %s67
    %s69 = sphi 0, %s67
    %s70 = sphi 0, %s69
    %s84 = sphi 0, %s70
    %s88 = sphi 0, %s88
    %s90 = sphi 0, %s88
    %s91 = sphi 0, %s90
    %s105 = sphi 0, %s91
    %s109 = sphi 0, %s109
    %s111 = sphi 0, %s109
    %s112 = sphi 0, %s111
    %s126 = sphi 0, %s112
    %s130 = sphi 0, %s130
    %s132 = sphi 0, %s130
    %s133 = sphi 0, %s132
    %s147 = sphi 0, %s133
    %s153 = sphi 0, %s155
    %s156 = sphi 0, %s153
    %s157 = sphi 0, %s156
    %s173 = sphi 0, %s157
  $region4: #{basic_block_forward.1} parent=0 // loop_header_branch
    %15 = sbr.rel (%p13) target = $region8
  $region5: #{basic_block_forward.1} parent=0 // loop_body
    %s17 = ssub.s32 %s12, 1
    %s18 = ssub.s32 %s12, 2
    %s19 = sadd.s32 %s12, 1
    %s20 = ssub.s32 %s12, %s19
    %p21 = scmp.eq.s32.totalorder %s20, 0
    %s23 = sadd.s32 %s22, 1
    %s24 = scalar_select %p21, %s22, %s23
    %p27 = pneg %p21
    %p28 = scmp.eq.s32.totalorder %s12, 1
    %p29 = por %p27, %p28
    %p30 = scmp.ne.s32.totalorder %s22, %s25
    %p31 = scmp.eq.s32.totalorder %s12, 0
    %p32 = por %p30, %p31
    %p33 = scmp.ne.s32.totalorder %s22, %s25
    %p34 = scmp.eq.s32.totalorder %s17, 1
    %p35 = por %p33, %p34
    %p36 = scmp.ne.s32.totalorder %s25, %s26
    %p37 = scmp.eq.s32.totalorder %s17, 0
    %p38 = por %p36, %p37
    %p39 = scmp.ne.s32.totalorder %s25, %s26
    %p40 = scmp.eq.s32.totalorder %s18, 1
    %p41 = por %p39, %p40
    %p43 = scmp.ne.s32.totalorder %s26, %s42
    %p44 = scmp.eq.s32.totalorder %s18, 0
    %p45 = por %p43, %p44
    %s47 = sadd.s32 %s46, 1
    %p50 = scmp.eq.s32.totalorder %s12, 1
    %p51 = scmp.ne.s32.totalorder %s46, %s48
    %p52 = scmp.eq.s32.totalorder %s12, 0
    %p53 = por %p51, %p52
    %p54 = scmp.ne.s32.totalorder %s46, %s48
    %p55 = scmp.eq.s32.totalorder %s17, 1
    %p56 = por %p54, %p55
    %p57 = scmp.ne.s32.totalorder %s48, %s49
    %p58 = scmp.eq.s32.totalorder %s17, 0
    %p59 = por %p57, %p58
    %p60 = scmp.ne.s32.totalorder %s48, %s49
    %p61 = scmp.eq.s32.totalorder %s18, 1
    %p62 = por %p60, %p61
    %p64 = scmp.ne.s32.totalorder %s49, %s63
    %p65 = scmp.eq.s32.totalorder %s18, 0
    %p66 = por %p64, %p65
    %s68 = sadd.s32 %s67, 1
    %p71 = scmp.eq.s32.totalorder %s12, 1
    %p72 = scmp.ne.s32.totalorder %s67, %s69
    %p73 = scmp.eq.s32.totalorder %s12, 0
    %p74 = por %p72, %p73
    %p75 = scmp.ne.s32.totalorder %s67, %s69
    %p76 = scmp.eq.s32.totalorder %s17, 1
    %p77 = por %p75, %p76
    %p78 = scmp.ne.s32.totalorder %s69, %s70
    %p79 = scmp.eq.s32.totalorder %s17, 0
    %p80 = por %p78, %p79
    %p81 = scmp.ne.s32.totalorder %s69, %s70
    %p82 = scmp.eq.s32.totalorder %s18, 1
    %p83 = por %p81, %p82
    %p85 = scmp.ne.s32.totalorder %s70, %s84
    %p86 = scmp.eq.s32.totalorder %s18, 0
    %p87 = por %p85, %p86
    %s89 = sadd.s32 %s88, 1
    %p92 = scmp.eq.s32.totalorder %s12, 1
    %p93 = scmp.ne.s32.totalorder %s88, %s90
    %p94 = scmp.eq.s32.totalorder %s12, 0
    %p95 = por %p93, %p94
    %p96 = scmp.ne.s32.totalorder %s88, %s90
    %p97 = scmp.eq.s32.totalorder %s17, 1
    %p98 = por %p96, %p97
    %p99 = scmp.ne.s32.totalorder %s90, %s91
    %p100 = scmp.eq.s32.totalorder %s17, 0
    %p101 = por %p99, %p100
    %p102 = scmp.ne.s32.totalorder %s90, %s91
    %p103 = scmp.eq.s32.totalorder %s18, 1
    %p104 = por %p102, %p103
    %p106 = scmp.ne.s32.totalorder %s91, %s105
    %p107 = scmp.eq.s32.totalorder %s18, 0
    %p108 = por %p106, %p107
    %s110 = sadd.s32 %s109, 1
    %p113 = scmp.eq.s32.totalorder %s12, 1
    %p114 = scmp.ne.s32.totalorder %s109, %s111
    %p115 = scmp.eq.s32.totalorder %s12, 0
    %p116 = por %p114, %p115
    %p117 = scmp.ne.s32.totalorder %s109, %s111
    %p118 = scmp.eq.s32.totalorder %s17, 1
    %p119 = por %p117, %p118
    %p120 = scmp.ne.s32.totalorder %s111, %s112
    %p121 = scmp.eq.s32.totalorder %s17, 0
    %p122 = por %p120, %p121
    %p123 = scmp.ne.s32.totalorder %s111, %s112
    %p124 = scmp.eq.s32.totalorder %s18, 1
    %p125 = por %p123, %p124
    %p127 = scmp.ne.s32.totalorder %s112, %s126
    %p128 = scmp.eq.s32.totalorder %s18, 0
    %p129 = por %p127, %p128
    %s131 = sadd.s32 %s130, 1
    %p134 = scmp.eq.s32.totalorder %s12, 1
    %p135 = scmp.ne.s32.totalorder %s130, %s132
    %p136 = scmp.eq.s32.totalorder %s12, 0
    %p137 = por %p135, %p136
    %p138 = scmp.ne.s32.totalorder %s130, %s132
    %p139 = scmp.eq.s32.totalorder %s17, 1
    %p140 = por %p138, %p139
    %p141 = scmp.ne.s32.totalorder %s132, %s133
    %p142 = scmp.eq.s32.totalorder %s17, 0
    %p143 = por %p141, %p142
    %p144 = scmp.ne.s32.totalorder %s132, %s133
    %p145 = scmp.eq.s32.totalorder %s18, 1
    %p146 = por %p144, %p145
    %p148 = scmp.ne.s32.totalorder %s133, %s147
    %p149 = scmp.eq.s32.totalorder %s18, 0
    %p150 = por %p148, %p149
    %s151 = ssub.s32 %s12, %s19
    %p152 = scmp.eq.s32.totalorder %s151, 0
    %s154 = sadd.s32 %s153, 1
    %s155 = scalar_select %p152, %s153, %s154
    %p158 = pneg %p152
    %p159 = scmp.eq.s32.totalorder %s12, 1
    %p160 = por %p158, %p159
    %p161 = scmp.ne.s32.totalorder %s153, %s156
    %p162 = scmp.eq.s32.totalorder %s12, 0
    %p163 = por %p161, %p162
    %p164 = scmp.ne.s32.totalorder %s153, %s156
    %p165 = scmp.eq.s32.totalorder %s17, 1
    %p166 = por %p164, %p165
    %p167 = scmp.ne.s32.totalorder %s156, %s157
    %p168 = scmp.eq.s32.totalorder %s17, 0
    %p169 = por %p167, %p168
    %p170 = scmp.ne.s32.totalorder %s156, %s157
    %p171 = scmp.eq.s32.totalorder %s18, 1
    %p172 = por %p170, %p171
    %p174 = scmp.ne.s32.totalorder %s157, %s173
    %p175 = scmp.eq.s32.totalorder %s18, 0
    %p176 = por %p174, %p175
    %p177 = scmp.le.s32.totalorder 1, %s12
    %p178 = scmp.lt.s32.totalorder %s12, 3
    %p179 = pnand %p177, %p178
    %p180 = pneg %p179
    // Predicated region
    $region9: #{basic_block_forward.1} parent=5 // pred_check
      _
    $region10: #{basic_block_forward.1} parent=5 // pred_check_branch
      %182 = sbr.rel (%p179) target = $region12
    $region11: #{basic_block_forward.1} parent=5 // pred_region
      %s183 = ssub.s32 %s12, 1
      // Predicated region
      $region13: #{basic_block_forward.1} parent=11 // pred_check
        %p184 = pneg %p59
      $region14: #{basic_block_forward.1} parent=11 // pred_check_branch
        %186 = sbr.rel (%p184) target = $region16
      $region15: #{basic_block_forward.1} parent=11 // pred_region
        _
      $region16: #{basic_block_forward.1} parent=11 // pred_fallthru
        _
      // Predicated region
      $region17: #{basic_block_forward.1} parent=11 // pred_check
        %p187 = pneg %p80
      $region18: #{basic_block_forward.1} parent=11 // pred_check_branch
        %189 = sbr.rel (%p187) target = $region20
      $region19: #{basic_block_forward.1} parent=11 // pred_region
        _
      $region20: #{basic_block_forward.1} parent=11 // pred_fallthru
        _
      // Predicated region
      $region21: #{basic_block_forward.1} parent=11 // pred_check
        %p190 = pneg %p101
      $region22: #{basic_block_forward.1} parent=11 // pred_check_branch
        %192 = sbr.rel (%p190) target = $region24
      $region23: #{basic_block_forward.1} parent=11 // pred_region
        _
      $region24: #{basic_block_forward.1} parent=11 // pred_fallthru
        _
      // Predicated region
      $region25: #{basic_block_forward.1} parent=11 // pred_check
        %p193 = pneg %p122
      $region26: #{basic_block_forward.1} parent=11 // pred_check_branch
        %195 = sbr.rel (%p193) target = $region28
      $region27: #{basic_block_forward.1} parent=11 // pred_region
        _
      $region28: #{basic_block_forward.1} parent=11 // pred_fallthru
        _
      // Predicated region
      $region29: #{basic_block_forward.1} parent=11 // pred_check
        %p196 = pneg %p143
      $region30: #{basic_block_forward.1} parent=11 // pred_check_branch
        %198 = sbr.rel (%p196) target = $region32
      $region31: #{basic_block_forward.1} parent=11 // pred_region
        _
      $region32: #{basic_block_forward.1} parent=11 // pred_fallthru
        _
    $region12: #{basic_block_forward.1} parent=5 // pred_fallthru
      _
    %p199 = scmp.lt.s32.totalorder %s12, 2
    // Predicated region
    $region33: #{basic_block_forward.1} parent=5 // pred_check
      %p200 = pneg %p199
    $region34: #{basic_block_forward.1} parent=5 // pred_check_branch
      %202 = sbr.rel (%p200) target = $region36
    $region35: #{basic_block_forward.1} parent=5 // pred_region
      // Predicated region
      $region37: #{basic_block_forward.1} parent=35 // pred_check
        %p203 = pneg %p32
      $region38: #{basic_block_forward.1} parent=35 // pred_check_branch
        %205 = sbr.rel (%p203) target = $region40
      $region39: #{basic_block_forward.1} parent=35 // pred_region
        %p206 = scmp.lt.s32.totalorder %s12, 1
        %s207 = scalar_select %p206, %s12, 1
        %s208 = smul.addr %s207, 46
        %s209 = smul.addr %s208, 4
        %s210 = scalar_lea.vmem %s0, %s209
      $region40: #{basic_block_forward.1} parent=35 // pred_fallthru
        _
    $region36: #{basic_block_forward.1} parent=5 // pred_fallthru
      _
    %p211 = scmp.le.s32.totalorder 1, %s12
    %p212 = scmp.lt.s32.totalorder %s12, 3
    %p213 = pnand %p211, %p212
    %p214 = pneg %p213
    // Predicated region
    $region41: #{basic_block_forward.1} parent=5 // pred_check
      _
    $region42: #{basic_block_forward.1} parent=5 // pred_check_branch
      %216 = sbr.rel (%p213) target = $region44
    $region43: #{basic_block_forward.1} parent=5 // pred_region
      %s217 = ssub.s32 %s12, 1
      %p218 = scmp.lt.s32.totalorder %s17, 1
      %s219 = scalar_select %p218, %s17, 1
      %s220 = smul.addr %s219, 46
      %s221 = smul.addr %s220, 4
      %s222 = scalar_lea.vmem %s0, %s221
      %p223 = pneg %p38
      %p224 = pneg %p35
      %p225 = pneg %p59
      %p226 = pneg %p56
      %p227 = pneg %p80
      %p228 = pneg %p77
      %p229 = pneg %p101
      %p230 = pneg %p98
      %p231 = pneg %p122
      %p232 = pneg %p119
      %p233 = pneg %p143
      %p234 = pneg %p140
      %p235 = pneg %p169
      %p236 = pneg %p166
      %p237 = scmp.lt.s32.totalorder %s17, 1
      %s238 = scalar_select %p237, %s17, 1
      %s239 = smul.addr %s238, 36
      %s240 = smul.addr %s239, 8
      %s241 = scalar_lea.vmem %s6, %s240
      %p242 = scmp.lt.s32.totalorder %s17, 1
      %s243 = scalar_select %p242, %s17, 1
      %s244 = smul.addr %s243, 46
      %s245 = smul.addr %s244, 4
      %s246 = scalar_lea.vmem %s0, %s245
      %p247 = scmp.lt.s32.totalorder %s17, 1
      %s248 = scalar_select %p247, %s17, 1
      %s249 = smul.addr %s248, 36
      %s250 = smul.addr %s249, 8
      %s251 = scalar_lea.vmem %s6, %s250
      %v253 = vld [vmem:[%s246] sm:$0xf]
      %v254 = vld [vmem:[%s246 + $0x4] sm:$0xf]
      %v255 = vld [vmem:[%s246 + $0x8] sm:$0xf]
      %v256 = vld [vmem:[%s246 + $0xc] sm:$0xf]
      %v257 = vld [vmem:[%s246 + $0x10] sm:$0xf]
      %v258 = vld [vmem:[%s246 + $0x14] sm:$0xf]
      %v259 = vld [vmem:[%s246 + $0x18] sm:$0xf]
      %v260 = vld [vmem:[%s246 + $0x1c] sm:$0xf]
      %v261 = vld [vmem:[%s246 + $0x20] sm:$0xf]
      %v262 = vld [vmem:[%s246 + $0x24] sm:$0xf]
      %v263 = vld [vmem:[%s246 + $0x28] sm:$0xf]
      %v264 = vld [vmem:[%s246 + $0x2c] sm:$0xf]
      %v265 = vld [vmem:[%s246 + $0x30] sm:$0xf]
      %v266 = vld [vmem:[%s246 + $0x34] sm:$0xf]
      %v267 = vld [vmem:[%s246 + $0x38] sm:$0xf]
      %v268 = vld [vmem:[%s246 + $0x3c] sm:$0xf]
      %v269 = vld [vmem:[%s246 + $0x40] sm:$0xf]
      %v270 = vld [vmem:[%s246 + $0x44] sm:$0xf]
      %v271 = vld [vmem:[%s246 + $0x48] sm:$0xf]
      %v272 = vld [vmem:[%s246 + $0x4c] sm:$0xf]
      %v273 = vld [vmem:[%s246 + $0x50] sm:$0xf]
      %v274 = vld [vmem:[%s246 + $0x54] sm:$0xf]
      %v275 = vld [vmem:[%s246 + $0x58] sm:$0xf]
      %v276 = vld [vmem:[%s246 + $0x5c] sm:$0xf]
      %v277 = vld [vmem:[%s246 + $0x60] sm:$0xf]
      %v278 = vld [vmem:[%s246 + $0x64] sm:$0xf]
      %v279 = vld [vmem:[%s246 + $0x68] sm:$0xf]
      %v280 = vld [vmem:[%s246 + $0x6c] sm:$0xf]
      %v281 = vld [vmem:[%s246 + $0x70] sm:$0xf]
      %v282 = vld [vmem:[%s246 + $0x74] sm:$0xf]
      %v283 = vld [vmem:[%s246 + $0x78] sm:$0xf]
      %v284 = vld [vmem:[%s246 + $0x7c] sm:$0xf]
      %v285 = vld [vmem:[%s246 + $0x80] sm:$0xf]
      %v286 = vld [vmem:[%s246 + $0x84] sm:$0xf]
      %v287 = vld [vmem:[%s246 + $0x88] sm:$0xf]
      %v288 = vld [vmem:[%s246 + $0x8c] sm:$0xf]
      %v289 = vld [vmem:[%s246 + $0x90] sm:$0xf]
      %v290 = vld [vmem:[%s246 + $0x94] sm:$0xf]
      %v291 = vld [vmem:[%s246 + $0x98] sm:$0xf]
      %v292 = vld [vmem:[%s246 + $0x9c] sm:$0xf]
      %v293 = vld [vmem:[%s246 + $0xa0] sm:$0x3]
      %v294 = vld [vmem:[%s2] sm:$0xf]
      %v295 = vld [vmem:[%s2 + $0x4] sm:$0xf]
      %v296 = vld [vmem:[%s2 + $0x8] sm:$0xf]
      %v297 = vld [vmem:[%s2 + $0xc] sm:$0xf]
      %v339 = vunpack.c.l.b16 %v253
      %v340 = vunpack.c.l.b16 %v254
      %v341 = vunpack.c.l.b16 %v255
      %v342 = vunpack.c.l.b16 %v256
      %v343 = vunpack.c.l.b16 %v257
      %v344 = vunpack.c.l.b16 %v258
      %v345 = vunpack.c.l.b16 %v259
      %v346 = vunpack.c.l.b16 %v260
      %v347 = vunpack.c.l.b16 %v261
      %v348 = vunpack.c.l.b16 %v262
      %v349 = vunpack.c.l.b16 %v263
      %v350 = vunpack.c.l.b16 %v264
      %v351 = vunpack.c.l.b16 %v265
      %v352 = vunpack.c.l.b16 %v266
      %v353 = vunpack.c.l.b16 %v267
      %v354 = vunpack.c.l.b16 %v268
      %v355 = vunpack.c.l.b16 %v269
      %v356 = vunpack.c.l.b16 %v270
      %v357 = vunpack.c.l.b16 %v271
      %v358 = vunpack.c.l.b16 %v272
      %v359 = vunpack.c.l.b16 %v273
      %v360 = vunpack.c.l.b16 %v274
      %v361 = vunpack.c.l.b16 %v275
      %v362 = vunpack.c.l.b16 %v276
      %v363 = vunpack.c.l.b16 %v277
      %v364 = vunpack.c.l.b16 %v278
      %v365 = vunpack.c.l.b16 %v279
      %v366 = vunpack.c.l.b16 %v280
      %v367 = vunpack.c.l.b16 %v281
      %v368 = vunpack.c.l.b16 %v282
      %v369 = vunpack.c.l.b16 %v283
      %v370 = vunpack.c.l.b16 %v284
      %v371 = vunpack.c.l.b16 %v285
      %v372 = vunpack.c.l.b16 %v286
      %v373 = vunpack.c.l.b16 %v287
      %v374 = vunpack.c.l.b16 %v288
      %v375 = vunpack.c.l.b16 %v289
      %v376 = vunpack.c.l.b16 %v290
      %v377 = vunpack.c.l.b16 %v291
      %v378 = vunpack.c.l.b16 %v292
      %v379 = vunpack.c.l.b16 %v293
      %v380 = vpack.c.b16 %v340, %v339
      %v381 = vpack.c.b16 %v342, %v341
      %v382 = vpack.c.b16 %v344, %v343
      %v383 = vpack.c.b16 %v346, %v345
      %v384 = vpack.c.b16 %v348, %v347
      %v385 = vpack.c.b16 %v350, %v349
      %v386 = vpack.c.b16 %v352, %v351
      %v387 = vpack.c.b16 %v354, %v353
      %v388 = vpack.c.b16 %v356, %v355
      %v389 = vpack.c.b16 %v358, %v357
      %v390 = vpack.c.b16 %v360, %v359
      %v391 = vpack.c.b16 %v362, %v361
      %v392 = vpack.c.b16 %v364, %v363
      %v393 = vpack.c.b16 %v366, %v365
      %v394 = vpack.c.b16 %v368, %v367
      %v395 = vpack.c.b16 %v370, %v369
      %v396 = vpack.c.b16 %v372, %v371
      %v397 = vpack.c.b16 %v374, %v373
      %v398 = vpack.c.b16 %v376, %v375
      %v399 = vpack.c.b16 %v378, %v377
      %v400 = vpack.c.b16 %v379, %v379
      %v405 = vunpack.c.l.b16 %v294
      %v406 = vunpack.c.l.b16 %v295
      %v407 = vunpack.c.l.b16 %v296
      %v408 = vunpack.c.l.b16 %v297
      %v409 = vpack.c.b16 %v406, %v405
      %v410 = vpack.c.b16 %v408, %v407
      %vm413 = vcmask 261120
      %v415 = vsel %vm413, %v380, 0
      %v418 = vsel %vm413, %v381, 0
      %v421 = vsel %vm413, %v382, 0
      %v424 = vsel %vm413, %v383, 0
      %v427 = vsel %vm413, %v384, 0
      %v430 = vsel %vm413, %v385, 0
      %v433 = vsel %vm413, %v386, 0
      %v436 = vsel %vm413, %v387, 0
      %v439 = vsel %vm413, %v388, 0
      %v442 = vsel %vm413, %v389, 0
      %v445 = vsel %vm413, %v390, 0
      %v448 = vsel %vm413, %v391, 0
      %v451 = vsel %vm413, %v392, 0
      %v454 = vsel %vm413, %v393, 0
      %v457 = vsel %vm413, %v394, 0
      %v460 = vsel %vm413, %v395, 0
      %v463 = vsel %vm413, %v396, 0
      %v466 = vsel %vm413, %v397, 0
      %v469 = vsel %vm413, %v398, 0
      %v472 = vsel %vm413, %v399, 0
      %v475 = vsel %vm413, %v400, 0
      %477 = vmatprep.subr.bf16.mxu0 0
      %478 = vmatpush1.bf16.msra.mxu0 %v409
      %479 = vmatprep.subr.bf16.mxu0 0
      %480 = vmatpush1.bf16.msra.mxu0 %v410
      %481 = vmatprep.subr.bf16.mxu0 0
      %482 = vmatpush1.bf16.msra.mxu0 0
      %483 = vmatprep.subr.bf16.mxu0 0
      %484 = vmatpush1.bf16.msra.mxu0 0
      %485 = vmatprep.subr.bf16.mxu0 0
      %486 = vmatpush1.bf16.msra.mxu0 0
      %487 = vmatprep.subr.bf16.mxu0 0
      %488 = vmatpush1.bf16.msra.mxu0 0
      %489 = vmatprep.subr.bf16.mxu0 0
      %490 = vmatpush1.bf16.msra.mxu0 0
      %491 = vmatprep.subr.bf16.mxu0 0
      %492 = vmatpush1.bf16.msra.mxu0 0
      %493 = vmatprep.subr.bf16.mxu0 0
      %494 = vmatpush1.bf16.msra.mxu0 0
      %495 = vmatprep.subr.bf16.mxu0 0
      %496 = vmatpush1.bf16.msra.mxu0 0
      %497 = vmatprep.subr.bf16.mxu0 0
      %498 = vmatpush1.bf16.msra.mxu0 0
      %499 = vmatprep.subr.bf16.mxu0 0
      %500 = vmatpush1.bf16.msra.mxu0 0
      %501 = vmatprep.subr.bf16.mxu0 0
      %502 = vmatpush1.bf16.msra.mxu0 0
      %503 = vmatprep.subr.bf16.mxu0 0
      %504 = vmatpush1.bf16.msra.mxu0 0
      %505 = vmatprep.subr.bf16.mxu0 0
      %506 = vmatpush1.bf16.msra.mxu0 0
      %507 = vmatprep.subr.bf16.mxu0 0
      %508 = vmatpush1.bf16.msra.mxu0 0
      %509 = vmatprep.mubr.bf16.mxu0 0
      %510 = vmatmul.mubr.bf16.gmra.mrb[0].mxu0 %v415
      %v511 = vpop.f32.mrb[0].mxu0
      %v512 = vadd.f32 0.0, %v511
      %v513 = vpop.f32.mrb[0].mxu0
      %v514 = vpop.f32.mrb[0].mxu0
      %v515 = vadd.f32 0.0, %v514
      %v516 = vpop.f32.mrb[0].mxu0
      %517 = vmatprep.mubr.bf16.mxu0 0
      %518 = vmatmul.mubr.bf16.gmra.mrb[0].mxu0 %v418
      %v519 = vpop.f32.mrb[0].mxu0
      %v520 = vadd.f32 0.0, %v519
      %v521 = vpop.f32.mrb[0].mxu0
      %v522 = vpop.f32.mrb[0].mxu0
      %v523 = vadd.f32 0.0, %v522
      %v524 = vpop.f32.mrb[0].mxu0
      %525 = vmatprep.mubr.bf16.mxu0 0
      %526 = vmatmul.mubr.bf16.gmra.mrb[0].mxu0 %v421
      %v527 = vpop.f32.mrb[0].mxu0
      %v528 = vadd.f32 0.0, %v527
      %v529 = vpop.f32.mrb[0].mxu0
      %v530 = vpop.f32.mrb[0].mxu0
      %v531 = vadd.f32 0.0, %v530
      %v532 = vpop.f32.mrb[0].mxu0
      %533 = vmatprep.mubr.bf16.mxu0 0
      %534 = vmatmul.mubr.bf16.gmra.mrb[0].mxu0 %v424
      %v535 = vpop.f32.mrb[0].mxu0
      %v536 = vadd.f32 0.0, %v535
      %v537 = vpop.f32.mrb[0].mxu0
      %v538 = vpop.f32.mrb[0].mxu0
      %v539 = vadd.f32 0.0, %v538
      %v540 = vpop.f32.mrb[0].mxu0
      %541 = vmatprep.mubr.bf16.mxu0 0
      %542 = vmatmul.mubr.bf16.gmra.mrb[0].mxu0 %v427
      %v543 = vpop.f32.mrb[0].mxu0
      %v544 = vadd.f32 0.0, %v543
      %v545 = vpop.f32.mrb[0].mxu0
      %v546 = vpop.f32.mrb[0].mxu0
      %v547 = vadd.f32 0.0, %v546
      %v548 = vpop.f32.mrb[0].mxu0
      %549 = vmatprep.mubr.bf16.mxu0 0
      %550 = vmatmul.mubr.bf16.gmra.mrb[0].mxu0 %v430
      %v551 = vpop.f32.mrb[0].mxu0
      %v552 = vadd.f32 0.0, %v551
      %v553 = vpop.f32.mrb[0].mxu0
      %v554 = vpop.f32.mrb[0].mxu0
      %v555 = vadd.f32 0.0, %v554
      %v556 = vpop.f32.mrb[0].mxu0
      %557 = vmatprep.mubr.bf16.mxu0 0
      %558 = vmatmul.mubr.bf16.gmra.mrb[0].mxu0 %v433
      %v559 = vpop.f32.mrb[0].mxu0
      %v560 = vadd.f32 0.0, %v559
      %v561 = vpop.f32.mrb[0].mxu0
      %v562 = vpop.f32.mrb[0].mxu0
      %v563 = vadd.f32 0.0, %v562
      %v564 = vpop.f32.mrb[0].mxu0
      %565 = vmatprep.mubr.bf16.mxu0 0
      %566 = vmatmul.mubr.bf16.gmra.mrb[0].mxu0 %v436
      %v567 = vpop.f32.mrb[0].mxu0
      %v568 = vadd.f32 0.0, %v567
      %v569 = vpop.f32.mrb[0].mxu0
      %v570 = vpop.f32.mrb[0].mxu0
      %v571 = vadd.f32 0.0, %v570
      %v572 = vpop.f32.mrb[0].mxu0
      %573 = vmatprep.mubr.bf16.mxu0 0
      %574 = vmatmul.mubr.bf16.gmra.mrb[0].mxu0 %v439
      %v575 = vpop.f32.mrb[0].mxu0
      %v576 = vadd.f32 0.0, %v575
      %v577 = vpop.f32.mrb[0].mxu0
      %v578 = vpop.f32.mrb[0].mxu0
      %v579 = vadd.f32 0.0, %v578
      %v580 = vpop.f32.mrb[0].mxu0
      %581 = vmatprep.mubr.bf16.mxu0 0
      %582 = vmatmul.mubr.bf16.gmra.mrb[0].mxu0 %v442
      %v583 = vpop.f32.mrb[0].mxu0
      %v584 = vadd.f32 0.0, %v583
      %v585 = vpop.f32.mrb[0].mxu0
      %v586 = vpop.f32.mrb[0].mxu0
      %v587 = vadd.f32 0.0, %v586
      %v588 = vpop.f32.mrb[0].mxu0
      %589 = vmatprep.mubr.bf16.mxu0 0
      %590 = vmatmul.mubr.bf16.gmra.mrb[0].mxu0 %v445
      %v591 = vpop.f32.mrb[0].mxu0
      %v592 = vadd.f32 0.0, %v591
      %v593 = vpop.f32.mrb[0].mxu0
      %v594 = vpop.f32.mrb[0].mxu0
      %v595 = vadd.f32 0.0, %v594
      %v596 = vpop.f32.mrb[0].mxu0
      %597 = vmatprep.mubr.bf16.mxu0 0
      %598 = vmatmul.mubr.bf16.gmra.mrb[0].mxu0 %v448
      %v599 = vpop.f32.mrb[0].mxu0
      %v600 = vadd.f32 0.0, %v599
      %v601 = vpop.f32.mrb[0].mxu0
      %v602 = vpop.f32.mrb[0].mxu0
      %v603 = vadd.f32 0.0, %v602
      %v604 = vpop.f32.mrb[0].mxu0
      %605 = vmatprep.mubr.bf16.mxu0 0
      %606 = vmatmul.mubr.bf16.gmra.mrb[0].mxu0 %v451
      %v607 = vpop.f32.mrb[0].mxu0
      %v608 = vadd.f32 0.0, %v607
      %v609 = vpop.f32.mrb[0].mxu0
      %v610 = vpop.f32.mrb[0].mxu0
      %v611 = vadd.f32 0.0, %v610
      %v612 = vpop.f32.mrb[0].mxu0
      %613 = vmatprep.mubr.bf16.mxu0 0
      %614 = vmatmul.mubr.bf16.gmra.mrb[0].mxu0 %v454
      %v615 = vpop.f32.mrb[0].mxu0
      %v616 = vadd.f32 0.0, %v615
      %v617 = vpop.f32.mrb[0].mxu0
      %v618 = vpop.f32.mrb[0].mxu0
      %v619 = vadd.f32 0.0, %v618
      %v620 = vpop.f32.mrb[0].mxu0
      %621 = vmatprep.mubr.bf16.mxu0 0
      %622 = vmatmul.mubr.bf16.gmra.mrb[0].mxu0 %v457
      %v623 = vpop.f32.mrb[0].mxu0
      %v624 = vadd.f32 0.0, %v623
      %v625 = vpop.f32.mrb[0].mxu0
      %v626 = vpop.f32.mrb[0].mxu0
      %v627 = vadd.f32 0.0, %v626
      %v628 = vpop.f32.mrb[0].mxu0
      %629 = vmatprep.mubr.bf16.mxu0 0
      %630 = vmatmul.mubr.bf16.gmra.mrb[0].mxu0 %v460
      %v631 = vpop.f32.mrb[0].mxu0
      %v632 = vadd.f32 0.0, %v631
      %v633 = vpop.f32.mrb[0].mxu0
      %v634 = vpop.f32.mrb[0].mxu0
      %v635 = vadd.f32 0.0, %v634
      %v636 = vpop.f32.mrb[0].mxu0
      %637 = vmatprep.mubr.bf16.mxu0 0
      %638 = vmatmul.mubr.bf16.gmra.mrb[0].mxu0 %v463
      %v639 = vpop.f32.mrb[0].mxu0
      %v640 = vadd.f32 0.0, %v639
      %v641 = vpop.f32.mrb[0].mxu0
      %v642 = vpop.f32.mrb[0].mxu0
      %v643 = vadd.f32 0.0, %v642
      %v644 = vpop.f32.mrb[0].mxu0
      %645 = vmatprep.mubr.bf16.mxu0 0
      %646 = vmatmul.mubr.bf16.gmra.mrb[0].mxu0 %v466
      %v647 = vpop.f32.mrb[0].mxu0
      %v648 = vadd.f32 0.0, %v647
      %v649 = vpop.f32.mrb[0].mxu0
      %v650 = vpop.f32.mrb[0].mxu0
      %v651 = vadd.f32 0.0, %v650
      %v652 = vpop.f32.mrb[0].mxu0
      %653 = vmatprep.mubr.bf16.mxu0 0
      %654 = vmatmul.mubr.bf16.gmra.mrb[0].mxu0 %v469
      %v655 = vpop.f32.mrb[0].mxu0
      %v656 = vadd.f32 0.0, %v655
      %v657 = vpop.f32.mrb[0].mxu0
      %v658 = vpop.f32.mrb[0].mxu0
      %v659 = vadd.f32 0.0, %v658
      %v660 = vpop.f32.mrb[0].mxu0
      %661 = vmatprep.mubr.bf16.mxu0 0
      %662 = vmatmul.mubr.bf16.gmra.mrb[0].mxu0 %v472
      %v663 = vpop.f32.mrb[0].mxu0
      %v664 = vadd.f32 0.0, %v663
      %v665 = vpop.f32.mrb[0].mxu0
      %v666 = vpop.f32.mrb[0].mxu0
      %v667 = vadd.f32 0.0, %v666
      %v668 = vpop.f32.mrb[0].mxu0
      %669 = vmatprep.mubr.bf16.mxu0 0
      %670 = vmatmul.mubr.bf16.gmra.mrb[0].mxu0 %v475
      %v671 = vpop.f32.mrb[0].mxu0
      %v672 = vadd.f32 0.0, %v671
      %v673 = vpop.f32.mrb[0].mxu0
      %v674 = vpop.f32.mrb[0].mxu0
      %v675 = vpop.f32.mrb[0].mxu0
      %676 = vdwg.mxu0
      %677 = vst.msk [vmem:[#allocation2] sm:$0xff] %vm413, %v512
      %678 = vst.msk [vmem:[#allocation2 + $0x8] sm:$0xff] %vm413, %v515
      %679 = vst.msk [vmem:[#allocation2 + $0x10] sm:$0xff] %vm413, %v520
      %680 = vst.msk [vmem:[#allocation2 + $0x18] sm:$0xff] %vm413, %v523
      %681 = vst.msk [vmem:[#allocation2 + $0x20] sm:$0xff] %vm413, %v528
      %682 = vst.msk [vmem:[#allocation2 + $0x28] sm:$0xff] %vm413, %v531
      %683 = vst.msk [vmem:[#allocation2 + $0x30] sm:$0xff] %vm413, %v536
      %684 = vst.msk [vmem:[#allocation2 + $0x38] sm:$0xff] %vm413, %v539
      %685 = vst.msk [vmem:[#allocation2 + $0x40] sm:$0xff] %vm413, %v544
      %686 = vst.msk [vmem:[#allocation2 + $0x48] sm:$0xff] %vm413, %v547
      %687 = vst.msk [vmem:[#allocation2 + $0x50] sm:$0xff] %vm413, %v552
      %688 = vst.msk [vmem:[#allocation2 + $0x58] sm:$0xff] %vm413, %v555
      %689 = vst.msk [vmem:[#allocation2 + $0x60] sm:$0xff] %vm413, %v560
      %690 = vst.msk [vmem:[#allocation2 + $0x68] sm:$0xff] %vm413, %v563
      %691 = vst.msk [vmem:[#allocation2 + $0x70] sm:$0xff] %vm413, %v568
      %692 = vst.msk [vmem:[#allocation2 + $0x78] sm:$0xff] %vm413, %v571
      %693 = vst.msk [vmem:[#allocation2 + $0x80] sm:$0xff] %vm413, %v576
      %694 = vst.msk [vmem:[#allocation2 + $0x88] sm:$0xff] %vm413, %v579
      %695 = vst.msk [vmem:[#allocation2 + $0x90] sm:$0xff] %vm413, %v584
      %696 = vst.msk [vmem:[#allocation2 + $0x98] sm:$0xff] %vm413, %v587
      %697 = vst.msk [vmem:[#allocation2 + $0xa0] sm:$0xff] %vm413, %v592
      %698 = vst.msk [vmem:[#allocation2 + $0xa8] sm:$0xff] %vm413, %v595
      %699 = vst.msk [vmem:[#allocation2 + $0xb0] sm:$0xff] %vm413, %v600
      %700 = vst.msk [vmem:[#allocation2 + $0xb8] sm:$0xff] %vm413, %v603
      %701 = vst.msk [vmem:[#allocation2 + $0xc0] sm:$0xff] %vm413, %v608
      %702 = vst.msk [vmem:[#allocation2 + $0xc8] sm:$0xff] %vm413, %v611
      %703 = vst.msk [vmem:[#allocation2 + $0xd0] sm:$0xff] %vm413, %v616
      %704 = vst.msk [vmem:[#allocation2 + $0xd8] sm:$0xff] %vm413, %v619
      %705 = vst.msk [vmem:[#allocation2 + $0xe0] sm:$0xff] %vm413, %v624
      %706 = vst.msk [vmem:[#allocation2 + $0xe8] sm:$0xff] %vm413, %v627
      %707 = vst.msk [vmem:[#allocation2 + $0xf0] sm:$0xff] %vm413, %v632
      %708 = vst.msk [vmem:[#allocation2 + $0xf8] sm:$0xff] %vm413, %v635
      %709 = vst.msk [vmem:[#allocation2 + $0x100] sm:$0xff] %vm413, %v640
      %710 = vst.msk [vmem:[#allocation2 + $0x108] sm:$0xff] %vm413, %v643
      %711 = vst.msk [vmem:[#allocation2 + $0x110] sm:$0xff] %vm413, %v648
      %712 = vst.msk [vmem:[#allocation2 + $0x118] sm:$0xff] %vm413, %v651
      %713 = vst.msk [vmem:[#allocation2 + $0x120] sm:$0xff] %vm413, %v656
      %714 = vst.msk [vmem:[#allocation2 + $0x128] sm:$0xff] %vm413, %v659
      %715 = vst.msk [vmem:[#allocation2 + $0x130] sm:$0xff] %vm413, %v664
      %716 = vst.msk [vmem:[#allocation2 + $0x138] sm:$0xff] %vm413, %v667
      %vm717 = vcmask 257024
      %718 = vst.msk [vmem:[#allocation2 + $0x140] sm:$0xf] %vm717, %v672
      %v719 = vld [vmem:[%s246] sm:$0xf]
      %v720 = vld [vmem:[%s246 + $0x4] sm:$0xf]
      %v721 = vld [vmem:[%s246 + $0x8] sm:$0xf]
      %v722 = vld [vmem:[%s246 + $0xc] sm:$0xf]
      %v723 = vld [vmem:[%s246 + $0x10] sm:$0xf]
      %v724 = vld [vmem:[%s246 + $0x14] sm:$0xf]
      %v725 = vld [vmem:[%s246 + $0x18] sm:$0xf]
      %v726 = vld [vmem:[%s246 + $0x1c] sm:$0xf]
      %v727 = vld [vmem:[%s246 + $0x20] sm:$0xf]
      %v728 = vld [vmem:[%s246 + $0x24] sm:$0xf]
      %v729 = vld [vmem:[%s246 + $0x28] sm:$0xf]
      %v730 = vld [vmem:[%s246 + $0x2c] sm:$0xf]
      %v731 = vld [vmem:[%s246 + $0x30] sm:$0xf]
      %v732 = vld [vmem:[%s246 + $0x34] sm:$0xf]
      %v733 = vld [vmem:[%s246 + $0x38] sm:$0xf]
      %v734 = vld [vmem:[%s246 + $0x3c] sm:$0xf]
      %v735 = vld [vmem:[%s246 + $0x40] sm:$0xf]
      %v736 = vld [vmem:[%s246 + $0x44] sm:$0xf]
      %v737 = vld [vmem:[%s246 + $0x48] sm:$0xf]
      %v738 = vld [vmem:[%s246 + $0x4c] sm:$0xf]
      %v739 = vld [vmem:[%s246 + $0x50] sm:$0xf]
      %v740 = vld [vmem:[%s246 + $0x54] sm:$0xf]
      %v741 = vld [vmem:[%s246 + $0x58] sm:$0xf]
      %v742 = vld [vmem:[%s246 + $0x5c] sm:$0xf]
      %v743 = vld [vmem:[%s246 + $0x60] sm:$0xf]
      %v744 = vld [vmem:[%s246 + $0x64] sm:$0xf]
      %v745 = vld [vmem:[%s246 + $0x68] sm:$0xf]
      %v746 = vld [vmem:[%s246 + $0x6c] sm:$0xf]
      %v747 = vld [vmem:[%s246 + $0x70] sm:$0xf]
      %v748 = vld [vmem:[%s246 + $0x74] sm:$0xf]
      %v749 = vld [vmem:[%s246 + $0x78] sm:$0xf]
      %v750 = vld [vmem:[%s246 + $0x7c] sm:$0xf]
      %v751 = vld [vmem:[%s246 + $0x80] sm:$0xf]
      %v752 = vld [vmem:[%s246 + $0x84] sm:$0xf]
      %v753 = vld [vmem:[%s246 + $0x88] sm:$0xf]
      %v754 = vld [vmem:[%s246 + $0x8c] sm:$0xf]
      %v755 = vld [vmem:[%s246 + $0x90] sm:$0xf]
      %v756 = vld [vmem:[%s246 + $0x94] sm:$0xf]
      %v757 = vld [vmem:[%s246 + $0x98] sm:$0xf]
      %v758 = vld [vmem:[%s246 + $0x9c] sm:$0xf]
      %v759 = vld [vmem:[%s246 + $0xa0] sm:$0x7]
      %s760 = scalar_lea.vmem %s2, 16
      %v761 = vld [vmem:[%s760] sm:$0xf]
      %v762 = vld [vmem:[%s760 + $0x4] sm:$0xf]
      %v763 = vld [vmem:[%s760 + $0x8] sm:$0xf]
      %v764 = vld [vmem:[%s760 + $0xc] sm:$0xf]
      %v806 = vunpack.c.l.b16 %v719
      %v807 = vunpack.c.l.b16 %v720
      %v808 = vunpack.c.l.b16 %v721
      %v809 = vunpack.c.l.b16 %v722
      %v810 = vunpack.c.l.b16 %v723
      %v811 = vunpack.c.l.b16 %v724
      %v812 = vunpack.c.l.b16 %v725
      %v813 = vunpack.c.l.b16 %v726
      %v814 = vunpack.c.l.b16 %v727
      %v815 = vunpack.c.l.b16 %v728
      %v816 = vunpack.c.l.b16 %v729
      %v817 = vunpack.c.l.b16 %v730
      %v818 = vunpack.c.l.b16 %v731
      %v819 = vunpack.c.l.b16 %v732
      %v820 = vunpack.c.l.b16 %v733
      %v821 = vunpack.c.l.b16 %v734
      %v822 = vunpack.c.l.b16 %v735
      %v823 = vunpack.c.l.b16 %v736
      %v824 = vunpack.c.l.b16 %v737
      %v825 = vunpack.c.l.b16 %v738
      %v826 = vunpack.c.l.b16 %v739
      %v827 = vunpack.c.l.b16 %v740
      %v828 = vunpack.c.l.b16 %v741
      %v829 = vunpack.c.l.b16 %v742
      %v830 = vunpack.c.l.b16 %v743
      %v831 = vunpack.c.l.b16 %v744
      %v832 = vunpack.c.l.b16 %v745
      %v833 = vunpack.c.l.b16 %v746
      %v834 = vunpack.c.l.b16 %v747
      %v835 = vunpack.c.l.b16 %v748
      %v836 = vunpack.c.l.b16 %v749
      %v837 = vunpack.c.l.b16 %v750
      %v838 = vunpack.c.l.b16 %v751
      %v839 = vunpack.c.l.b16 %v752
      %v840 = vunpack.c.l.b16 %v753
      %v841 = vunpack.c.l.b16 %v754
      %v842 = vunpack.c.l.b16 %v755
      %v843 = vunpack.c.l.b16 %v756
      %v844 = vunpack.c.l.b16 %v757
      %v845 = vunpack.c.l.b16 %v758
      %v846 = vunpack.c.l.b16 %v759
      %v847 = vpack.c.b16 %v807, %v806
      %v848 = vpack.c.b16 %v809, %v808
      %v849 = vpack.c.b16 %v811, %v810
      %v850 = vpack.c.b16 %v813, %v812
      %v851 = vpack.c.b16 %v815, %v814
      %v852 = vpack.c.b16 %v817, %v816
      %v853 = vpack.c.b16 %v819, %v818
      %v854 = vpack.c.b16 %v821, %v820
      %v855 = vpack.c.b16 %v823, %v822
      %v856 = vpack.c.b16 %v825, %v824
      %v857 = vpack.c.b16 %v827, %v826
      %v858 = vpack.c.b16 %v829, %v828
      %v859 = vpack.c.b16 %v831, %v830
      %v860 = vpack.c.b16 %v833, %v832
      %v861 = vpack.c.b16 %v835, %v834
      %v862 = vpack.c.b16 %v837, %v836
      %v863 = vpack.c.b16 %v839, %v838
      %v864 = vpack.c.b16 %v841, %v840
      %v865 = vpack.c.b16 %v843, %v842
      %v866 = vpack.c.b16 %v845, %v844
      %v867 = vpack.c.b16 %v846, %v846
      %vm868 = vsmask.f32 7424
      %v870 = vshrl.u32 %v847, 16
      %v872 = vshll.u32 %v847, 16
      %v874 = vrot.slane %v872, 1
      %v875 = vor.u32 %v870, %v874
      %v877 = vshll.u32 %v848, 16
      %v879 = vrot.slane %v877, 1
      %v880 = vsel %vm868, %v875, %v879
      %v881 = vshrl.u32 %v848, 16
      %v883 = vor.u32 %v881, %v879
      %v885 = vshll.u32 %v849, 16
      %v887 = vrot.slane %v885, 1
      %v888 = vsel %vm868, %v883, %v887
      %v889 = vshrl.u32 %v849, 16
      %v891 = vor.u32 %v889, %v887
      %v893 = vshll.u32 %v850, 16
      %v895 = vrot.slane %v893, 1
      %v896 = vsel %vm868, %v891, %v895
      %v897 = vshrl.u32 %v850, 16
      %v899 = vor.u32 %v897, %v895
      %v901 = vshll.u32 %v851, 16
      %v903 = vrot.slane %v901, 1
      %v904 = vsel %vm868, %v899, %v903
      %v905 = vshrl.u32 %v851, 16
      %v907 = vor.u32 %v905, %v903
      %v909 = vshll.u32 %v852, 16
      %v911 = vrot.slane %v909, 1
      %v912 = vsel %vm868, %v907, %v911
      %v913 = vshrl.u32 %v852, 16
      %v915 = vor.u32 %v913, %v911
      %v917 = vshll.u32 %v853, 16
      %v919 = vrot.slane %v917, 1
      %v920 = vsel %vm868, %v915, %v919
      %v921 = vshrl.u32 %v853, 16
      %v923 = vor.u32 %v921, %v919
      %v925 = vshll.u32 %v854, 16
      %v927 = vrot.slane %v925, 1
      %v928 = vsel %vm868, %v923, %v927
      %v929 = vshrl.u32 %v854, 16
      %v931 = vor.u32 %v929, %v927
      %v933 = vshll.u32 %v855, 16
      %v935 = vrot.slane %v933, 1
      %v936 = vsel %vm868, %v931, %v935
      %v937 = vshrl.u32 %v855, 16
      %v939 = vor.u32 %v937, %v935
      %v941 = vshll.u32 %v856, 16
      %v943 = vrot.slane %v941, 1
      %v944 = vsel %vm868, %v939, %v943
      %v945 = vshrl.u32 %v856, 16
      %v947 = vor.u32 %v945, %v943
      %v949 = vshll.u32 %v857, 16
      %v951 = vrot.slane %v949, 1
      %v952 = vsel %vm868, %v947, %v951
      %v953 = vshrl.u32 %v857, 16
      %v955 = vor.u32 %v953, %v951
      %v957 = vshll.u32 %v858, 16
      %v959 = vrot.slane %v957, 1
      %v960 = vsel %vm868, %v955, %v959
      %v961 = vshrl.u32 %v858, 16
      %v963 = vor.u32 %v961, %v959
      %v965 = vshll.u32 %v859, 16
      %v967 = vrot.slane %v965, 1
      %v968 = vsel %vm868, %v963, %v967
      %v969 = vshrl.u32 %v859, 16
      %v971 = vor.u32 %v969, %v967
      %v973 = vshll.u32 %v860, 16
      %v975 = vrot.slane %v973, 1
      %v976 = vsel %vm868, %v971, %v975
      %v977 = vshrl.u32 %v860, 16
      %v979 = vor.u32 %v977, %v975
      %v981 = vshll.u32 %v861, 16
      %v983 = vrot.slane %v981, 1
      %v984 = vsel %vm868, %v979, %v983
      %v985 = vshrl.u32 %v861, 16
      %v987 = vor.u32 %v985, %v983
      %v989 = vshll.u32 %v862, 16
      %v991 = vrot.slane %v989, 1
      %v992 = vsel %vm868, %v987, %v991
      %v993 = vshrl.u32 %v862, 16
      %v995 = vor.u32 %v993, %v991
      %v997 = vshll.u32 %v863, 16
      %v999 = vrot.slane %v997, 1
      %v1000 = vsel %vm868, %v995, %v999
      %v1001 = vshrl.u32 %v863, 16
      %v1003 = vor.u32 %v1001, %v999
      %v1005 = vshll.u32 %v864, 16
      %v1007 = vrot.slane %v1005, 1
      %v1008 = vsel %vm868, %v1003, %v1007
      %v1009 = vshrl.u32 %v864, 16
      %v1011 = vor.u32 %v1009, %v1007
      %v1013 = vshll.u32 %v865, 16
      %v1015 = vrot.slane %v1013, 1
      %v1016 = vsel %vm868, %v1011, %v1015
      %v1017 = vshrl.u32 %v865, 16
      %v1019 = vor.u32 %v1017, %v1015
      %v1021 = vshll.u32 %v866, 16
      %v1023 = vrot.slane %v1021, 1
      %v1024 = vsel %vm868, %v1019, %v1023
      %v1025 = vshrl.u32 %v866, 16
      %v1027 = vor.u32 %v1025, %v1023
      %v1029 = vshll.u32 %v867, 16
      %v1031 = vrot.slane %v1029, 1
      %v1032 = vsel %vm868, %v1027, %v1031
      %v1033 = vshrl.u32 %v867, 16
      %v1035 = vor.u32 %v1033, %v1031
      %v1040 = vunpack.c.l.b16 %v761
      %v1041 = vunpack.c.l.b16 %v762
      %v1042 = vunpack.c.l.b16 %v763
      %v1043 = vunpack.c.l.b16 %v764
      %v1044 = vpack.c.b16 %v1041, %v1040
      %v1045 = vpack.c.b16 %v1043, %v1042
      %v1049 = vsel %vm413, %v880, 0
      %v1052 = vsel %vm413, %v888, 0
      %v1055 = vsel %vm413, %v896, 0
      %v1058 = vsel %vm413, %v904, 0
      %v1061 = vsel %vm413, %v912, 0
      %v1064 = vsel %vm413, %v920, 0
      %v1067 = vsel %vm413, %v928, 0
      %v1070 = vsel %vm413, %v936, 0
      %v1073 = vsel %vm413, %v944, 0
      %v1076 = vsel %vm413, %v952, 0
      %v1079 = vsel %vm413, %v960, 0
      %v1082 = vsel %vm413, %v968, 0
      %v1085 = vsel %vm413, %v976, 0
      %v1088 = vsel %vm413, %v984, 0
      %v1091 = vsel %vm413, %v992, 0
      %v1094 = vsel %vm413, %v1000, 0
      %v1097 = vsel %vm413, %v1008, 0
      %v1100 = vsel %vm413, %v1016, 0
      %v1103 = vsel %vm413, %v1024, 0
      %v1106 = vsel %vm413, %v1032, 0
      %v1109 = vsel %vm413, %v1035, 0
      %1111 = vmatprep.subr.bf16.mxu0 0
      %1112 = vmatpush1.bf16.msra.mxu0 %v1044
      %1113 = vmatprep.subr.bf16.mxu0 0
      %1114 = vmatpush1.bf16.msra.mxu0 %v1045
      %1115 = vmatprep.subr.bf16.mxu0 0
      %1116 = vmatpush1.bf16.msra.mxu0 0
      %1117 = vmatprep.subr.bf16.mxu0 0
      %1118 = vmatpush1.bf16.msra.mxu0 0
      %1119 = vmatprep.subr.bf16.mxu0 0
      %1120 = vmatpush1.bf16.msra.mxu0 0
      %1121 = vmatprep.subr.bf16.mxu0 0
      %1122 = vmatpush1.bf16.msra.mxu0 0
      %1123 = vmatprep.subr.bf16.mxu0 0
      %1124 = vmatpush1.bf16.msra.mxu0 0
      %1125 = vmatprep.subr.bf16.mxu0 0
      %1126 = vmatpush1.bf16.msra.mxu0 0
      %1127 = vmatprep.subr.bf16.mxu0 0
      %1128 = vmatpush1.bf16.msra.mxu0 0
      %1129 = vmatprep.subr.bf16.mxu0 0
      %1130 = vmatpush1.bf16.msra.mxu0 0
      %1131 = vmatprep.subr.bf16.mxu0 0
      %1132 = vmatpush1.bf16.msra.mxu0 0
      %1133 = vmatprep.subr.bf16.mxu0 0
      %1134 = vmatpush1.bf16.msra.mxu0 0
      %1135 = vmatprep.subr.bf16.mxu0 0
      %1136 = vmatpush1.bf16.msra.mxu0 0
      %1137 = vmatprep.subr.bf16.mxu0 0
      %1138 = vmatpush1.bf16.msra.mxu0 0
      %1139 = vmatprep.subr.bf16.mxu0 0
      %1140 = vmatpush1.bf16.msra.mxu0 0
      %1141 = vmatprep.subr.bf16.mxu0 0
      %1142 = vmatpush1.bf16.msra.mxu0 0
      %1143 = vmatprep.mubr.bf16.mxu0 0
      %1144 = vmatmul.mubr.bf16.gmra.mrb[0].mxu0 %v1049
      %v1145 = vpop.f32.mrb[0].mxu0
      %v1146 = vadd.f32 0.0, %v1145
      %v1147 = vpop.f32.mrb[0].mxu0
      %v1148 = vpop.f32.mrb[0].mxu0
      %v1149 = vadd.f32 0.0, %v1148
      %v1150 = vpop.f32.mrb[0].mxu0
      %1151 = vmatprep.mubr.bf16.mxu0 0
      %1152 = vmatmul.mubr.bf16.gmra.mrb[0].mxu0 %v1052
      %v1153 = vpop.f32.mrb[0].mxu0
      %v1154 = vadd.f32 0.0, %v1153
      %v1155 = vpop.f32.mrb[0].mxu0
      %v1156 = vpop.f32.mrb[0].mxu0
      %v1157 = vadd.f32 0.0, %v1156
      %v1158 = vpop.f32.mrb[0].mxu0
      %1159 = vmatprep.mubr.bf16.mxu0 0
      %1160 = vmatmul.mubr.bf16.gmra.mrb[0].mxu0 %v1055
      %v1161 = vpop.f32.mrb[0].mxu0
      %v1162 = vadd.f32 0.0, %v1161
      %v1163 = vpop.f32.mrb[0].mxu0
      %v1164 = vpop.f32.mrb[0].mxu0
      %v1165 = vadd.f32 0.0, %v1164
      %v1166 = vpop.f32.mrb[0].mxu0
      %1167 = vmatprep.mubr.bf16.mxu0 0
      %1168 = vmatmul.mubr.bf16.gmra.mrb[0].mxu0 %v1058
      %v1169 = vpop.f32.mrb[0].mxu0
      %v1170 = vadd.f32 0.0, %v1169
      %v1171 = vpop.f32.mrb[0].mxu0
      %v1172 = vpop.f32.mrb[0].mxu0
      %v1173 = vadd.f32 0.0, %v1172
      %v1174 = vpop.f32.mrb[0].mxu0
      %1175 = vmatprep.mubr.bf16.mxu0 0
      %1176 = vmatmul.mubr.bf16.gmra.mrb[0].mxu0 %v1061
      %v1177 = vpop.f32.mrb[0].mxu0
      %v1178 = vadd.f32 0.0, %v1177
      %v1179 = vpop.f32.mrb[0].mxu0
      %v1180 = vpop.f32.mrb[0].mxu0
      %v1181 = vadd.f32 0.0, %v1180
      %v1182 = vpop.f32.mrb[0].mxu0
      %1183 = vmatprep.mubr.bf16.mxu0 0
      %1184 = vmatmul.mubr.bf16.gmra.mrb[0].mxu0 %v1064
      %v1185 = vpop.f32.mrb[0].mxu0
      %v1186 = vadd.f32 0.0, %v1185
      %v1187 = vpop.f32.mrb[0].mxu0
      %v1188 = vpop.f32.mrb[0].mxu0
      %v1189 = vadd.f32 0.0, %v1188
      %v1190 = vpop.f32.mrb[0].mxu0
      %1191 = vmatprep.mubr.bf16.mxu0 0
      %1192 = vmatmul.mubr.bf16.gmra.mrb[0].mxu0 %v1067
      %v1193 = vpop.f32.mrb[0].mxu0
      %v1194 = vadd.f32 0.0, %v1193
      %v1195 = vpop.f32.mrb[0].mxu0
      %v1196 = vpop.f32.mrb[0].mxu0
      %v1197 = vadd.f32 0.0, %v1196
      %v1198 = vpop.f32.mrb[0].mxu0
      %1199 = vmatprep.mubr.bf16.mxu0 0
      %1200 = vmatmul.mubr.bf16.gmra.mrb[0].mxu0 %v1070
      %v1201 = vpop.f32.mrb[0].mxu0
      %v1202 = vadd.f32 0.0, %v1201
      %v1203 = vpop.f32.mrb[0].mxu0
      %v1204 = vpop.f32.mrb[0].mxu0
      %v1205 = vadd.f32 0.0, %v1204
      %v1206 = vpop.f32.mrb[0].mxu0
      %1207 = vmatprep.mubr.bf16.mxu0 0
      %1208 = vmatmul.mubr.bf16.gmra.mrb[0].mxu0 %v1073
      %v1209 = vpop.f32.mrb[0].mxu0
      %v1210 = vadd.f32 0.0, %v1209
      %v1211 = vpop.f32.mrb[0].mxu0
      %v1212 = vpop.f32.mrb[0].mxu0
      %v1213 = vadd.f32 0.0, %v1212
      %v1214 = vpop.f32.mrb[0].mxu0
      %1215 = vmatprep.mubr.bf16.mxu0 0
      %1216 = vmatmul.mubr.bf16.gmra.mrb[0].mxu0 %v1076
      %v1217 = vpop.f32.mrb[0].mxu0
      %v1218 = vadd.f32 0.0, %v1217
      %v1219 = vpop.f32.mrb[0].mxu0
      %v1220 = vpop.f32.mrb[0].mxu0
      %v1221 = vadd.f32 0.0, %v1220
      %v1222 = vpop.f32.mrb[0].mxu0
      %1223 = vmatprep.mubr.bf16.mxu0 0
      %1224 = vmatmul.mubr.bf16.gmra.mrb[0].mxu0 %v1079
      %v1225 = vpop.f32.mrb[0].mxu0
      %v1226 = vadd.f32 0.0, %v1225
      %v1227 = vpop.f32.mrb[0].mxu0
      %v1228 = vpop.f32.mrb[0].mxu0
      %v1229 = vadd.f32 0.0, %v1228
      %v1230 = vpop.f32.mrb[0].mxu0
      %1231 = vmatprep.mubr.bf16.mxu0 0
      %1232 = vmatmul.mubr.bf16.gmra.mrb[0].mxu0 %v1082
      %v1233 = vpop.f32.mrb[0].mxu0
      %v1234 = vadd.f32 0.0, %v1233
      %v1235 = vpop.f32.mrb[0].mxu0
      %v1236 = vpop.f32.mrb[0].mxu0
      %v1237 = vadd.f32 0.0, %v1236
      %v1238 = vpop.f32.mrb[0].mxu0
      %1239 = vmatprep.mubr.bf16.mxu0 0
      %1240 = vmatmul.mubr.bf16.gmra.mrb[0].mxu0 %v1085
      %v1241 = vpop.f32.mrb[0].mxu0
      %v1242 = vadd.f32 0.0, %v1241
      %v1243 = vpop.f32.mrb[0].mxu0
      %v1244 = vpop.f32.mrb[0].mxu0
      %v1245 = vadd.f32 0.0, %v1244
      %v1246 = vpop.f32.mrb[0].mxu0
      %1247 = vmatprep.mubr.bf16.mxu0 0
      %1248 = vmatmul.mubr.bf16.gmra.mrb[0].mxu0 %v1088
      %v1249 = vpop.f32.mrb[0].mxu0
      %v1250 = vadd.f32 0.0, %v1249
      %v1251 = vpop.f32.mrb[0].mxu0
      %v1252 = vpop.f32.mrb[0].mxu0
      %v1253 = vadd.f32 0.0, %v1252
      %v1254 = vpop.f32.mrb[0].mxu0
      %1255 = vmatprep.mubr.bf16.mxu0 0
      %1256 = vmatmul.mubr.bf16.gmra.mrb[0].mxu0 %v1091
      %v1257 = vpop.f32.mrb[0].mxu0
      %v1258 = vadd.f32 0.0, %v1257
      %v1259 = vpop.f32.mrb[0].mxu0
      %v1260 = vpop.f32.mrb[0].mxu0
      %v1261 = vadd.f32 0.0, %v1260
      %v1262 = vpop.f32.mrb[0].mxu0
      %1263 = vmatprep.mubr.bf16.mxu0 0
      %1264 = vmatmul.mubr.bf16.gmra.mrb[0].mxu0 %v1094
      %v1265 = vpop.f32.mrb[0].mxu0
      %v1266 = vadd.f32 0.0, %v1265
      %v1267 = vpop.f32.mrb[0].mxu0
      %v1268 = vpop.f32.mrb[0].mxu0
      %v1269 = vadd.f32 0.0, %v1268
      %v1270 = vpop.f32.mrb[0].mxu0
      %1271 = vmatprep.mubr.bf16.mxu0 0
      %1272 = vmatmul.mubr.bf16.gmra.mrb[0].mxu0 %v1097
      %v1273 = vpop.f32.mrb[0].mxu0
      %v1274 = vadd.f32 0.0, %v1273
      %v1275 = vpop.f32.mrb[0].mxu0
      %v1276 = vpop.f32.mrb[0].mxu0
      %v1277 = vadd.f32 0.0, %v1276
      %v1278 = vpop.f32.mrb[0].mxu0
      %1279 = vmatprep.mubr.bf16.mxu0 0
      %1280 = vmatmul.mubr.bf16.gmra.mrb[0].mxu0 %v1100
      %v1281 = vpop.f32.mrb[0].mxu0
      %v1282 = vadd.f32 0.0, %v1281
      %v1283 = vpop.f32.mrb[0].mxu0
      %v1284 = vpop.f32.mrb[0].mxu0
      %v1285 = vadd.f32 0.0, %v1284
      %v1286 = vpop.f32.mrb[0].mxu0
      %1287 = vmatprep.mubr.bf16.mxu0 0
      %1288 = vmatmul.mubr.bf16.gmra.mrb[0].mxu0 %v1103
      %v1289 = vpop.f32.mrb[0].mxu0
      %v1290 = vadd.f32 0.0, %v1289
      %v1291 = vpop.f32.mrb[0].mxu0
      %v1292 = vpop.f32.mrb[0].mxu0
      %v1293 = vadd.f32 0.0, %v1292
      %v1294 = vpop.f32.mrb[0].mxu0
      %1295 = vmatprep.mubr.bf16.mxu0 0
      %1296 = vmatmul.mubr.bf16.gmra.mrb[0].mxu0 %v1106
      %v1297 = vpop.f32.mrb[0].mxu0
      %v1298 = vadd.f32 0.0, %v1297
      %v1299 = vpop.f32.mrb[0].mxu0
      %v1300 = vpop.f32.mrb[0].mxu0
      %v1301 = vadd.f32 0.0, %v1300
      %v1302 = vpop.f32.mrb[0].mxu0
      %1303 = vmatprep.mubr.bf16.mxu0 0
      %1304 = vmatmul.mubr.bf16.gmra.mrb[0].mxu0 %v1109
      %v1305 = vpop.f32.mrb[0].mxu0
      %v1306 = vadd.f32 0.0, %v1305
      %v1307 = vpop.f32.mrb[0].mxu0
      %v1308 = vpop.f32.mrb[0].mxu0
      %v1309 = vpop.f32.mrb[0].mxu0
      %1310 = vdwg.mxu0
      %v1311 = vld [vmem:[#allocation2] sm:$0xff]
      %v1312 = vld [vmem:[#allocation2 + $0x8] sm:$0xff]
      %v1313 = vld [vmem:[#allocation2 + $0x10] sm:$0xff]
      %v1314 = vld [vmem:[#allocation2 + $0x18] sm:$0xff]
      %v1315 = vld [vmem:[#allocation2 + $0x20] sm:$0xff]
      %v1316 = vld [vmem:[#allocation2 + $0x28] sm:$0xff]
      %v1317 = vld [vmem:[#allocation2 + $0x30] sm:$0xff]
      %v1318 = vld [vmem:[#allocation2 + $0x38] sm:$0xff]
      %v1319 = vld [vmem:[#allocation2 + $0x40] sm:$0xff]
      %v1320 = vld [vmem:[#allocation2 + $0x48] sm:$0xff]
      %v1321 = vld [vmem:[#allocation2 + $0x50] sm:$0xff]
      %v1322 = vld [vmem:[#allocation2 + $0x58] sm:$0xff]
      %v1323 = vld [vmem:[#allocation2 + $0x60] sm:$0xff]
      %v1324 = vld [vmem:[#allocation2 + $0x68] sm:$0xff]
      %v1325 = vld [vmem:[#allocation2 + $0x70] sm:$0xff]
      %v1326 = vld [vmem:[#allocation2 + $0x78] sm:$0xff]
      %v1327 = vld [vmem:[#allocation2 + $0x80] sm:$0xff]
      %v1328 = vld [vmem:[#allocation2 + $0x88] sm:$0xff]
      %v1329 = vld [vmem:[#allocation2 + $0x90] sm:$0xff]
      %v1330 = vld [vmem:[#allocation2 + $0x98] sm:$0xff]
      %v1331 = vld [vmem:[#allocation2 + $0xa0] sm:$0xff]
      %v1332 = vld [vmem:[#allocation2 + $0xa8] sm:$0xff]
      %v1333 = vld [vmem:[#allocation2 + $0xb0] sm:$0xff]
      %v1334 = vld [vmem:[#allocation2 + $0xb8] sm:$0xff]
      %v1335 = vld [vmem:[#allocation2 + $0xc0] sm:$0xff]
      %v1336 = vld [vmem:[#allocation2 + $0xc8] sm:$0xff]
      %v1337 = vld [vmem:[#allocation2 + $0xd0] sm:$0xff]
      %v1338 = vld [vmem:[#allocation2 + $0xd8] sm:$0xff]
      %v1339 = vld [vmem:[#allocation2 + $0xe0] sm:$0xff]
      %v1340 = vld [vmem:[#allocation2 + $0xe8] sm:$0xff]
      %v1341 = vld [vmem:[#allocation2 + $0xf0] sm:$0xff]
      %v1342 = vld [vmem:[#allocation2 + $0xf8] sm:$0xff]
      %v1343 = vld [vmem:[#allocation2 + $0x100] sm:$0xff]
      %v1344 = vld [vmem:[#allocation2 + $0x108] sm:$0xff]
      %v1345 = vld [vmem:[#allocation2 + $0x110] sm:$0xff]
      %v1346 = vld [vmem:[#allocation2 + $0x118] sm:$0xff]
      %v1347 = vld [vmem:[#allocation2 + $0x120] sm:$0xff]
      %v1348 = vld [vmem:[#allocation2 + $0x128] sm:$0xff]
      %v1349 = vld [vmem:[#allocation2 + $0x130] sm:$0xff]
      %v1350 = vld [vmem:[#allocation2 + $0x138] sm:$0xff]
      %v1351 = vld [vmem:[#allocation2 + $0x140] sm:$0xf]
      %v1352 = vadd.f32 %v1311, %v1146
      %v1353 = vadd.f32 %v1312, %v1149
      %v1354 = vadd.f32 %v1313, %v1154
      %v1355 = vadd.f32 %v1314, %v1157
      %v1356 = vadd.f32 %v1315, %v1162
      %v1357 = vadd.f32 %v1316, %v1165
      %v1358 = vadd.f32 %v1317, %v1170
      %v1359 = vadd.f32 %v1318, %v1173
      %v1360 = vadd.f32 %v1319, %v1178
      %v1361 = vadd.f32 %v1320, %v1181
      %v1362 = vadd.f32 %v1321, %v1186
      %v1363 = vadd.f32 %v1322, %v1189
      %v1364 = vadd.f32 %v1323, %v1194
      %v1365 = vadd.f32 %v1324, %v1197
      %v1366 = vadd.f32 %v1325, %v1202
      %v1367 = vadd.f32 %v1326, %v1205
      %v1368 = vadd.f32 %v1327, %v1210
      %v1369 = vadd.f32 %v1328, %v1213
      %v1370 = vadd.f32 %v1329, %v1218
      %v1371 = vadd.f32 %v1330, %v1221
      %v1372 = vadd.f32 %v1331, %v1226
      %v1373 = vadd.f32 %v1332, %v1229
      %v1374 = vadd.f32 %v1333, %v1234
      %v1375 = vadd.f32 %v1334, %v1237
      %v1376 = vadd.f32 %v1335, %v1242
      %v1377 = vadd.f32 %v1336, %v1245
      %v1378 = vadd.f32 %v1337, %v1250
      %v1379 = vadd.f32 %v1338, %v1253
      %v1380 = vadd.f32 %v1339, %v1258
      %v1381 = vadd.f32 %v1340, %v1261
      %v1382 = vadd.f32 %v1341, %v1266
      %v1383 = vadd.f32 %v1342, %v1269
      %v1384 = vadd.f32 %v1343, %v1274
      %v1385 = vadd.f32 %v1344, %v1277
      %v1386 = vadd.f32 %v1345, %v1282
      %v1387 = vadd.f32 %v1346, %v1285
      %v1388 = vadd.f32 %v1347, %v1290
      %v1389 = vadd.f32 %v1348, %v1293
      %v1390 = vadd.f32 %v1349, %v1298
      %v1391 = vadd.f32 %v1350, %v1301
      %v1392 = vadd.f32 %v1351, %v1306
      %1393 = vst.msk [vmem:[#allocation2] sm:$0xff] %vm413, %v1352
      %1394 = vst.msk [vmem:[#allocation2 + $0x8] sm:$0xff] %vm413, %v1353
      %1395 = vst.msk [vmem:[#allocation2 + $0x10] sm:$0xff] %vm413, %v1354
      %1396 = vst.msk [vmem:[#allocation2 + $0x18] sm:$0xff] %vm413, %v1355
      %1397 = vst.msk [vmem:[#allocation2 + $0x20] sm:$0xff] %vm413, %v1356
      %1398 = vst.msk [vmem:[#allocation2 + $0x28] sm:$0xff] %vm413, %v1357
      %1399 = vst.msk [vmem:[#allocation2 + $0x30] sm:$0xff] %vm413, %v1358
      %1400 = vst.msk [vmem:[#allocation2 + $0x38] sm:$0xff] %vm413, %v1359
      %1401 = vst.msk [vmem:[#allocation2 + $0x40] sm:$0xff] %vm413, %v1360
      %1402 = vst.msk [vmem:[#allocation2 + $0x48] sm:$0xff] %vm413, %v1361
      %1403 = vst.msk [vmem:[#allocation2 + $0x50] sm:$0xff] %vm413, %v1362
      %1404 = vst.msk [vmem:[#allocation2 + $0x58] sm:$0xff] %vm413, %v1363
      %1405 = vst.msk [vmem:[#allocation2 + $0x60] sm:$0xff] %vm413, %v1364
      %1406 = vst.msk [vmem:[#allocation2 + $0x68] sm:$0xff] %vm413, %v1365
      %1407 = vst.msk [vmem:[#allocation2 + $0x70] sm:$0xff] %vm413, %v1366
      %1408 = vst.msk [vmem:[#allocation2 + $0x78] sm:$0xff] %vm413, %v1367
      %1409 = vst.msk [vmem:[#allocation2 + $0x80] sm:$0xff] %vm413, %v1368
      %1410 = vst.msk [vmem:[#allocation2 + $0x88] sm:$0xff] %vm413, %v1369
      %1411 = vst.msk [vmem:[#allocation2 + $0x90] sm:$0xff] %vm413, %v1370
      %1412 = vst.msk [vmem:[#allocation2 + $0x98] sm:$0xff] %vm413, %v1371
      %1413 = vst.msk [vmem:[#allocation2 + $0xa0] sm:$0xff] %vm413, %v1372
      %1414 = vst.msk [vmem:[#allocation2 + $0xa8] sm:$0xff] %vm413, %v1373
      %1415 = vst.msk [vmem:[#allocation2 + $0xb0] sm:$0xff] %vm413, %v1374
      %1416 = vst.msk [vmem:[#allocation2 + $0xb8] sm:$0xff] %vm413, %v1375
      %1417 = vst.msk [vmem:[#allocation2 + $0xc0] sm:$0xff] %vm413, %v1376
      %1418 = vst.msk [vmem:[#allocation2 + $0xc8] sm:$0xff] %vm413, %v1377
      %1419 = vst.msk [vmem:[#allocation2 + $0xd0] sm:$0xff] %vm413, %v1378
      %1420 = vst.msk [vmem:[#allocation2 + $0xd8] sm:$0xff] %vm413, %v1379
      %1421 = vst.msk [vmem:[#allocation2 + $0xe0] sm:$0xff] %vm413, %v1380
      %1422 = vst.msk [vmem:[#allocation2 + $0xe8] sm:$0xff] %vm413, %v1381
      %1423 = vst.msk [vmem:[#allocation2 + $0xf0] sm:$0xff] %vm413, %v1382
      %1424 = vst.msk [vmem:[#allocation2 + $0xf8] sm:$0xff] %vm413, %v1383
      %1425 = vst.msk [vmem:[#allocation2 + $0x100] sm:$0xff] %vm413, %v1384
      %1426 = vst.msk [vmem:[#allocation2 + $0x108] sm:$0xff] %vm413, %v1385
      %1427 = vst.msk [vmem:[#allocation2 + $0x110] sm:$0xff] %vm413, %v1386
      %1428 = vst.msk [vmem:[#allocation2 + $0x118] sm:$0xff] %vm413, %v1387
      %1429 = vst.msk [vmem:[#allocation2 + $0x120] sm:$0xff] %vm413, %v1388
      %1430 = vst.msk [vmem:[#allocation2 + $0x128] sm:$0xff] %vm413, %v1389
      %1431 = vst.msk [vmem:[#allocation2 + $0x130] sm:$0xff] %vm413, %v1390
      %1432 = vst.msk [vmem:[#allocation2 + $0x138] sm:$0xff] %vm413, %v1391
      %1433 = vst.msk [vmem:[#allocation2 + $0x140] sm:$0xf] %vm717, %v1392
      %v1434 = vld [vmem:[%s246] sm:$0xe]
      %v1435 = vld [vmem:[%s246 + $0x4] sm:$0xf]
      %v1436 = vld [vmem:[%s246 + $0x8] sm:$0xf]
      %v1437 = vld [vmem:[%s246 + $0xc] sm:$0xf]
      %v1438 = vld [vmem:[%s246 + $0x10] sm:$0xf]
      %v1439 = vld [vmem:[%s246 + $0x14] sm:$0xf]
      %v1440 = vld [vmem:[%s246 + $0x18] sm:$0xf]
      %v1441 = vld [vmem:[%s246 + $0x1c] sm:$0xf]
      %v1442 = vld [vmem:[%s246 + $0x20] sm:$0xf]
      %v1443 = vld [vmem:[%s246 + $0x24] sm:$0xf]
      %v1444 = vld [vmem:[%s246 + $0x28] sm:$0xf]
      %v1445 = vld [vmem:[%s246 + $0x2c] sm:$0xf]
      %v1446 = vld [vmem:[%s246 + $0x30] sm:$0xf]
      %v1447 = vld [vmem:[%s246 + $0x34] sm:$0xf]
      %v1448 = vld [vmem:[%s246 + $0x38] sm:$0xf]
      %v1449 = vld [vmem:[%s246 + $0x3c] sm:$0xf]
      %v1450 = vld [vmem:[%s246 + $0x40] sm:$0xf]
      %v1451 = vld [vmem:[%s246 + $0x44] sm:$0xf]
      %v1452 = vld [vmem:[%s246 + $0x48] sm:$0xf]
      %v1453 = vld [vmem:[%s246 + $0x4c] sm:$0xf]
      %v1454 = vld [vmem:[%s246 + $0x50] sm:$0xf]
      %v1455 = vld [vmem:[%s246 + $0x54] sm:$0xf]
      %v1456 = vld [vmem:[%s246 + $0x58] sm:$0xf]
      %v1457 = vld [vmem:[%s246 + $0x5c] sm:$0xf]
      %v1458 = vld [vmem:[%s246 + $0x60] sm:$0xf]
      %v1459 = vld [vmem:[%s246 + $0x64] sm:$0xf]
      %v1460 = vld [vmem:[%s246 + $0x68] sm:$0xf]
      %v1461 = vld [vmem:[%s246 + $0x6c] sm:$0xf]
      %v1462 = vld [vmem:[%s246 + $0x70] sm:$0xf]
      %v1463 = vld [vmem:[%s246 + $0x74] sm:$0xf]
      %v1464 = vld [vmem:[%s246 + $0x78] sm:$0xf]
      %v1465 = vld [vmem:[%s246 + $0x7c] sm:$0xf]
      %v1466 = vld [vmem:[%s246 + $0x80] sm:$0xf]
      %v1467 = vld [vmem:[%s246 + $0x84] sm:$0xf]
      %v1468 = vld [vmem:[%s246 + $0x88] sm:$0xf]
      %v1469 = vld [vmem:[%s246 + $0x8c] sm:$0xf]
      %v1470 = vld [vmem:[%s246 + $0x90] sm:$0xf]
      %v1471 = vld [vmem:[%s246 + $0x94] sm:$0xf]
      %v1472 = vld [vmem:[%s246 + $0x98] sm:$0xf]
      %v1473 = vld [vmem:[%s246 + $0x9c] sm:$0xf]
      %v1474 = vld [vmem:[%s246 + $0xa0] sm:$0x7]
      %s1475 = scalar_lea.vmem %s2, 32
      %v1476 = vld [vmem:[%s1475] sm:$0xf]
      %v1477 = vld [vmem:[%s1475 + $0x4] sm:$0xf]
      %v1478 = vld [vmem:[%s1475 + $0x8] sm:$0xf]
      %v1479 = vld [vmem:[%s1475 + $0xc] sm:$0xf]
      %v1521 = vunpack.c.l.b16 %v1434
      %v1522 = vunpack.c.l.b16 %v1435
      %v1523 = vunpack.c.l.b16 %v1436
      %v1524 = vunpack.c.l.b16 %v1437
      %v1525 = vunpack.c.l.b16 %v1438
      %v1526 = vunpack.c.l.b16 %v1439
      %v1527 = vunpack.c.l.b16 %v1440
      %v1528 = vunpack.c.l.b16 %v1441
      %v1529 = vunpack.c.l.b16 %v1442
      %v1530 = vunpack.c.l.b16 %v1443
      %v1531 = vunpack.c.l.b16 %v1444
      %v1532 = vunpack.c.l.b16 %v1445
      %v1533 = vunpack.c.l.b16 %v1446
      %v1534 = vunpack.c.l.b16 %v1447
      %v1535 = vunpack.c.l.b16 %v1448
      %v1536 = vunpack.c.l.b16 %v1449
      %v1537 = vunpack.c.l.b16 %v1450
      %v1538 = vunpack.c.l.b16 %v1451
      %v1539 = vunpack.c.l.b16 %v1452
      %v1540 = vunpack.c.l.b16 %v1453
      %v1541 = vunpack.c.l.b16 %v1454
      %v1542 = vunpack.c.l.b16 %v1455
      %v1543 = vunpack.c.l.b16 %v1456
      %v1544 = vunpack.c.l.b16 %v1457
      %v1545 = vunpack.c.l.b16 %v1458
      %v1546 = vunpack.c.l.b16 %v1459
      %v1547 = vunpack.c.l.b16 %v1460
      %v1548 = vunpack.c.l.b16 %v1461
      %v1549 = vunpack.c.l.b16 %v1462
      %v1550 = vunpack.c.l.b16 %v1463
      %v1551 = vunpack.c.l.b16 %v1464
      %v1552 = vunpack.c.l.b16 %v1465
      %v1553 = vunpack.c.l.b16 %v1466
      %v1554 = vunpack.c.l.b16 %v1467
      %v1555 = vunpack.c.l.b16 %v1468
      %v1556 = vunpack.c.l.b16 %v1469
      %v1557 = vunpack.c.l.b16 %v1470
      %v1558 = vunpack.c.l.b16 %v1471
      %v1559 = vunpack.c.l.b16 %v1472
      %v1560 = vunpack.c.l.b16 %v1473
      %v1561 = vunpack.c.l.b16 %v1474
      %v1562 = vpack.c.b16 %v1522, %v1521
      %v1563 = vpack.c.b16 %v1524, %v1523
      %v1564 = vpack.c.b16 %v1526, %v1525
      %v1565 = vpack.c.b16 %v1528, %v1527
      %v1566 = vpack.c.b16 %v1530, %v1529
      %v1567 = vpack.c.b16 %v1532, %v1531
      %v1568 = vpack.c.b16 %v1534, %v1533
      %v1569 = vpack.c.b16 %v1536, %v1535
      %v1570 = vpack.c.b16 %v1538, %v1537
      %v1571 = vpack.c.b16 %v1540, %v1539
      %v1572 = vpack.c.b16 %v1542, %v1541
      %v1573 = vpack.c.b16 %v1544, %v1543
      %v1574 = vpack.c.b16 %v1546, %v1545
      %v1575 = vpack.c.b16 %v1548, %v1547
      %v1576 = vpack.c.b16 %v1550, %v1549
      %v1577 = vpack.c.b16 %v1552, %v1551
      %v1578 = vpack.c.b16 %v1554, %v1553
      %v1579 = vpack.c.b16 %v1556, %v1555
      %v1580 = vpack.c.b16 %v1558, %v1557
      %v1581 = vpack.c.b16 %v1560, %v1559
      %v1582 = vpack.c.b16 %v1561, %v1561
      %vm1583 = vcmask 1046528
      %v1584 = vrot.slane %v1562, 1
      %v1585 = vrot.slane %v1563, 1
      %v1586 = vsel %vm1583, %v1584, %v1585
      %v1587 = vrot.slane %v1564, 1
      %v1588 = vsel %vm1583, %v1585, %v1587
      %v1589 = vrot.slane %v1565, 1
      %v1590 = vsel %vm1583, %v1587, %v1589
      %v1591 = vrot.slane %v1566, 1
      %v1592 = vsel %vm1583, %v1589, %v1591
      %v1593 = vrot.slane %v1567, 1
      %v1594 = vsel %vm1583, %v1591, %v1593
      %v1595 = vrot.slane %v1568, 1
      %v1596 = vsel %vm1583, %v1593, %v1595
      %v1597 = vrot.slane %v1569, 1
      %v1598 = vsel %vm1583, %v1595, %v1597
      %v1599 = vrot.slane %v1570, 1
      %v1600 = vsel %vm1583, %v1597, %v1599
      %v1601 = vrot.slane %v1571, 1
      %v1602 = vsel %vm1583, %v1599, %v1601
      %v1603 = vrot.slane %v1572, 1
      %v1604 = vsel %vm1583, %v1601, %v1603
      %v1605 = vrot.slane %v1573, 1
      %v1606 = vsel %vm1583, %v1603, %v1605
      %v1607 = vrot.slane %v1574, 1
      %v1608 = vsel %vm1583, %v1605, %v1607
      %v1609 = vrot.slane %v1575, 1
      %v1610 = vsel %vm1583, %v1607, %v1609
      %v1611 = vrot.slane %v1576, 1
      %v1612 = vsel %vm1583, %v1609, %v1611
      %v1613 = vrot.slane %v1577, 1
      %v1614 = vsel %vm1583, %v1611, %v1613
      %v1615 = vrot.slane %v1578, 1
      %v1616 = vsel %vm1583, %v1613, %v1615
      %v1617 = vrot.slane %v1579, 1
      %v1618 = vsel %vm1583, %v1615, %v1617
      %v1619 = vrot.slane %v1580, 1
      %v1620 = vsel %vm1583, %v1617, %v1619
      %v1621 = vrot.slane %v1581, 1
      %v1622 = vsel %vm1583, %v1619, %v1621
      %v1623 = vrot.slane %v1582, 1
      %v1624 = vsel %vm1583, %v1621, %v1623
      %v1629 = vunpack.c.l.b16 %v1476
      %v1630 = vunpack.c.l.b16 %v1477
      %v1631 = vunpack.c.l.b16 %v1478
      %v1632 = vunpack.c.l.b16 %v1479
      %v1633 = vpack.c.b16 %v1630, %v1629
      %v1634 = vpack.c.b16 %v1632, %v1631
      %v1638 = vsel %vm413, %v1586, 0
      %v1641 = vsel %vm413, %v1588, 0
      %v1644 = vsel %vm413, %v1590, 0
      %v1647 = vsel %vm413, %v1592, 0
      %v1650 = vsel %vm413, %v1594, 0
      %v1653 = vsel %vm413, %v1596, 0
      %v1656 = vsel %vm413, %v1598, 0
      %v1659 = vsel %vm413, %v1600, 0
      %v1662 = vsel %vm413, %v1602, 0
      %v1665 = vsel %vm413, %v1604, 0
      %v1668 = vsel %vm413, %v1606, 0
      %v1671 = vsel %vm413, %v1608, 0
      %v1674 = vsel %vm413, %v1610, 0
      %v1677 = vsel %vm413, %v1612, 0
      %v1680 = vsel %vm413, %v1614, 0
      %v1683 = vsel %vm413, %v1616, 0
      %v1686 = vsel %vm413, %v1618, 0
      %v1689 = vsel %vm413, %v1620, 0
      %v1692 = vsel %vm413, %v1622, 0
      %v1695 = vsel %vm413, %v1624, 0
      %v1698 = vsel %vm413, %v1623, 0
      %1700 = vmatprep.subr.bf16.mxu0 0
      %1701 = vmatpush1.bf16.msra.mxu0 %v1633
      %1702 = vmatprep.subr.bf16.mxu0 0
      %1703 = vmatpush1.bf16.msra.mxu0 %v1634
      %1704 = vmatprep.subr.bf16.mxu0 0
      %1705 = vmatpush1.bf16.msra.mxu0 0
      %1706 = vmatprep.subr.bf16.mxu0 0
      %1707 = vmatpush1.bf16.msra.mxu0 0
      %1708 = vmatprep.subr.bf16.mxu0 0
      %1709 = vmatpush1.bf16.msra.mxu0 0
      %1710 = vmatprep.subr.bf16.mxu0 0
      %1711 = vmatpush1.bf16.msra.mxu0 0
      %1712 = vmatprep.subr.bf16.mxu0 0
      %1713 = vmatpush1.bf16.msra.mxu0 0
      %1714 = vmatprep.subr.bf16.mxu0 0
      %1715 = vmatpush1.bf16.msra.mxu0 0
      %1716 = vmatprep.subr.bf16.mxu0 0
      %1717 = vmatpush1.bf16.msra.mxu0 0
      %1718 = vmatprep.subr.bf16.mxu0 0
      %1719 = vmatpush1.bf16.msra.mxu0 0
      %1720 = vmatprep.subr.bf16.mxu0 0
      %1721 = vmatpush1.bf16.msra.mxu0 0
      %1722 = vmatprep.subr.bf16.mxu0 0
      %1723 = vmatpush1.bf16.msra.mxu0 0
      %1724 = vmatprep.subr.bf16.mxu0 0
      %1725 = vmatpush1.bf16.msra.mxu0 0
      %1726 = vmatprep.subr.bf16.mxu0 0
      %1727 = vmatpush1.bf16.msra.mxu0 0
      %1728 = vmatprep.subr.bf16.mxu0 0
      %1729 = vmatpush1.bf16.msra.mxu0 0
      %1730 = vmatprep.subr.bf16.mxu0 0
      %1731 = vmatpush1.bf16.msra.mxu0 0
      %1732 = vmatprep.mubr.bf16.mxu0 0
      %1733 = vmatmul.mubr.bf16.gmra.mrb[0].mxu0 %v1638
      %v1734 = vpop.f32.mrb[0].mxu0
      %v1735 = vadd.f32 0.0, %v1734
      %v1736 = vpop.f32.mrb[0].mxu0
      %v1737 = vpop.f32.mrb[0].mxu0
      %v1738 = vadd.f32 0.0, %v1737
      %v1739 = vpop.f32.mrb[0].mxu0
      %1740 = vmatprep.mubr.bf16.mxu0 0
      %1741 = vmatmul.mubr.bf16.gmra.mrb[0].mxu0 %v1641
      %v1742 = vpop.f32.mrb[0].mxu0
      %v1743 = vadd.f32 0.0, %v1742
      %v1744 = vpop.f32.mrb[0].mxu0
      %v1745 = vpop.f32.mrb[0].mxu0
      %v1746 = vadd.f32 0.0, %v1745
      %v1747 = vpop.f32.mrb[0].mxu0
      %1748 = vmatprep.mubr.bf16.mxu0 0
      %1749 = vmatmul.mubr.bf16.gmra.mrb[0].mxu0 %v1644
      %v1750 = vpop.f32.mrb[0].mxu0
      %v1751 = vadd.f32 0.0, %v1750
      %v1752 = vpop.f32.mrb[0].mxu0
      %v1753 = vpop.f32.mrb[0].mxu0
      %v1754 = vadd.f32 0.0, %v1753
      %v1755 = vpop.f32.mrb[0].mxu0
      %1756 = vmatprep.mubr.bf16.mxu0 0
      %1757 = vmatmul.mubr.bf16.gmra.mrb[0].mxu0 %v1647
      %v1758 = vpop.f32.mrb[0].mxu0
      %v1759 = vadd.f32 0.0, %v1758
      %v1760 = vpop.f32.mrb[0].mxu0
      %v1761 = vpop.f32.mrb[0].mxu0
      %v1762 = vadd.f32 0.0, %v1761
      %v1763 = vpop.f32.mrb[0].mxu0
      %1764 = vmatprep.mubr.bf16.mxu0 0
      %1765 = vmatmul.mubr.bf16.gmra.mrb[0].mxu0 %v1650
      %v1766 = vpop.f32.mrb[0].mxu0
      %v1767 = vadd.f32 0.0, %v1766
      %v1768 = vpop.f32.mrb[0].mxu0
      %v1769 = vpop.f32.mrb[0].mxu0
      %v1770 = vadd.f32 0.0, %v1769
      %v1771 = vpop.f32.mrb[0].mxu0
      %1772 = vmatprep.mubr.bf16.mxu0 0
      %1773 = vmatmul.mubr.bf16.gmra.mrb[0].mxu0 %v1653
      %v1774 = vpop.f32.mrb[0].mxu0
      %v1775 = vadd.f32 0.0, %v1774
      %v1776 = vpop.f32.mrb[0].mxu0
      %v1777 = vpop.f32.mrb[0].mxu0
      %v1778 = vadd.f32 0.0, %v1777
      %v1779 = vpop.f32.mrb[0].mxu0
      %1780 = vmatprep.mubr.bf16.mxu0 0
      %1781 = vmatmul.mubr.bf16.gmra.mrb[0].mxu0 %v1656
      %v1782 = vpop.f32.mrb[0].mxu0
      %v1783 = vadd.f32 0.0, %v1782
      %v1784 = vpop.f32.mrb[0].mxu0
      %v1785 = vpop.f32.mrb[0].mxu0
      %v1786 = vadd.f32 0.0, %v1785
      %v1787 = vpop.f32.mrb[0].mxu0
      %1788 = vmatprep.mubr.bf16.mxu0 0
      %1789 = vmatmul.mubr.bf16.gmra.mrb[0].mxu0 %v1659
      %v1790 = vpop.f32.mrb[0].mxu0
      %v1791 = vadd.f32 0.0, %v1790
      %v1792 = vpop.f32.mrb[0].mxu0
      %v1793 = vpop.f32.mrb[0].mxu0
      %v1794 = vadd.f32 0.0, %v1793
      %v1795 = vpop.f32.mrb[0].mxu0
      %1796 = vmatprep.mubr.bf16.mxu0 0
      %1797 = vmatmul.mubr.bf16.gmra.mrb[0].mxu0 %v1662
      %v1798 = vpop.f32.mrb[0].mxu0
      %v1799 = vadd.f32 0.0, %v1798
      %v1800 = vpop.f32.mrb[0].mxu0
      %v1801 = vpop.f32.mrb[0].mxu0
      %v1802 = vadd.f32 0.0, %v1801
      %v1803 = vpop.f32.mrb[0].mxu0
      %1804 = vmatprep.mubr.bf16.mxu0 0
      %1805 = vmatmul.mubr.bf16.gmra.mrb[0].mxu0 %v1665
      %v1806 = vpop.f32.mrb[0].mxu0
      %v1807 = vadd.f32 0.0, %v1806
      %v1808 = vpop.f32.mrb[0].mxu0
      %v1809 = vpop.f32.mrb[0].mxu0
      %v1810 = vadd.f32 0.0, %v1809
      %v1811 = vpop.f32.mrb[0].mxu0
      %1812 = vmatprep.mubr.bf16.mxu0 0
      %1813 = vmatmul.mubr.bf16.gmra.mrb[0].mxu0 %v1668
      %v1814 = vpop.f32.mrb[0].mxu0
      %v1815 = vadd.f32 0.0, %v1814
      %v1816 = vpop.f32.mrb[0].mxu0
      %v1817 = vpop.f32.mrb[0].mxu0
      %v1818 = vadd.f32 0.0, %v1817
      %v1819 = vpop.f32.mrb[0].mxu0
      %1820 = vmatprep.mubr.bf16.mxu0 0
      %1821 = vmatmul.mubr.bf16.gmra.mrb[0].mxu0 %v1671
      %v1822 = vpop.f32.mrb[0].mxu0
      %v1823 = vadd.f32 0.0, %v1822
      %v1824 = vpop.f32.mrb[0].mxu0
      %v1825 = vpop.f32.mrb[0].mxu0
      %v1826 = vadd.f32 0.0, %v1825
      %v1827 = vpop.f32.mrb[0].mxu0
      %1828 = vmatprep.mubr.bf16.mxu0 0
      %1829 = vmatmul.mubr.bf16.gmra.mrb[0].mxu0 %v1674
      %v1830 = vpop.f32.mrb[0].mxu0
      %v1831 = vadd.f32 0.0, %v1830
      %v1832 = vpop.f32.mrb[0].mxu0
      %v1833 = vpop.f32.mrb[0].mxu0
      %v1834 = vadd.f32 0.0, %v1833
      %v1835 = vpop.f32.mrb[0].mxu0
      %1836 = vmatprep.mubr.bf16.mxu0 0
      %1837 = vmatmul.mubr.bf16.gmra.mrb[0].mxu0 %v1677
      %v1838 = vpop.f32.mrb[0].mxu0
      %v1839 = vadd.f32 0.0, %v1838
      %v1840 = vpop.f32.mrb[0].mxu0
      %v1841 = vpop.f32.mrb[0].mxu0
      %v1842 = vadd.f32 0.0, %v1841
      %v1843 = vpop.f32.mrb[0].mxu0
      %1844 = vmatprep.mubr.bf16.mxu0 0
      %1845 = vmatmul.mubr.bf16.gmra.mrb[0].mxu0 %v1680
      %v1846 = vpop.f32.mrb[0].mxu0
      %v1847 = vadd.f32 0.0, %v1846
      %v1848 = vpop.f32.mrb[0].mxu0
      %v1849 = vpop.f32.mrb[0].mxu0
      %v1850 = vadd.f32 0.0, %v1849
      %v1851 = vpop.f32.mrb[0].mxu0
      %1852 = vmatprep.mubr.bf16.mxu0 0
      %1853 = vmatmul.mubr.bf16.gmra.mrb[0].mxu0 %v1683
      %v1854 = vpop.f32.mrb[0].mxu0
      %v1855 = vadd.f32 0.0, %v1854
      %v1856 = vpop.f32.mrb[0].mxu0
      %v1857 = vpop.f32.mrb[0].mxu0
      %v1858 = vadd.f32 0.0, %v1857
      %v1859 = vpop.f32.mrb[0].mxu0
      %1860 = vmatprep.mubr.bf16.mxu0 0
      %1861 = vmatmul.mubr.bf16.gmra.mrb[0].mxu0 %v1686
      %v1862 = vpop.f32.mrb[0].mxu0
      %v1863 = vadd.f32 0.0, %v1862
      %v1864 = vpop.f32.mrb[0].mxu0
      %v1865 = vpop.f32.mrb[0].mxu0
      %v1866 = vadd.f32 0.0, %v1865
      %v1867 = vpop.f32.mrb[0].mxu0
      %1868 = vmatprep.mubr.bf16.mxu0 0
      %1869 = vmatmul.mubr.bf16.gmra.mrb[0].mxu0 %v1689
      %v1870 = vpop.f32.mrb[0].mxu0
      %v1871 = vadd.f32 0.0, %v1870
      %v1872 = vpop.f32.mrb[0].mxu0
      %v1873 = vpop.f32.mrb[0].mxu0
      %v1874 = vadd.f32 0.0, %v1873
      %v1875 = vpop.f32.mrb[0].mxu0
      %1876 = vmatprep.mubr.bf16.mxu0 0
      %1877 = vmatmul.mubr.bf16.gmra.mrb[0].mxu0 %v1692
      %v1878 = vpop.f32.mrb[0].mxu0
      %v1879 = vadd.f32 0.0, %v1878
      %v1880 = vpop.f32.mrb[0].mxu0
      %v1881 = vpop.f32.mrb[0].mxu0
      %v1882 = vadd.f32 0.0, %v1881
      %v1883 = vpop.f32.mrb[0].mxu0
      %1884 = vmatprep.mubr.bf16.mxu0 0
      %1885 = vmatmul.mubr.bf16.gmra.mrb[0].mxu0 %v1695
      %v1886 = vpop.f32.mrb[0].mxu0
      %v1887 = vadd.f32 0.0, %v1886
      %v1888 = vpop.f32.mrb[0].mxu0
      %v1889 = vpop.f32.mrb[0].mxu0
      %v1890 = vadd.f32 0.0, %v1889
      %v1891 = vpop.f32.mrb[0].mxu0
      %1892 = vmatprep.mubr.bf16.mxu0 0
      %1893 = vmatmul.mubr.bf16.gmra.mrb[0].mxu0 %v1698
      %v1894 = vpop.f32.mrb[0].mxu0
      %v1895 = vadd.f32 0.0, %v1894
      %v1896 = vpop.f32.mrb[0].mxu0
      %v1897 = vpop.f32.mrb[0].mxu0
      %v1898 = vpop.f32.mrb[0].mxu0
      %1899 = vdwg.mxu0
      %v1900 = vld [vmem:[#allocation2] sm:$0xff]
      %v1901 = vld [vmem:[#allocation2 + $0x8] sm:$0xff]
      %v1902 = vld [vmem:[#allocation2 + $0x10] sm:$0xff]
      %v1903 = vld [vmem:[#allocation2 + $0x18] sm:$0xff]
      %v1904 = vld [vmem:[#allocation2 + $0x20] sm:$0xff]
      %v1905 = vld [vmem:[#allocation2 + $0x28] sm:$0xff]
      %v1906 = vld [vmem:[#allocation2 + $0x30] sm:$0xff]
      %v1907 = vld [vmem:[#allocation2 + $0x38] sm:$0xff]
      %v1908 = vld [vmem:[#allocation2 + $0x40] sm:$0xff]
      %v1909 = vld [vmem:[#allocation2 + $0x48] sm:$0xff]
      %v1910 = vld [vmem:[#allocation2 + $0x50] sm:$0xff]
      %v1911 = vld [vmem:[#allocation2 + $0x58] sm:$0xff]
      %v1912 = vld [vmem:[#allocation2 + $0x60] sm:$0xff]
      %v1913 = vld [vmem:[#allocation2 + $0x68] sm:$0xff]
      %v1914 = vld [vmem:[#allocation2 + $0x70] sm:$0xff]
      %v1915 = vld [vmem:[#allocation2 + $0x78] sm:$0xff]
      %v1916 = vld [vmem:[#allocation2 + $0x80] sm:$0xff]
      %v1917 = vld [vmem:[#allocation2 + $0x88] sm:$0xff]
      %v1918 = vld [vmem:[#allocation2 + $0x90] sm:$0xff]
      %v1919 = vld [vmem:[#allocation2 + $0x98] sm:$0xff]
      %v1920 = vld [vmem:[#allocation2 + $0xa0] sm:$0xff]
      %v1921 = vld [vmem:[#allocation2 + $0xa8] sm:$0xff]
      %v1922 = vld [vmem:[#allocation2 + $0xb0] sm:$0xff]
      %v1923 = vld [vmem:[#allocation2 + $0xb8] sm:$0xff]
      %v1924 = vld [vmem:[#allocation2 + $0xc0] sm:$0xff]
      %v1925 = vld [vmem:[#allocation2 + $0xc8] sm:$0xff]
      %v1926 = vld [vmem:[#allocation2 + $0xd0] sm:$0xff]
      %v1927 = vld [vmem:[#allocation2 + $0xd8] sm:$0xff]
      %v1928 = vld [vmem:[#allocation2 + $0xe0] sm:$0xff]
      %v1929 = vld [vmem:[#allocation2 + $0xe8] sm:$0xff]
      %v1930 = vld [vmem:[#allocation2 + $0xf0] sm:$0xff]
      %v1931 = vld [vmem:[#allocation2 + $0xf8] sm:$0xff]
      %v1932 = vld [vmem:[#allocation2 + $0x100] sm:$0xff]
      %v1933 = vld [vmem:[#allocation2 + $0x108] sm:$0xff]
      %v1934 = vld [vmem:[#allocation2 + $0x110] sm:$0xff]
      %v1935 = vld [vmem:[#allocation2 + $0x118] sm:$0xff]
      %v1936 = vld [vmem:[#allocation2 + $0x120] sm:$0xff]
      %v1937 = vld [vmem:[#allocation2 + $0x128] sm:$0xff]
      %v1938 = vld [vmem:[#allocation2 + $0x130] sm:$0xff]
      %v1939 = vld [vmem:[#allocation2 + $0x138] sm:$0xff]
      %v1940 = vld [vmem:[#allocation2 + $0x140] sm:$0xf]
      %v1941 = vadd.f32 %v1900, %v1735
      %v1942 = vadd.f32 %v1901, %v1738
      %v1943 = vadd.f32 %v1902, %v1743
      %v1944 = vadd.f32 %v1903, %v1746
      %v1945 = vadd.f32 %v1904, %v1751
      %v1946 = vadd.f32 %v1905, %v1754
      %v1947 = vadd.f32 %v1906, %v1759
      %v1948 = vadd.f32 %v1907, %v1762
      %v1949 = vadd.f32 %v1908, %v1767
      %v1950 = vadd.f32 %v1909, %v1770
      %v1951 = vadd.f32 %v1910, %v1775
      %v1952 = vadd.f32 %v1911, %v1778
      %v1953 = vadd.f32 %v1912, %v1783
      %v1954 = vadd.f32 %v1913, %v1786
      %v1955 = vadd.f32 %v1914, %v1791
      %v1956 = vadd.f32 %v1915, %v1794
      %v1957 = vadd.f32 %v1916, %v1799
      %v1958 = vadd.f32 %v1917, %v1802
      %v1959 = vadd.f32 %v1918, %v1807
      %v1960 = vadd.f32 %v1919, %v1810
      %v1961 = vadd.f32 %v1920, %v1815
      %v1962 = vadd.f32 %v1921, %v1818
      %v1963 = vadd.f32 %v1922, %v1823
      %v1964 = vadd.f32 %v1923, %v1826
      %v1965 = vadd.f32 %v1924, %v1831
      %v1966 = vadd.f32 %v1925, %v1834
      %v1967 = vadd.f32 %v1926, %v1839
      %v1968 = vadd.f32 %v1927, %v1842
      %v1969 = vadd.f32 %v1928, %v1847
      %v1970 = vadd.f32 %v1929, %v1850
      %v1971 = vadd.f32 %v1930, %v1855
      %v1972 = vadd.f32 %v1931, %v1858
      %v1973 = vadd.f32 %v1932, %v1863
      %v1974 = vadd.f32 %v1933, %v1866
      %v1975 = vadd.f32 %v1934, %v1871
      %v1976 = vadd.f32 %v1935, %v1874
      %v1977 = vadd.f32 %v1936, %v1879
      %v1978 = vadd.f32 %v1937, %v1882
      %v1979 = vadd.f32 %v1938, %v1887
      %v1980 = vadd.f32 %v1939, %v1890
      %v1981 = vadd.f32 %v1940, %v1895
      %1982 = vst.msk [vmem:[#allocation2] sm:$0xff] %vm413, %v1941
      %1983 = vst.msk [vmem:[#allocation2 + $0x8] sm:$0xff] %vm413, %v1942
      %1984 = vst.msk [vmem:[#allocation2 + $0x10] sm:$0xff] %vm413, %v1943
      %1985 = vst.msk [vmem:[#allocation2 + $0x18] sm:$0xff] %vm413, %v1944
      %1986 = vst.msk [vmem:[#allocation2 + $0x20] sm:$0xff] %vm413, %v1945
      %1987 = vst.msk [vmem:[#allocation2 + $0x28] sm:$0xff] %vm413, %v1946
      %1988 = vst.msk [vmem:[#allocation2 + $0x30] sm:$0xff] %vm413, %v1947
      %1989 = vst.msk [vmem:[#allocation2 + $0x38] sm:$0xff] %vm413, %v1948
      %1990 = vst.msk [vmem:[#allocation2 + $0x40] sm:$0xff] %vm413, %v1949
      %1991 = vst.msk [vmem:[#allocation2 + $0x48] sm:$0xff] %vm413, %v1950
      %1992 = vst.msk [vmem:[#allocation2 + $0x50] sm:$0xff] %vm413, %v1951
      %1993 = vst.msk [vmem:[#allocation2 + $0x58] sm:$0xff] %vm413, %v1952
      %1994 = vst.msk [vmem:[#allocation2 + $0x60] sm:$0xff] %vm413, %v1953
      %1995 = vst.msk [vmem:[#allocation2 + $0x68] sm:$0xff] %vm413, %v1954
      %1996 = vst.msk [vmem:[#allocation2 + $0x70] sm:$0xff] %vm413, %v1955
      %1997 = vst.msk [vmem:[#allocation2 + $0x78] sm:$0xff] %vm413, %v1956
      %1998 = vst.msk [vmem:[#allocation2 + $0x80] sm:$0xff] %vm413, %v1957
      %1999 = vst.msk [vmem:[#allocation2 + $0x88] sm:$0xff] %vm413, %v1958
      %2000 = vst.msk [vmem:[#allocation2 + $0x90] sm:$0xff] %vm413, %v1959
      %2001 = vst.msk [vmem:[#allocation2 + $0x98] sm:$0xff] %vm413, %v1960
      %2002 = vst.msk [vmem:[#allocation2 + $0xa0] sm:$0xff] %vm413, %v1961
      %2003 = vst.msk [vmem:[#allocation2 + $0xa8] sm:$0xff] %vm413, %v1962
      %2004 = vst.msk [vmem:[#allocation2 + $0xb0] sm:$0xff] %vm413, %v1963
      %2005 = vst.msk [vmem:[#allocation2 + $0xb8] sm:$0xff] %vm413, %v1964
      %2006 = vst.msk [vmem:[#allocation2 + $0xc0] sm:$0xff] %vm413, %v1965
      %2007 = vst.msk [vmem:[#allocation2 + $0xc8] sm:$0xff] %vm413, %v1966
      %2008 = vst.msk [vmem:[#allocation2 + $0xd0] sm:$0xff] %vm413, %v1967
      %2009 = vst.msk [vmem:[#allocation2 + $0xd8] sm:$0xff] %vm413, %v1968
      %2010 = vst.msk [vmem:[#allocation2 + $0xe0] sm:$0xff] %vm413, %v1969
      %2011 = vst.msk [vmem:[#allocation2 + $0xe8] sm:$0xff] %vm413, %v1970
      %2012 = vst.msk [vmem:[#allocation2 + $0xf0] sm:$0xff] %vm413, %v1971
      %2013 = vst.msk [vmem:[#allocation2 + $0xf8] sm:$0xff] %vm413, %v1972
      %2014 = vst.msk [vmem:[#allocation2 + $0x100] sm:$0xff] %vm413, %v1973
      %2015 = vst.msk [vmem:[#allocation2 + $0x108] sm:$0xff] %vm413, %v1974
      %2016 = vst.msk [vmem:[#allocation2 + $0x110] sm:$0xff] %vm413, %v1975
      %2017 = vst.msk [vmem:[#allocation2 + $0x118] sm:$0xff] %vm413, %v1976
      %2018 = vst.msk [vmem:[#allocation2 + $0x120] sm:$0xff] %vm413, %v1977
      %2019 = vst.msk [vmem:[#allocation2 + $0x128] sm:$0xff] %vm413, %v1978
      %2020 = vst.msk [vmem:[#allocation2 + $0x130] sm:$0xff] %vm413, %v1979
      %2021 = vst.msk [vmem:[#allocation2 + $0x138] sm:$0xff] %vm413, %v1980
      %2022 = vst.msk [vmem:[#allocation2 + $0x140] sm:$0xf] %vm717, %v1981
      %v2023 = vld [vmem:[%s246 + $0x8] sm:$0xe]
      %v2024 = vld [vmem:[%s246 + $0xc] sm:$0xf]
      %v2025 = vld [vmem:[%s246 + $0x10] sm:$0xf]
      %v2026 = vld [vmem:[%s246 + $0x14] sm:$0xf]
      %v2027 = vld [vmem:[%s246 + $0x18] sm:$0xf]
      %v2028 = vld [vmem:[%s246 + $0x1c] sm:$0xf]
      %v2029 = vld [vmem:[%s246 + $0x20] sm:$0xf]
      %v2030 = vld [vmem:[%s246 + $0x24] sm:$0xf]
      %v2031 = vld [vmem:[%s246 + $0x28] sm:$0xf]
      %v2032 = vld [vmem:[%s246 + $0x2c] sm:$0xf]
      %v2033 = vld [vmem:[%s246 + $0x30] sm:$0xf]
      %v2034 = vld [vmem:[%s246 + $0x34] sm:$0xf]
      %v2035 = vld [vmem:[%s246 + $0x38] sm:$0xf]
      %v2036 = vld [vmem:[%s246 + $0x3c] sm:$0xf]
      %v2037 = vld [vmem:[%s246 + $0x40] sm:$0xf]
      %v2038 = vld [vmem:[%s246 + $0x44] sm:$0xf]
      %v2039 = vld [vmem:[%s246 + $0x48] sm:$0xf]
      %v2040 = vld [vmem:[%s246 + $0x4c] sm:$0xf]
      %v2041 = vld [vmem:[%s246 + $0x50] sm:$0xf]
      %v2042 = vld [vmem:[%s246 + $0x54] sm:$0xf]
      %v2043 = vld [vmem:[%s246 + $0x58] sm:$0xf]
      %v2044 = vld [vmem:[%s246 + $0x5c] sm:$0xf]
      %v2045 = vld [vmem:[%s246 + $0x60] sm:$0xf]
      %v2046 = vld [vmem:[%s246 + $0x64] sm:$0xf]
      %v2047 = vld [vmem:[%s246 + $0x68] sm:$0xf]
      %v2048 = vld [vmem:[%s246 + $0x6c] sm:$0xf]
      %v2049 = vld [vmem:[%s246 + $0x70] sm:$0xf]
      %v2050 = vld [vmem:[%s246 + $0x74] sm:$0xf]
      %v2051 = vld [vmem:[%s246 + $0x78] sm:$0xf]
      %v2052 = vld [vmem:[%s246 + $0x7c] sm:$0xf]
      %v2053 = vld [vmem:[%s246 + $0x80] sm:$0xf]
      %v2054 = vld [vmem:[%s246 + $0x84] sm:$0xf]
      %v2055 = vld [vmem:[%s246 + $0x88] sm:$0xf]
      %v2056 = vld [vmem:[%s246 + $0x8c] sm:$0xf]
      %v2057 = vld [vmem:[%s246 + $0x90] sm:$0xf]
      %v2058 = vld [vmem:[%s246 + $0x94] sm:$0xf]
      %v2059 = vld [vmem:[%s246 + $0x98] sm:$0xf]
      %v2060 = vld [vmem:[%s246 + $0x9c] sm:$0xf]
      %v2061 = vld [vmem:[%s246 + $0xa0] sm:$0xf]
      %v2062 = vld [vmem:[%s246 + $0xa4] sm:$0xf]
      %v2063 = vld [vmem:[%s246 + $0xa8] sm:$0x7]
      %s2064 = scalar_lea.vmem %s2, 48
      %v2065 = vld [vmem:[%s2064] sm:$0xf]
      %v2066 = vld [vmem:[%s2064 + $0x4] sm:$0xf]
      %v2067 = vld [vmem:[%s2064 + $0x8] sm:$0xf]
      %v2068 = vld [vmem:[%s2064 + $0xc] sm:$0xf]
      %v2110 = vunpack.c.l.b16 %v2023
      %v2111 = vunpack.c.l.b16 %v2024
      %v2112 = vunpack.c.l.b16 %v2025
      %v2113 = vunpack.c.l.b16 %v2026
      %v2114 = vunpack.c.l.b16 %v2027
      %v2115 = vunpack.c.l.b16 %v2028
      %v2116 = vunpack.c.l.b16 %v2029
      %v2117 = vunpack.c.l.b16 %v2030
      %v2118 = vunpack.c.l.b16 %v2031
      %v2119 = vunpack.c.l.b16 %v2032
      %v2120 = vunpack.c.l.b16 %v2033
      %v2121 = vunpack.c.l.b16 %v2034
      %v2122 = vunpack.c.l.b16 %v2035
      %v2123 = vunpack.c.l.b16 %v2036
      %v2124 = vunpack.c.l.b16 %v2037
      %v2125 = vunpack.c.l.b16 %v2038
      %v2126 = vunpack.c.l.b16 %v2039
      %v2127 = vunpack.c.l.b16 %v2040
      %v2128 = vunpack.c.l.b16 %v2041
      %v2129 = vunpack.c.l.b16 %v2042
      %v2130 = vunpack.c.l.b16 %v2043
      %v2131 = vunpack.c.l.b16 %v2044
      %v2132 = vunpack.c.l.b16 %v2045
      %v2133 = vunpack.c.l.b16 %v2046
      %v2134 = vunpack.c.l.b16 %v2047
      %v2135 = vunpack.c.l.b16 %v2048
      %v2136 = vunpack.c.l.b16 %v2049
      %v2137 = vunpack.c.l.b16 %v2050
      %v2138 = vunpack.c.l.b16 %v2051
      %v2139 = vunpack.c.l.b16 %v2052
      %v2140 = vunpack.c.l.b16 %v2053
      %v2141 = vunpack.c.l.b16 %v2054
      %v2142 = vunpack.c.l.b16 %v2055
      %v2143 = vunpack.c.l.b16 %v2056
      %v2144 = vunpack.c.l.b16 %v2057
      %v2145 = vunpack.c.l.b16 %v2058
      %v2146 = vunpack.c.l.b16 %v2059
      %v2147 = vunpack.c.l.b16 %v2060
      %v2148 = vunpack.c.l.b16 %v2061
      %v2149 = vunpack.c.l.b16 %v2062
      %v2150 = vunpack.c.l.b16 %v2063
      %v2151 = vpack.c.b16 %v2111, %v2110
      %v2152 = vpack.c.b16 %v2113, %v2112
      %v2153 = vpack.c.b16 %v2115, %v2114
      %v2154 = vpack.c.b16 %v2117, %v2116
      %v2155 = vpack.c.b16 %v2119, %v2118
      %v2156 = vpack.c.b16 %v2121, %v2120
      %v2157 = vpack.c.b16 %v2123, %v2122
      %v2158 = vpack.c.b16 %v2125, %v2124
      %v2159 = vpack.c.b16 %v2127, %v2126
      %v2160 = vpack.c.b16 %v2129, %v2128
      %v2161 = vpack.c.b16 %v2131, %v2130
      %v2162 = vpack.c.b16 %v2133, %v2132
      %v2163 = vpack.c.b16 %v2135, %v2134
      %v2164 = vpack.c.b16 %v2137, %v2136
      %v2165 = vpack.c.b16 %v2139, %v2138
      %v2166 = vpack.c.b16 %v2141, %v2140
      %v2167 = vpack.c.b16 %v2143, %v2142
      %v2168 = vpack.c.b16 %v2145, %v2144
      %v2169 = vpack.c.b16 %v2147, %v2146
      %v2170 = vpack.c.b16 %v2149, %v2148
      %v2171 = vpack.c.b16 %v2150, %v2150
      %v2172 = vrot.slane %v2151, 1
      %v2173 = vrot.slane %v2152, 1
      %v2174 = vsel %vm1583, %v2172, %v2173
      %v2175 = vrot.slane %v2153, 1
      %v2176 = vsel %vm1583, %v2173, %v2175
      %v2177 = vrot.slane %v2154, 1
      %v2178 = vsel %vm1583, %v2175, %v2177
      %v2179 = vrot.slane %v2155, 1
      %v2180 = vsel %vm1583, %v2177, %v2179
      %v2181 = vrot.slane %v2156, 1
      %v2182 = vsel %vm1583, %v2179, %v2181
      %v2183 = vrot.slane %v2157, 1
      %v2184 = vsel %vm1583, %v2181, %v2183
      %v2185 = vrot.slane %v2158, 1
      %v2186 = vsel %vm1583, %v2183, %v2185
      %v2187 = vrot.slane %v2159, 1
      %v2188 = vsel %vm1583, %v2185, %v2187
      %v2189 = vrot.slane %v2160, 1
      %v2190 = vsel %vm1583, %v2187, %v2189
      %v2191 = vrot.slane %v2161, 1
      %v2192 = vsel %vm1583, %v2189, %v2191
      %v2193 = vrot.slane %v2162, 1
      %v2194 = vsel %vm1583, %v2191, %v2193
      %v2195 = vrot.slane %v2163, 1
      %v2196 = vsel %vm1583, %v2193, %v2195
      %v2197 = vrot.slane %v2164, 1
      %v2198 = vsel %vm1583, %v2195, %v2197
      %v2199 = vrot.slane %v2165, 1
      %v2200 = vsel %vm1583, %v2197, %v2199
      %v2201 = vrot.slane %v2166, 1
      %v2202 = vsel %vm1583, %v2199, %v2201
      %v2203 = vrot.slane %v2167, 1
      %v2204 = vsel %vm1583, %v2201, %v2203
      %v2205 = vrot.slane %v2168, 1
      %v2206 = vsel %vm1583, %v2203, %v2205
      %v2207 = vrot.slane %v2169, 1
      %v2208 = vsel %vm1583, %v2205, %v2207
      %v2209 = vrot.slane %v2170, 1
      %v2210 = vsel %vm1583, %v2207, %v2209
      %v2211 = vrot.slane %v2171, 1
      %v2212 = vsel %vm1583, %v2209, %v2211
      %v2217 = vunpack.c.l.b16 %v2065
      %v2218 = vunpack.c.l.b16 %v2066
      %v2219 = vunpack.c.l.b16 %v2067
      %v2220 = vunpack.c.l.b16 %v2068
      %v2221 = vpack.c.b16 %v2218, %v2217
      %v2222 = vpack.c.b16 %v2220, %v2219
      %v2226 = vsel %vm413, %v2174, 0
      %v2229 = vsel %vm413, %v2176, 0
      %v2232 = vsel %vm413, %v2178, 0
      %v2235 = vsel %vm413, %v2180, 0
      %v2238 = vsel %vm413, %v2182, 0
      %v2241 = vsel %vm413, %v2184, 0
      %v2244 = vsel %vm413, %v2186, 0
      %v2247 = vsel %vm413, %v2188, 0
      %v2250 = vsel %vm413, %v2190, 0
      %v2253 = vsel %vm413, %v2192, 0
      %v2256 = vsel %vm413, %v2194, 0
      %v2259 = vsel %vm413, %v2196, 0
      %v2262 = vsel %vm413, %v2198, 0
      %v2265 = vsel %vm413, %v2200, 0
      %v2268 = vsel %vm413, %v2202, 0
      %v2271 = vsel %vm413, %v2204, 0
      %v2274 = vsel %vm413, %v2206, 0
      %v2277 = vsel %vm413, %v2208, 0
      %v2280 = vsel %vm413, %v2210, 0
      %v2283 = vsel %vm413, %v2212, 0
      %v2286 = vsel %vm413, %v2211, 0
      %2288 = vmatprep.subr.bf16.mxu0 0
      %2289 = vmatpush1.bf16.msra.mxu0 %v2221
      %2290 = vmatprep.subr.bf16.mxu0 0
      %2291 = vmatpush1.bf16.msra.mxu0 %v2222
      %2292 = vmatprep.subr.bf16.mxu0 0
      %2293 = vmatpush1.bf16.msra.mxu0 0
      %2294 = vmatprep.subr.bf16.mxu0 0
      %2295 = vmatpush1.bf16.msra.mxu0 0
      %2296 = vmatprep.subr.bf16.mxu0 0
      %2297 = vmatpush1.bf16.msra.mxu0 0
      %2298 = vmatprep.subr.bf16.mxu0 0
      %2299 = vmatpush1.bf16.msra.mxu0 0
      %2300 = vmatprep.subr.bf16.mxu0 0
      %2301 = vmatpush1.bf16.msra.mxu0 0
      %2302 = vmatprep.subr.bf16.mxu0 0
      %2303 = vmatpush1.bf16.msra.mxu0 0
      %2304 = vmatprep.subr.bf16.mxu0 0
      %2305 = vmatpush1.bf16.msra.mxu0 0
      %2306 = vmatprep.subr.bf16.mxu0 0
      %2307 = vmatpush1.bf16.msra.mxu0 0
      %2308 = vmatprep.subr.bf16.mxu0 0
      %2309 = vmatpush1.bf16.msra.mxu0 0
      %2310 = vmatprep.subr.bf16.mxu0 0
      %2311 = vmatpush1.bf16.msra.mxu0 0
      %2312 = vmatprep.subr.bf16.mxu0 0
      %2313 = vmatpush1.bf16.msra.mxu0 0
      %2314 = vmatprep.subr.bf16.mxu0 0
      %2315 = vmatpush1.bf16.msra.mxu0 0
      %2316 = vmatprep.subr.bf16.mxu0 0
      %2317 = vmatpush1.bf16.msra.mxu0 0
      %2318 = vmatprep.subr.bf16.mxu0 0
      %2319 = vmatpush1.bf16.msra.mxu0 0
      %2320 = vmatprep.mubr.bf16.mxu0 0
      %2321 = vmatmul.mubr.bf16.gmra.mrb[0].mxu0 %v2226
      %v2322 = vpop.f32.mrb[0].mxu0
      %v2323 = vadd.f32 0.0, %v2322
      %v2324 = vpop.f32.mrb[0].mxu0
      %v2325 = vpop.f32.mrb[0].mxu0
      %v2326 = vadd.f32 0.0, %v2325
      %v2327 = vpop.f32.mrb[0].mxu0
      %2328 = vmatprep.mubr.bf16.mxu0 0
      %2329 = vmatmul.mubr.bf16.gmra.mrb[0].mxu0 %v2229
      %v2330 = vpop.f32.mrb[0].mxu0
      %v2331 = vadd.f32 0.0, %v2330
      %v2332 = vpop.f32.mrb[0].mxu0
      %v2333 = vpop.f32.mrb[0].mxu0
      %v2334 = vadd.f32 0.0, %v2333
      %v2335 = vpop.f32.mrb[0].mxu0
      %2336 = vmatprep.mubr.bf16.mxu0 0
      %2337 = vmatmul.mubr.bf16.gmra.mrb[0].mxu0 %v2232
      %v2338 = vpop.f32.mrb[0].mxu0
      %v2339 = vadd.f32 0.0, %v2338
      %v2340 = vpop.f32.mrb[0].mxu0
      %v2341 = vpop.f32.mrb[0].mxu0
      %v2342 = vadd.f32 0.0, %v2341
      %v2343 = vpop.f32.mrb[0].mxu0
      %2344 = vmatprep.mubr.bf16.mxu0 0
      %2345 = vmatmul.mubr.bf16.gmra.mrb[0].mxu0 %v2235
      %v2346 = vpop.f32.mrb[0].mxu0
      %v2347 = vadd.f32 0.0, %v2346
      %v2348 = vpop.f32.mrb[0].mxu0
      %v2349 = vpop.f32.mrb[0].mxu0
      %v2350 = vadd.f32 0.0, %v2349
      %v2351 = vpop.f32.mrb[0].mxu0
      %2352 = vmatprep.mubr.bf16.mxu0 0
      %2353 = vmatmul.mubr.bf16.gmra.mrb[0].mxu0 %v2238
      %v2354 = vpop.f32.mrb[0].mxu0
      %v2355 = vadd.f32 0.0, %v2354
      %v2356 = vpop.f32.mrb[0].mxu0
      %v2357 = vpop.f32.mrb[0].mxu0
      %v2358 = vadd.f32 0.0, %v2357
      %v2359 = vpop.f32.mrb[0].mxu0
      %2360 = vmatprep.mubr.bf16.mxu0 0
      %2361 = vmatmul.mubr.bf16.gmra.mrb[0].mxu0 %v2241
      %v2362 = vpop.f32.mrb[0].mxu0
      %v2363 = vadd.f32 0.0, %v2362
      %v2364 = vpop.f32.mrb[0].mxu0
      %v2365 = vpop.f32.mrb[0].mxu0
      %v2366 = vadd.f32 0.0, %v2365
      %v2367 = vpop.f32.mrb[0].mxu0
      %2368 = vmatprep.mubr.bf16.mxu0 0
      %2369 = vmatmul.mubr.bf16.gmra.mrb[0].mxu0 %v2244
      %v2370 = vpop.f32.mrb[0].mxu0
      %v2371 = vadd.f32 0.0, %v2370
      %v2372 = vpop.f32.mrb[0].mxu0
      %v2373 = vpop.f32.mrb[0].mxu0
      %v2374 = vadd.f32 0.0, %v2373
      %v2375 = vpop.f32.mrb[0].mxu0
      %2376 = vmatprep.mubr.bf16.mxu0 0
      %2377 = vmatmul.mubr.bf16.gmra.mrb[0].mxu0 %v2247
      %v2378 = vpop.f32.mrb[0].mxu0
      %v2379 = vadd.f32 0.0, %v2378
      %v2380 = vpop.f32.mrb[0].mxu0
      %v2381 = vpop.f32.mrb[0].mxu0
      %v2382 = vadd.f32 0.0, %v2381
      %v2383 = vpop.f32.mrb[0].mxu0
      %2384 = vmatprep.mubr.bf16.mxu0 0
      %2385 = vmatmul.mubr.bf16.gmra.mrb[0].mxu0 %v2250
      %v2386 = vpop.f32.mrb[0].mxu0
      %v2387 = vadd.f32 0.0, %v2386
      %v2388 = vpop.f32.mrb[0].mxu0
      %v2389 = vpop.f32.mrb[0].mxu0
      %v2390 = vadd.f32 0.0, %v2389
      %v2391 = vpop.f32.mrb[0].mxu0
      %2392 = vmatprep.mubr.bf16.mxu0 0
      %2393 = vmatmul.mubr.bf16.gmra.mrb[0].mxu0 %v2253
      %v2394 = vpop.f32.mrb[0].mxu0
      %v2395 = vadd.f32 0.0, %v2394
      %v2396 = vpop.f32.mrb[0].mxu0
      %v2397 = vpop.f32.mrb[0].mxu0
      %v2398 = vadd.f32 0.0, %v2397
      %v2399 = vpop.f32.mrb[0].mxu0
      %2400 = vmatprep.mubr.bf16.mxu0 0
      %2401 = vmatmul.mubr.bf16.gmra.mrb[0].mxu0 %v2256
      %v2402 = vpop.f32.mrb[0].mxu0
      %v2403 = vadd.f32 0.0, %v2402
      %v2404 = vpop.f32.mrb[0].mxu0
      %v2405 = vpop.f32.mrb[0].mxu0
      %v2406 = vadd.f32 0.0, %v2405
      %v2407 = vpop.f32.mrb[0].mxu0
      %2408 = vmatprep.mubr.bf16.mxu0 0
      %2409 = vmatmul.mubr.bf16.gmra.mrb[0].mxu0 %v2259
      %v2410 = vpop.f32.mrb[0].mxu0
      %v2411 = vadd.f32 0.0, %v2410
      %v2412 = vpop.f32.mrb[0].mxu0
      %v2413 = vpop.f32.mrb[0].mxu0
      %v2414 = vadd.f32 0.0, %v2413
      %v2415 = vpop.f32.mrb[0].mxu0
      %2416 = vmatprep.mubr.bf16.mxu0 0
      %2417 = vmatmul.mubr.bf16.gmra.mrb[0].mxu0 %v2262
      %v2418 = vpop.f32.mrb[0].mxu0
      %v2419 = vadd.f32 0.0, %v2418
      %v2420 = vpop.f32.mrb[0].mxu0
      %v2421 = vpop.f32.mrb[0].mxu0
      %v2422 = vadd.f32 0.0, %v2421
      %v2423 = vpop.f32.mrb[0].mxu0
      %2424 = vmatprep.mubr.bf16.mxu0 0
      %2425 = vmatmul.mubr.bf16.gmra.mrb[0].mxu0 %v2265
      %v2426 = vpop.f32.mrb[0].mxu0
      %v2427 = vadd.f32 0.0, %v2426
      %v2428 = vpop.f32.mrb[0].mxu0
      %v2429 = vpop.f32.mrb[0].mxu0
      %v2430 = vadd.f32 0.0, %v2429
      %v2431 = vpop.f32.mrb[0].mxu0
      %2432 = vmatprep.mubr.bf16.mxu0 0
      %2433 = vmatmul.mubr.bf16.gmra.mrb[0].mxu0 %v2268
      %v2434 = vpop.f32.mrb[0].mxu0
      %v2435 = vadd.f32 0.0, %v2434
      %v2436 = vpop.f32.mrb[0].mxu0
      %v2437 = vpop.f32.mrb[0].mxu0
      %v2438 = vadd.f32 0.0, %v2437
      %v2439 = vpop.f32.mrb[0].mxu0
      %2440 = vmatprep.mubr.bf16.mxu0 0
      %2441 = vmatmul.mubr.bf16.gmra.mrb[0].mxu0 %v2271
      %v2442 = vpop.f32.mrb[0].mxu0
      %v2443 = vadd.f32 0.0, %v2442
      %v2444 = vpop.f32.mrb[0].mxu0
      %v2445 = vpop.f32.mrb[0].mxu0
      %v2446 = vadd.f32 0.0, %v2445
      %v2447 = vpop.f32.mrb[0].mxu0
      %2448 = vmatprep.mubr.bf16.mxu0 0
      %2449 = vmatmul.mubr.bf16.gmra.mrb[0].mxu0 %v2274
      %v2450 = vpop.f32.mrb[0].mxu0
      %v2451 = vadd.f32 0.0, %v2450
      %v2452 = vpop.f32.mrb[0].mxu0
      %v2453 = vpop.f32.mrb[0].mxu0
      %v2454 = vadd.f32 0.0, %v2453
      %v2455 = vpop.f32.mrb[0].mxu0
      %2456 = vmatprep.mubr.bf16.mxu0 0
      %2457 = vmatmul.mubr.bf16.gmra.mrb[0].mxu0 %v2277
      %v2458 = vpop.f32.mrb[0].mxu0
      %v2459 = vadd.f32 0.0, %v2458
      %v2460 = vpop.f32.mrb[0].mxu0
      %v2461 = vpop.f32.mrb[0].mxu0
      %v2462 = vadd.f32 0.0, %v2461
      %v2463 = vpop.f32.mrb[0].mxu0
      %2464 = vmatprep.mubr.bf16.mxu0 0
      %2465 = vmatmul.mubr.bf16.gmra.mrb[0].mxu0 %v2280
      %v2466 = vpop.f32.mrb[0].mxu0
      %v2467 = vadd.f32 0.0, %v2466
      %v2468 = vpop.f32.mrb[0].mxu0
      %v2469 = vpop.f32.mrb[0].mxu0
      %v2470 = vadd.f32 0.0, %v2469
      %v2471 = vpop.f32.mrb[0].mxu0
      %2472 = vmatprep.mubr.bf16.mxu0 0
      %2473 = vmatmul.mubr.bf16.gmra.mrb[0].mxu0 %v2283
      %v2474 = vpop.f32.mrb[0].mxu0
      %v2475 = vadd.f32 0.0, %v2474
      %v2476 = vpop.f32.mrb[0].mxu0
      %v2477 = vpop.f32.mrb[0].mxu0
      %v2478 = vadd.f32 0.0, %v2477
      %v2479 = vpop.f32.mrb[0].mxu0
      %2480 = vmatprep.mubr.bf16.mxu0 0
      %2481 = vmatmul.mubr.bf16.gmra.mrb[0].mxu0 %v2286
      %v2482 = vpop.f32.mrb[0].mxu0
      %v2483 = vadd.f32 0.0, %v2482
      %v2484 = vpop.f32.mrb[0].mxu0
      %v2485 = vpop.f32.mrb[0].mxu0
      %v2486 = vpop.f32.mrb[0].mxu0
      %2487 = vdwg.mxu0
      %v2488 = vld [vmem:[#allocation2] sm:$0xff]
      %v2489 = vld [vmem:[#allocation2 + $0x8] sm:$0xff]
      %v2490 = vld [vmem:[#allocation2 + $0x10] sm:$0xff]
      %v2491 = vld [vmem:[#allocation2 + $0x18] sm:$0xff]
      %v2492 = vld [vmem:[#allocation2 + $0x20] sm:$0xff]
      %v2493 = vld [vmem:[#allocation2 + $0x28] sm:$0xff]
      %v2494 = vld [vmem:[#allocation2 + $0x30] sm:$0xff]
      %v2495 = vld [vmem:[#allocation2 + $0x38] sm:$0xff]
      %v2496 = vld [vmem:[#allocation2 + $0x40] sm:$0xff]
      %v2497 = vld [vmem:[#allocation2 + $0x48] sm:$0xff]
      %v2498 = vld [vmem:[#allocation2 + $0x50] sm:$0xff]
      %v2499 = vld [vmem:[#allocation2 + $0x58] sm:$0xff]
      %v2500 = vld [vmem:[#allocation2 + $0x60] sm:$0xff]
      %v2501 = vld [vmem:[#allocation2 + $0x68] sm:$0xff]
      %v2502 = vld [vmem:[#allocation2 + $0x70] sm:$0xff]
      %v2503 = vld [vmem:[#allocation2 + $0x78] sm:$0xff]
      %v2504 = vld [vmem:[#allocation2 + $0x80] sm:$0xff]
      %v2505 = vld [vmem:[#allocation2 + $0x88] sm:$0xff]
      %v2506 = vld [vmem:[#allocation2 + $0x90] sm:$0xff]
      %v2507 = vld [vmem:[#allocation2 + $0x98] sm:$0xff]
      %v2508 = vld [vmem:[#allocation2 + $0xa0] sm:$0xff]
      %v2509 = vld [vmem:[#allocation2 + $0xa8] sm:$0xff]
      %v2510 = vld [vmem:[#allocation2 + $0xb0] sm:$0xff]
      %v2511 = vld [vmem:[#allocation2 + $0xb8] sm:$0xff]
      %v2512 = vld [vmem:[#allocation2 + $0xc0] sm:$0xff]
      %v2513 = vld [vmem:[#allocation2 + $0xc8] sm:$0xff]
      %v2514 = vld [vmem:[#allocation2 + $0xd0] sm:$0xff]
      %v2515 = vld [vmem:[#allocation2 + $0xd8] sm:$0xff]
      %v2516 = vld [vmem:[#allocation2 + $0xe0] sm:$0xff]
      %v2517 = vld [vmem:[#allocation2 + $0xe8] sm:$0xff]
      %v2518 = vld [vmem:[#allocation2 + $0xf0] sm:$0xff]
      %v2519 = vld [vmem:[#allocation2 + $0xf8] sm:$0xff]
      %v2520 = vld [vmem:[#allocation2 + $0x100] sm:$0xff]
      %v2521 = vld [vmem:[#allocation2 + $0x108] sm:$0xff]
      %v2522 = vld [vmem:[#allocation2 + $0x110] sm:$0xff]
      %v2523 = vld [vmem:[#allocation2 + $0x118] sm:$0xff]
      %v2524 = vld [vmem:[#allocation2 + $0x120] sm:$0xff]
      %v2525 = vld [vmem:[#allocation2 + $0x128] sm:$0xff]
      %v2526 = vld [vmem:[#allocation2 + $0x130] sm:$0xff]
      %v2527 = vld [vmem:[#allocation2 + $0x138] sm:$0xff]
      %v2528 = vld [vmem:[#allocation2 + $0x140] sm:$0xf]
      %v2529 = vadd.f32 %v2488, %v2323
      %v2530 = vadd.f32 %v2489, %v2326
      %v2531 = vadd.f32 %v2490, %v2331
      %v2532 = vadd.f32 %v2491, %v2334
      %v2533 = vadd.f32 %v2492, %v2339
      %v2534 = vadd.f32 %v2493, %v2342
      %v2535 = vadd.f32 %v2494, %v2347
      %v2536 = vadd.f32 %v2495, %v2350
      %v2537 = vadd.f32 %v2496, %v2355
      %v2538 = vadd.f32 %v2497, %v2358
      %v2539 = vadd.f32 %v2498, %v2363
      %v2540 = vadd.f32 %v2499, %v2366
      %v2541 = vadd.f32 %v2500, %v2371
      %v2542 = vadd.f32 %v2501, %v2374
      %v2543 = vadd.f32 %v2502, %v2379
      %v2544 = vadd.f32 %v2503, %v2382
      %v2545 = vadd.f32 %v2504, %v2387
      %v2546 = vadd.f32 %v2505, %v2390
      %v2547 = vadd.f32 %v2506, %v2395
      %v2548 = vadd.f32 %v2507, %v2398
      %v2549 = vadd.f32 %v2508, %v2403
      %v2550 = vadd.f32 %v2509, %v2406
      %v2551 = vadd.f32 %v2510, %v2411
      %v2552 = vadd.f32 %v2511, %v2414
      %v2553 = vadd.f32 %v2512, %v2419
      %v2554 = vadd.f32 %v2513, %v2422
      %v2555 = vadd.f32 %v2514, %v2427
      %v2556 = vadd.f32 %v2515, %v2430
      %v2557 = vadd.f32 %v2516, %v2435
      %v2558 = vadd.f32 %v2517, %v2438
      %v2559 = vadd.f32 %v2518, %v2443
      %v2560 = vadd.f32 %v2519, %v2446
      %v2561 = vadd.f32 %v2520, %v2451
      %v2562 = vadd.f32 %v2521, %v2454
      %v2563 = vadd.f32 %v2522, %v2459
      %v2564 = vadd.f32 %v2523, %v2462
      %v2565 = vadd.f32 %v2524, %v2467
      %v2566 = vadd.f32 %v2525, %v2470
      %v2567 = vadd.f32 %v2526, %v2475
      %v2568 = vadd.f32 %v2527, %v2478
      %v2569 = vadd.f32 %v2528, %v2483
      %2570 = vst.msk [vmem:[#allocation2] sm:$0xff] %vm413, %v2529
      %2571 = vst.msk [vmem:[#allocation2 + $0x8] sm:$0xff] %vm413, %v2530
      %2572 = vst.msk [vmem:[#allocation2 + $0x10] sm:$0xff] %vm413, %v2531
      %2573 = vst.msk [vmem:[#allocation2 + $0x18] sm:$0xff] %vm413, %v2532
      %2574 = vst.msk [vmem:[#allocation2 + $0x20] sm:$0xff] %vm413, %v2533
      %2575 = vst.msk [vmem:[#allocation2 + $0x28] sm:$0xff] %vm413, %v2534
      %2576 = vst.msk [vmem:[#allocation2 + $0x30] sm:$0xff] %vm413, %v2535
      %2577 = vst.msk [vmem:[#allocation2 + $0x38] sm:$0xff] %vm413, %v2536
      %2578 = vst.msk [vmem:[#allocation2 + $0x40] sm:$0xff] %vm413, %v2537
      %2579 = vst.msk [vmem:[#allocation2 + $0x48] sm:$0xff] %vm413, %v2538
      %2580 = vst.msk [vmem:[#allocation2 + $0x50] sm:$0xff] %vm413, %v2539
      %2581 = vst.msk [vmem:[#allocation2 + $0x58] sm:$0xff] %vm413, %v2540
      %2582 = vst.msk [vmem:[#allocation2 + $0x60] sm:$0xff] %vm413, %v2541
      %2583 = vst.msk [vmem:[#allocation2 + $0x68] sm:$0xff] %vm413, %v2542
      %2584 = vst.msk [vmem:[#allocation2 + $0x70] sm:$0xff] %vm413, %v2543
      %2585 = vst.msk [vmem:[#allocation2 + $0x78] sm:$0xff] %vm413, %v2544
      %2586 = vst.msk [vmem:[#allocation2 + $0x80] sm:$0xff] %vm413, %v2545
      %2587 = vst.msk [vmem:[#allocation2 + $0x88] sm:$0xff] %vm413, %v2546
      %2588 = vst.msk [vmem:[#allocation2 + $0x90] sm:$0xff] %vm413, %v2547
      %2589 = vst.msk [vmem:[#allocation2 + $0x98] sm:$0xff] %vm413, %v2548
      %2590 = vst.msk [vmem:[#allocation2 + $0xa0] sm:$0xff] %vm413, %v2549
      %2591 = vst.msk [vmem:[#allocation2 + $0xa8] sm:$0xff] %vm413, %v2550
      %2592 = vst.msk [vmem:[#allocation2 + $0xb0] sm:$0xff] %vm413, %v2551
      %2593 = vst.msk [vmem:[#allocation2 + $0xb8] sm:$0xff] %vm413, %v2552
      %2594 = vst.msk [vmem:[#allocation2 + $0xc0] sm:$0xff] %vm413, %v2553
      %2595 = vst.msk [vmem:[#allocation2 + $0xc8] sm:$0xff] %vm413, %v2554
      %2596 = vst.msk [vmem:[#allocation2 + $0xd0] sm:$0xff] %vm413, %v2555
      %2597 = vst.msk [vmem:[#allocation2 + $0xd8] sm:$0xff] %vm413, %v2556
      %2598 = vst.msk [vmem:[#allocation2 + $0xe0] sm:$0xff] %vm413, %v2557
      %2599 = vst.msk [vmem:[#allocation2 + $0xe8] sm:$0xff] %vm413, %v2558
      %2600 = vst.msk [vmem:[#allocation2 + $0xf0] sm:$0xff] %vm413, %v2559
      %2601 = vst.msk [vmem:[#allocation2 + $0xf8] sm:$0xff] %vm413, %v2560
      %2602 = vst.msk [vmem:[#allocation2 + $0x100] sm:$0xff] %vm413, %v2561
      %2603 = vst.msk [vmem:[#allocation2 + $0x108] sm:$0xff] %vm413, %v2562
      %2604 = vst.msk [vmem:[#allocation2 + $0x110] sm:$0xff] %vm413, %v2563
      %2605 = vst.msk [vmem:[#allocation2 + $0x118] sm:$0xff] %vm413, %v2564
      %2606 = vst.msk [vmem:[#allocation2 + $0x120] sm:$0xff] %vm413, %v2565
      %2607 = vst.msk [vmem:[#allocation2 + $0x128] sm:$0xff] %vm413, %v2566
      %2608 = vst.msk [vmem:[#allocation2 + $0x130] sm:$0xff] %vm413, %v2567
      %2609 = vst.msk [vmem:[#allocation2 + $0x138] sm:$0xff] %vm413, %v2568
      %2610 = vst.msk [vmem:[#allocation2 + $0x140] sm:$0xf] %vm717, %v2569
      %v2611 = vld [vmem:[%s246 + $0x8] sm:$0xe]
      %v2612 = vld [vmem:[%s246 + $0xc] sm:$0xf]
      %v2613 = vld [vmem:[%s246 + $0x10] sm:$0xf]
      %v2614 = vld [vmem:[%s246 + $0x14] sm:$0xf]
      %v2615 = vld [vmem:[%s246 + $0x18] sm:$0xf]
      %v2616 = vld [vmem:[%s246 + $0x1c] sm:$0xf]
      %v2617 = vld [vmem:[%s246 + $0x20] sm:$0xf]
      %v2618 = vld [vmem:[%s246 + $0x24] sm:$0xf]
      %v2619 = vld [vmem:[%s246 + $0x28] sm:$0xf]
      %v2620 = vld [vmem:[%s246 + $0x2c] sm:$0xf]
      %v2621 = vld [vmem:[%s246 + $0x30] sm:$0xf]
      %v2622 = vld [vmem:[%s246 + $0x34] sm:$0xf]
      %v2623 = vld [vmem:[%s246 + $0x38] sm:$0xf]
      %v2624 = vld [vmem:[%s246 + $0x3c] sm:$0xf]
      %v2625 = vld [vmem:[%s246 + $0x40] sm:$0xf]
      %v2626 = vld [vmem:[%s246 + $0x44] sm:$0xf]
      %v2627 = vld [vmem:[%s246 + $0x48] sm:$0xf]
      %v2628 = vld [vmem:[%s246 + $0x4c] sm:$0xf]
      %v2629 = vld [vmem:[%s246 + $0x50] sm:$0xf]
      %v2630 = vld [vmem:[%s246 + $0x54] sm:$0xf]
      %v2631 = vld [vmem:[%s246 + $0x58] sm:$0xf]
      %v2632 = vld [vmem:[%s246 + $0x5c] sm:$0xf]
      %v2633 = vld [vmem:[%s246 + $0x60] sm:$0xf]
      %v2634 = vld [vmem:[%s246 + $0x64] sm:$0xf]
      %v2635 = vld [vmem:[%s246 + $0x68] sm:$0xf]
      %v2636 = vld [vmem:[%s246 + $0x6c] sm:$0xf]
      %v2637 = vld [vmem:[%s246 + $0x70] sm:$0xf]
      %v2638 = vld [vmem:[%s246 + $0x74] sm:$0xf]
      %v2639 = vld [vmem:[%s246 + $0x78] sm:$0xf]
      %v2640 = vld [vmem:[%s246 + $0x7c] sm:$0xf]
      %v2641 = vld [vmem:[%s246 + $0x80] sm:$0xf]
      %v2642 = vld [vmem:[%s246 + $0x84] sm:$0xf]
      %v2643 = vld [vmem:[%s246 + $0x88] sm:$0xf]
      %v2644 = vld [vmem:[%s246 + $0x8c] sm:$0xf]
      %v2645 = vld [vmem:[%s246 + $0x90] sm:$0xf]
      %v2646 = vld [vmem:[%s246 + $0x94] sm:$0xf]
      %v2647 = vld [vmem:[%s246 + $0x98] sm:$0xf]
      %v2648 = vld [vmem:[%s246 + $0x9c] sm:$0xf]
      %v2649 = vld [vmem:[%s246 + $0xa0] sm:$0xf]
      %v2650 = vld [vmem:[%s246 + $0xa4] sm:$0xf]
      %v2651 = vld [vmem:[%s246 + $0xa8] sm:$0xf]
      %s2652 = scalar_lea.vmem %s2, 64
      %v2653 = vld [vmem:[%s2652] sm:$0xf]
      %v2654 = vld [vmem:[%s2652 + $0x4] sm:$0xf]
      %v2655 = vld [vmem:[%s2652 + $0x8] sm:$0xf]
      %v2656 = vld [vmem:[%s2652 + $0xc] sm:$0xf]
      %v2698 = vunpack.c.l.b16 %v2611
      %v2699 = vunpack.c.l.b16 %v2612
      %v2700 = vunpack.c.l.b16 %v2613
      %v2701 = vunpack.c.l.b16 %v2614
      %v2702 = vunpack.c.l.b16 %v2615
      %v2703 = vunpack.c.l.b16 %v2616
      %v2704 = vunpack.c.l.b16 %v2617
      %v2705 = vunpack.c.l.b16 %v2618
      %v2706 = vunpack.c.l.b16 %v2619
      %v2707 = vunpack.c.l.b16 %v2620
      %v2708 = vunpack.c.l.b16 %v2621
      %v2709 = vunpack.c.l.b16 %v2622
      %v2710 = vunpack.c.l.b16 %v2623
      %v2711 = vunpack.c.l.b16 %v2624
      %v2712 = vunpack.c.l.b16 %v2625
      %v2713 = vunpack.c.l.b16 %v2626
      %v2714 = vunpack.c.l.b16 %v2627
      %v2715 = vunpack.c.l.b16 %v2628
      %v2716 = vunpack.c.l.b16 %v2629
      %v2717 = vunpack.c.l.b16 %v2630
      %v2718 = vunpack.c.l.b16 %v2631
      %v2719 = vunpack.c.l.b16 %v2632
      %v2720 = vunpack.c.l.b16 %v2633
      %v2721 = vunpack.c.l.b16 %v2634
      %v2722 = vunpack.c.l.b16 %v2635
      %v2723 = vunpack.c.l.b16 %v2636
      %v2724 = vunpack.c.l.b16 %v2637
      %v2725 = vunpack.c.l.b16 %v2638
      %v2726 = vunpack.c.l.b16 %v2639
      %v2727 = vunpack.c.l.b16 %v2640
      %v2728 = vunpack.c.l.b16 %v2641
      %v2729 = vunpack.c.l.b16 %v2642
      %v2730 = vunpack.c.l.b16 %v2643
      %v2731 = vunpack.c.l.b16 %v2644
      %v2732 = vunpack.c.l.b16 %v2645
      %v2733 = vunpack.c.l.b16 %v2646
      %v2734 = vunpack.c.l.b16 %v2647
      %v2735 = vunpack.c.l.b16 %v2648
      %v2736 = vunpack.c.l.b16 %v2649
      %v2737 = vunpack.c.l.b16 %v2650
      %v2738 = vunpack.c.l.b16 %v2651
      %v2739 = vpack.c.b16 %v2699, %v2698
      %v2740 = vpack.c.b16 %v2701, %v2700
      %v2741 = vpack.c.b16 %v2703, %v2702
      %v2742 = vpack.c.b16 %v2705, %v2704
      %v2743 = vpack.c.b16 %v2707, %v2706
      %v2744 = vpack.c.b16 %v2709, %v2708
      %v2745 = vpack.c.b16 %v2711, %v2710
      %v2746 = vpack.c.b16 %v2713, %v2712
      %v2747 = vpack.c.b16 %v2715, %v2714
      %v2748 = vpack.c.b16 %v2717, %v2716
      %v2749 = vpack.c.b16 %v2719, %v2718
      %v2750 = vpack.c.b16 %v2721, %v2720
      %v2751 = vpack.c.b16 %v2723, %v2722
      %v2752 = vpack.c.b16 %v2725, %v2724
      %v2753 = vpack.c.b16 %v2727, %v2726
      %v2754 = vpack.c.b16 %v2729, %v2728
      %v2755 = vpack.c.b16 %v2731, %v2730
      %v2756 = vpack.c.b16 %v2733, %v2732
      %v2757 = vpack.c.b16 %v2735, %v2734
      %v2758 = vpack.c.b16 %v2737, %v2736
      %v2759 = vpack.c.b16 %v2738, %v2738
      %vm2760 = vsmask.f32 6400
      %v2762 = vshrl.u32 %v2739, 16
      %v2764 = vrot.slane %v2762, 1
      %v2765 = vshll.u32 %v2739, 16
      %v2767 = vrot.slane %v2765, 2
      %v2768 = vor.u32 %v2764, %v2767
      %v2770 = vshrl.u32 %v2740, 16
      %v2772 = vrot.slane %v2770, 1
      %v2773 = vshll.u32 %v2740, 16
      %v2775 = vrot.slane %v2773, 2
      %v2776 = vor.u32 %v2772, %v2775
      %v2777 = vsel %vm2760, %v2768, %v2776
      %v2779 = vshrl.u32 %v2741, 16
      %v2781 = vrot.slane %v2779, 1
      %v2782 = vshll.u32 %v2741, 16
      %v2784 = vrot.slane %v2782, 2
      %v2785 = vor.u32 %v2781, %v2784
      %v2786 = vsel %vm2760, %v2776, %v2785
      %v2788 = vshrl.u32 %v2742, 16
      %v2790 = vrot.slane %v2788, 1
      %v2791 = vshll.u32 %v2742, 16
      %v2793 = vrot.slane %v2791, 2
      %v2794 = vor.u32 %v2790, %v2793
      %v2795 = vsel %vm2760, %v2785, %v2794
      %v2797 = vshrl.u32 %v2743, 16
      %v2799 = vrot.slane %v2797, 1
      %v2800 = vshll.u32 %v2743, 16
      %v2802 = vrot.slane %v2800, 2
      %v2803 = vor.u32 %v2799, %v2802
      %v2804 = vsel %vm2760, %v2794, %v2803
      %v2806 = vshrl.u32 %v2744, 16
      %v2808 = vrot.slane %v2806, 1
      %v2809 = vshll.u32 %v2744, 16
      %v2811 = vrot.slane %v2809, 2
      %v2812 = vor.u32 %v2808, %v2811
      %v2813 = vsel %vm2760, %v2803, %v2812
      %v2815 = vshrl.u32 %v2745, 16
      %v2817 = vrot.slane %v2815, 1
      %v2818 = vshll.u32 %v2745, 16
      %v2820 = vrot.slane %v2818, 2
      %v2821 = vor.u32 %v2817, %v2820
      %v2822 = vsel %vm2760, %v2812, %v2821
      %v2824 = vshrl.u32 %v2746, 16
      %v2826 = vrot.slane %v2824, 1
      %v2827 = vshll.u32 %v2746, 16
      %v2829 = vrot.slane %v2827, 2
      %v2830 = vor.u32 %v2826, %v2829
      %v2831 = vsel %vm2760, %v2821, %v2830
      %v2833 = vshrl.u32 %v2747, 16
      %v2835 = vrot.slane %v2833, 1
      %v2836 = vshll.u32 %v2747, 16
      %v2838 = vrot.slane %v2836, 2
      %v2839 = vor.u32 %v2835, %v2838
      %v2840 = vsel %vm2760, %v2830, %v2839
      %v2842 = vshrl.u32 %v2748, 16
      %v2844 = vrot.slane %v2842, 1
      %v2845 = vshll.u32 %v2748, 16
      %v2847 = vrot.slane %v2845, 2
      %v2848 = vor.u32 %v2844, %v2847
      %v2849 = vsel %vm2760, %v2839, %v2848
      %v2851 = vshrl.u32 %v2749, 16
      %v2853 = vrot.slane %v2851, 1
      %v2854 = vshll.u32 %v2749, 16
      %v2856 = vrot.slane %v2854, 2
      %v2857 = vor.u32 %v2853, %v2856
      %v2858 = vsel %vm2760, %v2848, %v2857
      %v2860 = vshrl.u32 %v2750, 16
      %v2862 = vrot.slane %v2860, 1
      %v2863 = vshll.u32 %v2750, 16
      %v2865 = vrot.slane %v2863, 2
      %v2866 = vor.u32 %v2862, %v2865
      %v2867 = vsel %vm2760, %v2857, %v2866
      %v2869 = vshrl.u32 %v2751, 16
      %v2871 = vrot.slane %v2869, 1
      %v2872 = vshll.u32 %v2751, 16
      %v2874 = vrot.slane %v2872, 2
      %v2875 = vor.u32 %v2871, %v2874
      %v2876 = vsel %vm2760, %v2866, %v2875
      %v2878 = vshrl.u32 %v2752, 16
      %v2880 = vrot.slane %v2878, 1
      %v2881 = vshll.u32 %v2752, 16
      %v2883 = vrot.slane %v2881, 2
      %v2884 = vor.u32 %v2880, %v2883
      %v2885 = vsel %vm2760, %v2875, %v2884
      %v2887 = vshrl.u32 %v2753, 16
      %v2889 = vrot.slane %v2887, 1
      %v2890 = vshll.u32 %v2753, 16
      %v2892 = vrot.slane %v2890, 2
      %v2893 = vor.u32 %v2889, %v2892
      %v2894 = vsel %vm2760, %v2884, %v2893
      %v2896 = vshrl.u32 %v2754, 16
      %v2898 = vrot.slane %v2896, 1
      %v2899 = vshll.u32 %v2754, 16
      %v2901 = vrot.slane %v2899, 2
      %v2902 = vor.u32 %v2898, %v2901
      %v2903 = vsel %vm2760, %v2893, %v2902
      %v2905 = vshrl.u32 %v2755, 16
      %v2907 = vrot.slane %v2905, 1
      %v2908 = vshll.u32 %v2755, 16
      %v2910 = vrot.slane %v2908, 2
      %v2911 = vor.u32 %v2907, %v2910
      %v2912 = vsel %vm2760, %v2902, %v2911
      %v2914 = vshrl.u32 %v2756, 16
      %v2916 = vrot.slane %v2914, 1
      %v2917 = vshll.u32 %v2756, 16
      %v2919 = vrot.slane %v2917, 2
      %v2920 = vor.u32 %v2916, %v2919
      %v2921 = vsel %vm2760, %v2911, %v2920
      %v2923 = vshrl.u32 %v2757, 16
      %v2925 = vrot.slane %v2923, 1
      %v2926 = vshll.u32 %v2757, 16
      %v2928 = vrot.slane %v2926, 2
      %v2929 = vor.u32 %v2925, %v2928
      %v2930 = vsel %vm2760, %v2920, %v2929
      %v2932 = vshrl.u32 %v2758, 16
      %v2934 = vrot.slane %v2932, 1
      %v2935 = vshll.u32 %v2758, 16
      %v2937 = vrot.slane %v2935, 2
      %v2938 = vor.u32 %v2934, %v2937
      %v2939 = vsel %vm2760, %v2929, %v2938
      %v2941 = vshrl.u32 %v2759, 16
      %v2943 = vrot.slane %v2941, 1
      %v2944 = vshll.u32 %v2759, 16
      %v2946 = vrot.slane %v2944, 2
      %v2947 = vor.u32 %v2943, %v2946
      %v2948 = vsel %vm2760, %v2938, %v2947
      %v2953 = vunpack.c.l.b16 %v2653
      %v2954 = vunpack.c.l.b16 %v2654
      %v2955 = vunpack.c.l.b16 %v2655
      %v2956 = vunpack.c.l.b16 %v2656
      %v2957 = vpack.c.b16 %v2954, %v2953
      %v2958 = vpack.c.b16 %v2956, %v2955
      %v2962 = vsel %vm413, %v2777, 0
      %v2965 = vsel %vm413, %v2786, 0
      %v2968 = vsel %vm413, %v2795, 0
      %v2971 = vsel %vm413, %v2804, 0
      %v2974 = vsel %vm413, %v2813, 0
      %v2977 = vsel %vm413, %v2822, 0
      %v2980 = vsel %vm413, %v2831, 0
      %v2983 = vsel %vm413, %v2840, 0
      %v2986 = vsel %vm413, %v2849, 0
      %v2989 = vsel %vm413, %v2858, 0
      %v2992 = vsel %vm413, %v2867, 0
      %v2995 = vsel %vm413, %v2876, 0
      %v2998 = vsel %vm413, %v2885, 0
      %v3001 = vsel %vm413, %v2894, 0
      %v3004 = vsel %vm413, %v2903, 0
      %v3007 = vsel %vm413, %v2912, 0
      %v3010 = vsel %vm413, %v2921, 0
      %v3013 = vsel %vm413, %v2930, 0
      %v3016 = vsel %vm413, %v2939, 0
      %v3019 = vsel %vm413, %v2948, 0
      %v3022 = vsel %vm413, %v2947, 0
      %3024 = vmatprep.subr.bf16.mxu0 0
      %3025 = vmatpush1.bf16.msra.mxu0 %v2957
      %3026 = vmatprep.subr.bf16.mxu0 0
      %3027 = vmatpush1.bf16.msra.mxu0 %v2958
      %3028 = vmatprep.subr.bf16.mxu0 0
      %3029 = vmatpush1.bf16.msra.mxu0 0
      %3030 = vmatprep.subr.bf16.mxu0 0
      %3031 = vmatpush1.bf16.msra.mxu0 0
      %3032 = vmatprep.subr.bf16.mxu0 0
      %3033 = vmatpush1.bf16.msra.mxu0 0
      %3034 = vmatprep.subr.bf16.mxu0 0
      %3035 = vmatpush1.bf16.msra.mxu0 0
      %3036 = vmatprep.subr.bf16.mxu0 0
      %3037 = vmatpush1.bf16.msra.mxu0 0
      %3038 = vmatprep.subr.bf16.mxu0 0
      %3039 = vmatpush1.bf16.msra.mxu0 0
      %3040 = vmatprep.subr.bf16.mxu0 0
      %3041 = vmatpush1.bf16.msra.mxu0 0
      %3042 = vmatprep.subr.bf16.mxu0 0
      %3043 = vmatpush1.bf16.msra.mxu0 0
      %3044 = vmatprep.subr.bf16.mxu0 0
      %3045 = vmatpush1.bf16.msra.mxu0 0
      %3046 = vmatprep.subr.bf16.mxu0 0
      %3047 = vmatpush1.bf16.msra.mxu0 0
      %3048 = vmatprep.subr.bf16.mxu0 0
      %3049 = vmatpush1.bf16.msra.mxu0 0
      %3050 = vmatprep.subr.bf16.mxu0 0
      %3051 = vmatpush1.bf16.msra.mxu0 0
      %3052 = vmatprep.subr.bf16.mxu0 0
      %3053 = vmatpush1.bf16.msra.mxu0 0
      %3054 = vmatprep.subr.bf16.mxu0 0
      %3055 = vmatpush1.bf16.msra.mxu0 0
      %3056 = vmatprep.mubr.bf16.mxu0 0
      %3057 = vmatmul.mubr.bf16.gmra.mrb[0].mxu0 %v2962
      %v3058 = vpop.f32.mrb[0].mxu0
      %v3059 = vadd.f32 0.0, %v3058
      %v3060 = vpop.f32.mrb[0].mxu0
      %v3061 = vpop.f32.mrb[0].mxu0
      %v3062 = vadd.f32 0.0, %v3061
      %v3063 = vpop.f32.mrb[0].mxu0
      %3064 = vmatprep.mubr.bf16.mxu0 0
      %3065 = vmatmul.mubr.bf16.gmra.mrb[0].mxu0 %v2965
      %v3066 = vpop.f32.mrb[0].mxu0
      %v3067 = vadd.f32 0.0, %v3066
      %v3068 = vpop.f32.mrb[0].mxu0
      %v3069 = vpop.f32.mrb[0].mxu0
      %v3070 = vadd.f32 0.0, %v3069
      %v3071 = vpop.f32.mrb[0].mxu0
      %3072 = vmatprep.mubr.bf16.mxu0 0
      %3073 = vmatmul.mubr.bf16.gmra.mrb[0].mxu0 %v2968
      %v3074 = vpop.f32.mrb[0].mxu0
      %v3075 = vadd.f32 0.0, %v3074
      %v3076 = vpop.f32.mrb[0].mxu0
      %v3077 = vpop.f32.mrb[0].mxu0
      %v3078 = vadd.f32 0.0, %v3077
      %v3079 = vpop.f32.mrb[0].mxu0
      %3080 = vmatprep.mubr.bf16.mxu0 0
      %3081 = vmatmul.mubr.bf16.gmra.mrb[0].mxu0 %v2971
      %v3082 = vpop.f32.mrb[0].mxu0
      %v3083 = vadd.f32 0.0, %v3082
      %v3084 = vpop.f32.mrb[0].mxu0
      %v3085 = vpop.f32.mrb[0].mxu0
      %v3086 = vadd.f32 0.0, %v3085
      %v3087 = vpop.f32.mrb[0].mxu0
      %3088 = vmatprep.mubr.bf16.mxu0 0
      %3089 = vmatmul.mubr.bf16.gmra.mrb[0].mxu0 %v2974
      %v3090 = vpop.f32.mrb[0].mxu0
      %v3091 = vadd.f32 0.0, %v3090
      %v3092 = vpop.f32.mrb[0].mxu0
      %v3093 = vpop.f32.mrb[0].mxu0
      %v3094 = vadd.f32 0.0, %v3093
      %v3095 = vpop.f32.mrb[0].mxu0
      %3096 = vmatprep.mubr.bf16.mxu0 0
      %3097 = vmatmul.mubr.bf16.gmra.mrb[0].mxu0 %v2977
      %v3098 = vpop.f32.mrb[0].mxu0
      %v3099 = vadd.f32 0.0, %v3098
      %v3100 = vpop.f32.mrb[0].mxu0
      %v3101 = vpop.f32.mrb[0].mxu0
      %v3102 = vadd.f32 0.0, %v3101
      %v3103 = vpop.f32.mrb[0].mxu0
      %3104 = vmatprep.mubr.bf16.mxu0 0
      %3105 = vmatmul.mubr.bf16.gmra.mrb[0].mxu0 %v2980
      %v3106 = vpop.f32.mrb[0].mxu0
      %v3107 = vadd.f32 0.0, %v3106
      %v3108 = vpop.f32.mrb[0].mxu0
      %v3109 = vpop.f32.mrb[0].mxu0
      %v3110 = vadd.f32 0.0, %v3109
      %v3111 = vpop.f32.mrb[0].mxu0
      %3112 = vmatprep.mubr.bf16.mxu0 0
      %3113 = vmatmul.mubr.bf16.gmra.mrb[0].mxu0 %v2983
      %v3114 = vpop.f32.mrb[0].mxu0
      %v3115 = vadd.f32 0.0, %v3114
      %v3116 = vpop.f32.mrb[0].mxu0
      %v3117 = vpop.f32.mrb[0].mxu0
      %v3118 = vadd.f32 0.0, %v3117
      %v3119 = vpop.f32.mrb[0].mxu0
      %3120 = vmatprep.mubr.bf16.mxu0 0
      %3121 = vmatmul.mubr.bf16.gmra.mrb[0].mxu0 %v2986
      %v3122 = vpop.f32.mrb[0].mxu0
      %v3123 = vadd.f32 0.0, %v3122
      %v3124 = vpop.f32.mrb[0].mxu0
      %v3125 = vpop.f32.mrb[0].mxu0
      %v3126 = vadd.f32 0.0, %v3125
      %v3127 = vpop.f32.mrb[0].mxu0
      %3128 = vmatprep.mubr.bf16.mxu0 0
      %3129 = vmatmul.mubr.bf16.gmra.mrb[0].mxu0 %v2989
      %v3130 = vpop.f32.mrb[0].mxu0
      %v3131 = vadd.f32 0.0, %v3130
      %v3132 = vpop.f32.mrb[0].mxu0
      %v3133 = vpop.f32.mrb[0].mxu0
      %v3134 = vadd.f32 0.0, %v3133
      %v3135 = vpop.f32.mrb[0].mxu0
      %3136 = vmatprep.mubr.bf16.mxu0 0
      %3137 = vmatmul.mubr.bf16.gmra.mrb[0].mxu0 %v2992
      %v3138 = vpop.f32.mrb[0].mxu0
      %v3139 = vadd.f32 0.0, %v3138
      %v3140 = vpop.f32.mrb[0].mxu0
      %v3141 = vpop.f32.mrb[0].mxu0
      %v3142 = vadd.f32 0.0, %v3141
      %v3143 = vpop.f32.mrb[0].mxu0
      %3144 = vmatprep.mubr.bf16.mxu0 0
      %3145 = vmatmul.mubr.bf16.gmra.mrb[0].mxu0 %v2995
      %v3146 = vpop.f32.mrb[0].mxu0
      %v3147 = vadd.f32 0.0, %v3146
      %v3148 = vpop.f32.mrb[0].mxu0
      %v3149 = vpop.f32.mrb[0].mxu0
      %v3150 = vadd.f32 0.0, %v3149
      %v3151 = vpop.f32.mrb[0].mxu0
      %3152 = vmatprep.mubr.bf16.mxu0 0
      %3153 = vmatmul.mubr.bf16.gmra.mrb[0].mxu0 %v2998
      %v3154 = vpop.f32.mrb[0].mxu0
      %v3155 = vadd.f32 0.0, %v3154
      %v3156 = vpop.f32.mrb[0].mxu0
      %v3157 = vpop.f32.mrb[0].mxu0
      %v3158 = vadd.f32 0.0, %v3157
      %v3159 = vpop.f32.mrb[0].mxu0
      %3160 = vmatprep.mubr.bf16.mxu0 0
      %3161 = vmatmul.mubr.bf16.gmra.mrb[0].mxu0 %v3001
      %v3162 = vpop.f32.mrb[0].mxu0
      %v3163 = vadd.f32 0.0, %v3162
      %v3164 = vpop.f32.mrb[0].mxu0
      %v3165 = vpop.f32.mrb[0].mxu0
      %v3166 = vadd.f32 0.0, %v3165
      %v3167 = vpop.f32.mrb[0].mxu0
      %3168 = vmatprep.mubr.bf16.mxu0 0
      %3169 = vmatmul.mubr.bf16.gmra.mrb[0].mxu0 %v3004
      %v3170 = vpop.f32.mrb[0].mxu0
      %v3171 = vadd.f32 0.0, %v3170
      %v3172 = vpop.f32.mrb[0].mxu0
      %v3173 = vpop.f32.mrb[0].mxu0
      %v3174 = vadd.f32 0.0, %v3173
      %v3175 = vpop.f32.mrb[0].mxu0
      %3176 = vmatprep.mubr.bf16.mxu0 0
      %3177 = vmatmul.mubr.bf16.gmra.mrb[0].mxu0 %v3007
      %v3178 = vpop.f32.mrb[0].mxu0
      %v3179 = vadd.f32 0.0, %v3178
      %v3180 = vpop.f32.mrb[0].mxu0
      %v3181 = vpop.f32.mrb[0].mxu0
      %v3182 = vadd.f32 0.0, %v3181
      %v3183 = vpop.f32.mrb[0].mxu0
      %3184 = vmatprep.mubr.bf16.mxu0 0
      %3185 = vmatmul.mubr.bf16.gmra.mrb[0].mxu0 %v3010
      %v3186 = vpop.f32.mrb[0].mxu0
      %v3187 = vadd.f32 0.0, %v3186
      %v3188 = vpop.f32.mrb[0].mxu0
      %v3189 = vpop.f32.mrb[0].mxu0
      %v3190 = vadd.f32 0.0, %v3189
      %v3191 = vpop.f32.mrb[0].mxu0
      %3192 = vmatprep.mubr.bf16.mxu0 0
      %3193 = vmatmul.mubr.bf16.gmra.mrb[0].mxu0 %v3013
      %v3194 = vpop.f32.mrb[0].mxu0
      %v3195 = vadd.f32 0.0, %v3194
      %v3196 = vpop.f32.mrb[0].mxu0
      %v3197 = vpop.f32.mrb[0].mxu0
      %v3198 = vadd.f32 0.0, %v3197
      %v3199 = vpop.f32.mrb[0].mxu0
      %3200 = vmatprep.mubr.bf16.mxu0 0
      %3201 = vmatmul.mubr.bf16.gmra.mrb[0].mxu0 %v3016
      %v3202 = vpop.f32.mrb[0].mxu0
      %v3203 = vadd.f32 0.0, %v3202
      %v3204 = vpop.f32.mrb[0].mxu0
      %v3205 = vpop.f32.mrb[0].mxu0
      %v3206 = vadd.f32 0.0, %v3205
      %v3207 = vpop.f32.mrb[0].mxu0
      %3208 = vmatprep.mubr.bf16.mxu0 0
      %3209 = vmatmul.mubr.bf16.gmra.mrb[0].mxu0 %v3019
      %v3210 = vpop.f32.mrb[0].mxu0
      %v3211 = vadd.f32 0.0, %v3210
      %v3212 = vpop.f32.mrb[0].mxu0
      %v3213 = vpop.f32.mrb[0].mxu0
      %v3214 = vadd.f32 0.0, %v3213
      %v3215 = vpop.f32.mrb[0].mxu0
      %3216 = vmatprep.mubr.bf16.mxu0 0
      %3217 = vmatmul.mubr.bf16.gmra.mrb[0].mxu0 %v3022
      %v3218 = vpop.f32.mrb[0].mxu0
      %v3219 = vadd.f32 0.0, %v3218
      %v3220 = vpop.f32.mrb[0].mxu0
      %v3221 = vpop.f32.mrb[0].mxu0
      %v3222 = vpop.f32.mrb[0].mxu0
      %3223 = vdwg.mxu0
      %v3224 = vld [vmem:[#allocation2] sm:$0xff]
      %v3225 = vld [vmem:[#allocation2 + $0x8] sm:$0xff]
      %v3226 = vld [vmem:[#allocation2 + $0x10] sm:$0xff]
      %v3227 = vld [vmem:[#allocation2 + $0x18] sm:$0xff]
      %v3228 = vld [vmem:[#allocation2 + $0x20] sm:$0xff]
      %v3229 = vld [vmem:[#allocation2 + $0x28] sm:$0xff]
      %v3230 = vld [vmem:[#allocation2 + $0x30] sm:$0xff]
      %v3231 = vld [vmem:[#allocation2 + $0x38] sm:$0xff]
      %v3232 = vld [vmem:[#allocation2 + $0x40] sm:$0xff]
      %v3233 = vld [vmem:[#allocation2 + $0x48] sm:$0xff]
      %v3234 = vld [vmem:[#allocation2 + $0x50] sm:$0xff]
      %v3235 = vld [vmem:[#allocation2 + $0x58] sm:$0xff]
      %v3236 = vld [vmem:[#allocation2 + $0x60] sm:$0xff]
      %v3237 = vld [vmem:[#allocation2 + $0x68] sm:$0xff]
      %v3238 = vld [vmem:[#allocation2 + $0x70] sm:$0xff]
      %v3239 = vld [vmem:[#allocation2 + $0x78] sm:$0xff]
      %v3240 = vld [vmem:[#allocation2 + $0x80] sm:$0xff]
      %v3241 = vld [vmem:[#allocation2 + $0x88] sm:$0xff]
      %v3242 = vld [vmem:[#allocation2 + $0x90] sm:$0xff]
      %v3243 = vld [vmem:[#allocation2 + $0x98] sm:$0xff]
      %v3244 = vld [vmem:[#allocation2 + $0xa0] sm:$0xff]
      %v3245 = vld [vmem:[#allocation2 + $0xa8] sm:$0xff]
      %v3246 = vld [vmem:[#allocation2 + $0xb0] sm:$0xff]
      %v3247 = vld [vmem:[#allocation2 + $0xb8] sm:$0xff]
      %v3248 = vld [vmem:[#allocation2 + $0xc0] sm:$0xff]
      %v3249 = vld [vmem:[#allocation2 + $0xc8] sm:$0xff]
      %v3250 = vld [vmem:[#allocation2 + $0xd0] sm:$0xff]
      %v3251 = vld [vmem:[#allocation2 + $0xd8] sm:$0xff]
      %v3252 = vld [vmem:[#allocation2 + $0xe0] sm:$0xff]
      %v3253 = vld [vmem:[#allocation2 + $0xe8] sm:$0xff]
      %v3254 = vld [vmem:[#allocation2 + $0xf0] sm:$0xff]
      %v3255 = vld [vmem:[#allocation2 + $0xf8] sm:$0xff]
      %v3256 = vld [vmem:[#allocation2 + $0x100] sm:$0xff]
      %v3257 = vld [vmem:[#allocation2 + $0x108] sm:$0xff]
      %v3258 = vld [vmem:[#allocation2 + $0x110] sm:$0xff]
      %v3259 = vld [vmem:[#allocation2 + $0x118] sm:$0xff]
      %v3260 = vld [vmem:[#allocation2 + $0x120] sm:$0xff]
      %v3261 = vld [vmem:[#allocation2 + $0x128] sm:$0xff]
      %v3262 = vld [vmem:[#allocation2 + $0x130] sm:$0xff]
      %v3263 = vld [vmem:[#allocation2 + $0x138] sm:$0xff]
      %v3264 = vld [vmem:[#allocation2 + $0x140] sm:$0xf]
      %v3265 = vadd.f32 %v3224, %v3059
      %v3266 = vadd.f32 %v3225, %v3062
      %v3267 = vadd.f32 %v3226, %v3067
      %v3268 = vadd.f32 %v3227, %v3070
      %v3269 = vadd.f32 %v3228, %v3075
      %v3270 = vadd.f32 %v3229, %v3078
      %v3271 = vadd.f32 %v3230, %v3083
      %v3272 = vadd.f32 %v3231, %v3086
      %v3273 = vadd.f32 %v3232, %v3091
      %v3274 = vadd.f32 %v3233, %v3094
      %v3275 = vadd.f32 %v3234, %v3099
      %v3276 = vadd.f32 %v3235, %v3102
      %v3277 = vadd.f32 %v3236, %v3107
      %v3278 = vadd.f32 %v3237, %v3110
      %v3279 = vadd.f32 %v3238, %v3115
      %v3280 = vadd.f32 %v3239, %v3118
      %v3281 = vadd.f32 %v3240, %v3123
      %v3282 = vadd.f32 %v3241, %v3126
      %v3283 = vadd.f32 %v3242, %v3131
      %v3284 = vadd.f32 %v3243, %v3134
      %v3285 = vadd.f32 %v3244, %v3139
      %v3286 = vadd.f32 %v3245, %v3142
      %v3287 = vadd.f32 %v3246, %v3147
      %v3288 = vadd.f32 %v3247, %v3150
      %v3289 = vadd.f32 %v3248, %v3155
      %v3290 = vadd.f32 %v3249, %v3158
      %v3291 = vadd.f32 %v3250, %v3163
      %v3292 = vadd.f32 %v3251, %v3166
      %v3293 = vadd.f32 %v3252, %v3171
      %v3294 = vadd.f32 %v3253, %v3174
      %v3295 = vadd.f32 %v3254, %v3179
      %v3296 = vadd.f32 %v3255, %v3182
      %v3297 = vadd.f32 %v3256, %v3187
      %v3298 = vadd.f32 %v3257, %v3190
      %v3299 = vadd.f32 %v3258, %v3195
      %v3300 = vadd.f32 %v3259, %v3198
      %v3301 = vadd.f32 %v3260, %v3203
      %v3302 = vadd.f32 %v3261, %v3206
      %v3303 = vadd.f32 %v3262, %v3211
      %v3304 = vadd.f32 %v3263, %v3214
      %v3305 = vadd.f32 %v3264, %v3219
      %3306 = vst.msk [vmem:[#allocation2] sm:$0xff] %vm413, %v3265
      %3307 = vst.msk [vmem:[#allocation2 + $0x8] sm:$0xff] %vm413, %v3266
      %3308 = vst.msk [vmem:[#allocation2 + $0x10] sm:$0xff] %vm413, %v3267
      %3309 = vst.msk [vmem:[#allocation2 + $0x18] sm:$0xff] %vm413, %v3268
      %3310 = vst.msk [vmem:[#allocation2 + $0x20] sm:$0xff] %vm413, %v3269
      %3311 = vst.msk [vmem:[#allocation2 + $0x28] sm:$0xff] %vm413, %v3270
      %3312 = vst.msk [vmem:[#allocation2 + $0x30] sm:$0xff] %vm413, %v3271
      %3313 = vst.msk [vmem:[#allocation2 + $0x38] sm:$0xff] %vm413, %v3272
      %3314 = vst.msk [vmem:[#allocation2 + $0x40] sm:$0xff] %vm413, %v3273
      %3315 = vst.msk [vmem:[#allocation2 + $0x48] sm:$0xff] %vm413, %v3274
      %3316 = vst.msk [vmem:[#allocation2 + $0x50] sm:$0xff] %vm413, %v3275
      %3317 = vst.msk [vmem:[#allocation2 + $0x58] sm:$0xff] %vm413, %v3276
      %3318 = vst.msk [vmem:[#allocation2 + $0x60] sm:$0xff] %vm413, %v3277
      %3319 = vst.msk [vmem:[#allocation2 + $0x68] sm:$0xff] %vm413, %v3278
      %3320 = vst.msk [vmem:[#allocation2 + $0x70] sm:$0xff] %vm413, %v3279
      %3321 = vst.msk [vmem:[#allocation2 + $0x78] sm:$0xff] %vm413, %v3280
      %3322 = vst.msk [vmem:[#allocation2 + $0x80] sm:$0xff] %vm413, %v3281
      %3323 = vst.msk [vmem:[#allocation2 + $0x88] sm:$0xff] %vm413, %v3282
      %3324 = vst.msk [vmem:[#allocation2 + $0x90] sm:$0xff] %vm413, %v3283
      %3325 = vst.msk [vmem:[#allocation2 + $0x98] sm:$0xff] %vm413, %v3284
      %3326 = vst.msk [vmem:[#allocation2 + $0xa0] sm:$0xff] %vm413, %v3285
      %3327 = vst.msk [vmem:[#allocation2 + $0xa8] sm:$0xff] %vm413, %v3286
      %3328 = vst.msk [vmem:[#allocation2 + $0xb0] sm:$0xff] %vm413, %v3287
      %3329 = vst.msk [vmem:[#allocation2 + $0xb8] sm:$0xff] %vm413, %v3288
      %3330 = vst.msk [vmem:[#allocation2 + $0xc0] sm:$0xff] %vm413, %v3289
      %3331 = vst.msk [vmem:[#allocation2 + $0xc8] sm:$0xff] %vm413, %v3290
      %3332 = vst.msk [vmem:[#allocation2 + $0xd0] sm:$0xff] %vm413, %v3291
      %3333 = vst.msk [vmem:[#allocation2 + $0xd8] sm:$0xff] %vm413, %v3292
      %3334 = vst.msk [vmem:[#allocation2 + $0xe0] sm:$0xff] %vm413, %v3293
      %3335 = vst.msk [vmem:[#allocation2 + $0xe8] sm:$0xff] %vm413, %v3294
      %3336 = vst.msk [vmem:[#allocation2 + $0xf0] sm:$0xff] %vm413, %v3295
      %3337 = vst.msk [vmem:[#allocation2 + $0xf8] sm:$0xff] %vm413, %v3296
      %3338 = vst.msk [vmem:[#allocation2 + $0x100] sm:$0xff] %vm413, %v3297
      %3339 = vst.msk [vmem:[#allocation2 + $0x108] sm:$0xff] %vm413, %v3298
      %3340 = vst.msk [vmem:[#allocation2 + $0x110] sm:$0xff] %vm413, %v3299
      %3341 = vst.msk [vmem:[#allocation2 + $0x118] sm:$0xff] %vm413, %v3300
      %3342 = vst.msk [vmem:[#allocation2 + $0x120] sm:$0xff] %vm413, %v3301
      %3343 = vst.msk [vmem:[#allocation2 + $0x128] sm:$0xff] %vm413, %v3302
      %3344 = vst.msk [vmem:[#allocation2 + $0x130] sm:$0xff] %vm413, %v3303
      %3345 = vst.msk [vmem:[#allocation2 + $0x138] sm:$0xff] %vm413, %v3304
      %3346 = vst.msk [vmem:[#allocation2 + $0x140] sm:$0xf] %vm717, %v3305
      %v3347 = vld [vmem:[%s246 + $0x8] sm:$0xc]
      %v3348 = vld [vmem:[%s246 + $0xc] sm:$0xf]
      %v3349 = vld [vmem:[%s246 + $0x10] sm:$0xf]
      %v3350 = vld [vmem:[%s246 + $0x14] sm:$0xf]
      %v3351 = vld [vmem:[%s246 + $0x18] sm:$0xf]
      %v3352 = vld [vmem:[%s246 + $0x1c] sm:$0xf]
      %v3353 = vld [vmem:[%s246 + $0x20] sm:$0xf]
      %v3354 = vld [vmem:[%s246 + $0x24] sm:$0xf]
      %v3355 = vld [vmem:[%s246 + $0x28] sm:$0xf]
      %v3356 = vld [vmem:[%s246 + $0x2c] sm:$0xf]
      %v3357 = vld [vmem:[%s246 + $0x30] sm:$0xf]
      %v3358 = vld [vmem:[%s246 + $0x34] sm:$0xf]
      %v3359 = vld [vmem:[%s246 + $0x38] sm:$0xf]
      %v3360 = vld [vmem:[%s246 + $0x3c] sm:$0xf]
      %v3361 = vld [vmem:[%s246 + $0x40] sm:$0xf]
      %v3362 = vld [vmem:[%s246 + $0x44] sm:$0xf]
      %v3363 = vld [vmem:[%s246 + $0x48] sm:$0xf]
      %v3364 = vld [vmem:[%s246 + $0x4c] sm:$0xf]
      %v3365 = vld [vmem:[%s246 + $0x50] sm:$0xf]
      %v3366 = vld [vmem:[%s246 + $0x54] sm:$0xf]
      %v3367 = vld [vmem:[%s246 + $0x58] sm:$0xf]
      %v3368 = vld [vmem:[%s246 + $0x5c] sm:$0xf]
      %v3369 = vld [vmem:[%s246 + $0x60] sm:$0xf]
      %v3370 = vld [vmem:[%s246 + $0x64] sm:$0xf]
      %v3371 = vld [vmem:[%s246 + $0x68] sm:$0xf]
      %v3372 = vld [vmem:[%s246 + $0x6c] sm:$0xf]
      %v3373 = vld [vmem:[%s246 + $0x70] sm:$0xf]
      %v3374 = vld [vmem:[%s246 + $0x74] sm:$0xf]
      %v3375 = vld [vmem:[%s246 + $0x78] sm:$0xf]
      %v3376 = vld [vmem:[%s246 + $0x7c] sm:$0xf]
      %v3377 = vld [vmem:[%s246 + $0x80] sm:$0xf]
      %v3378 = vld [vmem:[%s246 + $0x84] sm:$0xf]
      %v3379 = vld [vmem:[%s246 + $0x88] sm:$0xf]
      %v3380 = vld [vmem:[%s246 + $0x8c] sm:$0xf]
      %v3381 = vld [vmem:[%s246 + $0x90] sm:$0xf]
      %v3382 = vld [vmem:[%s246 + $0x94] sm:$0xf]
      %v3383 = vld [vmem:[%s246 + $0x98] sm:$0xf]
      %v3384 = vld [vmem:[%s246 + $0x9c] sm:$0xf]
      %v3385 = vld [vmem:[%s246 + $0xa0] sm:$0xf]
      %v3386 = vld [vmem:[%s246 + $0xa4] sm:$0xf]
      %v3387 = vld [vmem:[%s246 + $0xa8] sm:$0xf]
      %s3388 = scalar_lea.vmem %s2, 80
      %v3389 = vld [vmem:[%s3388] sm:$0xf]
      %v3390 = vld [vmem:[%s3388 + $0x4] sm:$0xf]
      %v3391 = vld [vmem:[%s3388 + $0x8] sm:$0xf]
      %v3392 = vld [vmem:[%s3388 + $0xc] sm:$0xf]
      %v3434 = vunpack.c.l.b16 %v3347
      %v3435 = vunpack.c.l.b16 %v3348
      %v3436 = vunpack.c.l.b16 %v3349
      %v3437 = vunpack.c.l.b16 %v3350
      %v3438 = vunpack.c.l.b16 %v3351
      %v3439 = vunpack.c.l.b16 %v3352
      %v3440 = vunpack.c.l.b16 %v3353
      %v3441 = vunpack.c.l.b16 %v3354
      %v3442 = vunpack.c.l.b16 %v3355
      %v3443 = vunpack.c.l.b16 %v3356
      %v3444 = vunpack.c.l.b16 %v3357
      %v3445 = vunpack.c.l.b16 %v3358
      %v3446 = vunpack.c.l.b16 %v3359
      %v3447 = vunpack.c.l.b16 %v3360
      %v3448 = vunpack.c.l.b16 %v3361
      %v3449 = vunpack.c.l.b16 %v3362
      %v3450 = vunpack.c.l.b16 %v3363
      %v3451 = vunpack.c.l.b16 %v3364
      %v3452 = vunpack.c.l.b16 %v3365
      %v3453 = vunpack.c.l.b16 %v3366
      %v3454 = vunpack.c.l.b16 %v3367
      %v3455 = vunpack.c.l.b16 %v3368
      %v3456 = vunpack.c.l.b16 %v3369
      %v3457 = vunpack.c.l.b16 %v3370
      %v3458 = vunpack.c.l.b16 %v3371
      %v3459 = vunpack.c.l.b16 %v3372
      %v3460 = vunpack.c.l.b16 %v3373
      %v3461 = vunpack.c.l.b16 %v3374
      %v3462 = vunpack.c.l.b16 %v3375
      %v3463 = vunpack.c.l.b16 %v3376
      %v3464 = vunpack.c.l.b16 %v3377
      %v3465 = vunpack.c.l.b16 %v3378
      %v3466 = vunpack.c.l.b16 %v3379
      %v3467 = vunpack.c.l.b16 %v3380
      %v3468 = vunpack.c.l.b16 %v3381
      %v3469 = vunpack.c.l.b16 %v3382
      %v3470 = vunpack.c.l.b16 %v3383
      %v3471 = vunpack.c.l.b16 %v3384
      %v3472 = vunpack.c.l.b16 %v3385
      %v3473 = vunpack.c.l.b16 %v3386
      %v3474 = vunpack.c.l.b16 %v3387
      %v3475 = vpack.c.b16 %v3435, %v3434
      %v3476 = vpack.c.b16 %v3437, %v3436
      %v3477 = vpack.c.b16 %v3439, %v3438
      %v3478 = vpack.c.b16 %v3441, %v3440
      %v3479 = vpack.c.b16 %v3443, %v3442
      %v3480 = vpack.c.b16 %v3445, %v3444
      %v3481 = vpack.c.b16 %v3447, %v3446
      %v3482 = vpack.c.b16 %v3449, %v3448
      %v3483 = vpack.c.b16 %v3451, %v3450
      %v3484 = vpack.c.b16 %v3453, %v3452
      %v3485 = vpack.c.b16 %v3455, %v3454
      %v3486 = vpack.c.b16 %v3457, %v3456
      %v3487 = vpack.c.b16 %v3459, %v3458
      %v3488 = vpack.c.b16 %v3461, %v3460
      %v3489 = vpack.c.b16 %v3463, %v3462
      %v3490 = vpack.c.b16 %v3465, %v3464
      %v3491 = vpack.c.b16 %v3467, %v3466
      %v3492 = vpack.c.b16 %v3469, %v3468
      %v3493 = vpack.c.b16 %v3471, %v3470
      %v3494 = vpack.c.b16 %v3473, %v3472
      %v3495 = vpack.c.b16 %v3474, %v3474
      %vm3496 = vcmask 1045504
      %v3497 = vrot.slane %v3475, 2
      %v3498 = vrot.slane %v3476, 2
      %v3499 = vsel %vm3496, %v3497, %v3498
      %v3500 = vrot.slane %v3477, 2
      %v3501 = vsel %vm3496, %v3498, %v3500
      %v3502 = vrot.slane %v3478, 2
      %v3503 = vsel %vm3496, %v3500, %v3502
      %v3504 = vrot.slane %v3479, 2
      %v3505 = vsel %vm3496, %v3502, %v3504
      %v3506 = vrot.slane %v3480, 2
      %v3507 = vsel %vm3496, %v3504, %v3506
      %v3508 = vrot.slane %v3481, 2
      %v3509 = vsel %vm3496, %v3506, %v3508
      %v3510 = vrot.slane %v3482, 2
      %v3511 = vsel %vm3496, %v3508, %v3510
      %v3512 = vrot.slane %v3483, 2
      %v3513 = vsel %vm3496, %v3510, %v3512
      %v3514 = vrot.slane %v3484, 2
      %v3515 = vsel %vm3496, %v3512, %v3514
      %v3516 = vrot.slane %v3485, 2
      %v3517 = vsel %vm3496, %v3514, %v3516
      %v3518 = vrot.slane %v3486, 2
      %v3519 = vsel %vm3496, %v3516, %v3518
      %v3520 = vrot.slane %v3487, 2
      %v3521 = vsel %vm3496, %v3518, %v3520
      %v3522 = vrot.slane %v3488, 2
      %v3523 = vsel %vm3496, %v3520, %v3522
      %v3524 = vrot.slane %v3489, 2
      %v3525 = vsel %vm3496, %v3522, %v3524
      %v3526 = vrot.slane %v3490, 2
      %v3527 = vsel %vm3496, %v3524, %v3526
      %v3528 = vrot.slane %v3491, 2
      %v3529 = vsel %vm3496, %v3526, %v3528
      %v3530 = vrot.slane %v3492, 2
      %v3531 = vsel %vm3496, %v3528, %v3530
      %v3532 = vrot.slane %v3493, 2
      %v3533 = vsel %vm3496, %v3530, %v3532
      %v3534 = vrot.slane %v3494, 2
      %v3535 = vsel %vm3496, %v3532, %v3534
      %v3536 = vrot.slane %v3495, 2
      %v3537 = vsel %vm3496, %v3534, %v3536
      %v3542 = vunpack.c.l.b16 %v3389
      %v3543 = vunpack.c.l.b16 %v3390
      %v3544 = vunpack.c.l.b16 %v3391
      %v3545 = vunpack.c.l.b16 %v3392
      %v3546 = vpack.c.b16 %v3543, %v3542
      %v3547 = vpack.c.b16 %v3545, %v3544
      %v3551 = vsel %vm413, %v3499, 0
      %v3554 = vsel %vm413, %v3501, 0
      %v3557 = vsel %vm413, %v3503, 0
      %v3560 = vsel %vm413, %v3505, 0
      %v3563 = vsel %vm413, %v3507, 0
      %v3566 = vsel %vm413, %v3509, 0
      %v3569 = vsel %vm413, %v3511, 0
      %v3572 = vsel %vm413, %v3513, 0
      %v3575 = vsel %vm413, %v3515, 0
      %v3578 = vsel %vm413, %v3517, 0
      %v3581 = vsel %vm413, %v3519, 0
      %v3584 = vsel %vm413, %v3521, 0
      %v3587 = vsel %vm413, %v3523, 0
      %v3590 = vsel %vm413, %v3525, 0
      %v3593 = vsel %vm413, %v3527, 0
      %v3596 = vsel %vm413, %v3529, 0
      %v3599 = vsel %vm413, %v3531, 0
      %v3602 = vsel %vm413, %v3533, 0
      %v3605 = vsel %vm413, %v3535, 0
      %v3608 = vsel %vm413, %v3537, 0
      %v3611 = vsel %vm413, %v3536, 0
      %3613 = vmatprep.subr.bf16.mxu0 0
      %3614 = vmatpush1.bf16.msra.mxu0 %v3546
      %3615 = vmatprep.subr.bf16.mxu0 0
      %3616 = vmatpush1.bf16.msra.mxu0 %v3547
      %3617 = vmatprep.subr.bf16.mxu0 0
      %3618 = vmatpush1.bf16.msra.mxu0 0
      %3619 = vmatprep.subr.bf16.mxu0 0
      %3620 = vmatpush1.bf16.msra.mxu0 0
      %3621 = vmatprep.subr.bf16.mxu0 0
      %3622 = vmatpush1.bf16.msra.mxu0 0
      %3623 = vmatprep.subr.bf16.mxu0 0
      %3624 = vmatpush1.bf16.msra.mxu0 0
      %3625 = vmatprep.subr.bf16.mxu0 0
      %3626 = vmatpush1.bf16.msra.mxu0 0
      %3627 = vmatprep.subr.bf16.mxu0 0
      %3628 = vmatpush1.bf16.msra.mxu0 0
      %3629 = vmatprep.subr.bf16.mxu0 0
      %3630 = vmatpush1.bf16.msra.mxu0 0
      %3631 = vmatprep.subr.bf16.mxu0 0
      %3632 = vmatpush1.bf16.msra.mxu0 0
      %3633 = vmatprep.subr.bf16.mxu0 0
      %3634 = vmatpush1.bf16.msra.mxu0 0
      %3635 = vmatprep.subr.bf16.mxu0 0
      %3636 = vmatpush1.bf16.msra.mxu0 0
      %3637 = vmatprep.subr.bf16.mxu0 0
      %3638 = vmatpush1.bf16.msra.mxu0 0
      %3639 = vmatprep.subr.bf16.mxu0 0
      %3640 = vmatpush1.bf16.msra.mxu0 0
      %3641 = vmatprep.subr.bf16.mxu0 0
      %3642 = vmatpush1.bf16.msra.mxu0 0
      %3643 = vmatprep.subr.bf16.mxu0 0
      %3644 = vmatpush1.bf16.msra.mxu0 0
      %3645 = vmatprep.mubr.bf16.mxu0 0
      %3646 = vmatmul.mubr.bf16.gmra.mrb[0].mxu0 %v3551
      %v3647 = vpop.f32.mrb[0].mxu0
      %v3648 = vadd.f32 0.0, %v3647
      %v3649 = vpop.f32.mrb[0].mxu0
      %v3650 = vpop.f32.mrb[0].mxu0
      %v3651 = vadd.f32 0.0, %v3650
      %v3652 = vpop.f32.mrb[0].mxu0
      %3653 = vmatprep.mubr.bf16.mxu0 0
      %3654 = vmatmul.mubr.bf16.gmra.mrb[0].mxu0 %v3554
      %v3655 = vpop.f32.mrb[0].mxu0
      %v3656 = vadd.f32 0.0, %v3655
      %v3657 = vpop.f32.mrb[0].mxu0
      %v3658 = vpop.f32.mrb[0].mxu0
      %v3659 = vadd.f32 0.0, %v3658
      %v3660 = vpop.f32.mrb[0].mxu0
      %3661 = vmatprep.mubr.bf16.mxu0 0
      %3662 = vmatmul.mubr.bf16.gmra.mrb[0].mxu0 %v3557
      %v3663 = vpop.f32.mrb[0].mxu0
      %v3664 = vadd.f32 0.0, %v3663
      %v3665 = vpop.f32.mrb[0].mxu0
      %v3666 = vpop.f32.mrb[0].mxu0
      %v3667 = vadd.f32 0.0, %v3666
      %v3668 = vpop.f32.mrb[0].mxu0
      %3669 = vmatprep.mubr.bf16.mxu0 0
      %3670 = vmatmul.mubr.bf16.gmra.mrb[0].mxu0 %v3560
      %v3671 = vpop.f32.mrb[0].mxu0
      %v3672 = vadd.f32 0.0, %v3671
      %v3673 = vpop.f32.mrb[0].mxu0
      %v3674 = vpop.f32.mrb[0].mxu0
      %v3675 = vadd.f32 0.0, %v3674
      %v3676 = vpop.f32.mrb[0].mxu0
      %3677 = vmatprep.mubr.bf16.mxu0 0
      %3678 = vmatmul.mubr.bf16.gmra.mrb[0].mxu0 %v3563
      %v3679 = vpop.f32.mrb[0].mxu0
      %v3680 = vadd.f32 0.0, %v3679
      %v3681 = vpop.f32.mrb[0].mxu0
      %v3682 = vpop.f32.mrb[0].mxu0
      %v3683 = vadd.f32 0.0, %v3682
      %v3684 = vpop.f32.mrb[0].mxu0
      %3685 = vmatprep.mubr.bf16.mxu0 0
      %3686 = vmatmul.mubr.bf16.gmra.mrb[0].mxu0 %v3566
      %v3687 = vpop.f32.mrb[0].mxu0
      %v3688 = vadd.f32 0.0, %v3687
      %v3689 = vpop.f32.mrb[0].mxu0
      %v3690 = vpop.f32.mrb[0].mxu0
      %v3691 = vadd.f32 0.0, %v3690
      %v3692 = vpop.f32.mrb[0].mxu0
      %3693 = vmatprep.mubr.bf16.mxu0 0
      %3694 = vmatmul.mubr.bf16.gmra.mrb[0].mxu0 %v3569
      %v3695 = vpop.f32.mrb[0].mxu0
      %v3696 = vadd.f32 0.0, %v3695
      %v3697 = vpop.f32.mrb[0].mxu0
      %v3698 = vpop.f32.mrb[0].mxu0
      %v3699 = vadd.f32 0.0, %v3698
      %v3700 = vpop.f32.mrb[0].mxu0
      %3701 = vmatprep.mubr.bf16.mxu0 0
      %3702 = vmatmul.mubr.bf16.gmra.mrb[0].mxu0 %v3572
      %v3703 = vpop.f32.mrb[0].mxu0
      %v3704 = vadd.f32 0.0, %v3703
      %v3705 = vpop.f32.mrb[0].mxu0
      %v3706 = vpop.f32.mrb[0].mxu0
      %v3707 = vadd.f32 0.0, %v3706
      %v3708 = vpop.f32.mrb[0].mxu0
      %3709 = vmatprep.mubr.bf16.mxu0 0
      %3710 = vmatmul.mubr.bf16.gmra.mrb[0].mxu0 %v3575
      %v3711 = vpop.f32.mrb[0].mxu0
      %v3712 = vadd.f32 0.0, %v3711
      %v3713 = vpop.f32.mrb[0].mxu0
      %v3714 = vpop.f32.mrb[0].mxu0
      %v3715 = vadd.f32 0.0, %v3714
      %v3716 = vpop.f32.mrb[0].mxu0
      %3717 = vmatprep.mubr.bf16.mxu0 0
      %3718 = vmatmul.mubr.bf16.gmra.mrb[0].mxu0 %v3578
      %v3719 = vpop.f32.mrb[0].mxu0
      %v3720 = vadd.f32 0.0, %v3719
      %v3721 = vpop.f32.mrb[0].mxu0
      %v3722 = vpop.f32.mrb[0].mxu0
      %v3723 = vadd.f32 0.0, %v3722
      %v3724 = vpop.f32.mrb[0].mxu0
      %3725 = vmatprep.mubr.bf16.mxu0 0
      %3726 = vmatmul.mubr.bf16.gmra.mrb[0].mxu0 %v3581
      %v3727 = vpop.f32.mrb[0].mxu0
      %v3728 = vadd.f32 0.0, %v3727
      %v3729 = vpop.f32.mrb[0].mxu0
      %v3730 = vpop.f32.mrb[0].mxu0
      %v3731 = vadd.f32 0.0, %v3730
      %v3732 = vpop.f32.mrb[0].mxu0
      %3733 = vmatprep.mubr.bf16.mxu0 0
      %3734 = vmatmul.mubr.bf16.gmra.mrb[0].mxu0 %v3584
      %v3735 = vpop.f32.mrb[0].mxu0
      %v3736 = vadd.f32 0.0, %v3735
      %v3737 = vpop.f32.mrb[0].mxu0
      %v3738 = vpop.f32.mrb[0].mxu0
      %v3739 = vadd.f32 0.0, %v3738
      %v3740 = vpop.f32.mrb[0].mxu0
      %3741 = vmatprep.mubr.bf16.mxu0 0
      %3742 = vmatmul.mubr.bf16.gmra.mrb[0].mxu0 %v3587
      %v3743 = vpop.f32.mrb[0].mxu0
      %v3744 = vadd.f32 0.0, %v3743
      %v3745 = vpop.f32.mrb[0].mxu0
      %v3746 = vpop.f32.mrb[0].mxu0
      %v3747 = vadd.f32 0.0, %v3746
      %v3748 = vpop.f32.mrb[0].mxu0
      %3749 = vmatprep.mubr.bf16.mxu0 0
      %3750 = vmatmul.mubr.bf16.gmra.mrb[0].mxu0 %v3590
      %v3751 = vpop.f32.mrb[0].mxu0
      %v3752 = vadd.f32 0.0, %v3751
      %v3753 = vpop.f32.mrb[0].mxu0
      %v3754 = vpop.f32.mrb[0].mxu0
      %v3755 = vadd.f32 0.0, %v3754
      %v3756 = vpop.f32.mrb[0].mxu0
      %3757 = vmatprep.mubr.bf16.mxu0 0
      %3758 = vmatmul.mubr.bf16.gmra.mrb[0].mxu0 %v3593
      %v3759 = vpop.f32.mrb[0].mxu0
      %v3760 = vadd.f32 0.0, %v3759
      %v3761 = vpop.f32.mrb[0].mxu0
      %v3762 = vpop.f32.mrb[0].mxu0
      %v3763 = vadd.f32 0.0, %v3762
      %v3764 = vpop.f32.mrb[0].mxu0
      %3765 = vmatprep.mubr.bf16.mxu0 0
      %3766 = vmatmul.mubr.bf16.gmra.mrb[0].mxu0 %v3596
      %v3767 = vpop.f32.mrb[0].mxu0
      %v3768 = vadd.f32 0.0, %v3767
      %v3769 = vpop.f32.mrb[0].mxu0
      %v3770 = vpop.f32.mrb[0].mxu0
      %v3771 = vadd.f32 0.0, %v3770
      %v3772 = vpop.f32.mrb[0].mxu0
      %3773 = vmatprep.mubr.bf16.mxu0 0
      %3774 = vmatmul.mubr.bf16.gmra.mrb[0].mxu0 %v3599
      %v3775 = vpop.f32.mrb[0].mxu0
      %v3776 = vadd.f32 0.0, %v3775
      %v3777 = vpop.f32.mrb[0].mxu0
      %v3778 = vpop.f32.mrb[0].mxu0
      %v3779 = vadd.f32 0.0, %v3778
      %v3780 = vpop.f32.mrb[0].mxu0
      %3781 = vmatprep.mubr.bf16.mxu0 0
      %3782 = vmatmul.mubr.bf16.gmra.mrb[0].mxu0 %v3602
      %v3783 = vpop.f32.mrb[0].mxu0
      %v3784 = vadd.f32 0.0, %v3783
      %v3785 = vpop.f32.mrb[0].mxu0
      %v3786 = vpop.f32.mrb[0].mxu0
      %v3787 = vadd.f32 0.0, %v3786
      %v3788 = vpop.f32.mrb[0].mxu0
      %3789 = vmatprep.mubr.bf16.mxu0 0
      %3790 = vmatmul.mubr.bf16.gmra.mrb[0].mxu0 %v3605
      %v3791 = vpop.f32.mrb[0].mxu0
      %v3792 = vadd.f32 0.0, %v3791
      %v3793 = vpop.f32.mrb[0].mxu0
      %v3794 = vpop.f32.mrb[0].mxu0
      %v3795 = vadd.f32 0.0, %v3794
      %v3796 = vpop.f32.mrb[0].mxu0
      %3797 = vmatprep.mubr.bf16.mxu0 0
      %3798 = vmatmul.mubr.bf16.gmra.mrb[0].mxu0 %v3608
      %v3799 = vpop.f32.mrb[0].mxu0
      %v3800 = vadd.f32 0.0, %v3799
      %v3801 = vpop.f32.mrb[0].mxu0
      %v3802 = vpop.f32.mrb[0].mxu0
      %v3803 = vadd.f32 0.0, %v3802
      %v3804 = vpop.f32.mrb[0].mxu0
      %3805 = vmatprep.mubr.bf16.mxu0 0
      %3806 = vmatmul.mubr.bf16.gmra.mrb[0].mxu0 %v3611
      %v3807 = vpop.f32.mrb[0].mxu0
      %v3808 = vadd.f32 0.0, %v3807
      %v3809 = vpop.f32.mrb[0].mxu0
      %v3810 = vpop.f32.mrb[0].mxu0
      %v3811 = vpop.f32.mrb[0].mxu0
      %3812 = vdwg.mxu0
      %v3813 = vld [vmem:[#allocation2] sm:$0xff]
      %v3814 = vld [vmem:[#allocation2 + $0x8] sm:$0xff]
      %v3815 = vld [vmem:[#allocation2 + $0x10] sm:$0xff]
      %v3816 = vld [vmem:[#allocation2 + $0x18] sm:$0xff]
      %v3817 = vld [vmem:[#allocation2 + $0x20] sm:$0xff]
      %v3818 = vld [vmem:[#allocation2 + $0x28] sm:$0xff]
      %v3819 = vld [vmem:[#allocation2 + $0x30] sm:$0xff]
      %v3820 = vld [vmem:[#allocation2 + $0x38] sm:$0xff]
      %v3821 = vld [vmem:[#allocation2 + $0x40] sm:$0xff]
      %v3822 = vld [vmem:[#allocation2 + $0x48] sm:$0xff]
      %v3823 = vld [vmem:[#allocation2 + $0x50] sm:$0xff]
      %v3824 = vld [vmem:[#allocation2 + $0x58] sm:$0xff]
      %v3825 = vld [vmem:[#allocation2 + $0x60] sm:$0xff]
      %v3826 = vld [vmem:[#allocation2 + $0x68] sm:$0xff]
      %v3827 = vld [vmem:[#allocation2 + $0x70] sm:$0xff]
      %v3828 = vld [vmem:[#allocation2 + $0x78] sm:$0xff]
      %v3829 = vld [vmem:[#allocation2 + $0x80] sm:$0xff]
      %v3830 = vld [vmem:[#allocation2 + $0x88] sm:$0xff]
      %v3831 = vld [vmem:[#allocation2 + $0x90] sm:$0xff]
      %v3832 = vld [vmem:[#allocation2 + $0x98] sm:$0xff]
      %v3833 = vld [vmem:[#allocation2 + $0xa0] sm:$0xff]
      %v3834 = vld [vmem:[#allocation2 + $0xa8] sm:$0xff]
      %v3835 = vld [vmem:[#allocation2 + $0xb0] sm:$0xff]
      %v3836 = vld [vmem:[#allocation2 + $0xb8] sm:$0xff]
      %v3837 = vld [vmem:[#allocation2 + $0xc0] sm:$0xff]
      %v3838 = vld [vmem:[#allocation2 + $0xc8] sm:$0xff]
      %v3839 = vld [vmem:[#allocation2 + $0xd0] sm:$0xff]
      %v3840 = vld [vmem:[#allocation2 + $0xd8] sm:$0xff]
      %v3841 = vld [vmem:[#allocation2 + $0xe0] sm:$0xff]
      %v3842 = vld [vmem:[#allocation2 + $0xe8] sm:$0xff]
      %v3843 = vld [vmem:[#allocation2 + $0xf0] sm:$0xff]
      %v3844 = vld [vmem:[#allocation2 + $0xf8] sm:$0xff]
      %v3845 = vld [vmem:[#allocation2 + $0x100] sm:$0xff]
      %v3846 = vld [vmem:[#allocation2 + $0x108] sm:$0xff]
      %v3847 = vld [vmem:[#allocation2 + $0x110] sm:$0xff]
      %v3848 = vld [vmem:[#allocation2 + $0x118] sm:$0xff]
      %v3849 = vld [vmem:[#allocation2 + $0x120] sm:$0xff]
      %v3850 = vld [vmem:[#allocation2 + $0x128] sm:$0xff]
      %v3851 = vld [vmem:[#allocation2 + $0x130] sm:$0xff]
      %v3852 = vld [vmem:[#allocation2 + $0x138] sm:$0xff]
      %v3853 = vld [vmem:[#allocation2 + $0x140] sm:$0xf]
      %v3854 = vadd.f32 %v3813, %v3648
      %v3855 = vadd.f32 %v3814, %v3651
      %v3856 = vadd.f32 %v3815, %v3656
      %v3857 = vadd.f32 %v3816, %v3659
      %v3858 = vadd.f32 %v3817, %v3664
      %v3859 = vadd.f32 %v3818, %v3667
      %v3860 = vadd.f32 %v3819, %v3672
      %v3861 = vadd.f32 %v3820, %v3675
      %v3862 = vadd.f32 %v3821, %v3680
      %v3863 = vadd.f32 %v3822, %v3683
      %v3864 = vadd.f32 %v3823, %v3688
      %v3865 = vadd.f32 %v3824, %v3691
      %v3866 = vadd.f32 %v3825, %v3696
      %v3867 = vadd.f32 %v3826, %v3699
      %v3868 = vadd.f32 %v3827, %v3704
      %v3869 = vadd.f32 %v3828, %v3707
      %v3870 = vadd.f32 %v3829, %v3712
      %v3871 = vadd.f32 %v3830, %v3715
      %v3872 = vadd.f32 %v3831, %v3720
      %v3873 = vadd.f32 %v3832, %v3723
      %v3874 = vadd.f32 %v3833, %v3728
      %v3875 = vadd.f32 %v3834, %v3731
      %v3876 = vadd.f32 %v3835, %v3736
      %v3877 = vadd.f32 %v3836, %v3739
      %v3878 = vadd.f32 %v3837, %v3744
      %v3879 = vadd.f32 %v3838, %v3747
      %v3880 = vadd.f32 %v3839, %v3752
      %v3881 = vadd.f32 %v3840, %v3755
      %v3882 = vadd.f32 %v3841, %v3760
      %v3883 = vadd.f32 %v3842, %v3763
      %v3884 = vadd.f32 %v3843, %v3768
      %v3885 = vadd.f32 %v3844, %v3771
      %v3886 = vadd.f32 %v3845, %v3776
      %v3887 = vadd.f32 %v3846, %v3779
      %v3888 = vadd.f32 %v3847, %v3784
      %v3889 = vadd.f32 %v3848, %v3787
      %v3890 = vadd.f32 %v3849, %v3792
      %v3891 = vadd.f32 %v3850, %v3795
      %v3892 = vadd.f32 %v3851, %v3800
      %v3893 = vadd.f32 %v3852, %v3803
      %v3894 = vadd.f32 %v3853, %v3808
      %3895 = vst.msk [vmem:[#allocation2] sm:$0xff] %vm413, %v3854
      %3896 = vst.msk [vmem:[#allocation2 + $0x8] sm:$0xff] %vm413, %v3855
      %3897 = vst.msk [vmem:[#allocation2 + $0x10] sm:$0xff] %vm413, %v3856
      %3898 = vst.msk [vmem:[#allocation2 + $0x18] sm:$0xff] %vm413, %v3857
      %3899 = vst.msk [vmem:[#allocation2 + $0x20] sm:$0xff] %vm413, %v3858
      %3900 = vst.msk [vmem:[#allocation2 + $0x28] sm:$0xff] %vm413, %v3859
      %3901 = vst.msk [vmem:[#allocation2 + $0x30] sm:$0xff] %vm413, %v3860
      %3902 = vst.msk [vmem:[#allocation2 + $0x38] sm:$0xff] %vm413, %v3861
      %3903 = vst.msk [vmem:[#allocation2 + $0x40] sm:$0xff] %vm413, %v3862
      %3904 = vst.msk [vmem:[#allocation2 + $0x48] sm:$0xff] %vm413, %v3863
      %3905 = vst.msk [vmem:[#allocation2 + $0x50] sm:$0xff] %vm413, %v3864
      %3906 = vst.msk [vmem:[#allocation2 + $0x58] sm:$0xff] %vm413, %v3865
      %3907 = vst.msk [vmem:[#allocation2 + $0x60] sm:$0xff] %vm413, %v3866
      %3908 = vst.msk [vmem:[#allocation2 + $0x68] sm:$0xff] %vm413, %v3867
      %3909 = vst.msk [vmem:[#allocation2 + $0x70] sm:$0xff] %vm413, %v3868
      %3910 = vst.msk [vmem:[#allocation2 + $0x78] sm:$0xff] %vm413, %v3869
      %3911 = vst.msk [vmem:[#allocation2 + $0x80] sm:$0xff] %vm413, %v3870
      %3912 = vst.msk [vmem:[#allocation2 + $0x88] sm:$0xff] %vm413, %v3871
      %3913 = vst.msk [vmem:[#allocation2 + $0x90] sm:$0xff] %vm413, %v3872
      %3914 = vst.msk [vmem:[#allocation2 + $0x98] sm:$0xff] %vm413, %v3873
      %3915 = vst.msk [vmem:[#allocation2 + $0xa0] sm:$0xff] %vm413, %v3874
      %3916 = vst.msk [vmem:[#allocation2 + $0xa8] sm:$0xff] %vm413, %v3875
      %3917 = vst.msk [vmem:[#allocation2 + $0xb0] sm:$0xff] %vm413, %v3876
      %3918 = vst.msk [vmem:[#allocation2 + $0xb8] sm:$0xff] %vm413, %v3877
      %3919 = vst.msk [vmem:[#allocation2 + $0xc0] sm:$0xff] %vm413, %v3878
      %3920 = vst.msk [vmem:[#allocation2 + $0xc8] sm:$0xff] %vm413, %v3879
      %3921 = vst.msk [vmem:[#allocation2 + $0xd0] sm:$0xff] %vm413, %v3880
      %3922 = vst.msk [vmem:[#allocation2 + $0xd8] sm:$0xff] %vm413, %v3881
      %3923 = vst.msk [vmem:[#allocation2 + $0xe0] sm:$0xff] %vm413, %v3882
      %3924 = vst.msk [vmem:[#allocation2 + $0xe8] sm:$0xff] %vm413, %v3883
      %3925 = vst.msk [vmem:[#allocation2 + $0xf0] sm:$0xff] %vm413, %v3884
      %3926 = vst.msk [vmem:[#allocation2 + $0xf8] sm:$0xff] %vm413, %v3885
      %3927 = vst.msk [vmem:[#allocation2 + $0x100] sm:$0xff] %vm413, %v3886
      %3928 = vst.msk [vmem:[#allocation2 + $0x108] sm:$0xff] %vm413, %v3887
      %3929 = vst.msk [vmem:[#allocation2 + $0x110] sm:$0xff] %vm413, %v3888
      %3930 = vst.msk [vmem:[#allocation2 + $0x118] sm:$0xff] %vm413, %v3889
      %3931 = vst.msk [vmem:[#allocation2 + $0x120] sm:$0xff] %vm413, %v3890
      %3932 = vst.msk [vmem:[#allocation2 + $0x128] sm:$0xff] %vm413, %v3891
      %3933 = vst.msk [vmem:[#allocation2 + $0x130] sm:$0xff] %vm413, %v3892
      %3934 = vst.msk [vmem:[#allocation2 + $0x138] sm:$0xff] %vm413, %v3893
      %3935 = vst.msk [vmem:[#allocation2 + $0x140] sm:$0xf] %vm717, %v3894
      %v3936 = vld [vmem:[%s246 + $0x10] sm:$0xc]
      %v3937 = vld [vmem:[%s246 + $0x14] sm:$0xf]
      %v3938 = vld [vmem:[%s246 + $0x18] sm:$0xf]
      %v3939 = vld [vmem:[%s246 + $0x1c] sm:$0xf]
      %v3940 = vld [vmem:[%s246 + $0x20] sm:$0xf]
      %v3941 = vld [vmem:[%s246 + $0x24] sm:$0xf]
      %v3942 = vld [vmem:[%s246 + $0x28] sm:$0xf]
      %v3943 = vld [vmem:[%s246 + $0x2c] sm:$0xf]
      %v3944 = vld [vmem:[%s246 + $0x30] sm:$0xf]
      %v3945 = vld [vmem:[%s246 + $0x34] sm:$0xf]
      %v3946 = vld [vmem:[%s246 + $0x38] sm:$0xf]
      %v3947 = vld [vmem:[%s246 + $0x3c] sm:$0xf]
      %v3948 = vld [vmem:[%s246 + $0x40] sm:$0xf]
      %v3949 = vld [vmem:[%s246 + $0x44] sm:$0xf]
      %v3950 = vld [vmem:[%s246 + $0x48] sm:$0xf]
      %v3951 = vld [vmem:[%s246 + $0x4c] sm:$0xf]
      %v3952 = vld [vmem:[%s246 + $0x50] sm:$0xf]
      %v3953 = vld [vmem:[%s246 + $0x54] sm:$0xf]
      %v3954 = vld [vmem:[%s246 + $0x58] sm:$0xf]
      %v3955 = vld [vmem:[%s246 + $0x5c] sm:$0xf]
      %v3956 = vld [vmem:[%s246 + $0x60] sm:$0xf]
      %v3957 = vld [vmem:[%s246 + $0x64] sm:$0xf]
      %v3958 = vld [vmem:[%s246 + $0x68] sm:$0xf]
      %v3959 = vld [vmem:[%s246 + $0x6c] sm:$0xf]
      %v3960 = vld [vmem:[%s246 + $0x70] sm:$0xf]
      %v3961 = vld [vmem:[%s246 + $0x74] sm:$0xf]
      %v3962 = vld [vmem:[%s246 + $0x78] sm:$0xf]
      %v3963 = vld [vmem:[%s246 + $0x7c] sm:$0xf]
      %v3964 = vld [vmem:[%s246 + $0x80] sm:$0xf]
      %v3965 = vld [vmem:[%s246 + $0x84] sm:$0xf]
      %v3966 = vld [vmem:[%s246 + $0x88] sm:$0xf]
      %v3967 = vld [vmem:[%s246 + $0x8c] sm:$0xf]
      %v3968 = vld [vmem:[%s246 + $0x90] sm:$0xf]
      %v3969 = vld [vmem:[%s246 + $0x94] sm:$0xf]
      %v3970 = vld [vmem:[%s246 + $0x98] sm:$0xf]
      %v3971 = vld [vmem:[%s246 + $0x9c] sm:$0xf]
      %v3972 = vld [vmem:[%s246 + $0xa0] sm:$0xf]
      %v3973 = vld [vmem:[%s246 + $0xa4] sm:$0xf]
      %v3974 = vld [vmem:[%s246 + $0xa8] sm:$0xf]
      %v3975 = vld [vmem:[%s246 + $0xac] sm:$0xf]
      %v3976 = vld [vmem:[%s246 + $0xb0] sm:$0xf]
      %s3977 = scalar_lea.vmem %s2, 96
      %v3978 = vld [vmem:[%s3977] sm:$0xf]
      %v3979 = vld [vmem:[%s3977 + $0x4] sm:$0xf]
      %v3980 = vld [vmem:[%s3977 + $0x8] sm:$0xf]
      %v3981 = vld [vmem:[%s3977 + $0xc] sm:$0xf]
      %v4023 = vunpack.c.l.b16 %v3936
      %v4024 = vunpack.c.l.b16 %v3937
      %v4025 = vunpack.c.l.b16 %v3938
      %v4026 = vunpack.c.l.b16 %v3939
      %v4027 = vunpack.c.l.b16 %v3940
      %v4028 = vunpack.c.l.b16 %v3941
      %v4029 = vunpack.c.l.b16 %v3942
      %v4030 = vunpack.c.l.b16 %v3943
      %v4031 = vunpack.c.l.b16 %v3944
      %v4032 = vunpack.c.l.b16 %v3945
      %v4033 = vunpack.c.l.b16 %v3946
      %v4034 = vunpack.c.l.b16 %v3947
      %v4035 = vunpack.c.l.b16 %v3948
      %v4036 = vunpack.c.l.b16 %v3949
      %v4037 = vunpack.c.l.b16 %v3950
      %v4038 = vunpack.c.l.b16 %v3951
      %v4039 = vunpack.c.l.b16 %v3952
      %v4040 = vunpack.c.l.b16 %v3953
      %v4041 = vunpack.c.l.b16 %v3954
      %v4042 = vunpack.c.l.b16 %v3955
      %v4043 = vunpack.c.l.b16 %v3956
      %v4044 = vunpack.c.l.b16 %v3957
      %v4045 = vunpack.c.l.b16 %v3958
      %v4046 = vunpack.c.l.b16 %v3959
      %v4047 = vunpack.c.l.b16 %v3960
      %v4048 = vunpack.c.l.b16 %v3961
      %v4049 = vunpack.c.l.b16 %v3962
      %v4050 = vunpack.c.l.b16 %v3963
      %v4051 = vunpack.c.l.b16 %v3964
      %v4052 = vunpack.c.l.b16 %v3965
      %v4053 = vunpack.c.l.b16 %v3966
      %v4054 = vunpack.c.l.b16 %v3967
      %v4055 = vunpack.c.l.b16 %v3968
      %v4056 = vunpack.c.l.b16 %v3969
      %v4057 = vunpack.c.l.b16 %v3970
      %v4058 = vunpack.c.l.b16 %v3971
      %v4059 = vunpack.c.l.b16 %v3972
      %v4060 = vunpack.c.l.b16 %v3973
      %v4061 = vunpack.c.l.b16 %v3974
      %v4062 = vunpack.c.l.b16 %v3975
      %v4063 = vunpack.c.l.b16 %v3976
      %v4064 = vpack.c.b16 %v4024, %v4023
      %v4065 = vpack.c.b16 %v4026, %v4025
      %v4066 = vpack.c.b16 %v4028, %v4027
      %v4067 = vpack.c.b16 %v4030, %v4029
      %v4068 = vpack.c.b16 %v4032, %v4031
      %v4069 = vpack.c.b16 %v4034, %v4033
      %v4070 = vpack.c.b16 %v4036, %v4035
      %v4071 = vpack.c.b16 %v4038, %v4037
      %v4072 = vpack.c.b16 %v4040, %v4039
      %v4073 = vpack.c.b16 %v4042, %v4041
      %v4074 = vpack.c.b16 %v4044, %v4043
      %v4075 = vpack.c.b16 %v4046, %v4045
      %v4076 = vpack.c.b16 %v4048, %v4047
      %v4077 = vpack.c.b16 %v4050, %v4049
      %v4078 = vpack.c.b16 %v4052, %v4051
      %v4079 = vpack.c.b16 %v4054, %v4053
      %v4080 = vpack.c.b16 %v4056, %v4055
      %v4081 = vpack.c.b16 %v4058, %v4057
      %v4082 = vpack.c.b16 %v4060, %v4059
      %v4083 = vpack.c.b16 %v4062, %v4061
      %v4084 = vpack.c.b16 %v4063, %v4063
      %v4085 = vrot.slane %v4064, 2
      %v4086 = vrot.slane %v4065, 2
      %v4087 = vsel %vm3496, %v4085, %v4086
      %v4088 = vrot.slane %v4066, 2
      %v4089 = vsel %vm3496, %v4086, %v4088
      %v4090 = vrot.slane %v4067, 2
      %v4091 = vsel %vm3496, %v4088, %v4090
      %v4092 = vrot.slane %v4068, 2
      %v4093 = vsel %vm3496, %v4090, %v4092
      %v4094 = vrot.slane %v4069, 2
      %v4095 = vsel %vm3496, %v4092, %v4094
      %v4096 = vrot.slane %v4070, 2
      %v4097 = vsel %vm3496, %v4094, %v4096
      %v4098 = vrot.slane %v4071, 2
      %v4099 = vsel %vm3496, %v4096, %v4098
      %v4100 = vrot.slane %v4072, 2
      %v4101 = vsel %vm3496, %v4098, %v4100
      %v4102 = vrot.slane %v4073, 2
      %v4103 = vsel %vm3496, %v4100, %v4102
      %v4104 = vrot.slane %v4074, 2
      %v4105 = vsel %vm3496, %v4102, %v4104
      %v4106 = vrot.slane %v4075, 2
      %v4107 = vsel %vm3496, %v4104, %v4106
      %v4108 = vrot.slane %v4076, 2
      %v4109 = vsel %vm3496, %v4106, %v4108
      %v4110 = vrot.slane %v4077, 2
      %v4111 = vsel %vm3496, %v4108, %v4110
      %v4112 = vrot.slane %v4078, 2
      %v4113 = vsel %vm3496, %v4110, %v4112
      %v4114 = vrot.slane %v4079, 2
      %v4115 = vsel %vm3496, %v4112, %v4114
      %v4116 = vrot.slane %v4080, 2
      %v4117 = vsel %vm3496, %v4114, %v4116
      %v4118 = vrot.slane %v4081, 2
      %v4119 = vsel %vm3496, %v4116, %v4118
      %v4120 = vrot.slane %v4082, 2
      %v4121 = vsel %vm3496, %v4118, %v4120
      %v4122 = vrot.slane %v4083, 2
      %v4123 = vsel %vm3496, %v4120, %v4122
      %v4124 = vrot.slane %v4084, 2
      %v4125 = vsel %vm3496, %v4122, %v4124
      %v4130 = vunpack.c.l.b16 %v3978
      %v4131 = vunpack.c.l.b16 %v3979
      %v4132 = vunpack.c.l.b16 %v3980
      %v4133 = vunpack.c.l.b16 %v3981
      %v4134 = vpack.c.b16 %v4131, %v4130
      %v4135 = vpack.c.b16 %v4133, %v4132
      %v4139 = vsel %vm413, %v4087, 0
      %v4142 = vsel %vm413, %v4089, 0
      %v4145 = vsel %vm413, %v4091, 0
      %v4148 = vsel %vm413, %v4093, 0
      %v4151 = vsel %vm413, %v4095, 0
      %v4154 = vsel %vm413, %v4097, 0
      %v4157 = vsel %vm413, %v4099, 0
      %v4160 = vsel %vm413, %v4101, 0
      %v4163 = vsel %vm413, %v4103, 0
      %v4166 = vsel %vm413, %v4105, 0
      %v4169 = vsel %vm413, %v4107, 0
      %v4172 = vsel %vm413, %v4109, 0
      %v4175 = vsel %vm413, %v4111, 0
      %v4178 = vsel %vm413, %v4113, 0
      %v4181 = vsel %vm413, %v4115, 0
      %v4184 = vsel %vm413, %v4117, 0
      %v4187 = vsel %vm413, %v4119, 0
      %v4190 = vsel %vm413, %v4121, 0
      %v4193 = vsel %vm413, %v4123, 0
      %v4196 = vsel %vm413, %v4125, 0
      %v4199 = vsel %vm413, %v4124, 0
      %4201 = vmatprep.subr.bf16.mxu0 0
      %4202 = vmatpush1.bf16.msra.mxu0 %v4134
      %4203 = vmatprep.subr.bf16.mxu0 0
      %4204 = vmatpush1.bf16.msra.mxu0 %v4135
      %4205 = vmatprep.subr.bf16.mxu0 0
      %4206 = vmatpush1.bf16.msra.mxu0 0
      %4207 = vmatprep.subr.bf16.mxu0 0
      %4208 = vmatpush1.bf16.msra.mxu0 0
      %4209 = vmatprep.subr.bf16.mxu0 0
      %4210 = vmatpush1.bf16.msra.mxu0 0
      %4211 = vmatprep.subr.bf16.mxu0 0
      %4212 = vmatpush1.bf16.msra.mxu0 0
      %4213 = vmatprep.subr.bf16.mxu0 0
      %4214 = vmatpush1.bf16.msra.mxu0 0
      %4215 = vmatprep.subr.bf16.mxu0 0
      %4216 = vmatpush1.bf16.msra.mxu0 0
      %4217 = vmatprep.subr.bf16.mxu0 0
      %4218 = vmatpush1.bf16.msra.mxu0 0
      %4219 = vmatprep.subr.bf16.mxu0 0
      %4220 = vmatpush1.bf16.msra.mxu0 0
      %4221 = vmatprep.subr.bf16.mxu0 0
      %4222 = vmatpush1.bf16.msra.mxu0 0
      %4223 = vmatprep.subr.bf16.mxu0 0
      %4224 = vmatpush1.bf16.msra.mxu0 0
      %4225 = vmatprep.subr.bf16.mxu0 0
      %4226 = vmatpush1.bf16.msra.mxu0 0
      %4227 = vmatprep.subr.bf16.mxu0 0
      %4228 = vmatpush1.bf16.msra.mxu0 0
      %4229 = vmatprep.subr.bf16.mxu0 0
      %4230 = vmatpush1.bf16.msra.mxu0 0
      %4231 = vmatprep.subr.bf16.mxu0 0
      %4232 = vmatpush1.bf16.msra.mxu0 0
      %4233 = vmatprep.mubr.bf16.mxu0 0
      %4234 = vmatmul.mubr.bf16.gmra.mrb[0].mxu0 %v4139
      %v4235 = vpop.f32.mrb[0].mxu0
      %v4236 = vadd.f32 0.0, %v4235
      %v4237 = vpop.f32.mrb[0].mxu0
      %v4238 = vpop.f32.mrb[0].mxu0
      %v4239 = vadd.f32 0.0, %v4238
      %v4240 = vpop.f32.mrb[0].mxu0
      %4241 = vmatprep.mubr.bf16.mxu0 0
      %4242 = vmatmul.mubr.bf16.gmra.mrb[0].mxu0 %v4142
      %v4243 = vpop.f32.mrb[0].mxu0
      %v4244 = vadd.f32 0.0, %v4243
      %v4245 = vpop.f32.mrb[0].mxu0
      %v4246 = vpop.f32.mrb[0].mxu0
      %v4247 = vadd.f32 0.0, %v4246
      %v4248 = vpop.f32.mrb[0].mxu0
      %4249 = vmatprep.mubr.bf16.mxu0 0
      %4250 = vmatmul.mubr.bf16.gmra.mrb[0].mxu0 %v4145
      %v4251 = vpop.f32.mrb[0].mxu0
      %v4252 = vadd.f32 0.0, %v4251
      %v4253 = vpop.f32.mrb[0].mxu0
      %v4254 = vpop.f32.mrb[0].mxu0
      %v4255 = vadd.f32 0.0, %v4254
      %v4256 = vpop.f32.mrb[0].mxu0
      %4257 = vmatprep.mubr.bf16.mxu0 0
      %4258 = vmatmul.mubr.bf16.gmra.mrb[0].mxu0 %v4148
      %v4259 = vpop.f32.mrb[0].mxu0
      %v4260 = vadd.f32 0.0, %v4259
      %v4261 = vpop.f32.mrb[0].mxu0
      %v4262 = vpop.f32.mrb[0].mxu0
      %v4263 = vadd.f32 0.0, %v4262
      %v4264 = vpop.f32.mrb[0].mxu0
      %4265 = vmatprep.mubr.bf16.mxu0 0
      %4266 = vmatmul.mubr.bf16.gmra.mrb[0].mxu0 %v4151
      %v4267 = vpop.f32.mrb[0].mxu0
      %v4268 = vadd.f32 0.0, %v4267
      %v4269 = vpop.f32.mrb[0].mxu0
      %v4270 = vpop.f32.mrb[0].mxu0
      %v4271 = vadd.f32 0.0, %v4270
      %v4272 = vpop.f32.mrb[0].mxu0
      %4273 = vmatprep.mubr.bf16.mxu0 0
      %4274 = vmatmul.mubr.bf16.gmra.mrb[0].mxu0 %v4154
      %v4275 = vpop.f32.mrb[0].mxu0
      %v4276 = vadd.f32 0.0, %v4275
      %v4277 = vpop.f32.mrb[0].mxu0
      %v4278 = vpop.f32.mrb[0].mxu0
      %v4279 = vadd.f32 0.0, %v4278
      %v4280 = vpop.f32.mrb[0].mxu0
      %4281 = vmatprep.mubr.bf16.mxu0 0
      %4282 = vmatmul.mubr.bf16.gmra.mrb[0].mxu0 %v4157
      %v4283 = vpop.f32.mrb[0].mxu0
      %v4284 = vadd.f32 0.0, %v4283
      %v4285 = vpop.f32.mrb[0].mxu0
      %v4286 = vpop.f32.mrb[0].mxu0
      %v4287 = vadd.f32 0.0, %v4286
      %v4288 = vpop.f32.mrb[0].mxu0
      %4289 = vmatprep.mubr.bf16.mxu0 0
      %4290 = vmatmul.mubr.bf16.gmra.mrb[0].mxu0 %v4160
      %v4291 = vpop.f32.mrb[0].mxu0
      %v4292 = vadd.f32 0.0, %v4291
      %v4293 = vpop.f32.mrb[0].mxu0
      %v4294 = vpop.f32.mrb[0].mxu0
      %v4295 = vadd.f32 0.0, %v4294
      %v4296 = vpop.f32.mrb[0].mxu0
      %4297 = vmatprep.mubr.bf16.mxu0 0
      %4298 = vmatmul.mubr.bf16.gmra.mrb[0].mxu0 %v4163
      %v4299 = vpop.f32.mrb[0].mxu0
      %v4300 = vadd.f32 0.0, %v4299
      %v4301 = vpop.f32.mrb[0].mxu0
      %v4302 = vpop.f32.mrb[0].mxu0
      %v4303 = vadd.f32 0.0, %v4302
      %v4304 = vpop.f32.mrb[0].mxu0
      %4305 = vmatprep.mubr.bf16.mxu0 0
      %4306 = vmatmul.mubr.bf16.gmra.mrb[0].mxu0 %v4166
      %v4307 = vpop.f32.mrb[0].mxu0
      %v4308 = vadd.f32 0.0, %v4307
      %v4309 = vpop.f32.mrb[0].mxu0
      %v4310 = vpop.f32.mrb[0].mxu0
      %v4311 = vadd.f32 0.0, %v4310
      %v4312 = vpop.f32.mrb[0].mxu0
      %4313 = vmatprep.mubr.bf16.mxu0 0
      %4314 = vmatmul.mubr.bf16.gmra.mrb[0].mxu0 %v4169
      %v4315 = vpop.f32.mrb[0].mxu0
      %v4316 = vadd.f32 0.0, %v4315
      %v4317 = vpop.f32.mrb[0].mxu0
      %v4318 = vpop.f32.mrb[0].mxu0
      %v4319 = vadd.f32 0.0, %v4318
      %v4320 = vpop.f32.mrb[0].mxu0
      %4321 = vmatprep.mubr.bf16.mxu0 0
      %4322 = vmatmul.mubr.bf16.gmra.mrb[0].mxu0 %v4172
      %v4323 = vpop.f32.mrb[0].mxu0
      %v4324 = vadd.f32 0.0, %v4323
      %v4325 = vpop.f32.mrb[0].mxu0
      %v4326 = vpop.f32.mrb[0].mxu0
      %v4327 = vadd.f32 0.0, %v4326
      %v4328 = vpop.f32.mrb[0].mxu0
      %4329 = vmatprep.mubr.bf16.mxu0 0
      %4330 = vmatmul.mubr.bf16.gmra.mrb[0].mxu0 %v4175
      %v4331 = vpop.f32.mrb[0].mxu0
      %v4332 = vadd.f32 0.0, %v4331
      %v4333 = vpop.f32.mrb[0].mxu0
      %v4334 = vpop.f32.mrb[0].mxu0
      %v4335 = vadd.f32 0.0, %v4334
      %v4336 = vpop.f32.mrb[0].mxu0
      %4337 = vmatprep.mubr.bf16.mxu0 0
      %4338 = vmatmul.mubr.bf16.gmra.mrb[0].mxu0 %v4178
      %v4339 = vpop.f32.mrb[0].mxu0
      %v4340 = vadd.f32 0.0, %v4339
      %v4341 = vpop.f32.mrb[0].mxu0
      %v4342 = vpop.f32.mrb[0].mxu0
      %v4343 = vadd.f32 0.0, %v4342
      %v4344 = vpop.f32.mrb[0].mxu0
      %4345 = vmatprep.mubr.bf16.mxu0 0
      %4346 = vmatmul.mubr.bf16.gmra.mrb[0].mxu0 %v4181
      %v4347 = vpop.f32.mrb[0].mxu0
      %v4348 = vadd.f32 0.0, %v4347
      %v4349 = vpop.f32.mrb[0].mxu0
      %v4350 = vpop.f32.mrb[0].mxu0
      %v4351 = vadd.f32 0.0, %v4350
      %v4352 = vpop.f32.mrb[0].mxu0
      %4353 = vmatprep.mubr.bf16.mxu0 0
      %4354 = vmatmul.mubr.bf16.gmra.mrb[0].mxu0 %v4184
      %v4355 = vpop.f32.mrb[0].mxu0
      %v4356 = vadd.f32 0.0, %v4355
      %v4357 = vpop.f32.mrb[0].mxu0
      %v4358 = vpop.f32.mrb[0].mxu0
      %v4359 = vadd.f32 0.0, %v4358
      %v4360 = vpop.f32.mrb[0].mxu0
      %4361 = vmatprep.mubr.bf16.mxu0 0
      %4362 = vmatmul.mubr.bf16.gmra.mrb[0].mxu0 %v4187
      %v4363 = vpop.f32.mrb[0].mxu0
      %v4364 = vadd.f32 0.0, %v4363
      %v4365 = vpop.f32.mrb[0].mxu0
      %v4366 = vpop.f32.mrb[0].mxu0
      %v4367 = vadd.f32 0.0, %v4366
      %v4368 = vpop.f32.mrb[0].mxu0
      %4369 = vmatprep.mubr.bf16.mxu0 0
      %4370 = vmatmul.mubr.bf16.gmra.mrb[0].mxu0 %v4190
      %v4371 = vpop.f32.mrb[0].mxu0
      %v4372 = vadd.f32 0.0, %v4371
      %v4373 = vpop.f32.mrb[0].mxu0
      %v4374 = vpop.f32.mrb[0].mxu0
      %v4375 = vadd.f32 0.0, %v4374
      %v4376 = vpop.f32.mrb[0].mxu0
      %4377 = vmatprep.mubr.bf16.mxu0 0
      %4378 = vmatmul.mubr.bf16.gmra.mrb[0].mxu0 %v4193
      %v4379 = vpop.f32.mrb[0].mxu0
      %v4380 = vadd.f32 0.0, %v4379
      %v4381 = vpop.f32.mrb[0].mxu0
      %v4382 = vpop.f32.mrb[0].mxu0
      %v4383 = vadd.f32 0.0, %v4382
      %v4384 = vpop.f32.mrb[0].mxu0
      %4385 = vmatprep.mubr.bf16.mxu0 0
      %4386 = vmatmul.mubr.bf16.gmra.mrb[0].mxu0 %v4196
      %v4387 = vpop.f32.mrb[0].mxu0
      %v4388 = vadd.f32 0.0, %v4387
      %v4389 = vpop.f32.mrb[0].mxu0
      %v4390 = vpop.f32.mrb[0].mxu0
      %v4391 = vadd.f32 0.0, %v4390
      %v4392 = vpop.f32.mrb[0].mxu0
      %4393 = vmatprep.mubr.bf16.mxu0 0
      %4394 = vmatmul.mubr.bf16.gmra.mrb[0].mxu0 %v4199
      %v4395 = vpop.f32.mrb[0].mxu0
      %v4396 = vadd.f32 0.0, %v4395
      %v4397 = vpop.f32.mrb[0].mxu0
      %v4398 = vpop.f32.mrb[0].mxu0
      %v4399 = vpop.f32.mrb[0].mxu0
      %4400 = vdwg.mxu0
      %v4401 = vld [vmem:[#allocation2] sm:$0xff]
      %v4402 = vld [vmem:[#allocation2 + $0x8] sm:$0xff]
      %v4403 = vld [vmem:[#allocation2 + $0x10] sm:$0xff]
      %v4404 = vld [vmem:[#allocation2 + $0x18] sm:$0xff]
      %v4405 = vld [vmem:[#allocation2 + $0x20] sm:$0xff]
      %v4406 = vld [vmem:[#allocation2 + $0x28] sm:$0xff]
      %v4407 = vld [vmem:[#allocation2 + $0x30] sm:$0xff]
      %v4408 = vld [vmem:[#allocation2 + $0x38] sm:$0xff]
      %v4409 = vld [vmem:[#allocation2 + $0x40] sm:$0xff]
      %v4410 = vld [vmem:[#allocation2 + $0x48] sm:$0xff]
      %v4411 = vld [vmem:[#allocation2 + $0x50] sm:$0xff]
      %v4412 = vld [vmem:[#allocation2 + $0x58] sm:$0xff]
      %v4413 = vld [vmem:[#allocation2 + $0x60] sm:$0xff]
      %v4414 = vld [vmem:[#allocation2 + $0x68] sm:$0xff]
      %v4415 = vld [vmem:[#allocation2 + $0x70] sm:$0xff]
      %v4416 = vld [vmem:[#allocation2 + $0x78] sm:$0xff]
      %v4417 = vld [vmem:[#allocation2 + $0x80] sm:$0xff]
      %v4418 = vld [vmem:[#allocation2 + $0x88] sm:$0xff]
      %v4419 = vld [vmem:[#allocation2 + $0x90] sm:$0xff]
      %v4420 = vld [vmem:[#allocation2 + $0x98] sm:$0xff]
      %v4421 = vld [vmem:[#allocation2 + $0xa0] sm:$0xff]
      %v4422 = vld [vmem:[#allocation2 + $0xa8] sm:$0xff]
      %v4423 = vld [vmem:[#allocation2 + $0xb0] sm:$0xff]
      %v4424 = vld [vmem:[#allocation2 + $0xb8] sm:$0xff]
      %v4425 = vld [vmem:[#allocation2 + $0xc0] sm:$0xff]
      %v4426 = vld [vmem:[#allocation2 + $0xc8] sm:$0xff]
      %v4427 = vld [vmem:[#allocation2 + $0xd0] sm:$0xff]
      %v4428 = vld [vmem:[#allocation2 + $0xd8] sm:$0xff]
      %v4429 = vld [vmem:[#allocation2 + $0xe0] sm:$0xff]
      %v4430 = vld [vmem:[#allocation2 + $0xe8] sm:$0xff]
      %v4431 = vld [vmem:[#allocation2 + $0xf0] sm:$0xff]
      %v4432 = vld [vmem:[#allocation2 + $0xf8] sm:$0xff]
      %v4433 = vld [vmem:[#allocation2 + $0x100] sm:$0xff]
      %v4434 = vld [vmem:[#allocation2 + $0x108] sm:$0xff]
      %v4435 = vld [vmem:[#allocation2 + $0x110] sm:$0xff]
      %v4436 = vld [vmem:[#allocation2 + $0x118] sm:$0xff]
      %v4437 = vld [vmem:[#allocation2 + $0x120] sm:$0xff]
      %v4438 = vld [vmem:[#allocation2 + $0x128] sm:$0xff]
      %v4439 = vld [vmem:[#allocation2 + $0x130] sm:$0xff]
      %v4440 = vld [vmem:[#allocation2 + $0x138] sm:$0xff]
      %v4441 = vld [vmem:[#allocation2 + $0x140] sm:$0xf]
      %v4442 = vadd.f32 %v4401, %v4236
      %v4443 = vadd.f32 %v4402, %v4239
      %v4444 = vadd.f32 %v4403, %v4244
      %v4445 = vadd.f32 %v4404, %v4247
      %v4446 = vadd.f32 %v4405, %v4252
      %v4447 = vadd.f32 %v4406, %v4255
      %v4448 = vadd.f32 %v4407, %v4260
      %v4449 = vadd.f32 %v4408, %v4263
      %v4450 = vadd.f32 %v4409, %v4268
      %v4451 = vadd.f32 %v4410, %v4271
      %v4452 = vadd.f32 %v4411, %v4276
      %v4453 = vadd.f32 %v4412, %v4279
      %v4454 = vadd.f32 %v4413, %v4284
      %v4455 = vadd.f32 %v4414, %v4287
      %v4456 = vadd.f32 %v4415, %v4292
      %v4457 = vadd.f32 %v4416, %v4295
      %v4458 = vadd.f32 %v4417, %v4300
      %v4459 = vadd.f32 %v4418, %v4303
      %v4460 = vadd.f32 %v4419, %v4308
      %v4461 = vadd.f32 %v4420, %v4311
      %v4462 = vadd.f32 %v4421, %v4316
      %v4463 = vadd.f32 %v4422, %v4319
      %v4464 = vadd.f32 %v4423, %v4324
      %v4465 = vadd.f32 %v4424, %v4327
      %v4466 = vadd.f32 %v4425, %v4332
      %v4467 = vadd.f32 %v4426, %v4335
      %v4468 = vadd.f32 %v4427, %v4340
      %v4469 = vadd.f32 %v4428, %v4343
      %v4470 = vadd.f32 %v4429, %v4348
      %v4471 = vadd.f32 %v4430, %v4351
      %v4472 = vadd.f32 %v4431, %v4356
      %v4473 = vadd.f32 %v4432, %v4359
      %v4474 = vadd.f32 %v4433, %v4364
      %v4475 = vadd.f32 %v4434, %v4367
      %v4476 = vadd.f32 %v4435, %v4372
      %v4477 = vadd.f32 %v4436, %v4375
      %v4478 = vadd.f32 %v4437, %v4380
      %v4479 = vadd.f32 %v4438, %v4383
      %v4480 = vadd.f32 %v4439, %v4388
      %v4481 = vadd.f32 %v4440, %v4391
      %v4482 = vadd.f32 %v4441, %v4396
      %4483 = vst.msk [vmem:[#allocation2] sm:$0xff] %vm413, %v4442
      %4484 = vst.msk [vmem:[#allocation2 + $0x8] sm:$0xff] %vm413, %v4443
      %4485 = vst.msk [vmem:[#allocation2 + $0x10] sm:$0xff] %vm413, %v4444
      %4486 = vst.msk [vmem:[#allocation2 + $0x18] sm:$0xff] %vm413, %v4445
      %4487 = vst.msk [vmem:[#allocation2 + $0x20] sm:$0xff] %vm413, %v4446
      %4488 = vst.msk [vmem:[#allocation2 + $0x28] sm:$0xff] %vm413, %v4447
      %4489 = vst.msk [vmem:[#allocation2 + $0x30] sm:$0xff] %vm413, %v4448
      %4490 = vst.msk [vmem:[#allocation2 + $0x38] sm:$0xff] %vm413, %v4449
      %4491 = vst.msk [vmem:[#allocation2 + $0x40] sm:$0xff] %vm413, %v4450
      %4492 = vst.msk [vmem:[#allocation2 + $0x48] sm:$0xff] %vm413, %v4451
      %4493 = vst.msk [vmem:[#allocation2 + $0x50] sm:$0xff] %vm413, %v4452
      %4494 = vst.msk [vmem:[#allocation2 + $0x58] sm:$0xff] %vm413, %v4453
      %4495 = vst.msk [vmem:[#allocation2 + $0x60] sm:$0xff] %vm413, %v4454
      %4496 = vst.msk [vmem:[#allocation2 + $0x68] sm:$0xff] %vm413, %v4455
      %4497 = vst.msk [vmem:[#allocation2 + $0x70] sm:$0xff] %vm413, %v4456
      %4498 = vst.msk [vmem:[#allocation2 + $0x78] sm:$0xff] %vm413, %v4457
      %4499 = vst.msk [vmem:[#allocation2 + $0x80] sm:$0xff] %vm413, %v4458
      %4500 = vst.msk [vmem:[#allocation2 + $0x88] sm:$0xff] %vm413, %v4459
      %4501 = vst.msk [vmem:[#allocation2 + $0x90] sm:$0xff] %vm413, %v4460
      %4502 = vst.msk [vmem:[#allocation2 + $0x98] sm:$0xff] %vm413, %v4461
      %4503 = vst.msk [vmem:[#allocation2 + $0xa0] sm:$0xff] %vm413, %v4462
      %4504 = vst.msk [vmem:[#allocation2 + $0xa8] sm:$0xff] %vm413, %v4463
      %4505 = vst.msk [vmem:[#allocation2 + $0xb0] sm:$0xff] %vm413, %v4464
      %4506 = vst.msk [vmem:[#allocation2 + $0xb8] sm:$0xff] %vm413, %v4465
      %4507 = vst.msk [vmem:[#allocation2 + $0xc0] sm:$0xff] %vm413, %v4466
      %4508 = vst.msk [vmem:[#allocation2 + $0xc8] sm:$0xff] %vm413, %v4467
      %4509 = vst.msk [vmem:[#allocation2 + $0xd0] sm:$0xff] %vm413, %v4468
      %4510 = vst.msk [vmem:[#allocation2 + $0xd8] sm:$0xff] %vm413, %v4469
      %4511 = vst.msk [vmem:[#allocation2 + $0xe0] sm:$0xff] %vm413, %v4470
      %4512 = vst.msk [vmem:[#allocation2 + $0xe8] sm:$0xff] %vm413, %v4471
      %4513 = vst.msk [vmem:[#allocation2 + $0xf0] sm:$0xff] %vm413, %v4472
      %4514 = vst.msk [vmem:[#allocation2 + $0xf8] sm:$0xff] %vm413, %v4473
      %4515 = vst.msk [vmem:[#allocation2 + $0x100] sm:$0xff] %vm413, %v4474
      %4516 = vst.msk [vmem:[#allocation2 + $0x108] sm:$0xff] %vm413, %v4475
      %4517 = vst.msk [vmem:[#allocation2 + $0x110] sm:$0xff] %vm413, %v4476
      %4518 = vst.msk [vmem:[#allocation2 + $0x118] sm:$0xff] %vm413, %v4477
      %4519 = vst.msk [vmem:[#allocation2 + $0x120] sm:$0xff] %vm413, %v4478
      %4520 = vst.msk [vmem:[#allocation2 + $0x128] sm:$0xff] %vm413, %v4479
      %4521 = vst.msk [vmem:[#allocation2 + $0x130] sm:$0xff] %vm413, %v4480
      %4522 = vst.msk [vmem:[#allocation2 + $0x138] sm:$0xff] %vm413, %v4481
      %4523 = vst.msk [vmem:[#allocation2 + $0x140] sm:$0xf] %vm717, %v4482
      %v4524 = vld [vmem:[%s246 + $0x10] sm:$0xc]
      %v4525 = vld [vmem:[%s246 + $0x14] sm:$0xf]
      %v4526 = vld [vmem:[%s246 + $0x18] sm:$0xf]
      %v4527 = vld [vmem:[%s246 + $0x1c] sm:$0xf]
      %v4528 = vld [vmem:[%s246 + $0x20] sm:$0xf]
      %v4529 = vld [vmem:[%s246 + $0x24] sm:$0xf]
      %v4530 = vld [vmem:[%s246 + $0x28] sm:$0xf]
      %v4531 = vld [vmem:[%s246 + $0x2c] sm:$0xf]
      %v4532 = vld [vmem:[%s246 + $0x30] sm:$0xf]
      %v4533 = vld [vmem:[%s246 + $0x34] sm:$0xf]
      %v4534 = vld [vmem:[%s246 + $0x38] sm:$0xf]
      %v4535 = vld [vmem:[%s246 + $0x3c] sm:$0xf]
      %v4536 = vld [vmem:[%s246 + $0x40] sm:$0xf]
      %v4537 = vld [vmem:[%s246 + $0x44] sm:$0xf]
      %v4538 = vld [vmem:[%s246 + $0x48] sm:$0xf]
      %v4539 = vld [vmem:[%s246 + $0x4c] sm:$0xf]
      %v4540 = vld [vmem:[%s246 + $0x50] sm:$0xf]
      %v4541 = vld [vmem:[%s246 + $0x54] sm:$0xf]
      %v4542 = vld [vmem:[%s246 + $0x58] sm:$0xf]
      %v4543 = vld [vmem:[%s246 + $0x5c] sm:$0xf]
      %v4544 = vld [vmem:[%s246 + $0x60] sm:$0xf]
      %v4545 = vld [vmem:[%s246 + $0x64] sm:$0xf]
      %v4546 = vld [vmem:[%s246 + $0x68] sm:$0xf]
      %v4547 = vld [vmem:[%s246 + $0x6c] sm:$0xf]
      %v4548 = vld [vmem:[%s246 + $0x70] sm:$0xf]
      %v4549 = vld [vmem:[%s246 + $0x74] sm:$0xf]
      %v4550 = vld [vmem:[%s246 + $0x78] sm:$0xf]
      %v4551 = vld [vmem:[%s246 + $0x7c] sm:$0xf]
      %v4552 = vld [vmem:[%s246 + $0x80] sm:$0xf]
      %v4553 = vld [vmem:[%s246 + $0x84] sm:$0xf]
      %v4554 = vld [vmem:[%s246 + $0x88] sm:$0xf]
      %v4555 = vld [vmem:[%s246 + $0x8c] sm:$0xf]
      %v4556 = vld [vmem:[%s246 + $0x90] sm:$0xf]
      %v4557 = vld [vmem:[%s246 + $0x94] sm:$0xf]
      %v4558 = vld [vmem:[%s246 + $0x98] sm:$0xf]
      %v4559 = vld [vmem:[%s246 + $0x9c] sm:$0xf]
      %v4560 = vld [vmem:[%s246 + $0xa0] sm:$0xf]
      %v4561 = vld [vmem:[%s246 + $0xa4] sm:$0xf]
      %v4562 = vld [vmem:[%s246 + $0xa8] sm:$0xf]
      %v4563 = vld [vmem:[%s246 + $0xac] sm:$0xf]
      %v4564 = vld [vmem:[%s246 + $0xb0] sm:$0xf]
      %v4565 = vld [vmem:[%s246 + $0xb4] sm:$0x1]
      %s4566 = scalar_lea.vmem %s2, 112
      %v4567 = vld [vmem:[%s4566] sm:$0xf]
      %v4568 = vld [vmem:[%s4566 + $0x4] sm:$0xf]
      %v4569 = vld [vmem:[%s4566 + $0x8] sm:$0xf]
      %v4570 = vld [vmem:[%s4566 + $0xc] sm:$0xf]
      %v4613 = vunpack.c.l.b16 %v4524
      %v4614 = vunpack.c.l.b16 %v4525
      %v4615 = vunpack.c.l.b16 %v4526
      %v4616 = vunpack.c.l.b16 %v4527
      %v4617 = vunpack.c.l.b16 %v4528
      %v4618 = vunpack.c.l.b16 %v4529
      %v4619 = vunpack.c.l.b16 %v4530
      %v4620 = vunpack.c.l.b16 %v4531
      %v4621 = vunpack.c.l.b16 %v4532
      %v4622 = vunpack.c.l.b16 %v4533
      %v4623 = vunpack.c.l.b16 %v4534
      %v4624 = vunpack.c.l.b16 %v4535
      %v4625 = vunpack.c.l.b16 %v4536
      %v4626 = vunpack.c.l.b16 %v4537
      %v4627 = vunpack.c.l.b16 %v4538
      %v4628 = vunpack.c.l.b16 %v4539
      %v4629 = vunpack.c.l.b16 %v4540
      %v4630 = vunpack.c.l.b16 %v4541
      %v4631 = vunpack.c.l.b16 %v4542
      %v4632 = vunpack.c.l.b16 %v4543
      %v4633 = vunpack.c.l.b16 %v4544
      %v4634 = vunpack.c.l.b16 %v4545
      %v4635 = vunpack.c.l.b16 %v4546
      %v4636 = vunpack.c.l.b16 %v4547
      %v4637 = vunpack.c.l.b16 %v4548
      %v4638 = vunpack.c.l.b16 %v4549
      %v4639 = vunpack.c.l.b16 %v4550
      %v4640 = vunpack.c.l.b16 %v4551
      %v4641 = vunpack.c.l.b16 %v4552
      %v4642 = vunpack.c.l.b16 %v4553
      %v4643 = vunpack.c.l.b16 %v4554
      %v4644 = vunpack.c.l.b16 %v4555
      %v4645 = vunpack.c.l.b16 %v4556
      %v4646 = vunpack.c.l.b16 %v4557
      %v4647 = vunpack.c.l.b16 %v4558
      %v4648 = vunpack.c.l.b16 %v4559
      %v4649 = vunpack.c.l.b16 %v4560
      %v4650 = vunpack.c.l.b16 %v4561
      %v4651 = vunpack.c.l.b16 %v4562
      %v4652 = vunpack.c.l.b16 %v4563
      %v4653 = vunpack.c.l.b16 %v4564
      %v4654 = vunpack.c.l.b16 %v4565
      %v4655 = vpack.c.b16 %v4614, %v4613
      %v4656 = vpack.c.b16 %v4616, %v4615
      %v4657 = vpack.c.b16 %v4618, %v4617
      %v4658 = vpack.c.b16 %v4620, %v4619
      %v4659 = vpack.c.b16 %v4622, %v4621
      %v4660 = vpack.c.b16 %v4624, %v4623
      %v4661 = vpack.c.b16 %v4626, %v4625
      %v4662 = vpack.c.b16 %v4628, %v4627
      %v4663 = vpack.c.b16 %v4630, %v4629
      %v4664 = vpack.c.b16 %v4632, %v4631
      %v4665 = vpack.c.b16 %v4634, %v4633
      %v4666 = vpack.c.b16 %v4636, %v4635
      %v4667 = vpack.c.b16 %v4638, %v4637
      %v4668 = vpack.c.b16 %v4640, %v4639
      %v4669 = vpack.c.b16 %v4642, %v4641
      %v4670 = vpack.c.b16 %v4644, %v4643
      %v4671 = vpack.c.b16 %v4646, %v4645
      %v4672 = vpack.c.b16 %v4648, %v4647
      %v4673 = vpack.c.b16 %v4650, %v4649
      %v4674 = vpack.c.b16 %v4652, %v4651
      %v4675 = vpack.c.b16 %v4654, %v4653
      %vm4676 = vsmask.f32 5376
      %v4678 = vshrl.u32 %v4655, 16
      %v4680 = vrot.slane %v4678, 2
      %v4681 = vshll.u32 %v4655, 16
      %v4683 = vrot.slane %v4681, 3
      %v4684 = vor.u32 %v4680, %v4683
      %v4686 = vshrl.u32 %v4656, 16
      %v4688 = vrot.slane %v4686, 2
      %v4689 = vshll.u32 %v4656, 16
      %v4691 = vrot.slane %v4689, 3
      %v4692 = vor.u32 %v4688, %v4691
      %v4693 = vsel %vm4676, %v4684, %v4692
      %v4695 = vshrl.u32 %v4657, 16
      %v4697 = vrot.slane %v4695, 2
      %v4698 = vshll.u32 %v4657, 16
      %v4700 = vrot.slane %v4698, 3
      %v4701 = vor.u32 %v4697, %v4700
      %v4702 = vsel %vm4676, %v4692, %v4701
      %v4704 = vshrl.u32 %v4658, 16
      %v4706 = vrot.slane %v4704, 2
      %v4707 = vshll.u32 %v4658, 16
      %v4709 = vrot.slane %v4707, 3
      %v4710 = vor.u32 %v4706, %v4709
      %v4711 = vsel %vm4676, %v4701, %v4710
      %v4713 = vshrl.u32 %v4659, 16
      %v4715 = vrot.slane %v4713, 2
      %v4716 = vshll.u32 %v4659, 16
      %v4718 = vrot.slane %v4716, 3
      %v4719 = vor.u32 %v4715, %v4718
      %v4720 = vsel %vm4676, %v4710, %v4719
      %v4722 = vshrl.u32 %v4660, 16
      %v4724 = vrot.slane %v4722, 2
      %v4725 = vshll.u32 %v4660, 16
      %v4727 = vrot.slane %v4725, 3
      %v4728 = vor.u32 %v4724, %v4727
      %v4729 = vsel %vm4676, %v4719, %v4728
      %v4731 = vshrl.u32 %v4661, 16
      %v4733 = vrot.slane %v4731, 2
      %v4734 = vshll.u32 %v4661, 16
      %v4736 = vrot.slane %v4734, 3
      %v4737 = vor.u32 %v4733, %v4736
      %v4738 = vsel %vm4676, %v4728, %v4737
      %v4740 = vshrl.u32 %v4662, 16
      %v4742 = vrot.slane %v4740, 2
      %v4743 = vshll.u32 %v4662, 16
      %v4745 = vrot.slane %v4743, 3
      %v4746 = vor.u32 %v4742, %v4745
      %v4747 = vsel %vm4676, %v4737, %v4746
      %v4749 = vshrl.u32 %v4663, 16
      %v4751 = vrot.slane %v4749, 2
      %v4752 = vshll.u32 %v4663, 16
      %v4754 = vrot.slane %v4752, 3
      %v4755 = vor.u32 %v4751, %v4754
      %v4756 = vsel %vm4676, %v4746, %v4755
      %v4758 = vshrl.u32 %v4664, 16
      %v4760 = vrot.slane %v4758, 2
      %v4761 = vshll.u32 %v4664, 16
      %v4763 = vrot.slane %v4761, 3
      %v4764 = vor.u32 %v4760, %v4763
      %v4765 = vsel %vm4676, %v4755, %v4764
      %v4767 = vshrl.u32 %v4665, 16
      %v4769 = vrot.slane %v4767, 2
      %v4770 = vshll.u32 %v4665, 16
      %v4772 = vrot.slane %v4770, 3
      %v4773 = vor.u32 %v4769, %v4772
      %v4774 = vsel %vm4676, %v4764, %v4773
      %v4776 = vshrl.u32 %v4666, 16
      %v4778 = vrot.slane %v4776, 2
      %v4779 = vshll.u32 %v4666, 16
      %v4781 = vrot.slane %v4779, 3
      %v4782 = vor.u32 %v4778, %v4781
      %v4783 = vsel %vm4676, %v4773, %v4782
      %v4785 = vshrl.u32 %v4667, 16
      %v4787 = vrot.slane %v4785, 2
      %v4788 = vshll.u32 %v4667, 16
      %v4790 = vrot.slane %v4788, 3
      %v4791 = vor.u32 %v4787, %v4790
      %v4792 = vsel %vm4676, %v4782, %v4791
      %v4794 = vshrl.u32 %v4668, 16
      %v4796 = vrot.slane %v4794, 2
      %v4797 = vshll.u32 %v4668, 16
      %v4799 = vrot.slane %v4797, 3
      %v4800 = vor.u32 %v4796, %v4799
      %v4801 = vsel %vm4676, %v4791, %v4800
      %v4803 = vshrl.u32 %v4669, 16
      %v4805 = vrot.slane %v4803, 2
      %v4806 = vshll.u32 %v4669, 16
      %v4808 = vrot.slane %v4806, 3
      %v4809 = vor.u32 %v4805, %v4808
      %v4810 = vsel %vm4676, %v4800, %v4809
      %v4812 = vshrl.u32 %v4670, 16
      %v4814 = vrot.slane %v4812, 2
      %v4815 = vshll.u32 %v4670, 16
      %v4817 = vrot.slane %v4815, 3
      %v4818 = vor.u32 %v4814, %v4817
      %v4819 = vsel %vm4676, %v4809, %v4818
      %v4821 = vshrl.u32 %v4671, 16
      %v4823 = vrot.slane %v4821, 2
      %v4824 = vshll.u32 %v4671, 16
      %v4826 = vrot.slane %v4824, 3
      %v4827 = vor.u32 %v4823, %v4826
      %v4828 = vsel %vm4676, %v4818, %v4827
      %v4830 = vshrl.u32 %v4672, 16
      %v4832 = vrot.slane %v4830, 2
      %v4833 = vshll.u32 %v4672, 16
      %v4835 = vrot.slane %v4833, 3
      %v4836 = vor.u32 %v4832, %v4835
      %v4837 = vsel %vm4676, %v4827, %v4836
      %v4839 = vshrl.u32 %v4673, 16
      %v4841 = vrot.slane %v4839, 2
      %v4842 = vshll.u32 %v4673, 16
      %v4844 = vrot.slane %v4842, 3
      %v4845 = vor.u32 %v4841, %v4844
      %v4846 = vsel %vm4676, %v4836, %v4845
      %v4848 = vshrl.u32 %v4674, 16
      %v4850 = vrot.slane %v4848, 2
      %v4851 = vshll.u32 %v4674, 16
      %v4853 = vrot.slane %v4851, 3
      %v4854 = vor.u32 %v4850, %v4853
      %v4855 = vsel %vm4676, %v4845, %v4854
      %v4857 = vshrl.u32 %v4675, 16
      %v4859 = vrot.slane %v4857, 2
      %v4860 = vshll.u32 %v4675, 16
      %v4862 = vrot.slane %v4860, 3
      %v4863 = vor.u32 %v4859, %v4862
      %v4864 = vsel %vm4676, %v4854, %v4863
      %v4869 = vunpack.c.l.b16 %v4567
      %v4870 = vunpack.c.l.b16 %v4568
      %v4871 = vunpack.c.l.b16 %v4569
      %v4872 = vunpack.c.l.b16 %v4570
      %v4873 = vpack.c.b16 %v4870, %v4869
      %v4874 = vpack.c.b16 %v4872, %v4871
      %v4878 = vsel %vm413, %v4693, 0
      %v4881 = vsel %vm413, %v4702, 0
      %v4884 = vsel %vm413, %v4711, 0
      %v4887 = vsel %vm413, %v4720, 0
      %v4890 = vsel %vm413, %v4729, 0
      %v4893 = vsel %vm413, %v4738, 0
      %v4896 = vsel %vm413, %v4747, 0
      %v4899 = vsel %vm413, %v4756, 0
      %v4902 = vsel %vm413, %v4765, 0
      %v4905 = vsel %vm413, %v4774, 0
      %v4908 = vsel %vm413, %v4783, 0
      %v4911 = vsel %vm413, %v4792, 0
      %v4914 = vsel %vm413, %v4801, 0
      %v4917 = vsel %vm413, %v4810, 0
      %v4920 = vsel %vm413, %v4819, 0
      %v4923 = vsel %vm413, %v4828, 0
      %v4926 = vsel %vm413, %v4837, 0
      %v4929 = vsel %vm413, %v4846, 0
      %v4932 = vsel %vm413, %v4855, 0
      %v4935 = vsel %vm413, %v4864, 0
      %v4938 = vsel %vm413, %v4863, 0
      %4940 = vmatprep.subr.bf16.mxu0 0
      %4941 = vmatpush1.bf16.msra.mxu0 %v4873
      %4942 = vmatprep.subr.bf16.mxu0 0
      %4943 = vmatpush1.bf16.msra.mxu0 %v4874
      %4944 = vmatprep.subr.bf16.mxu0 0
      %4945 = vmatpush1.bf16.msra.mxu0 0
      %4946 = vmatprep.subr.bf16.mxu0 0
      %4947 = vmatpush1.bf16.msra.mxu0 0
      %4948 = vmatprep.subr.bf16.mxu0 0
      %4949 = vmatpush1.bf16.msra.mxu0 0
      %4950 = vmatprep.subr.bf16.mxu0 0
      %4951 = vmatpush1.bf16.msra.mxu0 0
      %4952 = vmatprep.subr.bf16.mxu0 0
      %4953 = vmatpush1.bf16.msra.mxu0 0
      %4954 = vmatprep.subr.bf16.mxu0 0
      %4955 = vmatpush1.bf16.msra.mxu0 0
      %4956 = vmatprep.subr.bf16.mxu0 0
      %4957 = vmatpush1.bf16.msra.mxu0 0
      %4958 = vmatprep.subr.bf16.mxu0 0
      %4959 = vmatpush1.bf16.msra.mxu0 0
      %4960 = vmatprep.subr.bf16.mxu0 0
      %4961 = vmatpush1.bf16.msra.mxu0 0
      %4962 = vmatprep.subr.bf16.mxu0 0
      %4963 = vmatpush1.bf16.msra.mxu0 0
      %4964 = vmatprep.subr.bf16.mxu0 0
      %4965 = vmatpush1.bf16.msra.mxu0 0
      %4966 = vmatprep.subr.bf16.mxu0 0
      %4967 = vmatpush1.bf16.msra.mxu0 0
      %4968 = vmatprep.subr.bf16.mxu0 0
      %4969 = vmatpush1.bf16.msra.mxu0 0
      %4970 = vmatprep.subr.bf16.mxu0 0
      %4971 = vmatpush1.bf16.msra.mxu0 0
      %4972 = vmatprep.mubr.bf16.mxu0 0
      %4973 = vmatmul.mubr.bf16.gmra.mrb[0].mxu0 %v4878
      %v4974 = vpop.f32.mrb[0].mxu0
      %v4975 = vadd.f32 0.0, %v4974
      %v4976 = vpop.f32.mrb[0].mxu0
      %v4977 = vpop.f32.mrb[0].mxu0
      %v4978 = vadd.f32 0.0, %v4977
      %v4979 = vpop.f32.mrb[0].mxu0
      %4980 = vmatprep.mubr.bf16.mxu0 0
      %4981 = vmatmul.mubr.bf16.gmra.mrb[0].mxu0 %v4881
      %v4982 = vpop.f32.mrb[0].mxu0
      %v4983 = vadd.f32 0.0, %v4982
      %v4984 = vpop.f32.mrb[0].mxu0
      %v4985 = vpop.f32.mrb[0].mxu0
      %v4986 = vadd.f32 0.0, %v4985
      %v4987 = vpop.f32.mrb[0].mxu0
      %4988 = vmatprep.mubr.bf16.mxu0 0
      %4989 = vmatmul.mubr.bf16.gmra.mrb[0].mxu0 %v4884
      %v4990 = vpop.f32.mrb[0].mxu0
      %v4991 = vadd.f32 0.0, %v4990
      %v4992 = vpop.f32.mrb[0].mxu0
      %v4993 = vpop.f32.mrb[0].mxu0
      %v4994 = vadd.f32 0.0, %v4993
      %v4995 = vpop.f32.mrb[0].mxu0
      %4996 = vmatprep.mubr.bf16.mxu0 0
      %4997 = vmatmul.mubr.bf16.gmra.mrb[0].mxu0 %v4887
      %v4998 = vpop.f32.mrb[0].mxu0
      %v4999 = vadd.f32 0.0, %v4998
      %v5000 = vpop.f32.mrb[0].mxu0
      %v5001 = vpop.f32.mrb[0].mxu0
      %v5002 = vadd.f32 0.0, %v5001
      %v5003 = vpop.f32.mrb[0].mxu0
      %5004 = vmatprep.mubr.bf16.mxu0 0
      %5005 = vmatmul.mubr.bf16.gmra.mrb[0].mxu0 %v4890
      %v5006 = vpop.f32.mrb[0].mxu0
      %v5007 = vadd.f32 0.0, %v5006
      %v5008 = vpop.f32.mrb[0].mxu0
      %v5009 = vpop.f32.mrb[0].mxu0
      %v5010 = vadd.f32 0.0, %v5009
      %v5011 = vpop.f32.mrb[0].mxu0
      %5012 = vmatprep.mubr.bf16.mxu0 0
      %5013 = vmatmul.mubr.bf16.gmra.mrb[0].mxu0 %v4893
      %v5014 = vpop.f32.mrb[0].mxu0
      %v5015 = vadd.f32 0.0, %v5014
      %v5016 = vpop.f32.mrb[0].mxu0
      %v5017 = vpop.f32.mrb[0].mxu0
      %v5018 = vadd.f32 0.0, %v5017
      %v5019 = vpop.f32.mrb[0].mxu0
      %5020 = vmatprep.mubr.bf16.mxu0 0
      %5021 = vmatmul.mubr.bf16.gmra.mrb[0].mxu0 %v4896
      %v5022 = vpop.f32.mrb[0].mxu0
      %v5023 = vadd.f32 0.0, %v5022
      %v5024 = vpop.f32.mrb[0].mxu0
      %v5025 = vpop.f32.mrb[0].mxu0
      %v5026 = vadd.f32 0.0, %v5025
      %v5027 = vpop.f32.mrb[0].mxu0
      %5028 = vmatprep.mubr.bf16.mxu0 0
      %5029 = vmatmul.mubr.bf16.gmra.mrb[0].mxu0 %v4899
      %v5030 = vpop.f32.mrb[0].mxu0
      %v5031 = vadd.f32 0.0, %v5030
      %v5032 = vpop.f32.mrb[0].mxu0
      %v5033 = vpop.f32.mrb[0].mxu0
      %v5034 = vadd.f32 0.0, %v5033
      %v5035 = vpop.f32.mrb[0].mxu0
      %5036 = vmatprep.mubr.bf16.mxu0 0
      %5037 = vmatmul.mubr.bf16.gmra.mrb[0].mxu0 %v4902
      %v5038 = vpop.f32.mrb[0].mxu0
      %v5039 = vadd.f32 0.0, %v5038
      %v5040 = vpop.f32.mrb[0].mxu0
      %v5041 = vpop.f32.mrb[0].mxu0
      %v5042 = vadd.f32 0.0, %v5041
      %v5043 = vpop.f32.mrb[0].mxu0
      %5044 = vmatprep.mubr.bf16.mxu0 0
      %5045 = vmatmul.mubr.bf16.gmra.mrb[0].mxu0 %v4905
      %v5046 = vpop.f32.mrb[0].mxu0
      %v5047 = vadd.f32 0.0, %v5046
      %v5048 = vpop.f32.mrb[0].mxu0
      %v5049 = vpop.f32.mrb[0].mxu0
      %v5050 = vadd.f32 0.0, %v5049
      %v5051 = vpop.f32.mrb[0].mxu0
      %5052 = vmatprep.mubr.bf16.mxu0 0
      %5053 = vmatmul.mubr.bf16.gmra.mrb[0].mxu0 %v4908
      %v5054 = vpop.f32.mrb[0].mxu0
      %v5055 = vadd.f32 0.0, %v5054
      %v5056 = vpop.f32.mrb[0].mxu0
      %v5057 = vpop.f32.mrb[0].mxu0
      %v5058 = vadd.f32 0.0, %v5057
      %v5059 = vpop.f32.mrb[0].mxu0
      %5060 = vmatprep.mubr.bf16.mxu0 0
      %5061 = vmatmul.mubr.bf16.gmra.mrb[0].mxu0 %v4911
      %v5062 = vpop.f32.mrb[0].mxu0
      %v5063 = vadd.f32 0.0, %v5062
      %v5064 = vpop.f32.mrb[0].mxu0
      %v5065 = vpop.f32.mrb[0].mxu0
      %v5066 = vadd.f32 0.0, %v5065
      %v5067 = vpop.f32.mrb[0].mxu0
      %5068 = vmatprep.mubr.bf16.mxu0 0
      %5069 = vmatmul.mubr.bf16.gmra.mrb[0].mxu0 %v4914
      %v5070 = vpop.f32.mrb[0].mxu0
      %v5071 = vadd.f32 0.0, %v5070
      %v5072 = vpop.f32.mrb[0].mxu0
      %v5073 = vpop.f32.mrb[0].mxu0
      %v5074 = vadd.f32 0.0, %v5073
      %v5075 = vpop.f32.mrb[0].mxu0
      %5076 = vmatprep.mubr.bf16.mxu0 0
      %5077 = vmatmul.mubr.bf16.gmra.mrb[0].mxu0 %v4917
      %v5078 = vpop.f32.mrb[0].mxu0
      %v5079 = vadd.f32 0.0, %v5078
      %v5080 = vpop.f32.mrb[0].mxu0
      %v5081 = vpop.f32.mrb[0].mxu0
      %v5082 = vadd.f32 0.0, %v5081
      %v5083 = vpop.f32.mrb[0].mxu0
      %5084 = vmatprep.mubr.bf16.mxu0 0
      %5085 = vmatmul.mubr.bf16.gmra.mrb[0].mxu0 %v4920
      %v5086 = vpop.f32.mrb[0].mxu0
      %v5087 = vadd.f32 0.0, %v5086
      %v5088 = vpop.f32.mrb[0].mxu0
      %v5089 = vpop.f32.mrb[0].mxu0
      %v5090 = vadd.f32 0.0, %v5089
      %v5091 = vpop.f32.mrb[0].mxu0
      %5092 = vmatprep.mubr.bf16.mxu0 0
      %5093 = vmatmul.mubr.bf16.gmra.mrb[0].mxu0 %v4923
      %v5094 = vpop.f32.mrb[0].mxu0
      %v5095 = vadd.f32 0.0, %v5094
      %v5096 = vpop.f32.mrb[0].mxu0
      %v5097 = vpop.f32.mrb[0].mxu0
      %v5098 = vadd.f32 0.0, %v5097
      %v5099 = vpop.f32.mrb[0].mxu0
      %5100 = vmatprep.mubr.bf16.mxu0 0
      %5101 = vmatmul.mubr.bf16.gmra.mrb[0].mxu0 %v4926
      %v5102 = vpop.f32.mrb[0].mxu0
      %v5103 = vadd.f32 0.0, %v5102
      %v5104 = vpop.f32.mrb[0].mxu0
      %v5105 = vpop.f32.mrb[0].mxu0
      %v5106 = vadd.f32 0.0, %v5105
      %v5107 = vpop.f32.mrb[0].mxu0
      %5108 = vmatprep.mubr.bf16.mxu0 0
      %5109 = vmatmul.mubr.bf16.gmra.mrb[0].mxu0 %v4929
      %v5110 = vpop.f32.mrb[0].mxu0
      %v5111 = vadd.f32 0.0, %v5110
      %v5112 = vpop.f32.mrb[0].mxu0
      %v5113 = vpop.f32.mrb[0].mxu0
      %v5114 = vadd.f32 0.0, %v5113
      %v5115 = vpop.f32.mrb[0].mxu0
      %5116 = vmatprep.mubr.bf16.mxu0 0
      %5117 = vmatmul.mubr.bf16.gmra.mrb[0].mxu0 %v4932
      %v5118 = vpop.f32.mrb[0].mxu0
      %v5119 = vadd.f32 0.0, %v5118
      %v5120 = vpop.f32.mrb[0].mxu0
      %v5121 = vpop.f32.mrb[0].mxu0
      %v5122 = vadd.f32 0.0, %v5121
      %v5123 = vpop.f32.mrb[0].mxu0
      %5124 = vmatprep.mubr.bf16.mxu0 0
      %5125 = vmatmul.mubr.bf16.gmra.mrb[0].mxu0 %v4935
      %v5126 = vpop.f32.mrb[0].mxu0
      %v5127 = vadd.f32 0.0, %v5126
      %v5128 = vpop.f32.mrb[0].mxu0
      %v5129 = vpop.f32.mrb[0].mxu0
      %v5130 = vadd.f32 0.0, %v5129
      %v5131 = vpop.f32.mrb[0].mxu0
      %5132 = vmatprep.mubr.bf16.mxu0 0
      %5133 = vmatmul.mubr.bf16.gmra.mrb[0].mxu0 %v4938
      %v5134 = vpop.f32.mrb[0].mxu0
      %v5135 = vadd.f32 0.0, %v5134
      %v5136 = vpop.f32.mrb[0].mxu0
      %v5137 = vpop.f32.mrb[0].mxu0
      %v5138 = vpop.f32.mrb[0].mxu0
      %5139 = vdwg.mxu0
      %v5140 = vld [vmem:[#allocation2] sm:$0xff]
      %v5141 = vld [vmem:[#allocation2 + $0x8] sm:$0xff]
      %v5142 = vld [vmem:[#allocation2 + $0x10] sm:$0xff]
      %v5143 = vld [vmem:[#allocation2 + $0x18] sm:$0xff]
      %v5144 = vld [vmem:[#allocation2 + $0x20] sm:$0xff]
      %v5145 = vld [vmem:[#allocation2 + $0x28] sm:$0xff]
      %v5146 = vld [vmem:[#allocation2 + $0x30] sm:$0xff]
      %v5147 = vld [vmem:[#allocation2 + $0x38] sm:$0xff]
      %v5148 = vld [vmem:[#allocation2 + $0x40] sm:$0xff]
      %v5149 = vld [vmem:[#allocation2 + $0x48] sm:$0xff]
      %v5150 = vld [vmem:[#allocation2 + $0x50] sm:$0xff]
      %v5151 = vld [vmem:[#allocation2 + $0x58] sm:$0xff]
      %v5152 = vld [vmem:[#allocation2 + $0x60] sm:$0xff]
      %v5153 = vld [vmem:[#allocation2 + $0x68] sm:$0xff]
      %v5154 = vld [vmem:[#allocation2 + $0x70] sm:$0xff]
      %v5155 = vld [vmem:[#allocation2 + $0x78] sm:$0xff]
      %v5156 = vld [vmem:[#allocation2 + $0x80] sm:$0xff]
      %v5157 = vld [vmem:[#allocation2 + $0x88] sm:$0xff]
      %v5158 = vld [vmem:[#allocation2 + $0x90] sm:$0xff]
      %v5159 = vld [vmem:[#allocation2 + $0x98] sm:$0xff]
      %v5160 = vld [vmem:[#allocation2 + $0xa0] sm:$0xff]
      %v5161 = vld [vmem:[#allocation2 + $0xa8] sm:$0xff]
      %v5162 = vld [vmem:[#allocation2 + $0xb0] sm:$0xff]
      %v5163 = vld [vmem:[#allocation2 + $0xb8] sm:$0xff]
      %v5164 = vld [vmem:[#allocation2 + $0xc0] sm:$0xff]
      %v5165 = vld [vmem:[#allocation2 + $0xc8] sm:$0xff]
      %v5166 = vld [vmem:[#allocation2 + $0xd0] sm:$0xff]
      %v5167 = vld [vmem:[#allocation2 + $0xd8] sm:$0xff]
      %v5168 = vld [vmem:[#allocation2 + $0xe0] sm:$0xff]
      %v5169 = vld [vmem:[#allocation2 + $0xe8] sm:$0xff]
      %v5170 = vld [vmem:[#allocation2 + $0xf0] sm:$0xff]
      %v5171 = vld [vmem:[#allocation2 + $0xf8] sm:$0xff]
      %v5172 = vld [vmem:[#allocation2 + $0x100] sm:$0xff]
      %v5173 = vld [vmem:[#allocation2 + $0x108] sm:$0xff]
      %v5174 = vld [vmem:[#allocation2 + $0x110] sm:$0xff]
      %v5175 = vld [vmem:[#allocation2 + $0x118] sm:$0xff]
      %v5176 = vld [vmem:[#allocation2 + $0x120] sm:$0xff]
      %v5177 = vld [vmem:[#allocation2 + $0x128] sm:$0xff]
      %v5178 = vld [vmem:[#allocation2 + $0x130] sm:$0xff]
      %v5179 = vld [vmem:[#allocation2 + $0x138] sm:$0xff]
      %v5180 = vld [vmem:[#allocation2 + $0x140] sm:$0xf]
      %v5181 = vadd.f32 %v5140, %v4975
      %v5182 = vadd.f32 %v5141, %v4978
      %v5183 = vadd.f32 %v5142, %v4983
      %v5184 = vadd.f32 %v5143, %v4986
      %v5185 = vadd.f32 %v5144, %v4991
      %v5186 = vadd.f32 %v5145, %v4994
      %v5187 = vadd.f32 %v5146, %v4999
      %v5188 = vadd.f32 %v5147, %v5002
      %v5189 = vadd.f32 %v5148, %v5007
      %v5190 = vadd.f32 %v5149, %v5010
      %v5191 = vadd.f32 %v5150, %v5015
      %v5192 = vadd.f32 %v5151, %v5018
      %v5193 = vadd.f32 %v5152, %v5023
      %v5194 = vadd.f32 %v5153, %v5026
      %v5195 = vadd.f32 %v5154, %v5031
      %v5196 = vadd.f32 %v5155, %v5034
      %v5197 = vadd.f32 %v5156, %v5039
      %v5198 = vadd.f32 %v5157, %v5042
      %v5199 = vadd.f32 %v5158, %v5047
      %v5200 = vadd.f32 %v5159, %v5050
      %v5201 = vadd.f32 %v5160, %v5055
      %v5202 = vadd.f32 %v5161, %v5058
      %v5203 = vadd.f32 %v5162, %v5063
      %v5204 = vadd.f32 %v5163, %v5066
      %v5205 = vadd.f32 %v5164, %v5071
      %v5206 = vadd.f32 %v5165, %v5074
      %v5207 = vadd.f32 %v5166, %v5079
      %v5208 = vadd.f32 %v5167, %v5082
      %v5209 = vadd.f32 %v5168, %v5087
      %v5210 = vadd.f32 %v5169, %v5090
      %v5211 = vadd.f32 %v5170, %v5095
      %v5212 = vadd.f32 %v5171, %v5098
      %v5213 = vadd.f32 %v5172, %v5103
      %v5214 = vadd.f32 %v5173, %v5106
      %v5215 = vadd.f32 %v5174, %v5111
      %v5216 = vadd.f32 %v5175, %v5114
      %v5217 = vadd.f32 %v5176, %v5119
      %v5218 = vadd.f32 %v5177, %v5122
      %v5219 = vadd.f32 %v5178, %v5127
      %v5220 = vadd.f32 %v5179, %v5130
      %v5221 = vadd.f32 %v5180, %v5135
      %5222 = vst.msk [vmem:[#allocation2] sm:$0xff] %vm413, %v5181
      %5223 = vst.msk [vmem:[#allocation2 + $0x8] sm:$0xff] %vm413, %v5182
      %5224 = vst.msk [vmem:[#allocation2 + $0x10] sm:$0xff] %vm413, %v5183
      %5225 = vst.msk [vmem:[#allocation2 + $0x18] sm:$0xff] %vm413, %v5184
      %5226 = vst.msk [vmem:[#allocation2 + $0x20] sm:$0xff] %vm413, %v5185
      %5227 = vst.msk [vmem:[#allocation2 + $0x28] sm:$0xff] %vm413, %v5186
      %5228 = vst.msk [vmem:[#allocation2 + $0x30] sm:$0xff] %vm413, %v5187
      %5229 = vst.msk [vmem:[#allocation2 + $0x38] sm:$0xff] %vm413, %v5188
      %5230 = vst.msk [vmem:[#allocation2 + $0x40] sm:$0xff] %vm413, %v5189
      %5231 = vst.msk [vmem:[#allocation2 + $0x48] sm:$0xff] %vm413, %v5190
      %5232 = vst.msk [vmem:[#allocation2 + $0x50] sm:$0xff] %vm413, %v5191
      %5233 = vst.msk [vmem:[#allocation2 + $0x58] sm:$0xff] %vm413, %v5192
      %5234 = vst.msk [vmem:[#allocation2 + $0x60] sm:$0xff] %vm413, %v5193
      %5235 = vst.msk [vmem:[#allocation2 + $0x68] sm:$0xff] %vm413, %v5194
      %5236 = vst.msk [vmem:[#allocation2 + $0x70] sm:$0xff] %vm413, %v5195
      %5237 = vst.msk [vmem:[#allocation2 + $0x78] sm:$0xff] %vm413, %v5196
      %5238 = vst.msk [vmem:[#allocation2 + $0x80] sm:$0xff] %vm413, %v5197
      %5239 = vst.msk [vmem:[#allocation2 + $0x88] sm:$0xff] %vm413, %v5198
      %5240 = vst.msk [vmem:[#allocation2 + $0x90] sm:$0xff] %vm413, %v5199
      %5241 = vst.msk [vmem:[#allocation2 + $0x98] sm:$0xff] %vm413, %v5200
      %5242 = vst.msk [vmem:[#allocation2 + $0xa0] sm:$0xff] %vm413, %v5201
      %5243 = vst.msk [vmem:[#allocation2 + $0xa8] sm:$0xff] %vm413, %v5202
      %5244 = vst.msk [vmem:[#allocation2 + $0xb0] sm:$0xff] %vm413, %v5203
      %5245 = vst.msk [vmem:[#allocation2 + $0xb8] sm:$0xff] %vm413, %v5204
      %5246 = vst.msk [vmem:[#allocation2 + $0xc0] sm:$0xff] %vm413, %v5205
      %5247 = vst.msk [vmem:[#allocation2 + $0xc8] sm:$0xff] %vm413, %v5206
      %5248 = vst.msk [vmem:[#allocation2 + $0xd0] sm:$0xff] %vm413, %v5207
      %5249 = vst.msk [vmem:[#allocation2 + $0xd8] sm:$0xff] %vm413, %v5208
      %5250 = vst.msk [vmem:[#allocation2 + $0xe0] sm:$0xff] %vm413, %v5209
      %5251 = vst.msk [vmem:[#allocation2 + $0xe8] sm:$0xff] %vm413, %v5210
      %5252 = vst.msk [vmem:[#allocation2 + $0xf0] sm:$0xff] %vm413, %v5211
      %5253 = vst.msk [vmem:[#allocation2 + $0xf8] sm:$0xff] %vm413, %v5212
      %5254 = vst.msk [vmem:[#allocation2 + $0x100] sm:$0xff] %vm413, %v5213
      %5255 = vst.msk [vmem:[#allocation2 + $0x108] sm:$0xff] %vm413, %v5214
      %5256 = vst.msk [vmem:[#allocation2 + $0x110] sm:$0xff] %vm413, %v5215
      %5257 = vst.msk [vmem:[#allocation2 + $0x118] sm:$0xff] %vm413, %v5216
      %5258 = vst.msk [vmem:[#allocation2 + $0x120] sm:$0xff] %vm413, %v5217
      %5259 = vst.msk [vmem:[#allocation2 + $0x128] sm:$0xff] %vm413, %v5218
      %5260 = vst.msk [vmem:[#allocation2 + $0x130] sm:$0xff] %vm413, %v5219
      %5261 = vst.msk [vmem:[#allocation2 + $0x138] sm:$0xff] %vm413, %v5220
      %5262 = vst.msk [vmem:[#allocation2 + $0x140] sm:$0xf] %vm717, %v5221
      %v5263 = vld [vmem:[%s246 + $0x10] sm:$0x8]
      %v5264 = vld [vmem:[%s246 + $0x14] sm:$0xf]
      %v5265 = vld [vmem:[%s246 + $0x18] sm:$0xf]
      %v5266 = vld [vmem:[%s246 + $0x1c] sm:$0xf]
      %v5267 = vld [vmem:[%s246 + $0x20] sm:$0xf]
      %v5268 = vld [vmem:[%s246 + $0x24] sm:$0xf]
      %v5269 = vld [vmem:[%s246 + $0x28] sm:$0xf]
      %v5270 = vld [vmem:[%s246 + $0x2c] sm:$0xf]
      %v5271 = vld [vmem:[%s246 + $0x30] sm:$0xf]
      %v5272 = vld [vmem:[%s246 + $0x34] sm:$0xf]
      %v5273 = vld [vmem:[%s246 + $0x38] sm:$0xf]
      %v5274 = vld [vmem:[%s246 + $0x3c] sm:$0xf]
      %v5275 = vld [vmem:[%s246 + $0x40] sm:$0xf]
      %v5276 = vld [vmem:[%s246 + $0x44] sm:$0xf]
      %v5277 = vld [vmem:[%s246 + $0x48] sm:$0xf]
      %v5278 = vld [vmem:[%s246 + $0x4c] sm:$0xf]
      %v5279 = vld [vmem:[%s246 + $0x50] sm:$0xf]
      %v5280 = vld [vmem:[%s246 + $0x54] sm:$0xf]
      %v5281 = vld [vmem:[%s246 + $0x58] sm:$0xf]
      %v5282 = vld [vmem:[%s246 + $0x5c] sm:$0xf]
      %v5283 = vld [vmem:[%s246 + $0x60] sm:$0xf]
      %v5284 = vld [vmem:[%s246 + $0x64] sm:$0xf]
      %v5285 = vld [vmem:[%s246 + $0x68] sm:$0xf]
      %v5286 = vld [vmem:[%s246 + $0x6c] sm:$0xf]
      %v5287 = vld [vmem:[%s246 + $0x70] sm:$0xf]
      %v5288 = vld [vmem:[%s246 + $0x74] sm:$0xf]
      %v5289 = vld [vmem:[%s246 + $0x78] sm:$0xf]
      %v5290 = vld [vmem:[%s246 + $0x7c] sm:$0xf]
      %v5291 = vld [vmem:[%s246 + $0x80] sm:$0xf]
      %v5292 = vld [vmem:[%s246 + $0x84] sm:$0xf]
      %v5293 = vld [vmem:[%s246 + $0x88] sm:$0xf]
      %v5294 = vld [vmem:[%s246 + $0x8c] sm:$0xf]
      %v5295 = vld [vmem:[%s246 + $0x90] sm:$0xf]
      %v5296 = vld [vmem:[%s246 + $0x94] sm:$0xf]
      %v5297 = vld [vmem:[%s246 + $0x98] sm:$0xf]
      %v5298 = vld [vmem:[%s246 + $0x9c] sm:$0xf]
      %v5299 = vld [vmem:[%s246 + $0xa0] sm:$0xf]
      %v5300 = vld [vmem:[%s246 + $0xa4] sm:$0xf]
      %v5301 = vld [vmem:[%s246 + $0xa8] sm:$0xf]
      %v5302 = vld [vmem:[%s246 + $0xac] sm:$0xf]
      %v5303 = vld [vmem:[%s246 + $0xb0] sm:$0xf]
      %v5304 = vld [vmem:[%s246 + $0xb4] sm:$0x1]
      %s5305 = scalar_lea.vmem %s2, 128
      %v5306 = vld [vmem:[%s5305] sm:$0xf]
      %v5307 = vld [vmem:[%s5305 + $0x4] sm:$0xf]
      %v5308 = vld [vmem:[%s5305 + $0x8] sm:$0xf]
      %v5309 = vld [vmem:[%s5305 + $0xc] sm:$0xf]
      %v5352 = vunpack.c.l.b16 %v5263
      %v5353 = vunpack.c.l.b16 %v5264
      %v5354 = vunpack.c.l.b16 %v5265
      %v5355 = vunpack.c.l.b16 %v5266
      %v5356 = vunpack.c.l.b16 %v5267
      %v5357 = vunpack.c.l.b16 %v5268
      %v5358 = vunpack.c.l.b16 %v5269
      %v5359 = vunpack.c.l.b16 %v5270
      %v5360 = vunpack.c.l.b16 %v5271
      %v5361 = vunpack.c.l.b16 %v5272
      %v5362 = vunpack.c.l.b16 %v5273
      %v5363 = vunpack.c.l.b16 %v5274
      %v5364 = vunpack.c.l.b16 %v5275
      %v5365 = vunpack.c.l.b16 %v5276
      %v5366 = vunpack.c.l.b16 %v5277
      %v5367 = vunpack.c.l.b16 %v5278
      %v5368 = vunpack.c.l.b16 %v5279
      %v5369 = vunpack.c.l.b16 %v5280
      %v5370 = vunpack.c.l.b16 %v5281
      %v5371 = vunpack.c.l.b16 %v5282
      %v5372 = vunpack.c.l.b16 %v5283
      %v5373 = vunpack.c.l.b16 %v5284
      %v5374 = vunpack.c.l.b16 %v5285
      %v5375 = vunpack.c.l.b16 %v5286
      %v5376 = vunpack.c.l.b16 %v5287
      %v5377 = vunpack.c.l.b16 %v5288
      %v5378 = vunpack.c.l.b16 %v5289
      %v5379 = vunpack.c.l.b16 %v5290
      %v5380 = vunpack.c.l.b16 %v5291
      %v5381 = vunpack.c.l.b16 %v5292
      %v5382 = vunpack.c.l.b16 %v5293
      %v5383 = vunpack.c.l.b16 %v5294
      %v5384 = vunpack.c.l.b16 %v5295
      %v5385 = vunpack.c.l.b16 %v5296
      %v5386 = vunpack.c.l.b16 %v5297
      %v5387 = vunpack.c.l.b16 %v5298
      %v5388 = vunpack.c.l.b16 %v5299
      %v5389 = vunpack.c.l.b16 %v5300
      %v5390 = vunpack.c.l.b16 %v5301
      %v5391 = vunpack.c.l.b16 %v5302
      %v5392 = vunpack.c.l.b16 %v5303
      %v5393 = vunpack.c.l.b16 %v5304
      %v5394 = vpack.c.b16 %v5353, %v5352
      %v5395 = vpack.c.b16 %v5355, %v5354
      %v5396 = vpack.c.b16 %v5357, %v5356
      %v5397 = vpack.c.b16 %v5359, %v5358
      %v5398 = vpack.c.b16 %v5361, %v5360
      %v5399 = vpack.c.b16 %v5363, %v5362
      %v5400 = vpack.c.b16 %v5365, %v5364
      %v5401 = vpack.c.b16 %v5367, %v5366
      %v5402 = vpack.c.b16 %v5369, %v5368
      %v5403 = vpack.c.b16 %v5371, %v5370
      %v5404 = vpack.c.b16 %v5373, %v5372
      %v5405 = vpack.c.b16 %v5375, %v5374
      %v5406 = vpack.c.b16 %v5377, %v5376
      %v5407 = vpack.c.b16 %v5379, %v5378
      %v5408 = vpack.c.b16 %v5381, %v5380
      %v5409 = vpack.c.b16 %v5383, %v5382
      %v5410 = vpack.c.b16 %v5385, %v5384
      %v5411 = vpack.c.b16 %v5387, %v5386
      %v5412 = vpack.c.b16 %v5389, %v5388
      %v5413 = vpack.c.b16 %v5391, %v5390
      %v5414 = vpack.c.b16 %v5393, %v5392
      %vm5415 = vcmask 1044480
      %v5416 = vrot.slane %v5394, 3
      %v5417 = vrot.slane %v5395, 3
      %v5418 = vsel %vm5415, %v5416, %v5417
      %v5419 = vrot.slane %v5396, 3
      %v5420 = vsel %vm5415, %v5417, %v5419
      %v5421 = vrot.slane %v5397, 3
      %v5422 = vsel %vm5415, %v5419, %v5421
      %v5423 = vrot.slane %v5398, 3
      %v5424 = vsel %vm5415, %v5421, %v5423
      %v5425 = vrot.slane %v5399, 3
      %v5426 = vsel %vm5415, %v5423, %v5425
      %v5427 = vrot.slane %v5400, 3
      %v5428 = vsel %vm5415, %v5425, %v5427
      %v5429 = vrot.slane %v5401, 3
      %v5430 = vsel %vm5415, %v5427, %v5429
      %v5431 = vrot.slane %v5402, 3
      %v5432 = vsel %vm5415, %v5429, %v5431
      %v5433 = vrot.slane %v5403, 3
      %v5434 = vsel %vm5415, %v5431, %v5433
      %v5435 = vrot.slane %v5404, 3
      %v5436 = vsel %vm5415, %v5433, %v5435
      %v5437 = vrot.slane %v5405, 3
      %v5438 = vsel %vm5415, %v5435, %v5437
      %v5439 = vrot.slane %v5406, 3
      %v5440 = vsel %vm5415, %v5437, %v5439
      %v5441 = vrot.slane %v5407, 3
      %v5442 = vsel %vm5415, %v5439, %v5441
      %v5443 = vrot.slane %v5408, 3
      %v5444 = vsel %vm5415, %v5441, %v5443
      %v5445 = vrot.slane %v5409, 3
      %v5446 = vsel %vm5415, %v5443, %v5445
      %v5447 = vrot.slane %v5410, 3
      %v5448 = vsel %vm5415, %v5445, %v5447
      %v5449 = vrot.slane %v5411, 3
      %v5450 = vsel %vm5415, %v5447, %v5449
      %v5451 = vrot.slane %v5412, 3
      %v5452 = vsel %vm5415, %v5449, %v5451
      %v5453 = vrot.slane %v5413, 3
      %v5454 = vsel %vm5415, %v5451, %v5453
      %v5455 = vrot.slane %v5414, 3
      %v5456 = vsel %vm5415, %v5453, %v5455
      %v5461 = vunpack.c.l.b16 %v5306
      %v5462 = vunpack.c.l.b16 %v5307
      %v5463 = vunpack.c.l.b16 %v5308
      %v5464 = vunpack.c.l.b16 %v5309
      %v5465 = vpack.c.b16 %v5462, %v5461
      %v5466 = vpack.c.b16 %v5464, %v5463
      %v5470 = vsel %vm413, %v5418, 0
      %v5473 = vsel %vm413, %v5420, 0
      %v5476 = vsel %vm413, %v5422, 0
      %v5479 = vsel %vm413, %v5424, 0
      %v5482 = vsel %vm413, %v5426, 0
      %v5485 = vsel %vm413, %v5428, 0
      %v5488 = vsel %vm413, %v5430, 0
      %v5491 = vsel %vm413, %v5432, 0
      %v5494 = vsel %vm413, %v5434, 0
      %v5497 = vsel %vm413, %v5436, 0
      %v5500 = vsel %vm413, %v5438, 0
      %v5503 = vsel %vm413, %v5440, 0
      %v5506 = vsel %vm413, %v5442, 0
      %v5509 = vsel %vm413, %v5444, 0
      %v5512 = vsel %vm413, %v5446, 0
      %v5515 = vsel %vm413, %v5448, 0
      %v5518 = vsel %vm413, %v5450, 0
      %v5521 = vsel %vm413, %v5452, 0
      %v5524 = vsel %vm413, %v5454, 0
      %v5527 = vsel %vm413, %v5456, 0
      %v5530 = vsel %vm413, %v5455, 0
      %5532 = vmatprep.subr.bf16.mxu0 0
      %5533 = vmatpush1.bf16.msra.mxu0 %v5465
      %5534 = vmatprep.subr.bf16.mxu0 0
      %5535 = vmatpush1.bf16.msra.mxu0 %v5466
      %5536 = vmatprep.subr.bf16.mxu0 0
      %5537 = vmatpush1.bf16.msra.mxu0 0
      %5538 = vmatprep.subr.bf16.mxu0 0
      %5539 = vmatpush1.bf16.msra.mxu0 0
      %5540 = vmatprep.subr.bf16.mxu0 0
      %5541 = vmatpush1.bf16.msra.mxu0 0
      %5542 = vmatprep.subr.bf16.mxu0 0
      %5543 = vmatpush1.bf16.msra.mxu0 0
      %5544 = vmatprep.subr.bf16.mxu0 0
      %5545 = vmatpush1.bf16.msra.mxu0 0
      %5546 = vmatprep.subr.bf16.mxu0 0
      %5547 = vmatpush1.bf16.msra.mxu0 0
      %5548 = vmatprep.subr.bf16.mxu0 0
      %5549 = vmatpush1.bf16.msra.mxu0 0
      %5550 = vmatprep.subr.bf16.mxu0 0
      %5551 = vmatpush1.bf16.msra.mxu0 0
      %5552 = vmatprep.subr.bf16.mxu0 0
      %5553 = vmatpush1.bf16.msra.mxu0 0
      %5554 = vmatprep.subr.bf16.mxu0 0
      %5555 = vmatpush1.bf16.msra.mxu0 0
      %5556 = vmatprep.subr.bf16.mxu0 0
      %5557 = vmatpush1.bf16.msra.mxu0 0
      %5558 = vmatprep.subr.bf16.mxu0 0
      %5559 = vmatpush1.bf16.msra.mxu0 0
      %5560 = vmatprep.subr.bf16.mxu0 0
      %5561 = vmatpush1.bf16.msra.mxu0 0
      %5562 = vmatprep.subr.bf16.mxu0 0
      %5563 = vmatpush1.bf16.msra.mxu0 0
      %5564 = vmatprep.mubr.bf16.mxu0 0
      %5565 = vmatmul.mubr.bf16.gmra.mrb[0].mxu0 %v5470
      %v5566 = vpop.f32.mrb[0].mxu0
      %v5567 = vadd.f32 0.0, %v5566
      %v5568 = vpop.f32.mrb[0].mxu0
      %v5569 = vpop.f32.mrb[0].mxu0
      %v5570 = vadd.f32 0.0, %v5569
      %v5571 = vpop.f32.mrb[0].mxu0
      %5572 = vmatprep.mubr.bf16.mxu0 0
      %5573 = vmatmul.mubr.bf16.gmra.mrb[0].mxu0 %v5473
      %v5574 = vpop.f32.mrb[0].mxu0
      %v5575 = vadd.f32 0.0, %v5574
      %v5576 = vpop.f32.mrb[0].mxu0
      %v5577 = vpop.f32.mrb[0].mxu0
      %v5578 = vadd.f32 0.0, %v5577
      %v5579 = vpop.f32.mrb[0].mxu0
      %5580 = vmatprep.mubr.bf16.mxu0 0
      %5581 = vmatmul.mubr.bf16.gmra.mrb[0].mxu0 %v5476
      %v5582 = vpop.f32.mrb[0].mxu0
      %v5583 = vadd.f32 0.0, %v5582
      %v5584 = vpop.f32.mrb[0].mxu0
      %v5585 = vpop.f32.mrb[0].mxu0
      %v5586 = vadd.f32 0.0, %v5585
      %v5587 = vpop.f32.mrb[0].mxu0
      %5588 = vmatprep.mubr.bf16.mxu0 0
      %5589 = vmatmul.mubr.bf16.gmra.mrb[0].mxu0 %v5479
      %v5590 = vpop.f32.mrb[0].mxu0
      %v5591 = vadd.f32 0.0, %v5590
      %v5592 = vpop.f32.mrb[0].mxu0
      %v5593 = vpop.f32.mrb[0].mxu0
      %v5594 = vadd.f32 0.0, %v5593
      %v5595 = vpop.f32.mrb[0].mxu0
      %5596 = vmatprep.mubr.bf16.mxu0 0
      %5597 = vmatmul.mubr.bf16.gmra.mrb[0].mxu0 %v5482
      %v5598 = vpop.f32.mrb[0].mxu0
      %v5599 = vadd.f32 0.0, %v5598
      %v5600 = vpop.f32.mrb[0].mxu0
      %v5601 = vpop.f32.mrb[0].mxu0
      %v5602 = vadd.f32 0.0, %v5601
      %v5603 = vpop.f32.mrb[0].mxu0
      %5604 = vmatprep.mubr.bf16.mxu0 0
      %5605 = vmatmul.mubr.bf16.gmra.mrb[0].mxu0 %v5485
      %v5606 = vpop.f32.mrb[0].mxu0
      %v5607 = vadd.f32 0.0, %v5606
      %v5608 = vpop.f32.mrb[0].mxu0
      %v5609 = vpop.f32.mrb[0].mxu0
      %v5610 = vadd.f32 0.0, %v5609
      %v5611 = vpop.f32.mrb[0].mxu0
      %5612 = vmatprep.mubr.bf16.mxu0 0
      %5613 = vmatmul.mubr.bf16.gmra.mrb[0].mxu0 %v5488
      %v5614 = vpop.f32.mrb[0].mxu0
      %v5615 = vadd.f32 0.0, %v5614
      %v5616 = vpop.f32.mrb[0].mxu0
      %v5617 = vpop.f32.mrb[0].mxu0
      %v5618 = vadd.f32 0.0, %v5617
      %v5619 = vpop.f32.mrb[0].mxu0
      %5620 = vmatprep.mubr.bf16.mxu0 0
      %5621 = vmatmul.mubr.bf16.gmra.mrb[0].mxu0 %v5491
      %v5622 = vpop.f32.mrb[0].mxu0
      %v5623 = vadd.f32 0.0, %v5622
      %v5624 = vpop.f32.mrb[0].mxu0
      %v5625 = vpop.f32.mrb[0].mxu0
      %v5626 = vadd.f32 0.0, %v5625
      %v5627 = vpop.f32.mrb[0].mxu0
      %5628 = vmatprep.mubr.bf16.mxu0 0
      %5629 = vmatmul.mubr.bf16.gmra.mrb[0].mxu0 %v5494
      %v5630 = vpop.f32.mrb[0].mxu0
      %v5631 = vadd.f32 0.0, %v5630
      %v5632 = vpop.f32.mrb[0].mxu0
      %v5633 = vpop.f32.mrb[0].mxu0
      %v5634 = vadd.f32 0.0, %v5633
      %v5635 = vpop.f32.mrb[0].mxu0
      %5636 = vmatprep.mubr.bf16.mxu0 0
      %5637 = vmatmul.mubr.bf16.gmra.mrb[0].mxu0 %v5497
      %v5638 = vpop.f32.mrb[0].mxu0
      %v5639 = vadd.f32 0.0, %v5638
      %v5640 = vpop.f32.mrb[0].mxu0
      %v5641 = vpop.f32.mrb[0].mxu0
      %v5642 = vadd.f32 0.0, %v5641
      %v5643 = vpop.f32.mrb[0].mxu0
      %5644 = vmatprep.mubr.bf16.mxu0 0
      %5645 = vmatmul.mubr.bf16.gmra.mrb[0].mxu0 %v5500
      %v5646 = vpop.f32.mrb[0].mxu0
      %v5647 = vadd.f32 0.0, %v5646
      %v5648 = vpop.f32.mrb[0].mxu0
      %v5649 = vpop.f32.mrb[0].mxu0
      %v5650 = vadd.f32 0.0, %v5649
      %v5651 = vpop.f32.mrb[0].mxu0
      %5652 = vmatprep.mubr.bf16.mxu0 0
      %5653 = vmatmul.mubr.bf16.gmra.mrb[0].mxu0 %v5503
      %v5654 = vpop.f32.mrb[0].mxu0
      %v5655 = vadd.f32 0.0, %v5654
      %v5656 = vpop.f32.mrb[0].mxu0
      %v5657 = vpop.f32.mrb[0].mxu0
      %v5658 = vadd.f32 0.0, %v5657
      %v5659 = vpop.f32.mrb[0].mxu0
      %5660 = vmatprep.mubr.bf16.mxu0 0
      %5661 = vmatmul.mubr.bf16.gmra.mrb[0].mxu0 %v5506
      %v5662 = vpop.f32.mrb[0].mxu0
      %v5663 = vadd.f32 0.0, %v5662
      %v5664 = vpop.f32.mrb[0].mxu0
      %v5665 = vpop.f32.mrb[0].mxu0
      %v5666 = vadd.f32 0.0, %v5665
      %v5667 = vpop.f32.mrb[0].mxu0
      %5668 = vmatprep.mubr.bf16.mxu0 0
      %5669 = vmatmul.mubr.bf16.gmra.mrb[0].mxu0 %v5509
      %v5670 = vpop.f32.mrb[0].mxu0
      %v5671 = vadd.f32 0.0, %v5670
      %v5672 = vpop.f32.mrb[0].mxu0
      %v5673 = vpop.f32.mrb[0].mxu0
      %v5674 = vadd.f32 0.0, %v5673
      %v5675 = vpop.f32.mrb[0].mxu0
      %5676 = vmatprep.mubr.bf16.mxu0 0
      %5677 = vmatmul.mubr.bf16.gmra.mrb[0].mxu0 %v5512
      %v5678 = vpop.f32.mrb[0].mxu0
      %v5679 = vadd.f32 0.0, %v5678
      %v5680 = vpop.f32.mrb[0].mxu0
      %v5681 = vpop.f32.mrb[0].mxu0
      %v5682 = vadd.f32 0.0, %v5681
      %v5683 = vpop.f32.mrb[0].mxu0
      %5684 = vmatprep.mubr.bf16.mxu0 0
      %5685 = vmatmul.mubr.bf16.gmra.mrb[0].mxu0 %v5515
      %v5686 = vpop.f32.mrb[0].mxu0
      %v5687 = vadd.f32 0.0, %v5686
      %v5688 = vpop.f32.mrb[0].mxu0
      %v5689 = vpop.f32.mrb[0].mxu0
      %v5690 = vadd.f32 0.0, %v5689
      %v5691 = vpop.f32.mrb[0].mxu0
      %5692 = vmatprep.mubr.bf16.mxu0 0
      %5693 = vmatmul.mubr.bf16.gmra.mrb[0].mxu0 %v5518
      %v5694 = vpop.f32.mrb[0].mxu0
      %v5695 = vadd.f32 0.0, %v5694
      %v5696 = vpop.f32.mrb[0].mxu0
      %v5697 = vpop.f32.mrb[0].mxu0
      %v5698 = vadd.f32 0.0, %v5697
      %v5699 = vpop.f32.mrb[0].mxu0
      %5700 = vmatprep.mubr.bf16.mxu0 0
      %5701 = vmatmul.mubr.bf16.gmra.mrb[0].mxu0 %v5521
      %v5702 = vpop.f32.mrb[0].mxu0
      %v5703 = vadd.f32 0.0, %v5702
      %v5704 = vpop.f32.mrb[0].mxu0
      %v5705 = vpop.f32.mrb[0].mxu0
      %v5706 = vadd.f32 0.0, %v5705
      %v5707 = vpop.f32.mrb[0].mxu0
      %5708 = vmatprep.mubr.bf16.mxu0 0
      %5709 = vmatmul.mubr.bf16.gmra.mrb[0].mxu0 %v5524
      %v5710 = vpop.f32.mrb[0].mxu0
      %v5711 = vadd.f32 0.0, %v5710
      %v5712 = vpop.f32.mrb[0].mxu0
      %v5713 = vpop.f32.mrb[0].mxu0
      %v5714 = vadd.f32 0.0, %v5713
      %v5715 = vpop.f32.mrb[0].mxu0
      %5716 = vmatprep.mubr.bf16.mxu0 0
      %5717 = vmatmul.mubr.bf16.gmra.mrb[0].mxu0 %v5527
      %v5718 = vpop.f32.mrb[0].mxu0
      %v5719 = vadd.f32 0.0, %v5718
      %v5720 = vpop.f32.mrb[0].mxu0
      %v5721 = vpop.f32.mrb[0].mxu0
      %v5722 = vadd.f32 0.0, %v5721
      %v5723 = vpop.f32.mrb[0].mxu0
      %5724 = vmatprep.mubr.bf16.mxu0 0
      %5725 = vmatmul.mubr.bf16.gmra.mrb[0].mxu0 %v5530
      %v5726 = vpop.f32.mrb[0].mxu0
      %v5727 = vadd.f32 0.0, %v5726
      %v5728 = vpop.f32.mrb[0].mxu0
      %v5729 = vpop.f32.mrb[0].mxu0
      %v5730 = vpop.f32.mrb[0].mxu0
      %5731 = vdwg.mxu0
      %v5732 = vld [vmem:[#allocation2] sm:$0xff]
      %v5733 = vld [vmem:[#allocation2 + $0x8] sm:$0xff]
      %v5734 = vld [vmem:[#allocation2 + $0x10] sm:$0xff]
      %v5735 = vld [vmem:[#allocation2 + $0x18] sm:$0xff]
      %v5736 = vld [vmem:[#allocation2 + $0x20] sm:$0xff]
      %v5737 = vld [vmem:[#allocation2 + $0x28] sm:$0xff]
      %v5738 = vld [vmem:[#allocation2 + $0x30] sm:$0xff]
      %v5739 = vld [vmem:[#allocation2 + $0x38] sm:$0xff]
      %v5740 = vld [vmem:[#allocation2 + $0x40] sm:$0xff]
      %v5741 = vld [vmem:[#allocation2 + $0x48] sm:$0xff]
      %v5742 = vld [vmem:[#allocation2 + $0x50] sm:$0xff]
      %v5743 = vld [vmem:[#allocation2 + $0x58] sm:$0xff]
      %v5744 = vld [vmem:[#allocation2 + $0x60] sm:$0xff]
      %v5745 = vld [vmem:[#allocation2 + $0x68] sm:$0xff]
      %v5746 = vld [vmem:[#allocation2 + $0x70] sm:$0xff]
      %v5747 = vld [vmem:[#allocation2 + $0x78] sm:$0xff]
      %v5748 = vld [vmem:[#allocation2 + $0x80] sm:$0xff]
      %v5749 = vld [vmem:[#allocation2 + $0x88] sm:$0xff]
      %v5750 = vld [vmem:[#allocation2 + $0x90] sm:$0xff]
      %v5751 = vld [vmem:[#allocation2 + $0x98] sm:$0xff]
      %v5752 = vld [vmem:[#allocation2 + $0xa0] sm:$0xff]
      %v5753 = vld [vmem:[#allocation2 + $0xa8] sm:$0xff]
      %v5754 = vld [vmem:[#allocation2 + $0xb0] sm:$0xff]
      %v5755 = vld [vmem:[#allocation2 + $0xb8] sm:$0xff]
      %v5756 = vld [vmem:[#allocation2 + $0xc0] sm:$0xff]
      %v5757 = vld [vmem:[#allocation2 + $0xc8] sm:$0xff]
      %v5758 = vld [vmem:[#allocation2 + $0xd0] sm:$0xff]
      %v5759 = vld [vmem:[#allocation2 + $0xd8] sm:$0xff]
      %v5760 = vld [vmem:[#allocation2 + $0xe0] sm:$0xff]
      %v5761 = vld [vmem:[#allocation2 + $0xe8] sm:$0xff]
      %v5762 = vld [vmem:[#allocation2 + $0xf0] sm:$0xff]
      %v5763 = vld [vmem:[#allocation2 + $0xf8] sm:$0xff]
      %v5764 = vld [vmem:[#allocation2 + $0x100] sm:$0xff]
      %v5765 = vld [vmem:[#allocation2 + $0x108] sm:$0xff]
      %v5766 = vld [vmem:[#allocation2 + $0x110] sm:$0xff]
      %v5767 = vld [vmem:[#allocation2 + $0x118] sm:$0xff]
      %v5768 = vld [vmem:[#allocation2 + $0x120] sm:$0xff]
      %v5769 = vld [vmem:[#allocation2 + $0x128] sm:$0xff]
      %v5770 = vld [vmem:[#allocation2 + $0x130] sm:$0xff]
      %v5771 = vld [vmem:[#allocation2 + $0x138] sm:$0xff]
      %v5772 = vld [vmem:[#allocation2 + $0x140] sm:$0xf]
      %v5773 = vadd.f32 %v5732, %v5567
      %v5774 = vadd.f32 %v5733, %v5570
      %v5775 = vadd.f32 %v5734, %v5575
      %v5776 = vadd.f32 %v5735, %v5578
      %v5777 = vadd.f32 %v5736, %v5583
      %v5778 = vadd.f32 %v5737, %v5586
      %v5779 = vadd.f32 %v5738, %v5591
      %v5780 = vadd.f32 %v5739, %v5594
      %v5781 = vadd.f32 %v5740, %v5599
      %v5782 = vadd.f32 %v5741, %v5602
      %v5783 = vadd.f32 %v5742, %v5607
      %v5784 = vadd.f32 %v5743, %v5610
      %v5785 = vadd.f32 %v5744, %v5615
      %v5786 = vadd.f32 %v5745, %v5618
      %v5787 = vadd.f32 %v5746, %v5623
      %v5788 = vadd.f32 %v5747, %v5626
      %v5789 = vadd.f32 %v5748, %v5631
      %v5790 = vadd.f32 %v5749, %v5634
      %v5791 = vadd.f32 %v5750, %v5639
      %v5792 = vadd.f32 %v5751, %v5642
      %v5793 = vadd.f32 %v5752, %v5647
      %v5794 = vadd.f32 %v5753, %v5650
      %v5795 = vadd.f32 %v5754, %v5655
      %v5796 = vadd.f32 %v5755, %v5658
      %v5797 = vadd.f32 %v5756, %v5663
      %v5798 = vadd.f32 %v5757, %v5666
      %v5799 = vadd.f32 %v5758, %v5671
      %v5800 = vadd.f32 %v5759, %v5674
      %v5801 = vadd.f32 %v5760, %v5679
      %v5802 = vadd.f32 %v5761, %v5682
      %v5803 = vadd.f32 %v5762, %v5687
      %v5804 = vadd.f32 %v5763, %v5690
      %v5805 = vadd.f32 %v5764, %v5695
      %v5806 = vadd.f32 %v5765, %v5698
      %v5807 = vadd.f32 %v5766, %v5703
      %v5808 = vadd.f32 %v5767, %v5706
      %v5809 = vadd.f32 %v5768, %v5711
      %v5810 = vadd.f32 %v5769, %v5714
      %v5811 = vadd.f32 %v5770, %v5719
      %v5812 = vadd.f32 %v5771, %v5722
      %v5813 = vadd.f32 %v5772, %v5727
      %5814 = vst.msk [vmem:[#allocation2] sm:$0xff] %vm413, %v5773
      %5815 = vst.msk [vmem:[#allocation2 + $0x8] sm:$0xff] %vm413, %v5774
      %5816 = vst.msk [vmem:[#allocation2 + $0x10] sm:$0xff] %vm413, %v5775
      %5817 = vst.msk [vmem:[#allocation2 + $0x18] sm:$0xff] %vm413, %v5776
      %5818 = vst.msk [vmem:[#allocation2 + $0x20] sm:$0xff] %vm413, %v5777
      %5819 = vst.msk [vmem:[#allocation2 + $0x28] sm:$0xff] %vm413, %v5778
      %5820 = vst.msk [vmem:[#allocation2 + $0x30] sm:$0xff] %vm413, %v5779
      %5821 = vst.msk [vmem:[#allocation2 + $0x38] sm:$0xff] %vm413, %v5780
      %5822 = vst.msk [vmem:[#allocation2 + $0x40] sm:$0xff] %vm413, %v5781
      %5823 = vst.msk [vmem:[#allocation2 + $0x48] sm:$0xff] %vm413, %v5782
      %5824 = vst.msk [vmem:[#allocation2 + $0x50] sm:$0xff] %vm413, %v5783
      %5825 = vst.msk [vmem:[#allocation2 + $0x58] sm:$0xff] %vm413, %v5784
      %5826 = vst.msk [vmem:[#allocation2 + $0x60] sm:$0xff] %vm413, %v5785
      %5827 = vst.msk [vmem:[#allocation2 + $0x68] sm:$0xff] %vm413, %v5786
      %5828 = vst.msk [vmem:[#allocation2 + $0x70] sm:$0xff] %vm413, %v5787
      %5829 = vst.msk [vmem:[#allocation2 + $0x78] sm:$0xff] %vm413, %v5788
      %5830 = vst.msk [vmem:[#allocation2 + $0x80] sm:$0xff] %vm413, %v5789
      %5831 = vst.msk [vmem:[#allocation2 + $0x88] sm:$0xff] %vm413, %v5790
      %5832 = vst.msk [vmem:[#allocation2 + $0x90] sm:$0xff] %vm413, %v5791
      %5833 = vst.msk [vmem:[#allocation2 + $0x98] sm:$0xff] %vm413, %v5792
      %5834 = vst.msk [vmem:[#allocation2 + $0xa0] sm:$0xff] %vm413, %v5793
      %5835 = vst.msk [vmem:[#allocation2 + $0xa8] sm:$0xff] %vm413, %v5794
      %5836 = vst.msk [vmem:[#allocation2 + $0xb0] sm:$0xff] %vm413, %v5795
      %5837 = vst.msk [vmem:[#allocation2 + $0xb8] sm:$0xff] %vm413, %v5796
      %5838 = vst.msk [vmem:[#allocation2 + $0xc0] sm:$0xff] %vm413, %v5797
      %5839 = vst.msk [vmem:[#allocation2 + $0xc8] sm:$0xff] %vm413, %v5798
      %5840 = vst.msk [vmem:[#allocation2 + $0xd0] sm:$0xff] %vm413, %v5799
      %5841 = vst.msk [vmem:[#allocation2 + $0xd8] sm:$0xff] %vm413, %v5800
      %5842 = vst.msk [vmem:[#allocation2 + $0xe0] sm:$0xff] %vm413, %v5801
      %5843 = vst.msk [vmem:[#allocation2 + $0xe8] sm:$0xff] %vm413, %v5802
      %5844 = vst.msk [vmem:[#allocation2 + $0xf0] sm:$0xff] %vm413, %v5803
      %5845 = vst.msk [vmem:[#allocation2 + $0xf8] sm:$0xff] %vm413, %v5804
      %5846 = vst.msk [vmem:[#allocation2 + $0x100] sm:$0xff] %vm413, %v5805
      %5847 = vst.msk [vmem:[#allocation2 + $0x108] sm:$0xff] %vm413, %v5806
      %5848 = vst.msk [vmem:[#allocation2 + $0x110] sm:$0xff] %vm413, %v5807
      %5849 = vst.msk [vmem:[#allocation2 + $0x118] sm:$0xff] %vm413, %v5808
      %5850 = vst.msk [vmem:[#allocation2 + $0x120] sm:$0xff] %vm413, %v5809
      %5851 = vst.msk [vmem:[#allocation2 + $0x128] sm:$0xff] %vm413, %v5810
      %5852 = vst.msk [vmem:[#allocation2 + $0x130] sm:$0xff] %vm413, %v5811
      %5853 = vst.msk [vmem:[#allocation2 + $0x138] sm:$0xff] %vm413, %v5812
      %5854 = vst.msk [vmem:[#allocation2 + $0x140] sm:$0xf] %vm717, %v5813
      %v5855 = vld [vmem:[#allocation2] sm:$0xff]
      %v5856 = vld [vmem:[#allocation2 + $0x8] sm:$0xff]
      %v5857 = vld [vmem:[#allocation2 + $0x10] sm:$0xff]
      %v5858 = vld [vmem:[#allocation2 + $0x18] sm:$0xff]
      %v5859 = vld [vmem:[#allocation2 + $0x20] sm:$0xff]
      %v5860 = vld [vmem:[#allocation2 + $0x28] sm:$0xff]
      %v5861 = vld [vmem:[#allocation2 + $0x30] sm:$0xff]
      %v5862 = vld [vmem:[#allocation2 + $0x38] sm:$0xff]
      %v5863 = vld [vmem:[#allocation2 + $0x40] sm:$0xff]
      %v5864 = vld [vmem:[#allocation2 + $0x48] sm:$0xff]
      %v5865 = vld [vmem:[#allocation2 + $0x50] sm:$0xff]
      %v5866 = vld [vmem:[#allocation2 + $0x58] sm:$0xff]
      %v5867 = vld [vmem:[#allocation2 + $0x60] sm:$0xff]
      %v5868 = vld [vmem:[#allocation2 + $0x68] sm:$0xff]
      %v5869 = vld [vmem:[#allocation2 + $0x70] sm:$0xff]
      %v5870 = vld [vmem:[#allocation2 + $0x78] sm:$0xff]
      %v5871 = vld [vmem:[#allocation2 + $0x80] sm:$0xff]
      %v5872 = vld [vmem:[#allocation2 + $0x88] sm:$0xff]
      %v5873 = vld [vmem:[#allocation2 + $0x90] sm:$0xff]
      %v5874 = vld [vmem:[#allocation2 + $0x98] sm:$0xff]
      %v5875 = vld [vmem:[#allocation2 + $0xa0] sm:$0xff]
      %v5876 = vld [vmem:[#allocation2 + $0xa8] sm:$0xff]
      %v5877 = vld [vmem:[#allocation2 + $0xb0] sm:$0xff]
      %v5878 = vld [vmem:[#allocation2 + $0xb8] sm:$0xff]
      %v5879 = vld [vmem:[#allocation2 + $0xc0] sm:$0xff]
      %v5880 = vld [vmem:[#allocation2 + $0xc8] sm:$0xff]
      %v5881 = vld [vmem:[#allocation2 + $0xd0] sm:$0xff]
      %v5882 = vld [vmem:[#allocation2 + $0xd8] sm:$0xff]
      %v5883 = vld [vmem:[#allocation2 + $0xe0] sm:$0xff]
      %v5884 = vld [vmem:[#allocation2 + $0xe8] sm:$0xff]
      %v5885 = vld [vmem:[#allocation2 + $0xf0] sm:$0xff]
      %v5886 = vld [vmem:[#allocation2 + $0xf8] sm:$0xff]
      %v5887 = vld [vmem:[#allocation2 + $0x100] sm:$0xff]
      %v5888 = vld [vmem:[#allocation2 + $0x108] sm:$0xff]
      %v5889 = vld [vmem:[#allocation2 + $0x110] sm:$0xff]
      %v5890 = vld [vmem:[#allocation2 + $0x118] sm:$0xff]
      %v5891 = vld [vmem:[#allocation2 + $0x120] sm:$0xff]
      %v5892 = vld [vmem:[#allocation2 + $0x128] sm:$0xff]
      %v5893 = vld [vmem:[#allocation2 + $0x130] sm:$0xff]
      %v5894 = vld [vmem:[#allocation2 + $0x138] sm:$0xff]
      %v5895 = vld [vmem:[#allocation2 + $0x140] sm:$0xf]
      %v5896 = vld [vmem:[%s3] sm:$0x1]
      %v5898 = vlaneseq
      %v5899 = vshrl.u32 %v5898, 7
      %v5900 = vsub.s32 0, %v5899
      %v5901 = vrot.slane %v5896, %v5900
      %v5903 = vadd.f32 %v5855, %v5901
      %v5904 = vadd.f32 %v5856, %v5901
      %v5905 = vadd.f32 %v5857, %v5901
      %v5906 = vadd.f32 %v5858, %v5901
      %v5907 = vadd.f32 %v5859, %v5901
      %v5908 = vadd.f32 %v5860, %v5901
      %v5909 = vadd.f32 %v5861, %v5901
      %v5910 = vadd.f32 %v5862, %v5901
      %v5911 = vadd.f32 %v5863, %v5901
      %v5912 = vadd.f32 %v5864, %v5901
      %v5913 = vadd.f32 %v5865, %v5901
      %v5914 = vadd.f32 %v5866, %v5901
      %v5915 = vadd.f32 %v5867, %v5901
      %v5916 = vadd.f32 %v5868, %v5901
      %v5917 = vadd.f32 %v5869, %v5901
      %v5918 = vadd.f32 %v5870, %v5901
      %v5919 = vadd.f32 %v5871, %v5901
      %v5920 = vadd.f32 %v5872, %v5901
      %v5921 = vadd.f32 %v5873, %v5901
      %v5922 = vadd.f32 %v5874, %v5901
      %v5923 = vadd.f32 %v5875, %v5901
      %v5924 = vadd.f32 %v5876, %v5901
      %v5925 = vadd.f32 %v5877, %v5901
      %v5926 = vadd.f32 %v5878, %v5901
      %v5927 = vadd.f32 %v5879, %v5901
      %v5928 = vadd.f32 %v5880, %v5901
      %v5929 = vadd.f32 %v5881, %v5901
      %v5930 = vadd.f32 %v5882, %v5901
      %v5931 = vadd.f32 %v5883, %v5901
      %v5932 = vadd.f32 %v5884, %v5901
      %v5933 = vadd.f32 %v5885, %v5901
      %v5934 = vadd.f32 %v5886, %v5901
      %v5935 = vadd.f32 %v5887, %v5901
      %v5936 = vadd.f32 %v5888, %v5901
      %v5937 = vadd.f32 %v5889, %v5901
      %v5938 = vadd.f32 %v5890, %v5901
      %v5939 = vadd.f32 %v5891, %v5901
      %v5940 = vadd.f32 %v5892, %v5901
      %v5941 = vadd.f32 %v5893, %v5901
      %v5942 = vadd.f32 %v5894, %v5901
      %v5943 = vadd.f32 %v5895, %v5901
      %v5944 = vmax.f32 %v5903, 0.0
      %v5945 = vmax.f32 %v5904, 0.0
      %v5946 = vmax.f32 %v5905, 0.0
      %v5947 = vmax.f32 %v5906, 0.0
      %v5948 = vmax.f32 %v5907, 0.0
      %v5949 = vmax.f32 %v5908, 0.0
      %v5950 = vmax.f32 %v5909, 0.0
      %v5951 = vmax.f32 %v5910, 0.0
      %v5952 = vmax.f32 %v5911, 0.0
      %v5953 = vmax.f32 %v5912, 0.0
      %v5954 = vmax.f32 %v5913, 0.0
      %v5955 = vmax.f32 %v5914, 0.0
      %v5956 = vmax.f32 %v5915, 0.0
      %v5957 = vmax.f32 %v5916, 0.0
      %v5958 = vmax.f32 %v5917, 0.0
      %v5959 = vmax.f32 %v5918, 0.0
      %v5960 = vmax.f32 %v5919, 0.0
      %v5961 = vmax.f32 %v5920, 0.0
      %v5962 = vmax.f32 %v5921, 0.0
      %v5963 = vmax.f32 %v5922, 0.0
      %v5964 = vmax.f32 %v5923, 0.0
      %v5965 = vmax.f32 %v5924, 0.0
      %v5966 = vmax.f32 %v5925, 0.0
      %v5967 = vmax.f32 %v5926, 0.0
      %v5968 = vmax.f32 %v5927, 0.0
      %v5969 = vmax.f32 %v5928, 0.0
      %v5970 = vmax.f32 %v5929, 0.0
      %v5971 = vmax.f32 %v5930, 0.0
      %v5972 = vmax.f32 %v5931, 0.0
      %v5973 = vmax.f32 %v5932, 0.0
      %v5974 = vmax.f32 %v5933, 0.0
      %v5975 = vmax.f32 %v5934, 0.0
      %v5976 = vmax.f32 %v5935, 0.0
      %v5977 = vmax.f32 %v5936, 0.0
      %v5978 = vmax.f32 %v5937, 0.0
      %v5979 = vmax.f32 %v5938, 0.0
      %v5980 = vmax.f32 %v5939, 0.0
      %v5981 = vmax.f32 %v5940, 0.0
      %v5982 = vmax.f32 %v5941, 0.0
      %v5983 = vmax.f32 %v5942, 0.0
      %v5984 = vmax.f32 %v5943, 0.0
      %v5985 = vld [vmem:[%s1] sm:$0xff]
      %v5986 = vld [vmem:[%s1 + $0x8] sm:$0xff]
      %v5987 = vld [vmem:[%s1 + $0x10] sm:$0xff]
      %v5988 = vld [vmem:[%s1 + $0x18] sm:$0xff]
      %v5989 = vld [vmem:[%s1 + $0x20] sm:$0xff]
      %v5990 = vld [vmem:[%s1 + $0x28] sm:$0xff]
      %v5991 = vld [vmem:[%s1 + $0x30] sm:$0xff]
      %v5992 = vld [vmem:[%s1 + $0x38] sm:$0xff]
      %v5993 = vld [vmem:[%s1 + $0x40] sm:$0xff]
      %v5994 = vld [vmem:[%s1 + $0x48] sm:$0xff]
      %v5995 = vld [vmem:[%s1 + $0x50] sm:$0xff]
      %v5996 = vld [vmem:[%s1 + $0x58] sm:$0xff]
      %v5997 = vld [vmem:[%s1 + $0x60] sm:$0xff]
      %v5998 = vld [vmem:[%s1 + $0x68] sm:$0xff]
      %v5999 = vld [vmem:[%s1 + $0x70] sm:$0xff]
      %v6000 = vld [vmem:[%s1 + $0x78] sm:$0xff]
      %v6001 = vld [vmem:[%s1 + $0x80] sm:$0xff]
      %v6002 = vld [vmem:[%s1 + $0x88] sm:$0xff]
      %v6003 = vld [vmem:[%s1 + $0x90] sm:$0xff]
      %v6004 = vld [vmem:[%s1 + $0x98] sm:$0xff]
      %v6005 = vld [vmem:[%s1 + $0xa0] sm:$0xff]
      %v6006 = vld [vmem:[%s1 + $0xa8] sm:$0xff]
      %v6007 = vld [vmem:[%s1 + $0xb0] sm:$0xff]
      %v6008 = vld [vmem:[%s1 + $0xb8] sm:$0xff]
      %v6009 = vld [vmem:[%s1 + $0xc0] sm:$0xff]
      %v6010 = vld [vmem:[%s1 + $0xc8] sm:$0xff]
      %v6011 = vld [vmem:[%s1 + $0xd0] sm:$0xff]
      %v6012 = vld [vmem:[%s1 + $0xd8] sm:$0xff]
      %v6013 = vld [vmem:[%s1 + $0xe0] sm:$0xff]
      %v6014 = vld [vmem:[%s1 + $0xe8] sm:$0xff]
      %v6015 = vld [vmem:[%s1 + $0xf0] sm:$0xff]
      %v6016 = vld [vmem:[%s1 + $0xf8] sm:$0xff]
      %v6017 = vld [vmem:[%s1 + $0x100] sm:$0xff]
      %v6018 = vld [vmem:[%s1 + $0x108] sm:$0xff]
      %v6019 = vld [vmem:[%s1 + $0x110] sm:$0xff]
      %v6020 = vld [vmem:[%s1 + $0x118] sm:$0xff]
      %v6021 = vld [vmem:[%s1 + $0x120] sm:$0xff]
      %v6022 = vld [vmem:[%s1 + $0x128] sm:$0xff]
      %v6023 = vld [vmem:[%s1 + $0x130] sm:$0xff]
      %v6024 = vld [vmem:[%s1 + $0x138] sm:$0xff]
      %v6025 = vld [vmem:[%s1 + $0x140] sm:$0xf]
      %6027 = vset.pattern.permute.xlu0 0
      %6028 = vperm.xlu0 %6027, %v5985
      %v6029 = vpop.permute.xlu0 %6028
      %6032 = vset.pattern.permute.xlu0 0
      %6033 = vperm.xlu0 %6032, %v5986
      %v6034 = vpop.permute.xlu0 %6033
      %6037 = vset.pattern.permute.xlu0 0
      %6038 = vperm.xlu0 %6037, %v5987
      %v6039 = vpop.permute.xlu0 %6038
      %6042 = vset.pattern.permute.xlu0 0
      %6043 = vperm.xlu0 %6042, %v5988
      %v6044 = vpop.permute.xlu0 %6043
      %6047 = vset.pattern.permute.xlu0 0
      %6048 = vperm.xlu0 %6047, %v5989
      %v6049 = vpop.permute.xlu0 %6048
      %6052 = vset.pattern.permute.xlu0 0
      %6053 = vperm.xlu0 %6052, %v5990
      %v6054 = vpop.permute.xlu0 %6053
      %6057 = vset.pattern.permute.xlu0 0
      %6058 = vperm.xlu0 %6057, %v5991
      %v6059 = vpop.permute.xlu0 %6058
      %6062 = vset.pattern.permute.xlu0 0
      %6063 = vperm.xlu0 %6062, %v5992
      %v6064 = vpop.permute.xlu0 %6063
      %6067 = vset.pattern.permute.xlu0 0
      %6068 = vperm.xlu0 %6067, %v5993
      %v6069 = vpop.permute.xlu0 %6068
      %6072 = vset.pattern.permute.xlu0 0
      %6073 = vperm.xlu0 %6072, %v5994
      %v6074 = vpop.permute.xlu0 %6073
      %6077 = vset.pattern.permute.xlu0 0
      %6078 = vperm.xlu0 %6077, %v5995
      %v6079 = vpop.permute.xlu0 %6078
      %6082 = vset.pattern.permute.xlu0 0
      %6083 = vperm.xlu0 %6082, %v5996
      %v6084 = vpop.permute.xlu0 %6083
      %6087 = vset.pattern.permute.xlu0 0
      %6088 = vperm.xlu0 %6087, %v5997
      %v6089 = vpop.permute.xlu0 %6088
      %6092 = vset.pattern.permute.xlu0 0
      %6093 = vperm.xlu0 %6092, %v5998
      %v6094 = vpop.permute.xlu0 %6093
      %6097 = vset.pattern.permute.xlu0 0
      %6098 = vperm.xlu0 %6097, %v5999
      %v6099 = vpop.permute.xlu0 %6098
      %6102 = vset.pattern.permute.xlu0 0
      %6103 = vperm.xlu0 %6102, %v6000
      %v6104 = vpop.permute.xlu0 %6103
      %6107 = vset.pattern.permute.xlu0 0
      %6108 = vperm.xlu0 %6107, %v6001
      %v6109 = vpop.permute.xlu0 %6108
      %6112 = vset.pattern.permute.xlu0 0
      %6113 = vperm.xlu0 %6112, %v6002
      %v6114 = vpop.permute.xlu0 %6113
      %6117 = vset.pattern.permute.xlu0 0
      %6118 = vperm.xlu0 %6117, %v6003
      %v6119 = vpop.permute.xlu0 %6118
      %6122 = vset.pattern.permute.xlu0 0
      %6123 = vperm.xlu0 %6122, %v6004
      %v6124 = vpop.permute.xlu0 %6123
      %6127 = vset.pattern.permute.xlu0 0
      %6128 = vperm.xlu0 %6127, %v6005
      %v6129 = vpop.permute.xlu0 %6128
      %6132 = vset.pattern.permute.xlu0 0
      %6133 = vperm.xlu0 %6132, %v6006
      %v6134 = vpop.permute.xlu0 %6133
      %6137 = vset.pattern.permute.xlu0 0
      %6138 = vperm.xlu0 %6137, %v6007
      %v6139 = vpop.permute.xlu0 %6138
      %6142 = vset.pattern.permute.xlu0 0
      %6143 = vperm.xlu0 %6142, %v6008
      %v6144 = vpop.permute.xlu0 %6143
      %6147 = vset.pattern.permute.xlu0 0
      %6148 = vperm.xlu0 %6147, %v6009
      %v6149 = vpop.permute.xlu0 %6148
      %6152 = vset.pattern.permute.xlu0 0
      %6153 = vperm.xlu0 %6152, %v6010
      %v6154 = vpop.permute.xlu0 %6153
      %6157 = vset.pattern.permute.xlu0 0
      %6158 = vperm.xlu0 %6157, %v6011
      %v6159 = vpop.permute.xlu0 %6158
      %6162 = vset.pattern.permute.xlu0 0
      %6163 = vperm.xlu0 %6162, %v6012
      %v6164 = vpop.permute.xlu0 %6163
      %6167 = vset.pattern.permute.xlu0 0
      %6168 = vperm.xlu0 %6167, %v6013
      %v6169 = vpop.permute.xlu0 %6168
      %6172 = vset.pattern.permute.xlu0 0
      %6173 = vperm.xlu0 %6172, %v6014
      %v6174 = vpop.permute.xlu0 %6173
      %6177 = vset.pattern.permute.xlu0 0
      %6178 = vperm.xlu0 %6177, %v6015
      %v6179 = vpop.permute.xlu0 %6178
      %6182 = vset.pattern.permute.xlu0 0
      %6183 = vperm.xlu0 %6182, %v6016
      %v6184 = vpop.permute.xlu0 %6183
      %6187 = vset.pattern.permute.xlu0 0
      %6188 = vperm.xlu0 %6187, %v6017
      %v6189 = vpop.permute.xlu0 %6188
      %6192 = vset.pattern.permute.xlu0 0
      %6193 = vperm.xlu0 %6192, %v6018
      %v6194 = vpop.permute.xlu0 %6193
      %6197 = vset.pattern.permute.xlu0 0
      %6198 = vperm.xlu0 %6197, %v6019
      %v6199 = vpop.permute.xlu0 %6198
      %6202 = vset.pattern.permute.xlu0 0
      %6203 = vperm.xlu0 %6202, %v6020
      %v6204 = vpop.permute.xlu0 %6203
      %6207 = vset.pattern.permute.xlu0 0
      %6208 = vperm.xlu0 %6207, %v6021
      %v6209 = vpop.permute.xlu0 %6208
      %6212 = vset.pattern.permute.xlu0 0
      %6213 = vperm.xlu0 %6212, %v6022
      %v6214 = vpop.permute.xlu0 %6213
      %6217 = vset.pattern.permute.xlu0 0
      %6218 = vperm.xlu0 %6217, %v6023
      %v6219 = vpop.permute.xlu0 %6218
      %6222 = vset.pattern.permute.xlu0 0
      %6223 = vperm.xlu0 %6222, %v6024
      %v6224 = vpop.permute.xlu0 %6223
      %6227 = vset.pattern.permute.xlu0 0
      %6228 = vperm.xlu0 %6227, %v6025
      %v6229 = vpop.permute.xlu0 %6228
      %v6231 = vmul.f32 %v5944, %v6029
      %v6232 = vmul.f32 %v5945, %v6034
      %v6233 = vmul.f32 %v5946, %v6039
      %v6234 = vmul.f32 %v5947, %v6044
      %v6235 = vmul.f32 %v5948, %v6049
      %v6236 = vmul.f32 %v5949, %v6054
      %v6237 = vmul.f32 %v5950, %v6059
      %v6238 = vmul.f32 %v5951, %v6064
      %v6239 = vmul.f32 %v5952, %v6069
      %v6240 = vmul.f32 %v5953, %v6074
      %v6241 = vmul.f32 %v5954, %v6079
      %v6242 = vmul.f32 %v5955, %v6084
      %v6243 = vmul.f32 %v5956, %v6089
      %v6244 = vmul.f32 %v5957, %v6094
      %v6245 = vmul.f32 %v5958, %v6099
      %v6246 = vmul.f32 %v5959, %v6104
      %v6247 = vmul.f32 %v5960, %v6109
      %v6248 = vmul.f32 %v5961, %v6114
      %v6249 = vmul.f32 %v5962, %v6119
      %v6250 = vmul.f32 %v5963, %v6124
      %v6251 = vmul.f32 %v5964, %v6129
      %v6252 = vmul.f32 %v5965, %v6134
      %v6253 = vmul.f32 %v5966, %v6139
      %v6254 = vmul.f32 %v5967, %v6144
      %v6255 = vmul.f32 %v5968, %v6149
      %v6256 = vmul.f32 %v5969, %v6154
      %v6257 = vmul.f32 %v5970, %v6159
      %v6258 = vmul.f32 %v5971, %v6164
      %v6259 = vmul.f32 %v5972, %v6169
      %v6260 = vmul.f32 %v5973, %v6174
      %v6261 = vmul.f32 %v5974, %v6179
      %v6262 = vmul.f32 %v5975, %v6184
      %v6263 = vmul.f32 %v5976, %v6189
      %v6264 = vmul.f32 %v5977, %v6194
      %v6265 = vmul.f32 %v5978, %v6199
      %v6266 = vmul.f32 %v5979, %v6204
      %v6267 = vmul.f32 %v5980, %v6209
      %v6268 = vmul.f32 %v5981, %v6214
      %v6269 = vmul.f32 %v5982, %v6219
      %v6270 = vmul.f32 %v5983, %v6224
      %v6271 = vmul.f32 %v5984, %v6229
      %v6272 = vpack.c.bf16 %v6232, %v6231
      %v6273 = vpack.c.bf16 %v6234, %v6233
      %v6274 = vpack.c.bf16 %v6236, %v6235
      %v6275 = vpack.c.bf16 %v6238, %v6237
      %v6276 = vpack.c.bf16 %v6240, %v6239
      %v6277 = vpack.c.bf16 %v6242, %v6241
      %v6278 = vpack.c.bf16 %v6244, %v6243
      %v6279 = vpack.c.bf16 %v6246, %v6245
      %v6280 = vpack.c.bf16 %v6248, %v6247
      %v6281 = vpack.c.bf16 %v6250, %v6249
      %v6282 = vpack.c.bf16 %v6252, %v6251
      %v6283 = vpack.c.bf16 %v6254, %v6253
      %v6284 = vpack.c.bf16 %v6256, %v6255
      %v6285 = vpack.c.bf16 %v6258, %v6257
      %v6286 = vpack.c.bf16 %v6260, %v6259
      %v6287 = vpack.c.bf16 %v6262, %v6261
      %v6288 = vpack.c.bf16 %v6264, %v6263
      %v6289 = vpack.c.bf16 %v6266, %v6265
      %v6290 = vpack.c.bf16 %v6268, %v6267
      %v6291 = vpack.c.bf16 %v6270, %v6269
      %v6292 = vpack.c.bf16 %v6271, %v6271
      %v6314 = vunpack.c.l.b16 %v6272
      %v6315 = vunpack.c.h.b16 %v6272
      %v6316 = vunpack.c.l.b16 %v6273
      %v6317 = vunpack.c.h.b16 %v6273
      %v6318 = vunpack.c.l.b16 %v6274
      %v6319 = vunpack.c.h.b16 %v6274
      %v6320 = vunpack.c.l.b16 %v6275
      %v6321 = vunpack.c.h.b16 %v6275
      %v6322 = vunpack.c.l.b16 %v6276
      %v6323 = vunpack.c.h.b16 %v6276
      %v6324 = vunpack.c.l.b16 %v6277
      %v6325 = vunpack.c.h.b16 %v6277
      %v6326 = vunpack.c.l.b16 %v6278
      %v6327 = vunpack.c.h.b16 %v6278
      %v6328 = vunpack.c.l.b16 %v6279
      %v6329 = vunpack.c.h.b16 %v6279
      %v6330 = vunpack.c.l.b16 %v6280
      %v6331 = vunpack.c.h.b16 %v6280
      %v6332 = vunpack.c.l.b16 %v6281
      %v6333 = vunpack.c.h.b16 %v6281
      %v6334 = vunpack.c.l.b16 %v6282
      %v6335 = vunpack.c.h.b16 %v6282
      %v6336 = vunpack.c.l.b16 %v6283
      %v6337 = vunpack.c.h.b16 %v6283
      %v6338 = vunpack.c.l.b16 %v6284
      %v6339 = vunpack.c.h.b16 %v6284
      %v6340 = vunpack.c.l.b16 %v6285
      %v6341 = vunpack.c.h.b16 %v6285
      %v6342 = vunpack.c.l.b16 %v6286
      %v6343 = vunpack.c.h.b16 %v6286
      %v6344 = vunpack.c.l.b16 %v6287
      %v6345 = vunpack.c.h.b16 %v6287
      %v6346 = vunpack.c.l.b16 %v6288
      %v6347 = vunpack.c.h.b16 %v6288
      %v6348 = vunpack.c.l.b16 %v6289
      %v6349 = vunpack.c.h.b16 %v6289
      %v6350 = vunpack.c.l.b16 %v6290
      %v6351 = vunpack.c.h.b16 %v6290
      %v6352 = vunpack.c.l.b16 %v6291
      %v6353 = vunpack.c.h.b16 %v6291
      %v6354 = vunpack.c.l.b16 %v6292
      %v6355 = vpack.c.b16 %v6314, %v6314
      %v6356 = vpack.c.b16 %v6315, %v6315
      %v6357 = vpack.c.b16 %v6316, %v6316
      %v6358 = vpack.c.b16 %v6317, %v6317
      %v6359 = vpack.c.b16 %v6318, %v6318
      %v6360 = vpack.c.b16 %v6319, %v6319
      %v6361 = vpack.c.b16 %v6320, %v6320
      %v6362 = vpack.c.b16 %v6321, %v6321
      %v6363 = vpack.c.b16 %v6322, %v6322
      %v6364 = vpack.c.b16 %v6323, %v6323
      %v6365 = vpack.c.b16 %v6324, %v6324
      %v6366 = vpack.c.b16 %v6325, %v6325
      %v6367 = vpack.c.b16 %v6326, %v6326
      %v6368 = vpack.c.b16 %v6327, %v6327
      %v6369 = vpack.c.b16 %v6328, %v6328
      %v6370 = vpack.c.b16 %v6329, %v6329
      %v6371 = vpack.c.b16 %v6330, %v6330
      %v6372 = vpack.c.b16 %v6331, %v6331
      %v6373 = vpack.c.b16 %v6332, %v6332
      %v6374 = vpack.c.b16 %v6333, %v6333
      %v6375 = vpack.c.b16 %v6334, %v6334
      %v6376 = vpack.c.b16 %v6335, %v6335
      %v6377 = vpack.c.b16 %v6336, %v6336
      %v6378 = vpack.c.b16 %v6337, %v6337
      %v6379 = vpack.c.b16 %v6338, %v6338
      %v6380 = vpack.c.b16 %v6339, %v6339
      %v6381 = vpack.c.b16 %v6340, %v6340
      %v6382 = vpack.c.b16 %v6341, %v6341
      %v6383 = vpack.c.b16 %v6342, %v6342
      %v6384 = vpack.c.b16 %v6343, %v6343
      %v6385 = vpack.c.b16 %v6344, %v6344
      %v6386 = vpack.c.b16 %v6345, %v6345
      %v6387 = vpack.c.b16 %v6346, %v6346
      %v6388 = vpack.c.b16 %v6347, %v6347
      %v6389 = vpack.c.b16 %v6348, %v6348
      %v6390 = vpack.c.b16 %v6349, %v6349
      %v6391 = vpack.c.b16 %v6350, %v6350
      %v6392 = vpack.c.b16 %v6351, %v6351
      %v6393 = vpack.c.b16 %v6352, %v6352
      %v6394 = vpack.c.b16 %v6353, %v6353
      %v6395 = vpack.c.b16 %v6354, %v6354
      %6437 = vst.msk [vmem:[#allocation3] sm:$0xf] %vm717, %v6355
      %6438 = vst.msk [vmem:[#allocation3 + $0x4] sm:$0xf] %vm717, %v6356
      %6439 = vst.msk [vmem:[#allocation3 + $0x8] sm:$0xf] %vm717, %v6357
      %6440 = vst.msk [vmem:[#allocation3 + $0xc] sm:$0xf] %vm717, %v6358
      %6441 = vst.msk [vmem:[#allocation3 + $0x10] sm:$0xf] %vm717, %v6359
      %6442 = vst.msk [vmem:[#allocation3 + $0x14] sm:$0xf] %vm717, %v6360
      %6443 = vst.msk [vmem:[#allocation3 + $0x18] sm:$0xf] %vm717, %v6361
      %6444 = vst.msk [vmem:[#allocation3 + $0x1c] sm:$0xf] %vm717, %v6362
      %6445 = vst.msk [vmem:[#allocation3 + $0x20] sm:$0xf] %vm717, %v6363
      %6446 = vst.msk [vmem:[#allocation3 + $0x24] sm:$0xf] %vm717, %v6364
      %6447 = vst.msk [vmem:[#allocation3 + $0x28] sm:$0xf] %vm717, %v6365
      %6448 = vst.msk [vmem:[#allocation3 + $0x2c] sm:$0xf] %vm717, %v6366
      %6449 = vst.msk [vmem:[#allocation3 + $0x30] sm:$0xf] %vm717, %v6367
      %6450 = vst.msk [vmem:[#allocation3 + $0x34] sm:$0xf] %vm717, %v6368
      %6451 = vst.msk [vmem:[#allocation3 + $0x38] sm:$0xf] %vm717, %v6369
      %6452 = vst.msk [vmem:[#allocation3 + $0x3c] sm:$0xf] %vm717, %v6370
      %6453 = vst.msk [vmem:[#allocation3 + $0x40] sm:$0xf] %vm717, %v6371
      %6454 = vst.msk [vmem:[#allocation3 + $0x44] sm:$0xf] %vm717, %v6372
      %6455 = vst.msk [vmem:[#allocation3 + $0x48] sm:$0xf] %vm717, %v6373
      %6456 = vst.msk [vmem:[#allocation3 + $0x4c] sm:$0xf] %vm717, %v6374
      %6457 = vst.msk [vmem:[#allocation3 + $0x50] sm:$0xf] %vm717, %v6375
      %6458 = vst.msk [vmem:[#allocation3 + $0x54] sm:$0xf] %vm717, %v6376
      %6459 = vst.msk [vmem:[#allocation3 + $0x58] sm:$0xf] %vm717, %v6377
      %6460 = vst.msk [vmem:[#allocation3 + $0x5c] sm:$0xf] %vm717, %v6378
      %6461 = vst.msk [vmem:[#allocation3 + $0x60] sm:$0xf] %vm717, %v6379
      %6462 = vst.msk [vmem:[#allocation3 + $0x64] sm:$0xf] %vm717, %v6380
      %6463 = vst.msk [vmem:[#allocation3 + $0x68] sm:$0xf] %vm717, %v6381
      %6464 = vst.msk [vmem:[#allocation3 + $0x6c] sm:$0xf] %vm717, %v6382
      %6465 = vst.msk [vmem:[#allocation3 + $0x70] sm:$0xf] %vm717, %v6383
      %6466 = vst.msk [vmem:[#allocation3 + $0x74] sm:$0xf] %vm717, %v6384
      %6467 = vst.msk [vmem:[#allocation3 + $0x78] sm:$0xf] %vm717, %v6385
      %6468 = vst.msk [vmem:[#allocation3 + $0x7c] sm:$0xf] %vm717, %v6386
      %6469 = vst.msk [vmem:[#allocation3 + $0x80] sm:$0xf] %vm717, %v6387
      %6470 = vst.msk [vmem:[#allocation3 + $0x84] sm:$0xf] %vm717, %v6388
      %6471 = vst.msk [vmem:[#allocation3 + $0x88] sm:$0xf] %vm717, %v6389
      %6472 = vst.msk [vmem:[#allocation3 + $0x8c] sm:$0xf] %vm717, %v6390
      %6473 = vst.msk [vmem:[#allocation3 + $0x90] sm:$0xf] %vm717, %v6391
      %6474 = vst.msk [vmem:[#allocation3 + $0x94] sm:$0xf] %vm717, %v6392
      %6475 = vst.msk [vmem:[#allocation3 + $0x98] sm:$0xf] %vm717, %v6393
      %6476 = vst.msk [vmem:[#allocation3 + $0x9c] sm:$0xf] %vm717, %v6394
      %vm6477 = vcmask 254976
      %6478 = vst.msk [vmem:[#allocation3 + $0xa0] sm:$0x3] %vm6477, %v6395
      %v6479 = vld [vmem:[#allocation3] sm:$0xf]
      %v6480 = vld [vmem:[#allocation3 + $0x4] sm:$0xf]
      %v6481 = vld [vmem:[#allocation3 + $0x8] sm:$0xf]
      %v6482 = vld [vmem:[#allocation3 + $0xc] sm:$0xf]
      %v6483 = vld [vmem:[#allocation3 + $0x10] sm:$0xf]
      %v6484 = vld [vmem:[#allocation3 + $0x14] sm:$0xf]
      %v6485 = vld [vmem:[#allocation3 + $0x18] sm:$0xf]
      %v6486 = vld [vmem:[#allocation3 + $0x1c] sm:$0xf]
      %v6487 = vld [vmem:[#allocation3 + $0x20] sm:$0xf]
      %v6488 = vld [vmem:[#allocation3 + $0x24] sm:$0xf]
      %v6489 = vld [vmem:[#allocation3 + $0x28] sm:$0xf]
      %v6490 = vld [vmem:[#allocation3 + $0x2c] sm:$0xf]
      %v6491 = vld [vmem:[#allocation3 + $0x30] sm:$0xf]
      %v6492 = vld [vmem:[#allocation3 + $0x34] sm:$0xf]
      %v6493 = vld [vmem:[#allocation3 + $0x38] sm:$0xf]
      %v6494 = vld [vmem:[#allocation3 + $0x3c] sm:$0xf]
      %v6495 = vld [vmem:[#allocation3 + $0x40] sm:$0xf]
      %v6496 = vld [vmem:[#allocation3 + $0x44] sm:$0xf]
      %v6497 = vld [vmem:[#allocation3 + $0x48] sm:$0xf]
      %v6498 = vld [vmem:[#allocation3 + $0x4c] sm:$0xf]
      %v6499 = vld [vmem:[#allocation3 + $0x50] sm:$0xf]
      %v6500 = vld [vmem:[#allocation3 + $0x54] sm:$0xf]
      %v6501 = vld [vmem:[#allocation3 + $0x58] sm:$0xf]
      %v6502 = vld [vmem:[#allocation3 + $0x5c] sm:$0xf]
      %v6503 = vld [vmem:[#allocation3 + $0x60] sm:$0xf]
      %v6504 = vld [vmem:[#allocation3 + $0x64] sm:$0xf]
      %v6505 = vld [vmem:[#allocation3 + $0x68] sm:$0xf]
      %v6506 = vld [vmem:[#allocation3 + $0x6c] sm:$0xf]
      %v6507 = vld [vmem:[#allocation3 + $0x70] sm:$0xf]
      %v6508 = vld [vmem:[#allocation3 + $0x74] sm:$0xf]
      %v6509 = vld [vmem:[#allocation3 + $0x78] sm:$0xf]
      %v6510 = vld [vmem:[#allocation3 + $0x7c] sm:$0xf]
      %v6511 = vld [vmem:[#allocation3 + $0x80] sm:$0xf]
      %v6512 = vld [vmem:[#allocation3 + $0x84] sm:$0xf]
      %v6513 = vld [vmem:[#allocation3 + $0x88] sm:$0xf]
      %v6514 = vld [vmem:[#allocation3 + $0x8c] sm:$0x7]
      %v6515 = vld [vmem:[%s4] sm:$0xf]
      %v6516 = vld [vmem:[%s4 + $0x4] sm:$0xf]
      %v6517 = vld [vmem:[%s4 + $0x8] sm:$0xf]
      %v6518 = vld [vmem:[%s4 + $0xc] sm:$0xf]
      %v6555 = vunpack.c.l.b16 %v6479
      %v6556 = vunpack.c.l.b16 %v6480
      %v6557 = vunpack.c.l.b16 %v6481
      %v6558 = vunpack.c.l.b16 %v6482
      %v6559 = vunpack.c.l.b16 %v6483
      %v6560 = vunpack.c.l.b16 %v6484
      %v6561 = vunpack.c.l.b16 %v6485
      %v6562 = vunpack.c.l.b16 %v6486
      %v6563 = vunpack.c.l.b16 %v6487
      %v6564 = vunpack.c.l.b16 %v6488
      %v6565 = vunpack.c.l.b16 %v6489
      %v6566 = vunpack.c.l.b16 %v6490
      %v6567 = vunpack.c.l.b16 %v6491
      %v6568 = vunpack.c.l.b16 %v6492
      %v6569 = vunpack.c.l.b16 %v6493
      %v6570 = vunpack.c.l.b16 %v6494
      %v6571 = vunpack.c.l.b16 %v6495
      %v6572 = vunpack.c.l.b16 %v6496
      %v6573 = vunpack.c.l.b16 %v6497
      %v6574 = vunpack.c.l.b16 %v6498
      %v6575 = vunpack.c.l.b16 %v6499
      %v6576 = vunpack.c.l.b16 %v6500
      %v6577 = vunpack.c.l.b16 %v6501
      %v6578 = vunpack.c.l.b16 %v6502
      %v6579 = vunpack.c.l.b16 %v6503
      %v6580 = vunpack.c.l.b16 %v6504
      %v6581 = vunpack.c.l.b16 %v6505
      %v6582 = vunpack.c.l.b16 %v6506
      %v6583 = vunpack.c.l.b16 %v6507
      %v6584 = vunpack.c.l.b16 %v6508
      %v6585 = vunpack.c.l.b16 %v6509
      %v6586 = vunpack.c.l.b16 %v6510
      %v6587 = vunpack.c.l.b16 %v6511
      %v6588 = vunpack.c.l.b16 %v6512
      %v6589 = vunpack.c.l.b16 %v6513
      %v6590 = vunpack.c.l.b16 %v6514
      %v6591 = vpack.c.b16 %v6556, %v6555
      %v6592 = vpack.c.b16 %v6558, %v6557
      %v6593 = vpack.c.b16 %v6560, %v6559
      %v6594 = vpack.c.b16 %v6562, %v6561
      %v6595 = vpack.c.b16 %v6564, %v6563
      %v6596 = vpack.c.b16 %v6566, %v6565
      %v6597 = vpack.c.b16 %v6568, %v6567
      %v6598 = vpack.c.b16 %v6570, %v6569
      %v6599 = vpack.c.b16 %v6572, %v6571
      %v6600 = vpack.c.b16 %v6574, %v6573
      %v6601 = vpack.c.b16 %v6576, %v6575
      %v6602 = vpack.c.b16 %v6578, %v6577
      %v6603 = vpack.c.b16 %v6580, %v6579
      %v6604 = vpack.c.b16 %v6582, %v6581
      %v6605 = vpack.c.b16 %v6584, %v6583
      %v6606 = vpack.c.b16 %v6586, %v6585
      %v6607 = vpack.c.b16 %v6588, %v6587
      %v6608 = vpack.c.b16 %v6590, %v6589
      %v6613 = vunpack.c.l.b16 %v6515
      %v6614 = vunpack.c.l.b16 %v6516
      %v6615 = vunpack.c.l.b16 %v6517
      %v6616 = vunpack.c.l.b16 %v6518
      %v6617 = vpack.c.b16 %v6614, %v6613
      %v6618 = vpack.c.b16 %v6616, %v6615
      %v6622 = vsel %vm413, %v6591, 0
      %v6625 = vsel %vm413, %v6592, 0
      %v6628 = vsel %vm413, %v6593, 0
      %v6631 = vsel %vm413, %v6594, 0
      %v6634 = vsel %vm413, %v6595, 0
      %v6637 = vsel %vm413, %v6596, 0
      %v6640 = vsel %vm413, %v6597, 0
      %v6643 = vsel %vm413, %v6598, 0
      %v6646 = vsel %vm413, %v6599, 0
      %v6649 = vsel %vm413, %v6600, 0
      %v6652 = vsel %vm413, %v6601, 0
      %v6655 = vsel %vm413, %v6602, 0
      %v6658 = vsel %vm413, %v6603, 0
      %v6661 = vsel %vm413, %v6604, 0
      %v6664 = vsel %vm413, %v6605, 0
      %v6667 = vsel %vm413, %v6606, 0
      %v6670 = vsel %vm413, %v6607, 0
      %v6673 = vsel %vm413, %v6608, 0
      %6675 = vmatprep.subr.bf16.mxu0 0
      %6676 = vmatpush1.bf16.msra.mxu0 %v6617
      %6677 = vmatprep.subr.bf16.mxu0 0
      %6678 = vmatpush1.bf16.msra.mxu0 %v6618
      %6679 = vmatprep.subr.bf16.mxu0 0
      %6680 = vmatpush1.bf16.msra.mxu0 0
      %6681 = vmatprep.subr.bf16.mxu0 0
      %6682 = vmatpush1.bf16.msra.mxu0 0
      %6683 = vmatprep.subr.bf16.mxu0 0
      %6684 = vmatpush1.bf16.msra.mxu0 0
      %6685 = vmatprep.subr.bf16.mxu0 0
      %6686 = vmatpush1.bf16.msra.mxu0 0
      %6687 = vmatprep.subr.bf16.mxu0 0
      %6688 = vmatpush1.bf16.msra.mxu0 0
      %6689 = vmatprep.subr.bf16.mxu0 0
      %6690 = vmatpush1.bf16.msra.mxu0 0
      %6691 = vmatprep.subr.bf16.mxu0 0
      %6692 = vmatpush1.bf16.msra.mxu0 0
      %6693 = vmatprep.subr.bf16.mxu0 0
      %6694 = vmatpush1.bf16.msra.mxu0 0
      %6695 = vmatprep.subr.bf16.mxu0 0
      %6696 = vmatpush1.bf16.msra.mxu0 0
      %6697 = vmatprep.subr.bf16.mxu0 0
      %6698 = vmatpush1.bf16.msra.mxu0 0
      %6699 = vmatprep.subr.bf16.mxu0 0
      %6700 = vmatpush1.bf16.msra.mxu0 0
      %6701 = vmatprep.subr.bf16.mxu0 0
      %6702 = vmatpush1.bf16.msra.mxu0 0
      %6703 = vmatprep.subr.bf16.mxu0 0
      %6704 = vmatpush1.bf16.msra.mxu0 0
      %6705 = vmatprep.subr.bf16.mxu0 0
      %6706 = vmatpush1.bf16.msra.mxu0 0
      %6707 = vmatprep.mubr.bf16.mxu0 0
      %6708 = vmatmul.mubr.bf16.gmra.mrb[0].mxu0 %v6622
      %v6709 = vpop.f32.mrb[0].mxu0
      %v6710 = vadd.f32 0.0, %v6709
      %v6711 = vpop.f32.mrb[0].mxu0
      %v6712 = vpop.f32.mrb[0].mxu0
      %v6713 = vadd.f32 0.0, %v6712
      %v6714 = vpop.f32.mrb[0].mxu0
      %6715 = vmatprep.mubr.bf16.mxu0 0
      %6716 = vmatmul.mubr.bf16.gmra.mrb[0].mxu0 %v6625
      %v6717 = vpop.f32.mrb[0].mxu0
      %v6718 = vadd.f32 0.0, %v6717
      %v6719 = vpop.f32.mrb[0].mxu0
      %v6720 = vpop.f32.mrb[0].mxu0
      %v6721 = vadd.f32 0.0, %v6720
      %v6722 = vpop.f32.mrb[0].mxu0
      %6723 = vmatprep.mubr.bf16.mxu0 0
      %6724 = vmatmul.mubr.bf16.gmra.mrb[0].mxu0 %v6628
      %v6725 = vpop.f32.mrb[0].mxu0
      %v6726 = vadd.f32 0.0, %v6725
      %v6727 = vpop.f32.mrb[0].mxu0
      %v6728 = vpop.f32.mrb[0].mxu0
      %v6729 = vadd.f32 0.0, %v6728
      %v6730 = vpop.f32.mrb[0].mxu0
      %6731 = vmatprep.mubr.bf16.mxu0 0
      %6732 = vmatmul.mubr.bf16.gmra.mrb[0].mxu0 %v6631
      %v6733 = vpop.f32.mrb[0].mxu0
      %v6734 = vadd.f32 0.0, %v6733
      %v6735 = vpop.f32.mrb[0].mxu0
      %v6736 = vpop.f32.mrb[0].mxu0
      %v6737 = vadd.f32 0.0, %v6736
      %v6738 = vpop.f32.mrb[0].mxu0
      %6739 = vmatprep.mubr.bf16.mxu0 0
      %6740 = vmatmul.mubr.bf16.gmra.mrb[0].mxu0 %v6634
      %v6741 = vpop.f32.mrb[0].mxu0
      %v6742 = vadd.f32 0.0, %v6741
      %v6743 = vpop.f32.mrb[0].mxu0
      %v6744 = vpop.f32.mrb[0].mxu0
      %v6745 = vadd.f32 0.0, %v6744
      %v6746 = vpop.f32.mrb[0].mxu0
      %6747 = vmatprep.mubr.bf16.mxu0 0
      %6748 = vmatmul.mubr.bf16.gmra.mrb[0].mxu0 %v6637
      %v6749 = vpop.f32.mrb[0].mxu0
      %v6750 = vadd.f32 0.0, %v6749
      %v6751 = vpop.f32.mrb[0].mxu0
      %v6752 = vpop.f32.mrb[0].mxu0
      %v6753 = vadd.f32 0.0, %v6752
      %v6754 = vpop.f32.mrb[0].mxu0
      %6755 = vmatprep.mubr.bf16.mxu0 0
      %6756 = vmatmul.mubr.bf16.gmra.mrb[0].mxu0 %v6640
      %v6757 = vpop.f32.mrb[0].mxu0
      %v6758 = vadd.f32 0.0, %v6757
      %v6759 = vpop.f32.mrb[0].mxu0
      %v6760 = vpop.f32.mrb[0].mxu0
      %v6761 = vadd.f32 0.0, %v6760
      %v6762 = vpop.f32.mrb[0].mxu0
      %6763 = vmatprep.mubr.bf16.mxu0 0
      %6764 = vmatmul.mubr.bf16.gmra.mrb[0].mxu0 %v6643
      %v6765 = vpop.f32.mrb[0].mxu0
      %v6766 = vadd.f32 0.0, %v6765
      %v6767 = vpop.f32.mrb[0].mxu0
      %v6768 = vpop.f32.mrb[0].mxu0
      %v6769 = vadd.f32 0.0, %v6768
      %v6770 = vpop.f32.mrb[0].mxu0
      %6771 = vmatprep.mubr.bf16.mxu0 0
      %6772 = vmatmul.mubr.bf16.gmra.mrb[0].mxu0 %v6646
      %v6773 = vpop.f32.mrb[0].mxu0
      %v6774 = vadd.f32 0.0, %v6773
      %v6775 = vpop.f32.mrb[0].mxu0
      %v6776 = vpop.f32.mrb[0].mxu0
      %v6777 = vadd.f32 0.0, %v6776
      %v6778 = vpop.f32.mrb[0].mxu0
      %6779 = vmatprep.mubr.bf16.mxu0 0
      %6780 = vmatmul.mubr.bf16.gmra.mrb[0].mxu0 %v6649
      %v6781 = vpop.f32.mrb[0].mxu0
      %v6782 = vadd.f32 0.0, %v6781
      %v6783 = vpop.f32.mrb[0].mxu0
      %v6784 = vpop.f32.mrb[0].mxu0
      %v6785 = vadd.f32 0.0, %v6784
      %v6786 = vpop.f32.mrb[0].mxu0
      %6787 = vmatprep.mubr.bf16.mxu0 0
      %6788 = vmatmul.mubr.bf16.gmra.mrb[0].mxu0 %v6652
      %v6789 = vpop.f32.mrb[0].mxu0
      %v6790 = vadd.f32 0.0, %v6789
      %v6791 = vpop.f32.mrb[0].mxu0
      %v6792 = vpop.f32.mrb[0].mxu0
      %v6793 = vadd.f32 0.0, %v6792
      %v6794 = vpop.f32.mrb[0].mxu0
      %6795 = vmatprep.mubr.bf16.mxu0 0
      %6796 = vmatmul.mubr.bf16.gmra.mrb[0].mxu0 %v6655
      %v6797 = vpop.f32.mrb[0].mxu0
      %v6798 = vadd.f32 0.0, %v6797
      %v6799 = vpop.f32.mrb[0].mxu0
      %v6800 = vpop.f32.mrb[0].mxu0
      %v6801 = vadd.f32 0.0, %v6800
      %v6802 = vpop.f32.mrb[0].mxu0
      %6803 = vmatprep.mubr.bf16.mxu0 0
      %6804 = vmatmul.mubr.bf16.gmra.mrb[0].mxu0 %v6658
      %v6805 = vpop.f32.mrb[0].mxu0
      %v6806 = vadd.f32 0.0, %v6805
      %v6807 = vpop.f32.mrb[0].mxu0
      %v6808 = vpop.f32.mrb[0].mxu0
      %v6809 = vadd.f32 0.0, %v6808
      %v6810 = vpop.f32.mrb[0].mxu0
      %6811 = vmatprep.mubr.bf16.mxu0 0
      %6812 = vmatmul.mubr.bf16.gmra.mrb[0].mxu0 %v6661
      %v6813 = vpop.f32.mrb[0].mxu0
      %v6814 = vadd.f32 0.0, %v6813
      %v6815 = vpop.f32.mrb[0].mxu0
      %v6816 = vpop.f32.mrb[0].mxu0
      %v6817 = vadd.f32 0.0, %v6816
      %v6818 = vpop.f32.mrb[0].mxu0
      %6819 = vmatprep.mubr.bf16.mxu0 0
      %6820 = vmatmul.mubr.bf16.gmra.mrb[0].mxu0 %v6664
      %v6821 = vpop.f32.mrb[0].mxu0
      %v6822 = vadd.f32 0.0, %v6821
      %v6823 = vpop.f32.mrb[0].mxu0
      %v6824 = vpop.f32.mrb[0].mxu0
      %v6825 = vadd.f32 0.0, %v6824
      %v6826 = vpop.f32.mrb[0].mxu0
      %6827 = vmatprep.mubr.bf16.mxu0 0
      %6828 = vmatmul.mubr.bf16.gmra.mrb[0].mxu0 %v6667
      %v6829 = vpop.f32.mrb[0].mxu0
      %v6830 = vadd.f32 0.0, %v6829
      %v6831 = vpop.f32.mrb[0].mxu0
      %v6832 = vpop.f32.mrb[0].mxu0
      %v6833 = vadd.f32 0.0, %v6832
      %v6834 = vpop.f32.mrb[0].mxu0
      %6835 = vmatprep.mubr.bf16.mxu0 0
      %6836 = vmatmul.mubr.bf16.gmra.mrb[0].mxu0 %v6670
      %v6837 = vpop.f32.mrb[0].mxu0
      %v6838 = vadd.f32 0.0, %v6837
      %v6839 = vpop.f32.mrb[0].mxu0
      %v6840 = vpop.f32.mrb[0].mxu0
      %v6841 = vadd.f32 0.0, %v6840
      %v6842 = vpop.f32.mrb[0].mxu0
      %6843 = vmatprep.mubr.bf16.mxu0 0
      %6844 = vmatmul.mubr.bf16.gmra.mrb[0].mxu0 %v6673
      %v6845 = vpop.f32.mrb[0].mxu0
      %v6846 = vadd.f32 0.0, %v6845
      %v6847 = vpop.f32.mrb[0].mxu0
      %v6848 = vpop.f32.mrb[0].mxu0
      %v6849 = vadd.f32 0.0, %v6848
      %v6850 = vpop.f32.mrb[0].mxu0
      %6851 = vdwg.mxu0
      %6852 = vst.msk [vmem:[#allocation4] sm:$0xff] %vm413, %v6710
      %6853 = vst.msk [vmem:[#allocation4 + $0x8] sm:$0xff] %vm413, %v6713
      %6854 = vst.msk [vmem:[#allocation4 + $0x10] sm:$0xff] %vm413, %v6718
      %6855 = vst.msk [vmem:[#allocation4 + $0x18] sm:$0xff] %vm413, %v6721
      %6856 = vst.msk [vmem:[#allocation4 + $0x20] sm:$0xff] %vm413, %v6726
      %6857 = vst.msk [vmem:[#allocation4 + $0x28] sm:$0xff] %vm413, %v6729
      %6858 = vst.msk [vmem:[#allocation4 + $0x30] sm:$0xff] %vm413, %v6734
      %6859 = vst.msk [vmem:[#allocation4 + $0x38] sm:$0xff] %vm413, %v6737
      %6860 = vst.msk [vmem:[#allocation4 + $0x40] sm:$0xff] %vm413, %v6742
      %6861 = vst.msk [vmem:[#allocation4 + $0x48] sm:$0xff] %vm413, %v6745
      %6862 = vst.msk [vmem:[#allocation4 + $0x50] sm:$0xff] %vm413, %v6750
      %6863 = vst.msk [vmem:[#allocation4 + $0x58] sm:$0xff] %vm413, %v6753
      %6864 = vst.msk [vmem:[#allocation4 + $0x60] sm:$0xff] %vm413, %v6758
      %6865 = vst.msk [vmem:[#allocation4 + $0x68] sm:$0xff] %vm413, %v6761
      %6866 = vst.msk [vmem:[#allocation4 + $0x70] sm:$0xff] %vm413, %v6766
      %6867 = vst.msk [vmem:[#allocation4 + $0x78] sm:$0xff] %vm413, %v6769
      %6868 = vst.msk [vmem:[#allocation4 + $0x80] sm:$0xff] %vm413, %v6774
      %6869 = vst.msk [vmem:[#allocation4 + $0x88] sm:$0xff] %vm413, %v6777
      %6870 = vst.msk [vmem:[#allocation4 + $0x90] sm:$0xff] %vm413, %v6782
      %6871 = vst.msk [vmem:[#allocation4 + $0x98] sm:$0xff] %vm413, %v6785
      %6872 = vst.msk [vmem:[#allocation4 + $0xa0] sm:$0xff] %vm413, %v6790
      %6873 = vst.msk [vmem:[#allocation4 + $0xa8] sm:$0xff] %vm413, %v6793
      %6874 = vst.msk [vmem:[#allocation4 + $0xb0] sm:$0xff] %vm413, %v6798
      %6875 = vst.msk [vmem:[#allocation4 + $0xb8] sm:$0xff] %vm413, %v6801
      %6876 = vst.msk [vmem:[#allocation4 + $0xc0] sm:$0xff] %vm413, %v6806
      %6877 = vst.msk [vmem:[#allocation4 + $0xc8] sm:$0xff] %vm413, %v6809
      %6878 = vst.msk [vmem:[#allocation4 + $0xd0] sm:$0xff] %vm413, %v6814
      %6879 = vst.msk [vmem:[#allocation4 + $0xd8] sm:$0xff] %vm413, %v6817
      %6880 = vst.msk [vmem:[#allocation4 + $0xe0] sm:$0xff] %vm413, %v6822
      %6881 = vst.msk [vmem:[#allocation4 + $0xe8] sm:$0xff] %vm413, %v6825
      %6882 = vst.msk [vmem:[#allocation4 + $0xf0] sm:$0xff] %vm413, %v6830
      %6883 = vst.msk [vmem:[#allocation4 + $0xf8] sm:$0xff] %vm413, %v6833
      %6884 = vst.msk [vmem:[#allocation4 + $0x100] sm:$0xff] %vm413, %v6838
      %6885 = vst.msk [vmem:[#allocation4 + $0x108] sm:$0xff] %vm413, %v6841
      %6886 = vst.msk [vmem:[#allocation4 + $0x110] sm:$0xff] %vm413, %v6846
      %vm6887 = vcmask 259072
      %6888 = vst.msk [vmem:[#allocation4 + $0x118] sm:$0x3f] %vm6887, %v6849
      %v6889 = vld [vmem:[#allocation3] sm:$0xf]
      %v6890 = vld [vmem:[#allocation3 + $0x4] sm:$0xf]
      %v6891 = vld [vmem:[#allocation3 + $0x8] sm:$0xf]
      %v6892 = vld [vmem:[#allocation3 + $0xc] sm:$0xf]
      %v6893 = vld [vmem:[#allocation3 + $0x10] sm:$0xf]
      %v6894 = vld [vmem:[#allocation3 + $0x14] sm:$0xf]
      %v6895 = vld [vmem:[#allocation3 + $0x18] sm:$0xf]
      %v6896 = vld [vmem:[#allocation3 + $0x1c] sm:$0xf]
      %v6897 = vld [vmem:[#allocation3 + $0x20] sm:$0xf]
      %v6898 = vld [vmem:[#allocation3 + $0x24] sm:$0xf]
      %v6899 = vld [vmem:[#allocation3 + $0x28] sm:$0xf]
      %v6900 = vld [vmem:[#allocation3 + $0x2c] sm:$0xf]
      %v6901 = vld [vmem:[#allocation3 + $0x30] sm:$0xf]
      %v6902 = vld [vmem:[#allocation3 + $0x34] sm:$0xf]
      %v6903 = vld [vmem:[#allocation3 + $0x38] sm:$0xf]
      %v6904 = vld [vmem:[#allocation3 + $0x3c] sm:$0xf]
      %v6905 = vld [vmem:[#allocation3 + $0x40] sm:$0xf]
      %v6906 = vld [vmem:[#allocation3 + $0x44] sm:$0xf]
      %v6907 = vld [vmem:[#allocation3 + $0x48] sm:$0xf]
      %v6908 = vld [vmem:[#allocation3 + $0x4c] sm:$0xf]
      %v6909 = vld [vmem:[#allocation3 + $0x50] sm:$0xf]
      %v6910 = vld [vmem:[#allocation3 + $0x54] sm:$0xf]
      %v6911 = vld [vmem:[#allocation3 + $0x58] sm:$0xf]
      %v6912 = vld [vmem:[#allocation3 + $0x5c] sm:$0xf]
      %v6913 = vld [vmem:[#allocation3 + $0x60] sm:$0xf]
      %v6914 = vld [vmem:[#allocation3 + $0x64] sm:$0xf]
      %v6915 = vld [vmem:[#allocation3 + $0x68] sm:$0xf]
      %v6916 = vld [vmem:[#allocation3 + $0x6c] sm:$0xf]
      %v6917 = vld [vmem:[#allocation3 + $0x70] sm:$0xf]
      %v6918 = vld [vmem:[#allocation3 + $0x74] sm:$0xf]
      %v6919 = vld [vmem:[#allocation3 + $0x78] sm:$0xf]
      %v6920 = vld [vmem:[#allocation3 + $0x7c] sm:$0xf]
      %v6921 = vld [vmem:[#allocation3 + $0x80] sm:$0xf]
      %v6922 = vld [vmem:[#allocation3 + $0x84] sm:$0xf]
      %v6923 = vld [vmem:[#allocation3 + $0x88] sm:$0xf]
      %v6924 = vld [vmem:[#allocation3 + $0x8c] sm:$0xf]
      %s6925 = scalar_lea.vmem %s4, 16
      %v6926 = vld [vmem:[%s6925] sm:$0xf]
      %v6927 = vld [vmem:[%s6925 + $0x4] sm:$0xf]
      %v6928 = vld [vmem:[%s6925 + $0x8] sm:$0xf]
      %v6929 = vld [vmem:[%s6925 + $0xc] sm:$0xf]
      %v6966 = vunpack.c.l.b16 %v6889
      %v6967 = vunpack.c.l.b16 %v6890
      %v6968 = vunpack.c.l.b16 %v6891
      %v6969 = vunpack.c.l.b16 %v6892
      %v6970 = vunpack.c.l.b16 %v6893
      %v6971 = vunpack.c.l.b16 %v6894
      %v6972 = vunpack.c.l.b16 %v6895
      %v6973 = vunpack.c.l.b16 %v6896
      %v6974 = vunpack.c.l.b16 %v6897
      %v6975 = vunpack.c.l.b16 %v6898
      %v6976 = vunpack.c.l.b16 %v6899
      %v6977 = vunpack.c.l.b16 %v6900
      %v6978 = vunpack.c.l.b16 %v6901
      %v6979 = vunpack.c.l.b16 %v6902
      %v6980 = vunpack.c.l.b16 %v6903
      %v6981 = vunpack.c.l.b16 %v6904
      %v6982 = vunpack.c.l.b16 %v6905
      %v6983 = vunpack.c.l.b16 %v6906
      %v6984 = vunpack.c.l.b16 %v6907
      %v6985 = vunpack.c.l.b16 %v6908
      %v6986 = vunpack.c.l.b16 %v6909
      %v6987 = vunpack.c.l.b16 %v6910
      %v6988 = vunpack.c.l.b16 %v6911
      %v6989 = vunpack.c.l.b16 %v6912
      %v6990 = vunpack.c.l.b16 %v6913
      %v6991 = vunpack.c.l.b16 %v6914
      %v6992 = vunpack.c.l.b16 %v6915
      %v6993 = vunpack.c.l.b16 %v6916
      %v6994 = vunpack.c.l.b16 %v6917
      %v6995 = vunpack.c.l.b16 %v6918
      %v6996 = vunpack.c.l.b16 %v6919
      %v6997 = vunpack.c.l.b16 %v6920
      %v6998 = vunpack.c.l.b16 %v6921
      %v6999 = vunpack.c.l.b16 %v6922
      %v7000 = vunpack.c.l.b16 %v6923
      %v7001 = vunpack.c.l.b16 %v6924
      %v7002 = vpack.c.b16 %v6967, %v6966
      %v7003 = vpack.c.b16 %v6969, %v6968
      %v7004 = vpack.c.b16 %v6971, %v6970
      %v7005 = vpack.c.b16 %v6973, %v6972
      %v7006 = vpack.c.b16 %v6975, %v6974
      %v7007 = vpack.c.b16 %v6977, %v6976
      %v7008 = vpack.c.b16 %v6979, %v6978
      %v7009 = vpack.c.b16 %v6981, %v6980
      %v7010 = vpack.c.b16 %v6983, %v6982
      %v7011 = vpack.c.b16 %v6985, %v6984
      %v7012 = vpack.c.b16 %v6987, %v6986
      %v7013 = vpack.c.b16 %v6989, %v6988
      %v7014 = vpack.c.b16 %v6991, %v6990
      %v7015 = vpack.c.b16 %v6993, %v6992
      %v7016 = vpack.c.b16 %v6995, %v6994
      %v7017 = vpack.c.b16 %v6997, %v6996
      %v7018 = vpack.c.b16 %v6999, %v6998
      %v7019 = vpack.c.b16 %v7001, %v7000
      %v7021 = vshrl.u32 %v7002, 16
      %v7023 = vshll.u32 %v7002, 16
      %v7025 = vrot.slane %v7023, 1
      %v7026 = vor.u32 %v7021, %v7025
      %v7028 = vshll.u32 %v7003, 16
      %v7030 = vrot.slane %v7028, 1
      %v7031 = vsel %vm868, %v7026, %v7030
      %v7032 = vshrl.u32 %v7003, 16
      %v7034 = vor.u32 %v7032, %v7030
      %v7036 = vshll.u32 %v7004, 16
      %v7038 = vrot.slane %v7036, 1
      %v7039 = vsel %vm868, %v7034, %v7038
      %v7040 = vshrl.u32 %v7004, 16
      %v7042 = vor.u32 %v7040, %v7038
      %v7044 = vshll.u32 %v7005, 16
      %v7046 = vrot.slane %v7044, 1
      %v7047 = vsel %vm868, %v7042, %v7046
      %v7048 = vshrl.u32 %v7005, 16
      %v7050 = vor.u32 %v7048, %v7046
      %v7052 = vshll.u32 %v7006, 16
      %v7054 = vrot.slane %v7052, 1
      %v7055 = vsel %vm868, %v7050, %v7054
      %v7056 = vshrl.u32 %v7006, 16
      %v7058 = vor.u32 %v7056, %v7054
      %v7060 = vshll.u32 %v7007, 16
      %v7062 = vrot.slane %v7060, 1
      %v7063 = vsel %vm868, %v7058, %v7062
      %v7064 = vshrl.u32 %v7007, 16
      %v7066 = vor.u32 %v7064, %v7062
      %v7068 = vshll.u32 %v7008, 16
      %v7070 = vrot.slane %v7068, 1
      %v7071 = vsel %vm868, %v7066, %v7070
      %v7072 = vshrl.u32 %v7008, 16
      %v7074 = vor.u32 %v7072, %v7070
      %v7076 = vshll.u32 %v7009, 16
      %v7078 = vrot.slane %v7076, 1
      %v7079 = vsel %vm868, %v7074, %v7078
      %v7080 = vshrl.u32 %v7009, 16
      %v7082 = vor.u32 %v7080, %v7078
      %v7084 = vshll.u32 %v7010, 16
      %v7086 = vrot.slane %v7084, 1
      %v7087 = vsel %vm868, %v7082, %v7086
      %v7088 = vshrl.u32 %v7010, 16
      %v7090 = vor.u32 %v7088, %v7086
      %v7092 = vshll.u32 %v7011, 16
      %v7094 = vrot.slane %v7092, 1
      %v7095 = vsel %vm868, %v7090, %v7094
      %v7096 = vshrl.u32 %v7011, 16
      %v7098 = vor.u32 %v7096, %v7094
      %v7100 = vshll.u32 %v7012, 16
      %v7102 = vrot.slane %v7100, 1
      %v7103 = vsel %vm868, %v7098, %v7102
      %v7104 = vshrl.u32 %v7012, 16
      %v7106 = vor.u32 %v7104, %v7102
      %v7108 = vshll.u32 %v7013, 16
      %v7110 = vrot.slane %v7108, 1
      %v7111 = vsel %vm868, %v7106, %v7110
      %v7112 = vshrl.u32 %v7013, 16
      %v7114 = vor.u32 %v7112, %v7110
      %v7116 = vshll.u32 %v7014, 16
      %v7118 = vrot.slane %v7116, 1
      %v7119 = vsel %vm868, %v7114, %v7118
      %v7120 = vshrl.u32 %v7014, 16
      %v7122 = vor.u32 %v7120, %v7118
      %v7124 = vshll.u32 %v7015, 16
      %v7126 = vrot.slane %v7124, 1
      %v7127 = vsel %vm868, %v7122, %v7126
      %v7128 = vshrl.u32 %v7015, 16
      %v7130 = vor.u32 %v7128, %v7126
      %v7132 = vshll.u32 %v7016, 16
      %v7134 = vrot.slane %v7132, 1
      %v7135 = vsel %vm868, %v7130, %v7134
      %v7136 = vshrl.u32 %v7016, 16
      %v7138 = vor.u32 %v7136, %v7134
      %v7140 = vshll.u32 %v7017, 16
      %v7142 = vrot.slane %v7140, 1
      %v7143 = vsel %vm868, %v7138, %v7142
      %v7144 = vshrl.u32 %v7017, 16
      %v7146 = vor.u32 %v7144, %v7142
      %v7148 = vshll.u32 %v7018, 16
      %v7150 = vrot.slane %v7148, 1
      %v7151 = vsel %vm868, %v7146, %v7150
      %v7152 = vshrl.u32 %v7018, 16
      %v7154 = vor.u32 %v7152, %v7150
      %v7156 = vshll.u32 %v7019, 16
      %v7158 = vrot.slane %v7156, 1
      %v7159 = vsel %vm868, %v7154, %v7158
      %v7160 = vshrl.u32 %v7019, 16
      %v7162 = vor.u32 %v7160, %v7158
      %v7167 = vunpack.c.l.b16 %v6926
      %v7168 = vunpack.c.l.b16 %v6927
      %v7169 = vunpack.c.l.b16 %v6928
      %v7170 = vunpack.c.l.b16 %v6929
      %v7171 = vpack.c.b16 %v7168, %v7167
      %v7172 = vpack.c.b16 %v7170, %v7169
      %v7176 = vsel %vm413, %v7031, 0
      %v7179 = vsel %vm413, %v7039, 0
      %v7182 = vsel %vm413, %v7047, 0
      %v7185 = vsel %vm413, %v7055, 0
      %v7188 = vsel %vm413, %v7063, 0
      %v7191 = vsel %vm413, %v7071, 0
      %v7194 = vsel %vm413, %v7079, 0
      %v7197 = vsel %vm413, %v7087, 0
      %v7200 = vsel %vm413, %v7095, 0
      %v7203 = vsel %vm413, %v7103, 0
      %v7206 = vsel %vm413, %v7111, 0
      %v7209 = vsel %vm413, %v7119, 0
      %v7212 = vsel %vm413, %v7127, 0
      %v7215 = vsel %vm413, %v7135, 0
      %v7218 = vsel %vm413, %v7143, 0
      %v7221 = vsel %vm413, %v7151, 0
      %v7224 = vsel %vm413, %v7159, 0
      %v7227 = vsel %vm413, %v7162, 0
      %7229 = vmatprep.subr.bf16.mxu0 0
      %7230 = vmatpush1.bf16.msra.mxu0 %v7171
      %7231 = vmatprep.subr.bf16.mxu0 0
      %7232 = vmatpush1.bf16.msra.mxu0 %v7172
      %7233 = vmatprep.subr.bf16.mxu0 0
      %7234 = vmatpush1.bf16.msra.mxu0 0
      %7235 = vmatprep.subr.bf16.mxu0 0
      %7236 = vmatpush1.bf16.msra.mxu0 0
      %7237 = vmatprep.subr.bf16.mxu0 0
      %7238 = vmatpush1.bf16.msra.mxu0 0
      %7239 = vmatprep.subr.bf16.mxu0 0
      %7240 = vmatpush1.bf16.msra.mxu0 0
      %7241 = vmatprep.subr.bf16.mxu0 0
      %7242 = vmatpush1.bf16.msra.mxu0 0
      %7243 = vmatprep.subr.bf16.mxu0 0
      %7244 = vmatpush1.bf16.msra.mxu0 0
      %7245 = vmatprep.subr.bf16.mxu0 0
      %7246 = vmatpush1.bf16.msra.mxu0 0
      %7247 = vmatprep.subr.bf16.mxu0 0
      %7248 = vmatpush1.bf16.msra.mxu0 0
      %7249 = vmatprep.subr.bf16.mxu0 0
      %7250 = vmatpush1.bf16.msra.mxu0 0
      %7251 = vmatprep.subr.bf16.mxu0 0
      %7252 = vmatpush1.bf16.msra.mxu0 0
      %7253 = vmatprep.subr.bf16.mxu0 0
      %7254 = vmatpush1.bf16.msra.mxu0 0
      %7255 = vmatprep.subr.bf16.mxu0 0
      %7256 = vmatpush1.bf16.msra.mxu0 0
      %7257 = vmatprep.subr.bf16.mxu0 0
      %7258 = vmatpush1.bf16.msra.mxu0 0
      %7259 = vmatprep.subr.bf16.mxu0 0
      %7260 = vmatpush1.bf16.msra.mxu0 0
      %7261 = vmatprep.mubr.bf16.mxu0 0
      %7262 = vmatmul.mubr.bf16.gmra.mrb[0].mxu0 %v7176
      %v7263 = vpop.f32.mrb[0].mxu0
      %v7264 = vadd.f32 0.0, %v7263
      %v7265 = vpop.f32.mrb[0].mxu0
      %v7266 = vpop.f32.mrb[0].mxu0
      %v7267 = vadd.f32 0.0, %v7266
      %v7268 = vpop.f32.mrb[0].mxu0
      %7269 = vmatprep.mubr.bf16.mxu0 0
      %7270 = vmatmul.mubr.bf16.gmra.mrb[0].mxu0 %v7179
      %v7271 = vpop.f32.mrb[0].mxu0
      %v7272 = vadd.f32 0.0, %v7271
      %v7273 = vpop.f32.mrb[0].mxu0
      %v7274 = vpop.f32.mrb[0].mxu0
      %v7275 = vadd.f32 0.0, %v7274
      %v7276 = vpop.f32.mrb[0].mxu0
      %7277 = vmatprep.mubr.bf16.mxu0 0
      %7278 = vmatmul.mubr.bf16.gmra.mrb[0].mxu0 %v7182
      %v7279 = vpop.f32.mrb[0].mxu0
      %v7280 = vadd.f32 0.0, %v7279
      %v7281 = vpop.f32.mrb[0].mxu0
      %v7282 = vpop.f32.mrb[0].mxu0
      %v7283 = vadd.f32 0.0, %v7282
      %v7284 = vpop.f32.mrb[0].mxu0
      %7285 = vmatprep.mubr.bf16.mxu0 0
      %7286 = vmatmul.mubr.bf16.gmra.mrb[0].mxu0 %v7185
      %v7287 = vpop.f32.mrb[0].mxu0
      %v7288 = vadd.f32 0.0, %v7287
      %v7289 = vpop.f32.mrb[0].mxu0
      %v7290 = vpop.f32.mrb[0].mxu0
      %v7291 = vadd.f32 0.0, %v7290
      %v7292 = vpop.f32.mrb[0].mxu0
      %7293 = vmatprep.mubr.bf16.mxu0 0
      %7294 = vmatmul.mubr.bf16.gmra.mrb[0].mxu0 %v7188
      %v7295 = vpop.f32.mrb[0].mxu0
      %v7296 = vadd.f32 0.0, %v7295
      %v7297 = vpop.f32.mrb[0].mxu0
      %v7298 = vpop.f32.mrb[0].mxu0
      %v7299 = vadd.f32 0.0, %v7298
      %v7300 = vpop.f32.mrb[0].mxu0
      %7301 = vmatprep.mubr.bf16.mxu0 0
      %7302 = vmatmul.mubr.bf16.gmra.mrb[0].mxu0 %v7191
      %v7303 = vpop.f32.mrb[0].mxu0
      %v7304 = vadd.f32 0.0, %v7303
      %v7305 = vpop.f32.mrb[0].mxu0
      %v7306 = vpop.f32.mrb[0].mxu0
      %v7307 = vadd.f32 0.0, %v7306
      %v7308 = vpop.f32.mrb[0].mxu0
      %7309 = vmatprep.mubr.bf16.mxu0 0
      %7310 = vmatmul.mubr.bf16.gmra.mrb[0].mxu0 %v7194
      %v7311 = vpop.f32.mrb[0].mxu0
      %v7312 = vadd.f32 0.0, %v7311
      %v7313 = vpop.f32.mrb[0].mxu0
      %v7314 = vpop.f32.mrb[0].mxu0
      %v7315 = vadd.f32 0.0, %v7314
      %v7316 = vpop.f32.mrb[0].mxu0
      %7317 = vmatprep.mubr.bf16.mxu0 0
      %7318 = vmatmul.mubr.bf16.gmra.mrb[0].mxu0 %v7197
      %v7319 = vpop.f32.mrb[0].mxu0
      %v7320 = vadd.f32 0.0, %v7319
      %v7321 = vpop.f32.mrb[0].mxu0
      %v7322 = vpop.f32.mrb[0].mxu0
      %v7323 = vadd.f32 0.0, %v7322
      %v7324 = vpop.f32.mrb[0].mxu0
      %7325 = vmatprep.mubr.bf16.mxu0 0
      %7326 = vmatmul.mubr.bf16.gmra.mrb[0].mxu0 %v7200
      %v7327 = vpop.f32.mrb[0].mxu0
      %v7328 = vadd.f32 0.0, %v7327
      %v7329 = vpop.f32.mrb[0].mxu0
      %v7330 = vpop.f32.mrb[0].mxu0
      %v7331 = vadd.f32 0.0, %v7330
      %v7332 = vpop.f32.mrb[0].mxu0
      %7333 = vmatprep.mubr.bf16.mxu0 0
      %7334 = vmatmul.mubr.bf16.gmra.mrb[0].mxu0 %v7203
      %v7335 = vpop.f32.mrb[0].mxu0
      %v7336 = vadd.f32 0.0, %v7335
      %v7337 = vpop.f32.mrb[0].mxu0
      %v7338 = vpop.f32.mrb[0].mxu0
      %v7339 = vadd.f32 0.0, %v7338
      %v7340 = vpop.f32.mrb[0].mxu0
      %7341 = vmatprep.mubr.bf16.mxu0 0
      %7342 = vmatmul.mubr.bf16.gmra.mrb[0].mxu0 %v7206
      %v7343 = vpop.f32.mrb[0].mxu0
      %v7344 = vadd.f32 0.0, %v7343
      %v7345 = vpop.f32.mrb[0].mxu0
      %v7346 = vpop.f32.mrb[0].mxu0
      %v7347 = vadd.f32 0.0, %v7346
      %v7348 = vpop.f32.mrb[0].mxu0
      %7349 = vmatprep.mubr.bf16.mxu0 0
      %7350 = vmatmul.mubr.bf16.gmra.mrb[0].mxu0 %v7209
      %v7351 = vpop.f32.mrb[0].mxu0
      %v7352 = vadd.f32 0.0, %v7351
      %v7353 = vpop.f32.mrb[0].mxu0
      %v7354 = vpop.f32.mrb[0].mxu0
      %v7355 = vadd.f32 0.0, %v7354
      %v7356 = vpop.f32.mrb[0].mxu0
      %7357 = vmatprep.mubr.bf16.mxu0 0
      %7358 = vmatmul.mubr.bf16.gmra.mrb[0].mxu0 %v7212
      %v7359 = vpop.f32.mrb[0].mxu0
      %v7360 = vadd.f32 0.0, %v7359
      %v7361 = vpop.f32.mrb[0].mxu0
      %v7362 = vpop.f32.mrb[0].mxu0
      %v7363 = vadd.f32 0.0, %v7362
      %v7364 = vpop.f32.mrb[0].mxu0
      %7365 = vmatprep.mubr.bf16.mxu0 0
      %7366 = vmatmul.mubr.bf16.gmra.mrb[0].mxu0 %v7215
      %v7367 = vpop.f32.mrb[0].mxu0
      %v7368 = vadd.f32 0.0, %v7367
      %v7369 = vpop.f32.mrb[0].mxu0
      %v7370 = vpop.f32.mrb[0].mxu0
      %v7371 = vadd.f32 0.0, %v7370
      %v7372 = vpop.f32.mrb[0].mxu0
      %7373 = vmatprep.mubr.bf16.mxu0 0
      %7374 = vmatmul.mubr.bf16.gmra.mrb[0].mxu0 %v7218
      %v7375 = vpop.f32.mrb[0].mxu0
      %v7376 = vadd.f32 0.0, %v7375
      %v7377 = vpop.f32.mrb[0].mxu0
      %v7378 = vpop.f32.mrb[0].mxu0
      %v7379 = vadd.f32 0.0, %v7378
      %v7380 = vpop.f32.mrb[0].mxu0
      %7381 = vmatprep.mubr.bf16.mxu0 0
      %7382 = vmatmul.mubr.bf16.gmra.mrb[0].mxu0 %v7221
      %v7383 = vpop.f32.mrb[0].mxu0
      %v7384 = vadd.f32 0.0, %v7383
      %v7385 = vpop.f32.mrb[0].mxu0
      %v7386 = vpop.f32.mrb[0].mxu0
      %v7387 = vadd.f32 0.0, %v7386
      %v7388 = vpop.f32.mrb[0].mxu0
      %7389 = vmatprep.mubr.bf16.mxu0 0
      %7390 = vmatmul.mubr.bf16.gmra.mrb[0].mxu0 %v7224
      %v7391 = vpop.f32.mrb[0].mxu0
      %v7392 = vadd.f32 0.0, %v7391
      %v7393 = vpop.f32.mrb[0].mxu0
      %v7394 = vpop.f32.mrb[0].mxu0
      %v7395 = vadd.f32 0.0, %v7394
      %v7396 = vpop.f32.mrb[0].mxu0
      %7397 = vmatprep.mubr.bf16.mxu0 0
      %7398 = vmatmul.mubr.bf16.gmra.mrb[0].mxu0 %v7227
      %v7399 = vpop.f32.mrb[0].mxu0
      %v7400 = vadd.f32 0.0, %v7399
      %v7401 = vpop.f32.mrb[0].mxu0
      %v7402 = vpop.f32.mrb[0].mxu0
      %v7403 = vadd.f32 0.0, %v7402
      %v7404 = vpop.f32.mrb[0].mxu0
      %7405 = vdwg.mxu0
      %v7406 = vld [vmem:[#allocation4] sm:$0xff]
      %v7407 = vld [vmem:[#allocation4 + $0x8] sm:$0xff]
      %v7408 = vld [vmem:[#allocation4 + $0x10] sm:$0xff]
      %v7409 = vld [vmem:[#allocation4 + $0x18] sm:$0xff]
      %v7410 = vld [vmem:[#allocation4 + $0x20] sm:$0xff]
      %v7411 = vld [vmem:[#allocation4 + $0x28] sm:$0xff]
      %v7412 = vld [vmem:[#allocation4 + $0x30] sm:$0xff]
      %v7413 = vld [vmem:[#allocation4 + $0x38] sm:$0xff]
      %v7414 = vld [vmem:[#allocation4 + $0x40] sm:$0xff]
      %v7415 = vld [vmem:[#allocation4 + $0x48] sm:$0xff]
      %v7416 = vld [vmem:[#allocation4 + $0x50] sm:$0xff]
      %v7417 = vld [vmem:[#allocation4 + $0x58] sm:$0xff]
      %v7418 = vld [vmem:[#allocation4 + $0x60] sm:$0xff]
      %v7419 = vld [vmem:[#allocation4 + $0x68] sm:$0xff]
      %v7420 = vld [vmem:[#allocation4 + $0x70] sm:$0xff]
      %v7421 = vld [vmem:[#allocation4 + $0x78] sm:$0xff]
      %v7422 = vld [vmem:[#allocation4 + $0x80] sm:$0xff]
      %v7423 = vld [vmem:[#allocation4 + $0x88] sm:$0xff]
      %v7424 = vld [vmem:[#allocation4 + $0x90] sm:$0xff]
      %v7425 = vld [vmem:[#allocation4 + $0x98] sm:$0xff]
      %v7426 = vld [vmem:[#allocation4 + $0xa0] sm:$0xff]
      %v7427 = vld [vmem:[#allocation4 + $0xa8] sm:$0xff]
      %v7428 = vld [vmem:[#allocation4 + $0xb0] sm:$0xff]
      %v7429 = vld [vmem:[#allocation4 + $0xb8] sm:$0xff]
      %v7430 = vld [vmem:[#allocation4 + $0xc0] sm:$0xff]
      %v7431 = vld [vmem:[#allocation4 + $0xc8] sm:$0xff]
      %v7432 = vld [vmem:[#allocation4 + $0xd0] sm:$0xff]
      %v7433 = vld [vmem:[#allocation4 + $0xd8] sm:$0xff]
      %v7434 = vld [vmem:[#allocation4 + $0xe0] sm:$0xff]
      %v7435 = vld [vmem:[#allocation4 + $0xe8] sm:$0xff]
      %v7436 = vld [vmem:[#allocation4 + $0xf0] sm:$0xff]
      %v7437 = vld [vmem:[#allocation4 + $0xf8] sm:$0xff]
      %v7438 = vld [vmem:[#allocation4 + $0x100] sm:$0xff]
      %v7439 = vld [vmem:[#allocation4 + $0x108] sm:$0xff]
      %v7440 = vld [vmem:[#allocation4 + $0x110] sm:$0xff]
      %v7441 = vld [vmem:[#allocation4 + $0x118] sm:$0x3f]
      %v7442 = vadd.f32 %v7406, %v7264
      %v7443 = vadd.f32 %v7407, %v7267
      %v7444 = vadd.f32 %v7408, %v7272
      %v7445 = vadd.f32 %v7409, %v7275
      %v7446 = vadd.f32 %v7410, %v7280
      %v7447 = vadd.f32 %v7411, %v7283
      %v7448 = vadd.f32 %v7412, %v7288
      %v7449 = vadd.f32 %v7413, %v7291
      %v7450 = vadd.f32 %v7414, %v7296
      %v7451 = vadd.f32 %v7415, %v7299
      %v7452 = vadd.f32 %v7416, %v7304
      %v7453 = vadd.f32 %v7417, %v7307
      %v7454 = vadd.f32 %v7418, %v7312
      %v7455 = vadd.f32 %v7419, %v7315
      %v7456 = vadd.f32 %v7420, %v7320
      %v7457 = vadd.f32 %v7421, %v7323
      %v7458 = vadd.f32 %v7422, %v7328
      %v7459 = vadd.f32 %v7423, %v7331
      %v7460 = vadd.f32 %v7424, %v7336
      %v7461 = vadd.f32 %v7425, %v7339
      %v7462 = vadd.f32 %v7426, %v7344
      %v7463 = vadd.f32 %v7427, %v7347
      %v7464 = vadd.f32 %v7428, %v7352
      %v7465 = vadd.f32 %v7429, %v7355
      %v7466 = vadd.f32 %v7430, %v7360
      %v7467 = vadd.f32 %v7431, %v7363
      %v7468 = vadd.f32 %v7432, %v7368
      %v7469 = vadd.f32 %v7433, %v7371
      %v7470 = vadd.f32 %v7434, %v7376
      %v7471 = vadd.f32 %v7435, %v7379
      %v7472 = vadd.f32 %v7436, %v7384
      %v7473 = vadd.f32 %v7437, %v7387
      %v7474 = vadd.f32 %v7438, %v7392
      %v7475 = vadd.f32 %v7439, %v7395
      %v7476 = vadd.f32 %v7440, %v7400
      %v7477 = vadd.f32 %v7441, %v7403
      %7478 = vst.msk [vmem:[#allocation4] sm:$0xff] %vm413, %v7442
      %7479 = vst.msk [vmem:[#allocation4 + $0x8] sm:$0xff] %vm413, %v7443
      %7480 = vst.msk [vmem:[#allocation4 + $0x10] sm:$0xff] %vm413, %v7444
      %7481 = vst.msk [vmem:[#allocation4 + $0x18] sm:$0xff] %vm413, %v7445
      %7482 = vst.msk [vmem:[#allocation4 + $0x20] sm:$0xff] %vm413, %v7446
      %7483 = vst.msk [vmem:[#allocation4 + $0x28] sm:$0xff] %vm413, %v7447
      %7484 = vst.msk [vmem:[#allocation4 + $0x30] sm:$0xff] %vm413, %v7448
      %7485 = vst.msk [vmem:[#allocation4 + $0x38] sm:$0xff] %vm413, %v7449
      %7486 = vst.msk [vmem:[#allocation4 + $0x40] sm:$0xff] %vm413, %v7450
      %7487 = vst.msk [vmem:[#allocation4 + $0x48] sm:$0xff] %vm413, %v7451
      %7488 = vst.msk [vmem:[#allocation4 + $0x50] sm:$0xff] %vm413, %v7452
      %7489 = vst.msk [vmem:[#allocation4 + $0x58] sm:$0xff] %vm413, %v7453
      %7490 = vst.msk [vmem:[#allocation4 + $0x60] sm:$0xff] %vm413, %v7454
      %7491 = vst.msk [vmem:[#allocation4 + $0x68] sm:$0xff] %vm413, %v7455
      %7492 = vst.msk [vmem:[#allocation4 + $0x70] sm:$0xff] %vm413, %v7456
      %7493 = vst.msk [vmem:[#allocation4 + $0x78] sm:$0xff] %vm413, %v7457
      %7494 = vst.msk [vmem:[#allocation4 + $0x80] sm:$0xff] %vm413, %v7458
      %7495 = vst.msk [vmem:[#allocation4 + $0x88] sm:$0xff] %vm413, %v7459
      %7496 = vst.msk [vmem:[#allocation4 + $0x90] sm:$0xff] %vm413, %v7460
      %7497 = vst.msk [vmem:[#allocation4 + $0x98] sm:$0xff] %vm413, %v7461
      %7498 = vst.msk [vmem:[#allocation4 + $0xa0] sm:$0xff] %vm413, %v7462
      %7499 = vst.msk [vmem:[#allocation4 + $0xa8] sm:$0xff] %vm413, %v7463
      %7500 = vst.msk [vmem:[#allocation4 + $0xb0] sm:$0xff] %vm413, %v7464
      %7501 = vst.msk [vmem:[#allocation4 + $0xb8] sm:$0xff] %vm413, %v7465
      %7502 = vst.msk [vmem:[#allocation4 + $0xc0] sm:$0xff] %vm413, %v7466
      %7503 = vst.msk [vmem:[#allocation4 + $0xc8] sm:$0xff] %vm413, %v7467
      %7504 = vst.msk [vmem:[#allocation4 + $0xd0] sm:$0xff] %vm413, %v7468
      %7505 = vst.msk [vmem:[#allocation4 + $0xd8] sm:$0xff] %vm413, %v7469
      %7506 = vst.msk [vmem:[#allocation4 + $0xe0] sm:$0xff] %vm413, %v7470
      %7507 = vst.msk [vmem:[#allocation4 + $0xe8] sm:$0xff] %vm413, %v7471
      %7508 = vst.msk [vmem:[#allocation4 + $0xf0] sm:$0xff] %vm413, %v7472
      %7509 = vst.msk [vmem:[#allocation4 + $0xf8] sm:$0xff] %vm413, %v7473
      %7510 = vst.msk [vmem:[#allocation4 + $0x100] sm:$0xff] %vm413, %v7474
      %7511 = vst.msk [vmem:[#allocation4 + $0x108] sm:$0xff] %vm413, %v7475
      %7512 = vst.msk [vmem:[#allocation4 + $0x110] sm:$0xff] %vm413, %v7476
      %7513 = vst.msk [vmem:[#allocation4 + $0x118] sm:$0x3f] %vm6887, %v7477
      %v7514 = vld [vmem:[#allocation3] sm:$0xe]
      %v7515 = vld [vmem:[#allocation3 + $0x4] sm:$0xf]
      %v7516 = vld [vmem:[#allocation3 + $0x8] sm:$0xf]
      %v7517 = vld [vmem:[#allocation3 + $0xc] sm:$0xf]
      %v7518 = vld [vmem:[#allocation3 + $0x10] sm:$0xf]
      %v7519 = vld [vmem:[#allocation3 + $0x14] sm:$0xf]
      %v7520 = vld [vmem:[#allocation3 + $0x18] sm:$0xf]
      %v7521 = vld [vmem:[#allocation3 + $0x1c] sm:$0xf]
      %v7522 = vld [vmem:[#allocation3 + $0x20] sm:$0xf]
      %v7523 = vld [vmem:[#allocation3 + $0x24] sm:$0xf]
      %v7524 = vld [vmem:[#allocation3 + $0x28] sm:$0xf]
      %v7525 = vld [vmem:[#allocation3 + $0x2c] sm:$0xf]
      %v7526 = vld [vmem:[#allocation3 + $0x30] sm:$0xf]
      %v7527 = vld [vmem:[#allocation3 + $0x34] sm:$0xf]
      %v7528 = vld [vmem:[#allocation3 + $0x38] sm:$0xf]
      %v7529 = vld [vmem:[#allocation3 + $0x3c] sm:$0xf]
      %v7530 = vld [vmem:[#allocation3 + $0x40] sm:$0xf]
      %v7531 = vld [vmem:[#allocation3 + $0x44] sm:$0xf]
      %v7532 = vld [vmem:[#allocation3 + $0x48] sm:$0xf]
      %v7533 = vld [vmem:[#allocation3 + $0x4c] sm:$0xf]
      %v7534 = vld [vmem:[#allocation3 + $0x50] sm:$0xf]
      %v7535 = vld [vmem:[#allocation3 + $0x54] sm:$0xf]
      %v7536 = vld [vmem:[#allocation3 + $0x58] sm:$0xf]
      %v7537 = vld [vmem:[#allocation3 + $0x5c] sm:$0xf]
      %v7538 = vld [vmem:[#allocation3 + $0x60] sm:$0xf]
      %v7539 = vld [vmem:[#allocation3 + $0x64] sm:$0xf]
      %v7540 = vld [vmem:[#allocation3 + $0x68] sm:$0xf]
      %v7541 = vld [vmem:[#allocation3 + $0x6c] sm:$0xf]
      %v7542 = vld [vmem:[#allocation3 + $0x70] sm:$0xf]
      %v7543 = vld [vmem:[#allocation3 + $0x74] sm:$0xf]
      %v7544 = vld [vmem:[#allocation3 + $0x78] sm:$0xf]
      %v7545 = vld [vmem:[#allocation3 + $0x7c] sm:$0xf]
      %v7546 = vld [vmem:[#allocation3 + $0x80] sm:$0xf]
      %v7547 = vld [vmem:[#allocation3 + $0x84] sm:$0xf]
      %v7548 = vld [vmem:[#allocation3 + $0x88] sm:$0xf]
      %v7549 = vld [vmem:[#allocation3 + $0x8c] sm:$0xf]
      %s7550 = scalar_lea.vmem %s4, 32
      %v7551 = vld [vmem:[%s7550] sm:$0xf]
      %v7552 = vld [vmem:[%s7550 + $0x4] sm:$0xf]
      %v7553 = vld [vmem:[%s7550 + $0x8] sm:$0xf]
      %v7554 = vld [vmem:[%s7550 + $0xc] sm:$0xf]
      %v7591 = vunpack.c.l.b16 %v7514
      %v7592 = vunpack.c.l.b16 %v7515
      %v7593 = vunpack.c.l.b16 %v7516
      %v7594 = vunpack.c.l.b16 %v7517
      %v7595 = vunpack.c.l.b16 %v7518
      %v7596 = vunpack.c.l.b16 %v7519
      %v7597 = vunpack.c.l.b16 %v7520
      %v7598 = vunpack.c.l.b16 %v7521
      %v7599 = vunpack.c.l.b16 %v7522
      %v7600 = vunpack.c.l.b16 %v7523
      %v7601 = vunpack.c.l.b16 %v7524
      %v7602 = vunpack.c.l.b16 %v7525
      %v7603 = vunpack.c.l.b16 %v7526
      %v7604 = vunpack.c.l.b16 %v7527
      %v7605 = vunpack.c.l.b16 %v7528
      %v7606 = vunpack.c.l.b16 %v7529
      %v7607 = vunpack.c.l.b16 %v7530
      %v7608 = vunpack.c.l.b16 %v7531
      %v7609 = vunpack.c.l.b16 %v7532
      %v7610 = vunpack.c.l.b16 %v7533
      %v7611 = vunpack.c.l.b16 %v7534
      %v7612 = vunpack.c.l.b16 %v7535
      %v7613 = vunpack.c.l.b16 %v7536
      %v7614 = vunpack.c.l.b16 %v7537
      %v7615 = vunpack.c.l.b16 %v7538
      %v7616 = vunpack.c.l.b16 %v7539
      %v7617 = vunpack.c.l.b16 %v7540
      %v7618 = vunpack.c.l.b16 %v7541
      %v7619 = vunpack.c.l.b16 %v7542
      %v7620 = vunpack.c.l.b16 %v7543
      %v7621 = vunpack.c.l.b16 %v7544
      %v7622 = vunpack.c.l.b16 %v7545
      %v7623 = vunpack.c.l.b16 %v7546
      %v7624 = vunpack.c.l.b16 %v7547
      %v7625 = vunpack.c.l.b16 %v7548
      %v7626 = vunpack.c.l.b16 %v7549
      %v7627 = vpack.c.b16 %v7592, %v7591
      %v7628 = vpack.c.b16 %v7594, %v7593
      %v7629 = vpack.c.b16 %v7596, %v7595
      %v7630 = vpack.c.b16 %v7598, %v7597
      %v7631 = vpack.c.b16 %v7600, %v7599
      %v7632 = vpack.c.b16 %v7602, %v7601
      %v7633 = vpack.c.b16 %v7604, %v7603
      %v7634 = vpack.c.b16 %v7606, %v7605
      %v7635 = vpack.c.b16 %v7608, %v7607
      %v7636 = vpack.c.b16 %v7610, %v7609
      %v7637 = vpack.c.b16 %v7612, %v7611
      %v7638 = vpack.c.b16 %v7614, %v7613
      %v7639 = vpack.c.b16 %v7616, %v7615
      %v7640 = vpack.c.b16 %v7618, %v7617
      %v7641 = vpack.c.b16 %v7620, %v7619
      %v7642 = vpack.c.b16 %v7622, %v7621
      %v7643 = vpack.c.b16 %v7624, %v7623
      %v7644 = vpack.c.b16 %v7626, %v7625
      %v7645 = vrot.slane %v7627, 1
      %v7646 = vrot.slane %v7628, 1
      %v7647 = vsel %vm1583, %v7645, %v7646
      %v7648 = vrot.slane %v7629, 1
      %v7649 = vsel %vm1583, %v7646, %v7648
      %v7650 = vrot.slane %v7630, 1
      %v7651 = vsel %vm1583, %v7648, %v7650
      %v7652 = vrot.slane %v7631, 1
      %v7653 = vsel %vm1583, %v7650, %v7652
      %v7654 = vrot.slane %v7632, 1
      %v7655 = vsel %vm1583, %v7652, %v7654
      %v7656 = vrot.slane %v7633, 1
      %v7657 = vsel %vm1583, %v7654, %v7656
      %v7658 = vrot.slane %v7634, 1
      %v7659 = vsel %vm1583, %v7656, %v7658
      %v7660 = vrot.slane %v7635, 1
      %v7661 = vsel %vm1583, %v7658, %v7660
      %v7662 = vrot.slane %v7636, 1
      %v7663 = vsel %vm1583, %v7660, %v7662
      %v7664 = vrot.slane %v7637, 1
      %v7665 = vsel %vm1583, %v7662, %v7664
      %v7666 = vrot.slane %v7638, 1
      %v7667 = vsel %vm1583, %v7664, %v7666
      %v7668 = vrot.slane %v7639, 1
      %v7669 = vsel %vm1583, %v7666, %v7668
      %v7670 = vrot.slane %v7640, 1
      %v7671 = vsel %vm1583, %v7668, %v7670
      %v7672 = vrot.slane %v7641, 1
      %v7673 = vsel %vm1583, %v7670, %v7672
      %v7674 = vrot.slane %v7642, 1
      %v7675 = vsel %vm1583, %v7672, %v7674
      %v7676 = vrot.slane %v7643, 1
      %v7677 = vsel %vm1583, %v7674, %v7676
      %v7678 = vrot.slane %v7644, 1
      %v7679 = vsel %vm1583, %v7676, %v7678
      %v7684 = vunpack.c.l.b16 %v7551
      %v7685 = vunpack.c.l.b16 %v7552
      %v7686 = vunpack.c.l.b16 %v7553
      %v7687 = vunpack.c.l.b16 %v7554
      %v7688 = vpack.c.b16 %v7685, %v7684
      %v7689 = vpack.c.b16 %v7687, %v7686
      %v7693 = vsel %vm413, %v7647, 0
      %v7696 = vsel %vm413, %v7649, 0
      %v7699 = vsel %vm413, %v7651, 0
      %v7702 = vsel %vm413, %v7653, 0
      %v7705 = vsel %vm413, %v7655, 0
      %v7708 = vsel %vm413, %v7657, 0
      %v7711 = vsel %vm413, %v7659, 0
      %v7714 = vsel %vm413, %v7661, 0
      %v7717 = vsel %vm413, %v7663, 0
      %v7720 = vsel %vm413, %v7665, 0
      %v7723 = vsel %vm413, %v7667, 0
      %v7726 = vsel %vm413, %v7669, 0
      %v7729 = vsel %vm413, %v7671, 0
      %v7732 = vsel %vm413, %v7673, 0
      %v7735 = vsel %vm413, %v7675, 0
      %v7738 = vsel %vm413, %v7677, 0
      %v7741 = vsel %vm413, %v7679, 0
      %v7744 = vsel %vm413, %v7678, 0
      %7746 = vmatprep.subr.bf16.mxu0 0
      %7747 = vmatpush1.bf16.msra.mxu0 %v7688
      %7748 = vmatprep.subr.bf16.mxu0 0
      %7749 = vmatpush1.bf16.msra.mxu0 %v7689
      %7750 = vmatprep.subr.bf16.mxu0 0
      %7751 = vmatpush1.bf16.msra.mxu0 0
      %7752 = vmatprep.subr.bf16.mxu0 0
      %7753 = vmatpush1.bf16.msra.mxu0 0
      %7754 = vmatprep.subr.bf16.mxu0 0
      %7755 = vmatpush1.bf16.msra.mxu0 0
      %7756 = vmatprep.subr.bf16.mxu0 0
      %7757 = vmatpush1.bf16.msra.mxu0 0
      %7758 = vmatprep.subr.bf16.mxu0 0
      %7759 = vmatpush1.bf16.msra.mxu0 0
      %7760 = vmatprep.subr.bf16.mxu0 0
      %7761 = vmatpush1.bf16.msra.mxu0 0
      %7762 = vmatprep.subr.bf16.mxu0 0
      %7763 = vmatpush1.bf16.msra.mxu0 0
      %7764 = vmatprep.subr.bf16.mxu0 0
      %7765 = vmatpush1.bf16.msra.mxu0 0
      %7766 = vmatprep.subr.bf16.mxu0 0
      %7767 = vmatpush1.bf16.msra.mxu0 0
      %7768 = vmatprep.subr.bf16.mxu0 0
      %7769 = vmatpush1.bf16.msra.mxu0 0
      %7770 = vmatprep.subr.bf16.mxu0 0
      %7771 = vmatpush1.bf16.msra.mxu0 0
      %7772 = vmatprep.subr.bf16.mxu0 0
      %7773 = vmatpush1.bf16.msra.mxu0 0
      %7774 = vmatprep.subr.bf16.mxu0 0
      %7775 = vmatpush1.bf16.msra.mxu0 0
      %7776 = vmatprep.subr.bf16.mxu0 0
      %7777 = vmatpush1.bf16.msra.mxu0 0
      %7778 = vmatprep.mubr.bf16.mxu0 0
      %7779 = vmatmul.mubr.bf16.gmra.mrb[0].mxu0 %v7693
      %v7780 = vpop.f32.mrb[0].mxu0
      %v7781 = vadd.f32 0.0, %v7780
      %v7782 = vpop.f32.mrb[0].mxu0
      %v7783 = vpop.f32.mrb[0].mxu0
      %v7784 = vadd.f32 0.0, %v7783
      %v7785 = vpop.f32.mrb[0].mxu0
      %7786 = vmatprep.mubr.bf16.mxu0 0
      %7787 = vmatmul.mubr.bf16.gmra.mrb[0].mxu0 %v7696
      %v7788 = vpop.f32.mrb[0].mxu0
      %v7789 = vadd.f32 0.0, %v7788
      %v7790 = vpop.f32.mrb[0].mxu0
      %v7791 = vpop.f32.mrb[0].mxu0
      %v7792 = vadd.f32 0.0, %v7791
      %v7793 = vpop.f32.mrb[0].mxu0
      %7794 = vmatprep.mubr.bf16.mxu0 0
      %7795 = vmatmul.mubr.bf16.gmra.mrb[0].mxu0 %v7699
      %v7796 = vpop.f32.mrb[0].mxu0
      %v7797 = vadd.f32 0.0, %v7796
      %v7798 = vpop.f32.mrb[0].mxu0
      %v7799 = vpop.f32.mrb[0].mxu0
      %v7800 = vadd.f32 0.0, %v7799
      %v7801 = vpop.f32.mrb[0].mxu0
      %7802 = vmatprep.mubr.bf16.mxu0 0
      %7803 = vmatmul.mubr.bf16.gmra.mrb[0].mxu0 %v7702
      %v7804 = vpop.f32.mrb[0].mxu0
      %v7805 = vadd.f32 0.0, %v7804
      %v7806 = vpop.f32.mrb[0].mxu0
      %v7807 = vpop.f32.mrb[0].mxu0
      %v7808 = vadd.f32 0.0, %v7807
      %v7809 = vpop.f32.mrb[0].mxu0
      %7810 = vmatprep.mubr.bf16.mxu0 0
      %7811 = vmatmul.mubr.bf16.gmra.mrb[0].mxu0 %v7705
      %v7812 = vpop.f32.mrb[0].mxu0
      %v7813 = vadd.f32 0.0, %v7812
      %v7814 = vpop.f32.mrb[0].mxu0
      %v7815 = vpop.f32.mrb[0].mxu0
      %v7816 = vadd.f32 0.0, %v7815
      %v7817 = vpop.f32.mrb[0].mxu0
      %7818 = vmatprep.mubr.bf16.mxu0 0
      %7819 = vmatmul.mubr.bf16.gmra.mrb[0].mxu0 %v7708
      %v7820 = vpop.f32.mrb[0].mxu0
      %v7821 = vadd.f32 0.0, %v7820
      %v7822 = vpop.f32.mrb[0].mxu0
      %v7823 = vpop.f32.mrb[0].mxu0
      %v7824 = vadd.f32 0.0, %v7823
      %v7825 = vpop.f32.mrb[0].mxu0
      %7826 = vmatprep.mubr.bf16.mxu0 0
      %7827 = vmatmul.mubr.bf16.gmra.mrb[0].mxu0 %v7711
      %v7828 = vpop.f32.mrb[0].mxu0
      %v7829 = vadd.f32 0.0, %v7828
      %v7830 = vpop.f32.mrb[0].mxu0
      %v7831 = vpop.f32.mrb[0].mxu0
      %v7832 = vadd.f32 0.0, %v7831
      %v7833 = vpop.f32.mrb[0].mxu0
      %7834 = vmatprep.mubr.bf16.mxu0 0
      %7835 = vmatmul.mubr.bf16.gmra.mrb[0].mxu0 %v7714
      %v7836 = vpop.f32.mrb[0].mxu0
      %v7837 = vadd.f32 0.0, %v7836
      %v7838 = vpop.f32.mrb[0].mxu0
      %v7839 = vpop.f32.mrb[0].mxu0
      %v7840 = vadd.f32 0.0, %v7839
      %v7841 = vpop.f32.mrb[0].mxu0
      %7842 = vmatprep.mubr.bf16.mxu0 0
      %7843 = vmatmul.mubr.bf16.gmra.mrb[0].mxu0 %v7717
      %v7844 = vpop.f32.mrb[0].mxu0
      %v7845 = vadd.f32 0.0, %v7844
      %v7846 = vpop.f32.mrb[0].mxu0
      %v7847 = vpop.f32.mrb[0].mxu0
      %v7848 = vadd.f32 0.0, %v7847
      %v7849 = vpop.f32.mrb[0].mxu0
      %7850 = vmatprep.mubr.bf16.mxu0 0
      %7851 = vmatmul.mubr.bf16.gmra.mrb[0].mxu0 %v7720
      %v7852 = vpop.f32.mrb[0].mxu0
      %v7853 = vadd.f32 0.0, %v7852
      %v7854 = vpop.f32.mrb[0].mxu0
      %v7855 = vpop.f32.mrb[0].mxu0
      %v7856 = vadd.f32 0.0, %v7855
      %v7857 = vpop.f32.mrb[0].mxu0
      %7858 = vmatprep.mubr.bf16.mxu0 0
      %7859 = vmatmul.mubr.bf16.gmra.mrb[0].mxu0 %v7723
      %v7860 = vpop.f32.mrb[0].mxu0
      %v7861 = vadd.f32 0.0, %v7860
      %v7862 = vpop.f32.mrb[0].mxu0
      %v7863 = vpop.f32.mrb[0].mxu0
      %v7864 = vadd.f32 0.0, %v7863
      %v7865 = vpop.f32.mrb[0].mxu0
      %7866 = vmatprep.mubr.bf16.mxu0 0
      %7867 = vmatmul.mubr.bf16.gmra.mrb[0].mxu0 %v7726
      %v7868 = vpop.f32.mrb[0].mxu0
      %v7869 = vadd.f32 0.0, %v7868
      %v7870 = vpop.f32.mrb[0].mxu0
      %v7871 = vpop.f32.mrb[0].mxu0
      %v7872 = vadd.f32 0.0, %v7871
      %v7873 = vpop.f32.mrb[0].mxu0
      %7874 = vmatprep.mubr.bf16.mxu0 0
      %7875 = vmatmul.mubr.bf16.gmra.mrb[0].mxu0 %v7729
      %v7876 = vpop.f32.mrb[0].mxu0
      %v7877 = vadd.f32 0.0, %v7876
      %v7878 = vpop.f32.mrb[0].mxu0
      %v7879 = vpop.f32.mrb[0].mxu0
      %v7880 = vadd.f32 0.0, %v7879
      %v7881 = vpop.f32.mrb[0].mxu0
      %7882 = vmatprep.mubr.bf16.mxu0 0
      %7883 = vmatmul.mubr.bf16.gmra.mrb[0].mxu0 %v7732
      %v7884 = vpop.f32.mrb[0].mxu0
      %v7885 = vadd.f32 0.0, %v7884
      %v7886 = vpop.f32.mrb[0].mxu0
      %v7887 = vpop.f32.mrb[0].mxu0
      %v7888 = vadd.f32 0.0, %v7887
      %v7889 = vpop.f32.mrb[0].mxu0
      %7890 = vmatprep.mubr.bf16.mxu0 0
      %7891 = vmatmul.mubr.bf16.gmra.mrb[0].mxu0 %v7735
      %v7892 = vpop.f32.mrb[0].mxu0
      %v7893 = vadd.f32 0.0, %v7892
      %v7894 = vpop.f32.mrb[0].mxu0
      %v7895 = vpop.f32.mrb[0].mxu0
      %v7896 = vadd.f32 0.0, %v7895
      %v7897 = vpop.f32.mrb[0].mxu0
      %7898 = vmatprep.mubr.bf16.mxu0 0
      %7899 = vmatmul.mubr.bf16.gmra.mrb[0].mxu0 %v7738
      %v7900 = vpop.f32.mrb[0].mxu0
      %v7901 = vadd.f32 0.0, %v7900
      %v7902 = vpop.f32.mrb[0].mxu0
      %v7903 = vpop.f32.mrb[0].mxu0
      %v7904 = vadd.f32 0.0, %v7903
      %v7905 = vpop.f32.mrb[0].mxu0
      %7906 = vmatprep.mubr.bf16.mxu0 0
      %7907 = vmatmul.mubr.bf16.gmra.mrb[0].mxu0 %v7741
      %v7908 = vpop.f32.mrb[0].mxu0
      %v7909 = vadd.f32 0.0, %v7908
      %v7910 = vpop.f32.mrb[0].mxu0
      %v7911 = vpop.f32.mrb[0].mxu0
      %v7912 = vadd.f32 0.0, %v7911
      %v7913 = vpop.f32.mrb[0].mxu0
      %7914 = vmatprep.mubr.bf16.mxu0 0
      %7915 = vmatmul.mubr.bf16.gmra.mrb[0].mxu0 %v7744
      %v7916 = vpop.f32.mrb[0].mxu0
      %v7917 = vadd.f32 0.0, %v7916
      %v7918 = vpop.f32.mrb[0].mxu0
      %v7919 = vpop.f32.mrb[0].mxu0
      %v7920 = vadd.f32 0.0, %v7919
      %v7921 = vpop.f32.mrb[0].mxu0
      %7922 = vdwg.mxu0
      %v7923 = vld [vmem:[#allocation4] sm:$0xff]
      %v7924 = vld [vmem:[#allocation4 + $0x8] sm:$0xff]
      %v7925 = vld [vmem:[#allocation4 + $0x10] sm:$0xff]
      %v7926 = vld [vmem:[#allocation4 + $0x18] sm:$0xff]
      %v7927 = vld [vmem:[#allocation4 + $0x20] sm:$0xff]
      %v7928 = vld [vmem:[#allocation4 + $0x28] sm:$0xff]
      %v7929 = vld [vmem:[#allocation4 + $0x30] sm:$0xff]
      %v7930 = vld [vmem:[#allocation4 + $0x38] sm:$0xff]
      %v7931 = vld [vmem:[#allocation4 + $0x40] sm:$0xff]
      %v7932 = vld [vmem:[#allocation4 + $0x48] sm:$0xff]
      %v7933 = vld [vmem:[#allocation4 + $0x50] sm:$0xff]
      %v7934 = vld [vmem:[#allocation4 + $0x58] sm:$0xff]
      %v7935 = vld [vmem:[#allocation4 + $0x60] sm:$0xff]
      %v7936 = vld [vmem:[#allocation4 + $0x68] sm:$0xff]
      %v7937 = vld [vmem:[#allocation4 + $0x70] sm:$0xff]
      %v7938 = vld [vmem:[#allocation4 + $0x78] sm:$0xff]
      %v7939 = vld [vmem:[#allocation4 + $0x80] sm:$0xff]
      %v7940 = vld [vmem:[#allocation4 + $0x88] sm:$0xff]
      %v7941 = vld [vmem:[#allocation4 + $0x90] sm:$0xff]
      %v7942 = vld [vmem:[#allocation4 + $0x98] sm:$0xff]
      %v7943 = vld [vmem:[#allocation4 + $0xa0] sm:$0xff]
      %v7944 = vld [vmem:[#allocation4 + $0xa8] sm:$0xff]
      %v7945 = vld [vmem:[#allocation4 + $0xb0] sm:$0xff]
      %v7946 = vld [vmem:[#allocation4 + $0xb8] sm:$0xff]
      %v7947 = vld [vmem:[#allocation4 + $0xc0] sm:$0xff]
      %v7948 = vld [vmem:[#allocation4 + $0xc8] sm:$0xff]
      %v7949 = vld [vmem:[#allocation4 + $0xd0] sm:$0xff]
      %v7950 = vld [vmem:[#allocation4 + $0xd8] sm:$0xff]
      %v7951 = vld [vmem:[#allocation4 + $0xe0] sm:$0xff]
      %v7952 = vld [vmem:[#allocation4 + $0xe8] sm:$0xff]
      %v7953 = vld [vmem:[#allocation4 + $0xf0] sm:$0xff]
      %v7954 = vld [vmem:[#allocation4 + $0xf8] sm:$0xff]
      %v7955 = vld [vmem:[#allocation4 + $0x100] sm:$0xff]
      %v7956 = vld [vmem:[#allocation4 + $0x108] sm:$0xff]
      %v7957 = vld [vmem:[#allocation4 + $0x110] sm:$0xff]
      %v7958 = vld [vmem:[#allocation4 + $0x118] sm:$0x3f]
      %v7959 = vadd.f32 %v7923, %v7781
      %v7960 = vadd.f32 %v7924, %v7784
      %v7961 = vadd.f32 %v7925, %v7789
      %v7962 = vadd.f32 %v7926, %v7792
      %v7963 = vadd.f32 %v7927, %v7797
      %v7964 = vadd.f32 %v7928, %v7800
      %v7965 = vadd.f32 %v7929, %v7805
      %v7966 = vadd.f32 %v7930, %v7808
      %v7967 = vadd.f32 %v7931, %v7813
      %v7968 = vadd.f32 %v7932, %v7816
      %v7969 = vadd.f32 %v7933, %v7821
      %v7970 = vadd.f32 %v7934, %v7824
      %v7971 = vadd.f32 %v7935, %v7829
      %v7972 = vadd.f32 %v7936, %v7832
      %v7973 = vadd.f32 %v7937, %v7837
      %v7974 = vadd.f32 %v7938, %v7840
      %v7975 = vadd.f32 %v7939, %v7845
      %v7976 = vadd.f32 %v7940, %v7848
      %v7977 = vadd.f32 %v7941, %v7853
      %v7978 = vadd.f32 %v7942, %v7856
      %v7979 = vadd.f32 %v7943, %v7861
      %v7980 = vadd.f32 %v7944, %v7864
      %v7981 = vadd.f32 %v7945, %v7869
      %v7982 = vadd.f32 %v7946, %v7872
      %v7983 = vadd.f32 %v7947, %v7877
      %v7984 = vadd.f32 %v7948, %v7880
      %v7985 = vadd.f32 %v7949, %v7885
      %v7986 = vadd.f32 %v7950, %v7888
      %v7987 = vadd.f32 %v7951, %v7893
      %v7988 = vadd.f32 %v7952, %v7896
      %v7989 = vadd.f32 %v7953, %v7901
      %v7990 = vadd.f32 %v7954, %v7904
      %v7991 = vadd.f32 %v7955, %v7909
      %v7992 = vadd.f32 %v7956, %v7912
      %v7993 = vadd.f32 %v7957, %v7917
      %v7994 = vadd.f32 %v7958, %v7920
      %7995 = vst.msk [vmem:[#allocation4] sm:$0xff] %vm413, %v7959
      %7996 = vst.msk [vmem:[#allocation4 + $0x8] sm:$0xff] %vm413, %v7960
      %7997 = vst.msk [vmem:[#allocation4 + $0x10] sm:$0xff] %vm413, %v7961
      %7998 = vst.msk [vmem:[#allocation4 + $0x18] sm:$0xff] %vm413, %v7962
      %7999 = vst.msk [vmem:[#allocation4 + $0x20] sm:$0xff] %vm413, %v7963
      %8000 = vst.msk [vmem:[#allocation4 + $0x28] sm:$0xff] %vm413, %v7964
      %8001 = vst.msk [vmem:[#allocation4 + $0x30] sm:$0xff] %vm413, %v7965
      %8002 = vst.msk [vmem:[#allocation4 + $0x38] sm:$0xff] %vm413, %v7966
      %8003 = vst.msk [vmem:[#allocation4 + $0x40] sm:$0xff] %vm413, %v7967
      %8004 = vst.msk [vmem:[#allocation4 + $0x48] sm:$0xff] %vm413, %v7968
      %8005 = vst.msk [vmem:[#allocation4 + $0x50] sm:$0xff] %vm413, %v7969
      %8006 = vst.msk [vmem:[#allocation4 + $0x58] sm:$0xff] %vm413, %v7970
      %8007 = vst.msk [vmem:[#allocation4 + $0x60] sm:$0xff] %vm413, %v7971
      %8008 = vst.msk [vmem:[#allocation4 + $0x68] sm:$0xff] %vm413, %v7972
      %8009 = vst.msk [vmem:[#allocation4 + $0x70] sm:$0xff] %vm413, %v7973
      %8010 = vst.msk [vmem:[#allocation4 + $0x78] sm:$0xff] %vm413, %v7974
      %8011 = vst.msk [vmem:[#allocation4 + $0x80] sm:$0xff] %vm413, %v7975
      %8012 = vst.msk [vmem:[#allocation4 + $0x88] sm:$0xff] %vm413, %v7976
      %8013 = vst.msk [vmem:[#allocation4 + $0x90] sm:$0xff] %vm413, %v7977
      %8014 = vst.msk [vmem:[#allocation4 + $0x98] sm:$0xff] %vm413, %v7978
      %8015 = vst.msk [vmem:[#allocation4 + $0xa0] sm:$0xff] %vm413, %v7979
      %8016 = vst.msk [vmem:[#allocation4 + $0xa8] sm:$0xff] %vm413, %v7980
      %8017 = vst.msk [vmem:[#allocation4 + $0xb0] sm:$0xff] %vm413, %v7981
      %8018 = vst.msk [vmem:[#allocation4 + $0xb8] sm:$0xff] %vm413, %v7982
      %8019 = vst.msk [vmem:[#allocation4 + $0xc0] sm:$0xff] %vm413, %v7983
      %8020 = vst.msk [vmem:[#allocation4 + $0xc8] sm:$0xff] %vm413, %v7984
      %8021 = vst.msk [vmem:[#allocation4 + $0xd0] sm:$0xff] %vm413, %v7985
      %8022 = vst.msk [vmem:[#allocation4 + $0xd8] sm:$0xff] %vm413, %v7986
      %8023 = vst.msk [vmem:[#allocation4 + $0xe0] sm:$0xff] %vm413, %v7987
      %8024 = vst.msk [vmem:[#allocation4 + $0xe8] sm:$0xff] %vm413, %v7988
      %8025 = vst.msk [vmem:[#allocation4 + $0xf0] sm:$0xff] %vm413, %v7989
      %8026 = vst.msk [vmem:[#allocation4 + $0xf8] sm:$0xff] %vm413, %v7990
      %8027 = vst.msk [vmem:[#allocation4 + $0x100] sm:$0xff] %vm413, %v7991
      %8028 = vst.msk [vmem:[#allocation4 + $0x108] sm:$0xff] %vm413, %v7992
      %8029 = vst.msk [vmem:[#allocation4 + $0x110] sm:$0xff] %vm413, %v7993
      %8030 = vst.msk [vmem:[#allocation4 + $0x118] sm:$0x3f] %vm6887, %v7994
      %v8031 = vld [vmem:[#allocation3 + $0x8] sm:$0xe]
      %v8032 = vld [vmem:[#allocation3 + $0xc] sm:$0xf]
      %v8033 = vld [vmem:[#allocation3 + $0x10] sm:$0xf]
      %v8034 = vld [vmem:[#allocation3 + $0x14] sm:$0xf]
      %v8035 = vld [vmem:[#allocation3 + $0x18] sm:$0xf]
      %v8036 = vld [vmem:[#allocation3 + $0x1c] sm:$0xf]
      %v8037 = vld [vmem:[#allocation3 + $0x20] sm:$0xf]
      %v8038 = vld [vmem:[#allocation3 + $0x24] sm:$0xf]
      %v8039 = vld [vmem:[#allocation3 + $0x28] sm:$0xf]
      %v8040 = vld [vmem:[#allocation3 + $0x2c] sm:$0xf]
      %v8041 = vld [vmem:[#allocation3 + $0x30] sm:$0xf]
      %v8042 = vld [vmem:[#allocation3 + $0x34] sm:$0xf]
      %v8043 = vld [vmem:[#allocation3 + $0x38] sm:$0xf]
      %v8044 = vld [vmem:[#allocation3 + $0x3c] sm:$0xf]
      %v8045 = vld [vmem:[#allocation3 + $0x40] sm:$0xf]
      %v8046 = vld [vmem:[#allocation3 + $0x44] sm:$0xf]
      %v8047 = vld [vmem:[#allocation3 + $0x48] sm:$0xf]
      %v8048 = vld [vmem:[#allocation3 + $0x4c] sm:$0xf]
      %v8049 = vld [vmem:[#allocation3 + $0x50] sm:$0xf]
      %v8050 = vld [vmem:[#allocation3 + $0x54] sm:$0xf]
      %v8051 = vld [vmem:[#allocation3 + $0x58] sm:$0xf]
      %v8052 = vld [vmem:[#allocation3 + $0x5c] sm:$0xf]
      %v8053 = vld [vmem:[#allocation3 + $0x60] sm:$0xf]
      %v8054 = vld [vmem:[#allocation3 + $0x64] sm:$0xf]
      %v8055 = vld [vmem:[#allocation3 + $0x68] sm:$0xf]
      %v8056 = vld [vmem:[#allocation3 + $0x6c] sm:$0xf]
      %v8057 = vld [vmem:[#allocation3 + $0x70] sm:$0xf]
      %v8058 = vld [vmem:[#allocation3 + $0x74] sm:$0xf]
      %v8059 = vld [vmem:[#allocation3 + $0x78] sm:$0xf]
      %v8060 = vld [vmem:[#allocation3 + $0x7c] sm:$0xf]
      %v8061 = vld [vmem:[#allocation3 + $0x80] sm:$0xf]
      %v8062 = vld [vmem:[#allocation3 + $0x84] sm:$0xf]
      %v8063 = vld [vmem:[#allocation3 + $0x88] sm:$0xf]
      %v8064 = vld [vmem:[#allocation3 + $0x8c] sm:$0xf]
      %v8065 = vld [vmem:[#allocation3 + $0x90] sm:$0xf]
      %v8066 = vld [vmem:[#allocation3 + $0x94] sm:$0xf]
      %s8067 = scalar_lea.vmem %s4, 48
      %v8068 = vld [vmem:[%s8067] sm:$0xf]
      %v8069 = vld [vmem:[%s8067 + $0x4] sm:$0xf]
      %v8070 = vld [vmem:[%s8067 + $0x8] sm:$0xf]
      %v8071 = vld [vmem:[%s8067 + $0xc] sm:$0xf]
      %v8108 = vunpack.c.l.b16 %v8031
      %v8109 = vunpack.c.l.b16 %v8032
      %v8110 = vunpack.c.l.b16 %v8033
      %v8111 = vunpack.c.l.b16 %v8034
      %v8112 = vunpack.c.l.b16 %v8035
      %v8113 = vunpack.c.l.b16 %v8036
      %v8114 = vunpack.c.l.b16 %v8037
      %v8115 = vunpack.c.l.b16 %v8038
      %v8116 = vunpack.c.l.b16 %v8039
      %v8117 = vunpack.c.l.b16 %v8040
      %v8118 = vunpack.c.l.b16 %v8041
      %v8119 = vunpack.c.l.b16 %v8042
      %v8120 = vunpack.c.l.b16 %v8043
      %v8121 = vunpack.c.l.b16 %v8044
      %v8122 = vunpack.c.l.b16 %v8045
      %v8123 = vunpack.c.l.b16 %v8046
      %v8124 = vunpack.c.l.b16 %v8047
      %v8125 = vunpack.c.l.b16 %v8048
      %v8126 = vunpack.c.l.b16 %v8049
      %v8127 = vunpack.c.l.b16 %v8050
      %v8128 = vunpack.c.l.b16 %v8051
      %v8129 = vunpack.c.l.b16 %v8052
      %v8130 = vunpack.c.l.b16 %v8053
      %v8131 = vunpack.c.l.b16 %v8054
      %v8132 = vunpack.c.l.b16 %v8055
      %v8133 = vunpack.c.l.b16 %v8056
      %v8134 = vunpack.c.l.b16 %v8057
      %v8135 = vunpack.c.l.b16 %v8058
      %v8136 = vunpack.c.l.b16 %v8059
      %v8137 = vunpack.c.l.b16 %v8060
      %v8138 = vunpack.c.l.b16 %v8061
      %v8139 = vunpack.c.l.b16 %v8062
      %v8140 = vunpack.c.l.b16 %v8063
      %v8141 = vunpack.c.l.b16 %v8064
      %v8142 = vunpack.c.l.b16 %v8065
      %v8143 = vunpack.c.l.b16 %v8066
      %v8144 = vpack.c.b16 %v8109, %v8108
      %v8145 = vpack.c.b16 %v8111, %v8110
      %v8146 = vpack.c.b16 %v8113, %v8112
      %v8147 = vpack.c.b16 %v8115, %v8114
      %v8148 = vpack.c.b16 %v8117, %v8116
      %v8149 = vpack.c.b16 %v8119, %v8118
      %v8150 = vpack.c.b16 %v8121, %v8120
      %v8151 = vpack.c.b16 %v8123, %v8122
      %v8152 = vpack.c.b16 %v8125, %v8124
      %v8153 = vpack.c.b16 %v8127, %v8126
      %v8154 = vpack.c.b16 %v8129, %v8128
      %v8155 = vpack.c.b16 %v8131, %v8130
      %v8156 = vpack.c.b16 %v8133, %v8132
      %v8157 = vpack.c.b16 %v8135, %v8134
      %v8158 = vpack.c.b16 %v8137, %v8136
      %v8159 = vpack.c.b16 %v8139, %v8138
      %v8160 = vpack.c.b16 %v8141, %v8140
      %v8161 = vpack.c.b16 %v8143, %v8142
      %v8162 = vrot.slane %v8144, 1
      %v8163 = vrot.slane %v8145, 1
      %v8164 = vsel %vm1583, %v8162, %v8163
      %v8165 = vrot.slane %v8146, 1
      %v8166 = vsel %vm1583, %v8163, %v8165
      %v8167 = vrot.slane %v8147, 1
      %v8168 = vsel %vm1583, %v8165, %v8167
      %v8169 = vrot.slane %v8148, 1
      %v8170 = vsel %vm1583, %v8167, %v8169
      %v8171 = vrot.slane %v8149, 1
      %v8172 = vsel %vm1583, %v8169, %v8171
      %v8173 = vrot.slane %v8150, 1
      %v8174 = vsel %vm1583, %v8171, %v8173
      %v8175 = vrot.slane %v8151, 1
      %v8176 = vsel %vm1583, %v8173, %v8175
      %v8177 = vrot.slane %v8152, 1
      %v8178 = vsel %vm1583, %v8175, %v8177
      %v8179 = vrot.slane %v8153, 1
      %v8180 = vsel %vm1583, %v8177, %v8179
      %v8181 = vrot.slane %v8154, 1
      %v8182 = vsel %vm1583, %v8179, %v8181
      %v8183 = vrot.slane %v8155, 1
      %v8184 = vsel %vm1583, %v8181, %v8183
      %v8185 = vrot.slane %v8156, 1
      %v8186 = vsel %vm1583, %v8183, %v8185
      %v8187 = vrot.slane %v8157, 1
      %v8188 = vsel %vm1583, %v8185, %v8187
      %v8189 = vrot.slane %v8158, 1
      %v8190 = vsel %vm1583, %v8187, %v8189
      %v8191 = vrot.slane %v8159, 1
      %v8192 = vsel %vm1583, %v8189, %v8191
      %v8193 = vrot.slane %v8160, 1
      %v8194 = vsel %vm1583, %v8191, %v8193
      %v8195 = vrot.slane %v8161, 1
      %v8196 = vsel %vm1583, %v8193, %v8195
      %v8201 = vunpack.c.l.b16 %v8068
      %v8202 = vunpack.c.l.b16 %v8069
      %v8203 = vunpack.c.l.b16 %v8070
      %v8204 = vunpack.c.l.b16 %v8071
      %v8205 = vpack.c.b16 %v8202, %v8201
      %v8206 = vpack.c.b16 %v8204, %v8203
      %v8210 = vsel %vm413, %v8164, 0
      %v8213 = vsel %vm413, %v8166, 0
      %v8216 = vsel %vm413, %v8168, 0
      %v8219 = vsel %vm413, %v8170, 0
      %v8222 = vsel %vm413, %v8172, 0
      %v8225 = vsel %vm413, %v8174, 0
      %v8228 = vsel %vm413, %v8176, 0
      %v8231 = vsel %vm413, %v8178, 0
      %v8234 = vsel %vm413, %v8180, 0
      %v8237 = vsel %vm413, %v8182, 0
      %v8240 = vsel %vm413, %v8184, 0
      %v8243 = vsel %vm413, %v8186, 0
      %v8246 = vsel %vm413, %v8188, 0
      %v8249 = vsel %vm413, %v8190, 0
      %v8252 = vsel %vm413, %v8192, 0
      %v8255 = vsel %vm413, %v8194, 0
      %v8258 = vsel %vm413, %v8196, 0
      %v8261 = vsel %vm413, %v8195, 0
      %8263 = vmatprep.subr.bf16.mxu0 0
      %8264 = vmatpush1.bf16.msra.mxu0 %v8205
      %8265 = vmatprep.subr.bf16.mxu0 0
      %8266 = vmatpush1.bf16.msra.mxu0 %v8206
      %8267 = vmatprep.subr.bf16.mxu0 0
      %8268 = vmatpush1.bf16.msra.mxu0 0
      %8269 = vmatprep.subr.bf16.mxu0 0
      %8270 = vmatpush1.bf16.msra.mxu0 0
      %8271 = vmatprep.subr.bf16.mxu0 0
      %8272 = vmatpush1.bf16.msra.mxu0 0
      %8273 = vmatprep.subr.bf16.mxu0 0
      %8274 = vmatpush1.bf16.msra.mxu0 0
      %8275 = vmatprep.subr.bf16.mxu0 0
      %8276 = vmatpush1.bf16.msra.mxu0 0
      %8277 = vmatprep.subr.bf16.mxu0 0
      %8278 = vmatpush1.bf16.msra.mxu0 0
      %8279 = vmatprep.subr.bf16.mxu0 0
      %8280 = vmatpush1.bf16.msra.mxu0 0
      %8281 = vmatprep.subr.bf16.mxu0 0
      %8282 = vmatpush1.bf16.msra.mxu0 0
      %8283 = vmatprep.subr.bf16.mxu0 0
      %8284 = vmatpush1.bf16.msra.mxu0 0
      %8285 = vmatprep.subr.bf16.mxu0 0
      %8286 = vmatpush1.bf16.msra.mxu0 0
      %8287 = vmatprep.subr.bf16.mxu0 0
      %8288 = vmatpush1.bf16.msra.mxu0 0
      %8289 = vmatprep.subr.bf16.mxu0 0
      %8290 = vmatpush1.bf16.msra.mxu0 0
      %8291 = vmatprep.subr.bf16.mxu0 0
      %8292 = vmatpush1.bf16.msra.mxu0 0
      %8293 = vmatprep.subr.bf16.mxu0 0
      %8294 = vmatpush1.bf16.msra.mxu0 0
      %8295 = vmatprep.mubr.bf16.mxu0 0
      %8296 = vmatmul.mubr.bf16.gmra.mrb[0].mxu0 %v8210
      %v8297 = vpop.f32.mrb[0].mxu0
      %v8298 = vadd.f32 0.0, %v8297
      %v8299 = vpop.f32.mrb[0].mxu0
      %v8300 = vpop.f32.mrb[0].mxu0
      %v8301 = vadd.f32 0.0, %v8300
      %v8302 = vpop.f32.mrb[0].mxu0
      %8303 = vmatprep.mubr.bf16.mxu0 0
      %8304 = vmatmul.mubr.bf16.gmra.mrb[0].mxu0 %v8213
      %v8305 = vpop.f32.mrb[0].mxu0
      %v8306 = vadd.f32 0.0, %v8305
      %v8307 = vpop.f32.mrb[0].mxu0
      %v8308 = vpop.f32.mrb[0].mxu0
      %v8309 = vadd.f32 0.0, %v8308
      %v8310 = vpop.f32.mrb[0].mxu0
      %8311 = vmatprep.mubr.bf16.mxu0 0
      %8312 = vmatmul.mubr.bf16.gmra.mrb[0].mxu0 %v8216
      %v8313 = vpop.f32.mrb[0].mxu0
      %v8314 = vadd.f32 0.0, %v8313
      %v8315 = vpop.f32.mrb[0].mxu0
      %v8316 = vpop.f32.mrb[0].mxu0
      %v8317 = vadd.f32 0.0, %v8316
      %v8318 = vpop.f32.mrb[0].mxu0
      %8319 = vmatprep.mubr.bf16.mxu0 0
      %8320 = vmatmul.mubr.bf16.gmra.mrb[0].mxu0 %v8219
      %v8321 = vpop.f32.mrb[0].mxu0
      %v8322 = vadd.f32 0.0, %v8321
      %v8323 = vpop.f32.mrb[0].mxu0
      %v8324 = vpop.f32.mrb[0].mxu0
      %v8325 = vadd.f32 0.0, %v8324
      %v8326 = vpop.f32.mrb[0].mxu0
      %8327 = vmatprep.mubr.bf16.mxu0 0
      %8328 = vmatmul.mubr.bf16.gmra.mrb[0].mxu0 %v8222
      %v8329 = vpop.f32.mrb[0].mxu0
      %v8330 = vadd.f32 0.0, %v8329
      %v8331 = vpop.f32.mrb[0].mxu0
      %v8332 = vpop.f32.mrb[0].mxu0
      %v8333 = vadd.f32 0.0, %v8332
      %v8334 = vpop.f32.mrb[0].mxu0
      %8335 = vmatprep.mubr.bf16.mxu0 0
      %8336 = vmatmul.mubr.bf16.gmra.mrb[0].mxu0 %v8225
      %v8337 = vpop.f32.mrb[0].mxu0
      %v8338 = vadd.f32 0.0, %v8337
      %v8339 = vpop.f32.mrb[0].mxu0
      %v8340 = vpop.f32.mrb[0].mxu0
      %v8341 = vadd.f32 0.0, %v8340
      %v8342 = vpop.f32.mrb[0].mxu0
      %8343 = vmatprep.mubr.bf16.mxu0 0
      %8344 = vmatmul.mubr.bf16.gmra.mrb[0].mxu0 %v8228
      %v8345 = vpop.f32.mrb[0].mxu0
      %v8346 = vadd.f32 0.0, %v8345
      %v8347 = vpop.f32.mrb[0].mxu0
      %v8348 = vpop.f32.mrb[0].mxu0
      %v8349 = vadd.f32 0.0, %v8348
      %v8350 = vpop.f32.mrb[0].mxu0
      %8351 = vmatprep.mubr.bf16.mxu0 0
      %8352 = vmatmul.mubr.bf16.gmra.mrb[0].mxu0 %v8231
      %v8353 = vpop.f32.mrb[0].mxu0
      %v8354 = vadd.f32 0.0, %v8353
      %v8355 = vpop.f32.mrb[0].mxu0
      %v8356 = vpop.f32.mrb[0].mxu0
      %v8357 = vadd.f32 0.0, %v8356
      %v8358 = vpop.f32.mrb[0].mxu0
      %8359 = vmatprep.mubr.bf16.mxu0 0
      %8360 = vmatmul.mubr.bf16.gmra.mrb[0].mxu0 %v8234
      %v8361 = vpop.f32.mrb[0].mxu0
      %v8362 = vadd.f32 0.0, %v8361
      %v8363 = vpop.f32.mrb[0].mxu0
      %v8364 = vpop.f32.mrb[0].mxu0
      %v8365 = vadd.f32 0.0, %v8364
      %v8366 = vpop.f32.mrb[0].mxu0
      %8367 = vmatprep.mubr.bf16.mxu0 0
      %8368 = vmatmul.mubr.bf16.gmra.mrb[0].mxu0 %v8237
      %v8369 = vpop.f32.mrb[0].mxu0
      %v8370 = vadd.f32 0.0, %v8369
      %v8371 = vpop.f32.mrb[0].mxu0
      %v8372 = vpop.f32.mrb[0].mxu0
      %v8373 = vadd.f32 0.0, %v8372
      %v8374 = vpop.f32.mrb[0].mxu0
      %8375 = vmatprep.mubr.bf16.mxu0 0
      %8376 = vmatmul.mubr.bf16.gmra.mrb[0].mxu0 %v8240
      %v8377 = vpop.f32.mrb[0].mxu0
      %v8378 = vadd.f32 0.0, %v8377
      %v8379 = vpop.f32.mrb[0].mxu0
      %v8380 = vpop.f32.mrb[0].mxu0
      %v8381 = vadd.f32 0.0, %v8380
      %v8382 = vpop.f32.mrb[0].mxu0
      %8383 = vmatprep.mubr.bf16.mxu0 0
      %8384 = vmatmul.mubr.bf16.gmra.mrb[0].mxu0 %v8243
      %v8385 = vpop.f32.mrb[0].mxu0
      %v8386 = vadd.f32 0.0, %v8385
      %v8387 = vpop.f32.mrb[0].mxu0
      %v8388 = vpop.f32.mrb[0].mxu0
      %v8389 = vadd.f32 0.0, %v8388
      %v8390 = vpop.f32.mrb[0].mxu0
      %8391 = vmatprep.mubr.bf16.mxu0 0
      %8392 = vmatmul.mubr.bf16.gmra.mrb[0].mxu0 %v8246
      %v8393 = vpop.f32.mrb[0].mxu0
      %v8394 = vadd.f32 0.0, %v8393
      %v8395 = vpop.f32.mrb[0].mxu0
      %v8396 = vpop.f32.mrb[0].mxu0
      %v8397 = vadd.f32 0.0, %v8396
      %v8398 = vpop.f32.mrb[0].mxu0
      %8399 = vmatprep.mubr.bf16.mxu0 0
      %8400 = vmatmul.mubr.bf16.gmra.mrb[0].mxu0 %v8249
      %v8401 = vpop.f32.mrb[0].mxu0
      %v8402 = vadd.f32 0.0, %v8401
      %v8403 = vpop.f32.mrb[0].mxu0
      %v8404 = vpop.f32.mrb[0].mxu0
      %v8405 = vadd.f32 0.0, %v8404
      %v8406 = vpop.f32.mrb[0].mxu0
      %8407 = vmatprep.mubr.bf16.mxu0 0
      %8408 = vmatmul.mubr.bf16.gmra.mrb[0].mxu0 %v8252
      %v8409 = vpop.f32.mrb[0].mxu0
      %v8410 = vadd.f32 0.0, %v8409
      %v8411 = vpop.f32.mrb[0].mxu0
      %v8412 = vpop.f32.mrb[0].mxu0
      %v8413 = vadd.f32 0.0, %v8412
      %v8414 = vpop.f32.mrb[0].mxu0
      %8415 = vmatprep.mubr.bf16.mxu0 0
      %8416 = vmatmul.mubr.bf16.gmra.mrb[0].mxu0 %v8255
      %v8417 = vpop.f32.mrb[0].mxu0
      %v8418 = vadd.f32 0.0, %v8417
      %v8419 = vpop.f32.mrb[0].mxu0
      %v8420 = vpop.f32.mrb[0].mxu0
      %v8421 = vadd.f32 0.0, %v8420
      %v8422 = vpop.f32.mrb[0].mxu0
      %8423 = vmatprep.mubr.bf16.mxu0 0
      %8424 = vmatmul.mubr.bf16.gmra.mrb[0].mxu0 %v8258
      %v8425 = vpop.f32.mrb[0].mxu0
      %v8426 = vadd.f32 0.0, %v8425
      %v8427 = vpop.f32.mrb[0].mxu0
      %v8428 = vpop.f32.mrb[0].mxu0
      %v8429 = vadd.f32 0.0, %v8428
      %v8430 = vpop.f32.mrb[0].mxu0
      %8431 = vmatprep.mubr.bf16.mxu0 0
      %8432 = vmatmul.mubr.bf16.gmra.mrb[0].mxu0 %v8261
      %v8433 = vpop.f32.mrb[0].mxu0
      %v8434 = vadd.f32 0.0, %v8433
      %v8435 = vpop.f32.mrb[0].mxu0
      %v8436 = vpop.f32.mrb[0].mxu0
      %v8437 = vadd.f32 0.0, %v8436
      %v8438 = vpop.f32.mrb[0].mxu0
      %8439 = vdwg.mxu0
      %v8440 = vld [vmem:[#allocation4] sm:$0xff]
      %v8441 = vld [vmem:[#allocation4 + $0x8] sm:$0xff]
      %v8442 = vld [vmem:[#allocation4 + $0x10] sm:$0xff]
      %v8443 = vld [vmem:[#allocation4 + $0x18] sm:$0xff]
      %v8444 = vld [vmem:[#allocation4 + $0x20] sm:$0xff]
      %v8445 = vld [vmem:[#allocation4 + $0x28] sm:$0xff]
      %v8446 = vld [vmem:[#allocation4 + $0x30] sm:$0xff]
      %v8447 = vld [vmem:[#allocation4 + $0x38] sm:$0xff]
      %v8448 = vld [vmem:[#allocation4 + $0x40] sm:$0xff]
      %v8449 = vld [vmem:[#allocation4 + $0x48] sm:$0xff]
      %v8450 = vld [vmem:[#allocation4 + $0x50] sm:$0xff]
      %v8451 = vld [vmem:[#allocation4 + $0x58] sm:$0xff]
      %v8452 = vld [vmem:[#allocation4 + $0x60] sm:$0xff]
      %v8453 = vld [vmem:[#allocation4 + $0x68] sm:$0xff]
      %v8454 = vld [vmem:[#allocation4 + $0x70] sm:$0xff]
      %v8455 = vld [vmem:[#allocation4 + $0x78] sm:$0xff]
      %v8456 = vld [vmem:[#allocation4 + $0x80] sm:$0xff]
      %v8457 = vld [vmem:[#allocation4 + $0x88] sm:$0xff]
      %v8458 = vld [vmem:[#allocation4 + $0x90] sm:$0xff]
      %v8459 = vld [vmem:[#allocation4 + $0x98] sm:$0xff]
      %v8460 = vld [vmem:[#allocation4 + $0xa0] sm:$0xff]
      %v8461 = vld [vmem:[#allocation4 + $0xa8] sm:$0xff]
      %v8462 = vld [vmem:[#allocation4 + $0xb0] sm:$0xff]
      %v8463 = vld [vmem:[#allocation4 + $0xb8] sm:$0xff]
      %v8464 = vld [vmem:[#allocation4 + $0xc0] sm:$0xff]
      %v8465 = vld [vmem:[#allocation4 + $0xc8] sm:$0xff]
      %v8466 = vld [vmem:[#allocation4 + $0xd0] sm:$0xff]
      %v8467 = vld [vmem:[#allocation4 + $0xd8] sm:$0xff]
      %v8468 = vld [vmem:[#allocation4 + $0xe0] sm:$0xff]
      %v8469 = vld [vmem:[#allocation4 + $0xe8] sm:$0xff]
      %v8470 = vld [vmem:[#allocation4 + $0xf0] sm:$0xff]
      %v8471 = vld [vmem:[#allocation4 + $0xf8] sm:$0xff]
      %v8472 = vld [vmem:[#allocation4 + $0x100] sm:$0xff]
      %v8473 = vld [vmem:[#allocation4 + $0x108] sm:$0xff]
      %v8474 = vld [vmem:[#allocation4 + $0x110] sm:$0xff]
      %v8475 = vld [vmem:[#allocation4 + $0x118] sm:$0x3f]
      %v8476 = vadd.f32 %v8440, %v8298
      %v8477 = vadd.f32 %v8441, %v8301
      %v8478 = vadd.f32 %v8442, %v8306
      %v8479 = vadd.f32 %v8443, %v8309
      %v8480 = vadd.f32 %v8444, %v8314
      %v8481 = vadd.f32 %v8445, %v8317
      %v8482 = vadd.f32 %v8446, %v8322
      %v8483 = vadd.f32 %v8447, %v8325
      %v8484 = vadd.f32 %v8448, %v8330
      %v8485 = vadd.f32 %v8449, %v8333
      %v8486 = vadd.f32 %v8450, %v8338
      %v8487 = vadd.f32 %v8451, %v8341
      %v8488 = vadd.f32 %v8452, %v8346
      %v8489 = vadd.f32 %v8453, %v8349
      %v8490 = vadd.f32 %v8454, %v8354
      %v8491 = vadd.f32 %v8455, %v8357
      %v8492 = vadd.f32 %v8456, %v8362
      %v8493 = vadd.f32 %v8457, %v8365
      %v8494 = vadd.f32 %v8458, %v8370
      %v8495 = vadd.f32 %v8459, %v8373
      %v8496 = vadd.f32 %v8460, %v8378
      %v8497 = vadd.f32 %v8461, %v8381
      %v8498 = vadd.f32 %v8462, %v8386
      %v8499 = vadd.f32 %v8463, %v8389
      %v8500 = vadd.f32 %v8464, %v8394
      %v8501 = vadd.f32 %v8465, %v8397
      %v8502 = vadd.f32 %v8466, %v8402
      %v8503 = vadd.f32 %v8467, %v8405
      %v8504 = vadd.f32 %v8468, %v8410
      %v8505 = vadd.f32 %v8469, %v8413
      %v8506 = vadd.f32 %v8470, %v8418
      %v8507 = vadd.f32 %v8471, %v8421
      %v8508 = vadd.f32 %v8472, %v8426
      %v8509 = vadd.f32 %v8473, %v8429
      %v8510 = vadd.f32 %v8474, %v8434
      %v8511 = vadd.f32 %v8475, %v8437
      %8512 = vst.msk [vmem:[#allocation4] sm:$0xff] %vm413, %v8476
      %8513 = vst.msk [vmem:[#allocation4 + $0x8] sm:$0xff] %vm413, %v8477
      %8514 = vst.msk [vmem:[#allocation4 + $0x10] sm:$0xff] %vm413, %v8478
      %8515 = vst.msk [vmem:[#allocation4 + $0x18] sm:$0xff] %vm413, %v8479
      %8516 = vst.msk [vmem:[#allocation4 + $0x20] sm:$0xff] %vm413, %v8480
      %8517 = vst.msk [vmem:[#allocation4 + $0x28] sm:$0xff] %vm413, %v8481
      %8518 = vst.msk [vmem:[#allocation4 + $0x30] sm:$0xff] %vm413, %v8482
      %8519 = vst.msk [vmem:[#allocation4 + $0x38] sm:$0xff] %vm413, %v8483
      %8520 = vst.msk [vmem:[#allocation4 + $0x40] sm:$0xff] %vm413, %v8484
      %8521 = vst.msk [vmem:[#allocation4 + $0x48] sm:$0xff] %vm413, %v8485
      %8522 = vst.msk [vmem:[#allocation4 + $0x50] sm:$0xff] %vm413, %v8486
      %8523 = vst.msk [vmem:[#allocation4 + $0x58] sm:$0xff] %vm413, %v8487
      %8524 = vst.msk [vmem:[#allocation4 + $0x60] sm:$0xff] %vm413, %v8488
      %8525 = vst.msk [vmem:[#allocation4 + $0x68] sm:$0xff] %vm413, %v8489
      %8526 = vst.msk [vmem:[#allocation4 + $0x70] sm:$0xff] %vm413, %v8490
      %8527 = vst.msk [vmem:[#allocation4 + $0x78] sm:$0xff] %vm413, %v8491
      %8528 = vst.msk [vmem:[#allocation4 + $0x80] sm:$0xff] %vm413, %v8492
      %8529 = vst.msk [vmem:[#allocation4 + $0x88] sm:$0xff] %vm413, %v8493
      %8530 = vst.msk [vmem:[#allocation4 + $0x90] sm:$0xff] %vm413, %v8494
      %8531 = vst.msk [vmem:[#allocation4 + $0x98] sm:$0xff] %vm413, %v8495
      %8532 = vst.msk [vmem:[#allocation4 + $0xa0] sm:$0xff] %vm413, %v8496
      %8533 = vst.msk [vmem:[#allocation4 + $0xa8] sm:$0xff] %vm413, %v8497
      %8534 = vst.msk [vmem:[#allocation4 + $0xb0] sm:$0xff] %vm413, %v8498
      %8535 = vst.msk [vmem:[#allocation4 + $0xb8] sm:$0xff] %vm413, %v8499
      %8536 = vst.msk [vmem:[#allocation4 + $0xc0] sm:$0xff] %vm413, %v8500
      %8537 = vst.msk [vmem:[#allocation4 + $0xc8] sm:$0xff] %vm413, %v8501
      %8538 = vst.msk [vmem:[#allocation4 + $0xd0] sm:$0xff] %vm413, %v8502
      %8539 = vst.msk [vmem:[#allocation4 + $0xd8] sm:$0xff] %vm413, %v8503
      %8540 = vst.msk [vmem:[#allocation4 + $0xe0] sm:$0xff] %vm413, %v8504
      %8541 = vst.msk [vmem:[#allocation4 + $0xe8] sm:$0xff] %vm413, %v8505
      %8542 = vst.msk [vmem:[#allocation4 + $0xf0] sm:$0xff] %vm413, %v8506
      %8543 = vst.msk [vmem:[#allocation4 + $0xf8] sm:$0xff] %vm413, %v8507
      %8544 = vst.msk [vmem:[#allocation4 + $0x100] sm:$0xff] %vm413, %v8508
      %8545 = vst.msk [vmem:[#allocation4 + $0x108] sm:$0xff] %vm413, %v8509
      %8546 = vst.msk [vmem:[#allocation4 + $0x110] sm:$0xff] %vm413, %v8510
      %8547 = vst.msk [vmem:[#allocation4 + $0x118] sm:$0x3f] %vm6887, %v8511
      %v8548 = vld [vmem:[#allocation3 + $0x8] sm:$0xe]
      %v8549 = vld [vmem:[#allocation3 + $0xc] sm:$0xf]
      %v8550 = vld [vmem:[#allocation3 + $0x10] sm:$0xf]
      %v8551 = vld [vmem:[#allocation3 + $0x14] sm:$0xf]
      %v8552 = vld [vmem:[#allocation3 + $0x18] sm:$0xf]
      %v8553 = vld [vmem:[#allocation3 + $0x1c] sm:$0xf]
      %v8554 = vld [vmem:[#allocation3 + $0x20] sm:$0xf]
      %v8555 = vld [vmem:[#allocation3 + $0x24] sm:$0xf]
      %v8556 = vld [vmem:[#allocation3 + $0x28] sm:$0xf]
      %v8557 = vld [vmem:[#allocation3 + $0x2c] sm:$0xf]
      %v8558 = vld [vmem:[#allocation3 + $0x30] sm:$0xf]
      %v8559 = vld [vmem:[#allocation3 + $0x34] sm:$0xf]
      %v8560 = vld [vmem:[#allocation3 + $0x38] sm:$0xf]
      %v8561 = vld [vmem:[#allocation3 + $0x3c] sm:$0xf]
      %v8562 = vld [vmem:[#allocation3 + $0x40] sm:$0xf]
      %v8563 = vld [vmem:[#allocation3 + $0x44] sm:$0xf]
      %v8564 = vld [vmem:[#allocation3 + $0x48] sm:$0xf]
      %v8565 = vld [vmem:[#allocation3 + $0x4c] sm:$0xf]
      %v8566 = vld [vmem:[#allocation3 + $0x50] sm:$0xf]
      %v8567 = vld [vmem:[#allocation3 + $0x54] sm:$0xf]
      %v8568 = vld [vmem:[#allocation3 + $0x58] sm:$0xf]
      %v8569 = vld [vmem:[#allocation3 + $0x5c] sm:$0xf]
      %v8570 = vld [vmem:[#allocation3 + $0x60] sm:$0xf]
      %v8571 = vld [vmem:[#allocation3 + $0x64] sm:$0xf]
      %v8572 = vld [vmem:[#allocation3 + $0x68] sm:$0xf]
      %v8573 = vld [vmem:[#allocation3 + $0x6c] sm:$0xf]
      %v8574 = vld [vmem:[#allocation3 + $0x70] sm:$0xf]
      %v8575 = vld [vmem:[#allocation3 + $0x74] sm:$0xf]
      %v8576 = vld [vmem:[#allocation3 + $0x78] sm:$0xf]
      %v8577 = vld [vmem:[#allocation3 + $0x7c] sm:$0xf]
      %v8578 = vld [vmem:[#allocation3 + $0x80] sm:$0xf]
      %v8579 = vld [vmem:[#allocation3 + $0x84] sm:$0xf]
      %v8580 = vld [vmem:[#allocation3 + $0x88] sm:$0xf]
      %v8581 = vld [vmem:[#allocation3 + $0x8c] sm:$0xf]
      %v8582 = vld [vmem:[#allocation3 + $0x90] sm:$0xf]
      %v8583 = vld [vmem:[#allocation3 + $0x94] sm:$0xf]
      %v8584 = vld [vmem:[#allocation3 + $0x98] sm:$0x1]
      %s8585 = scalar_lea.vmem %s4, 64
      %v8586 = vld [vmem:[%s8585] sm:$0xf]
      %v8587 = vld [vmem:[%s8585 + $0x4] sm:$0xf]
      %v8588 = vld [vmem:[%s8585 + $0x8] sm:$0xf]
      %v8589 = vld [vmem:[%s8585 + $0xc] sm:$0xf]
      %v8627 = vunpack.c.l.b16 %v8548
      %v8628 = vunpack.c.l.b16 %v8549
      %v8629 = vunpack.c.l.b16 %v8550
      %v8630 = vunpack.c.l.b16 %v8551
      %v8631 = vunpack.c.l.b16 %v8552
      %v8632 = vunpack.c.l.b16 %v8553
      %v8633 = vunpack.c.l.b16 %v8554
      %v8634 = vunpack.c.l.b16 %v8555
      %v8635 = vunpack.c.l.b16 %v8556
      %v8636 = vunpack.c.l.b16 %v8557
      %v8637 = vunpack.c.l.b16 %v8558
      %v8638 = vunpack.c.l.b16 %v8559
      %v8639 = vunpack.c.l.b16 %v8560
      %v8640 = vunpack.c.l.b16 %v8561
      %v8641 = vunpack.c.l.b16 %v8562
      %v8642 = vunpack.c.l.b16 %v8563
      %v8643 = vunpack.c.l.b16 %v8564
      %v8644 = vunpack.c.l.b16 %v8565
      %v8645 = vunpack.c.l.b16 %v8566
      %v8646 = vunpack.c.l.b16 %v8567
      %v8647 = vunpack.c.l.b16 %v8568
      %v8648 = vunpack.c.l.b16 %v8569
      %v8649 = vunpack.c.l.b16 %v8570
      %v8650 = vunpack.c.l.b16 %v8571
      %v8651 = vunpack.c.l.b16 %v8572
      %v8652 = vunpack.c.l.b16 %v8573
      %v8653 = vunpack.c.l.b16 %v8574
      %v8654 = vunpack.c.l.b16 %v8575
      %v8655 = vunpack.c.l.b16 %v8576
      %v8656 = vunpack.c.l.b16 %v8577
      %v8657 = vunpack.c.l.b16 %v8578
      %v8658 = vunpack.c.l.b16 %v8579
      %v8659 = vunpack.c.l.b16 %v8580
      %v8660 = vunpack.c.l.b16 %v8581
      %v8661 = vunpack.c.l.b16 %v8582
      %v8662 = vunpack.c.l.b16 %v8583
      %v8663 = vunpack.c.l.b16 %v8584
      %v8664 = vpack.c.b16 %v8628, %v8627
      %v8665 = vpack.c.b16 %v8630, %v8629
      %v8666 = vpack.c.b16 %v8632, %v8631
      %v8667 = vpack.c.b16 %v8634, %v8633
      %v8668 = vpack.c.b16 %v8636, %v8635
      %v8669 = vpack.c.b16 %v8638, %v8637
      %v8670 = vpack.c.b16 %v8640, %v8639
      %v8671 = vpack.c.b16 %v8642, %v8641
      %v8672 = vpack.c.b16 %v8644, %v8643
      %v8673 = vpack.c.b16 %v8646, %v8645
      %v8674 = vpack.c.b16 %v8648, %v8647
      %v8675 = vpack.c.b16 %v8650, %v8649
      %v8676 = vpack.c.b16 %v8652, %v8651
      %v8677 = vpack.c.b16 %v8654, %v8653
      %v8678 = vpack.c.b16 %v8656, %v8655
      %v8679 = vpack.c.b16 %v8658, %v8657
      %v8680 = vpack.c.b16 %v8660, %v8659
      %v8681 = vpack.c.b16 %v8662, %v8661
      %v8682 = vpack.c.b16 %v8663, %v8663
      %v8684 = vshrl.u32 %v8664, 16
      %v8686 = vrot.slane %v8684, 1
      %v8687 = vshll.u32 %v8664, 16
      %v8689 = vrot.slane %v8687, 2
      %v8690 = vor.u32 %v8686, %v8689
      %v8692 = vshrl.u32 %v8665, 16
      %v8694 = vrot.slane %v8692, 1
      %v8695 = vshll.u32 %v8665, 16
      %v8697 = vrot.slane %v8695, 2
      %v8698 = vor.u32 %v8694, %v8697
      %v8699 = vsel %vm2760, %v8690, %v8698
      %v8701 = vshrl.u32 %v8666, 16
      %v8703 = vrot.slane %v8701, 1
      %v8704 = vshll.u32 %v8666, 16
      %v8706 = vrot.slane %v8704, 2
      %v8707 = vor.u32 %v8703, %v8706
      %v8708 = vsel %vm2760, %v8698, %v8707
      %v8710 = vshrl.u32 %v8667, 16
      %v8712 = vrot.slane %v8710, 1
      %v8713 = vshll.u32 %v8667, 16
      %v8715 = vrot.slane %v8713, 2
      %v8716 = vor.u32 %v8712, %v8715
      %v8717 = vsel %vm2760, %v8707, %v8716
      %v8719 = vshrl.u32 %v8668, 16
      %v8721 = vrot.slane %v8719, 1
      %v8722 = vshll.u32 %v8668, 16
      %v8724 = vrot.slane %v8722, 2
      %v8725 = vor.u32 %v8721, %v8724
      %v8726 = vsel %vm2760, %v8716, %v8725
      %v8728 = vshrl.u32 %v8669, 16
      %v8730 = vrot.slane %v8728, 1
      %v8731 = vshll.u32 %v8669, 16
      %v8733 = vrot.slane %v8731, 2
      %v8734 = vor.u32 %v8730, %v8733
      %v8735 = vsel %vm2760, %v8725, %v8734
      %v8737 = vshrl.u32 %v8670, 16
      %v8739 = vrot.slane %v8737, 1
      %v8740 = vshll.u32 %v8670, 16
      %v8742 = vrot.slane %v8740, 2
      %v8743 = vor.u32 %v8739, %v8742
      %v8744 = vsel %vm2760, %v8734, %v8743
      %v8746 = vshrl.u32 %v8671, 16
      %v8748 = vrot.slane %v8746, 1
      %v8749 = vshll.u32 %v8671, 16
      %v8751 = vrot.slane %v8749, 2
      %v8752 = vor.u32 %v8748, %v8751
      %v8753 = vsel %vm2760, %v8743, %v8752
      %v8755 = vshrl.u32 %v8672, 16
      %v8757 = vrot.slane %v8755, 1
      %v8758 = vshll.u32 %v8672, 16
      %v8760 = vrot.slane %v8758, 2
      %v8761 = vor.u32 %v8757, %v8760
      %v8762 = vsel %vm2760, %v8752, %v8761
      %v8764 = vshrl.u32 %v8673, 16
      %v8766 = vrot.slane %v8764, 1
      %v8767 = vshll.u32 %v8673, 16
      %v8769 = vrot.slane %v8767, 2
      %v8770 = vor.u32 %v8766, %v8769
      %v8771 = vsel %vm2760, %v8761, %v8770
      %v8773 = vshrl.u32 %v8674, 16
      %v8775 = vrot.slane %v8773, 1
      %v8776 = vshll.u32 %v8674, 16
      %v8778 = vrot.slane %v8776, 2
      %v8779 = vor.u32 %v8775, %v8778
      %v8780 = vsel %vm2760, %v8770, %v8779
      %v8782 = vshrl.u32 %v8675, 16
      %v8784 = vrot.slane %v8782, 1
      %v8785 = vshll.u32 %v8675, 16
      %v8787 = vrot.slane %v8785, 2
      %v8788 = vor.u32 %v8784, %v8787
      %v8789 = vsel %vm2760, %v8779, %v8788
      %v8791 = vshrl.u32 %v8676, 16
      %v8793 = vrot.slane %v8791, 1
      %v8794 = vshll.u32 %v8676, 16
      %v8796 = vrot.slane %v8794, 2
      %v8797 = vor.u32 %v8793, %v8796
      %v8798 = vsel %vm2760, %v8788, %v8797
      %v8800 = vshrl.u32 %v8677, 16
      %v8802 = vrot.slane %v8800, 1
      %v8803 = vshll.u32 %v8677, 16
      %v8805 = vrot.slane %v8803, 2
      %v8806 = vor.u32 %v8802, %v8805
      %v8807 = vsel %vm2760, %v8797, %v8806
      %v8809 = vshrl.u32 %v8678, 16
      %v8811 = vrot.slane %v8809, 1
      %v8812 = vshll.u32 %v8678, 16
      %v8814 = vrot.slane %v8812, 2
      %v8815 = vor.u32 %v8811, %v8814
      %v8816 = vsel %vm2760, %v8806, %v8815
      %v8818 = vshrl.u32 %v8679, 16
      %v8820 = vrot.slane %v8818, 1
      %v8821 = vshll.u32 %v8679, 16
      %v8823 = vrot.slane %v8821, 2
      %v8824 = vor.u32 %v8820, %v8823
      %v8825 = vsel %vm2760, %v8815, %v8824
      %v8827 = vshrl.u32 %v8680, 16
      %v8829 = vrot.slane %v8827, 1
      %v8830 = vshll.u32 %v8680, 16
      %v8832 = vrot.slane %v8830, 2
      %v8833 = vor.u32 %v8829, %v8832
      %v8834 = vsel %vm2760, %v8824, %v8833
      %v8836 = vshrl.u32 %v8681, 16
      %v8838 = vrot.slane %v8836, 1
      %v8839 = vshll.u32 %v8681, 16
      %v8841 = vrot.slane %v8839, 2
      %v8842 = vor.u32 %v8838, %v8841
      %v8843 = vsel %vm2760, %v8833, %v8842
      %v8845 = vshll.u32 %v8682, 16
      %v8847 = vrot.slane %v8845, 2
      %v8848 = vsel %vm2760, %v8842, %v8847
      %v8853 = vunpack.c.l.b16 %v8586
      %v8854 = vunpack.c.l.b16 %v8587
      %v8855 = vunpack.c.l.b16 %v8588
      %v8856 = vunpack.c.l.b16 %v8589
      %v8857 = vpack.c.b16 %v8854, %v8853
      %v8858 = vpack.c.b16 %v8856, %v8855
      %v8862 = vsel %vm413, %v8699, 0
      %v8865 = vsel %vm413, %v8708, 0
      %v8868 = vsel %vm413, %v8717, 0
      %v8871 = vsel %vm413, %v8726, 0
      %v8874 = vsel %vm413, %v8735, 0
      %v8877 = vsel %vm413, %v8744, 0
      %v8880 = vsel %vm413, %v8753, 0
      %v8883 = vsel %vm413, %v8762, 0
      %v8886 = vsel %vm413, %v8771, 0
      %v8889 = vsel %vm413, %v8780, 0
      %v8892 = vsel %vm413, %v8789, 0
      %v8895 = vsel %vm413, %v8798, 0
      %v8898 = vsel %vm413, %v8807, 0
      %v8901 = vsel %vm413, %v8816, 0
      %v8904 = vsel %vm413, %v8825, 0
      %v8907 = vsel %vm413, %v8834, 0
      %v8910 = vsel %vm413, %v8843, 0
      %v8913 = vsel %vm413, %v8848, 0
      %8915 = vmatprep.subr.bf16.mxu0 0
      %8916 = vmatpush1.bf16.msra.mxu0 %v8857
      %8917 = vmatprep.subr.bf16.mxu0 0
      %8918 = vmatpush1.bf16.msra.mxu0 %v8858
      %8919 = vmatprep.subr.bf16.mxu0 0
      %8920 = vmatpush1.bf16.msra.mxu0 0
      %8921 = vmatprep.subr.bf16.mxu0 0
      %8922 = vmatpush1.bf16.msra.mxu0 0
      %8923 = vmatprep.subr.bf16.mxu0 0
      %8924 = vmatpush1.bf16.msra.mxu0 0
      %8925 = vmatprep.subr.bf16.mxu0 0
      %8926 = vmatpush1.bf16.msra.mxu0 0
      %8927 = vmatprep.subr.bf16.mxu0 0
      %8928 = vmatpush1.bf16.msra.mxu0 0
      %8929 = vmatprep.subr.bf16.mxu0 0
      %8930 = vmatpush1.bf16.msra.mxu0 0
      %8931 = vmatprep.subr.bf16.mxu0 0
      %8932 = vmatpush1.bf16.msra.mxu0 0
      %8933 = vmatprep.subr.bf16.mxu0 0
      %8934 = vmatpush1.bf16.msra.mxu0 0
      %8935 = vmatprep.subr.bf16.mxu0 0
      %8936 = vmatpush1.bf16.msra.mxu0 0
      %8937 = vmatprep.subr.bf16.mxu0 0
      %8938 = vmatpush1.bf16.msra.mxu0 0
      %8939 = vmatprep.subr.bf16.mxu0 0
      %8940 = vmatpush1.bf16.msra.mxu0 0
      %8941 = vmatprep.subr.bf16.mxu0 0
      %8942 = vmatpush1.bf16.msra.mxu0 0
      %8943 = vmatprep.subr.bf16.mxu0 0
      %8944 = vmatpush1.bf16.msra.mxu0 0
      %8945 = vmatprep.subr.bf16.mxu0 0
      %8946 = vmatpush1.bf16.msra.mxu0 0
      %8947 = vmatprep.mubr.bf16.mxu0 0
      %8948 = vmatmul.mubr.bf16.gmra.mrb[0].mxu0 %v8862
      %v8949 = vpop.f32.mrb[0].mxu0
      %v8950 = vadd.f32 0.0, %v8949
      %v8951 = vpop.f32.mrb[0].mxu0
      %v8952 = vpop.f32.mrb[0].mxu0
      %v8953 = vadd.f32 0.0, %v8952
      %v8954 = vpop.f32.mrb[0].mxu0
      %8955 = vmatprep.mubr.bf16.mxu0 0
      %8956 = vmatmul.mubr.bf16.gmra.mrb[0].mxu0 %v8865
      %v8957 = vpop.f32.mrb[0].mxu0
      %v8958 = vadd.f32 0.0, %v8957
      %v8959 = vpop.f32.mrb[0].mxu0
      %v8960 = vpop.f32.mrb[0].mxu0
      %v8961 = vadd.f32 0.0, %v8960
      %v8962 = vpop.f32.mrb[0].mxu0
      %8963 = vmatprep.mubr.bf16.mxu0 0
      %8964 = vmatmul.mubr.bf16.gmra.mrb[0].mxu0 %v8868
      %v8965 = vpop.f32.mrb[0].mxu0
      %v8966 = vadd.f32 0.0, %v8965
      %v8967 = vpop.f32.mrb[0].mxu0
      %v8968 = vpop.f32.mrb[0].mxu0
      %v8969 = vadd.f32 0.0, %v8968
      %v8970 = vpop.f32.mrb[0].mxu0
      %8971 = vmatprep.mubr.bf16.mxu0 0
      %8972 = vmatmul.mubr.bf16.gmra.mrb[0].mxu0 %v8871
      %v8973 = vpop.f32.mrb[0].mxu0
      %v8974 = vadd.f32 0.0, %v8973
      %v8975 = vpop.f32.mrb[0].mxu0
      %v8976 = vpop.f32.mrb[0].mxu0
      %v8977 = vadd.f32 0.0, %v8976
      %v8978 = vpop.f32.mrb[0].mxu0
      %8979 = vmatprep.mubr.bf16.mxu0 0
      %8980 = vmatmul.mubr.bf16.gmra.mrb[0].mxu0 %v8874
      %v8981 = vpop.f32.mrb[0].mxu0
      %v8982 = vadd.f32 0.0, %v8981
      %v8983 = vpop.f32.mrb[0].mxu0
      %v8984 = vpop.f32.mrb[0].mxu0
      %v8985 = vadd.f32 0.0, %v8984
      %v8986 = vpop.f32.mrb[0].mxu0
      %8987 = vmatprep.mubr.bf16.mxu0 0
      %8988 = vmatmul.mubr.bf16.gmra.mrb[0].mxu0 %v8877
      %v8989 = vpop.f32.mrb[0].mxu0
      %v8990 = vadd.f32 0.0, %v8989
      %v8991 = vpop.f32.mrb[0].mxu0
      %v8992 = vpop.f32.mrb[0].mxu0
      %v8993 = vadd.f32 0.0, %v8992
      %v8994 = vpop.f32.mrb[0].mxu0
      %8995 = vmatprep.mubr.bf16.mxu0 0
      %8996 = vmatmul.mubr.bf16.gmra.mrb[0].mxu0 %v8880
      %v8997 = vpop.f32.mrb[0].mxu0
      %v8998 = vadd.f32 0.0, %v8997
      %v8999 = vpop.f32.mrb[0].mxu0
      %v9000 = vpop.f32.mrb[0].mxu0
      %v9001 = vadd.f32 0.0, %v9000
      %v9002 = vpop.f32.mrb[0].mxu0
      %9003 = vmatprep.mubr.bf16.mxu0 0
      %9004 = vmatmul.mubr.bf16.gmra.mrb[0].mxu0 %v8883
      %v9005 = vpop.f32.mrb[0].mxu0
      %v9006 = vadd.f32 0.0, %v9005
      %v9007 = vpop.f32.mrb[0].mxu0
      %v9008 = vpop.f32.mrb[0].mxu0
      %v9009 = vadd.f32 0.0, %v9008
      %v9010 = vpop.f32.mrb[0].mxu0
      %9011 = vmatprep.mubr.bf16.mxu0 0
      %9012 = vmatmul.mubr.bf16.gmra.mrb[0].mxu0 %v8886
      %v9013 = vpop.f32.mrb[0].mxu0
      %v9014 = vadd.f32 0.0, %v9013
      %v9015 = vpop.f32.mrb[0].mxu0
      %v9016 = vpop.f32.mrb[0].mxu0
      %v9017 = vadd.f32 0.0, %v9016
      %v9018 = vpop.f32.mrb[0].mxu0
      %9019 = vmatprep.mubr.bf16.mxu0 0
      %9020 = vmatmul.mubr.bf16.gmra.mrb[0].mxu0 %v8889
      %v9021 = vpop.f32.mrb[0].mxu0
      %v9022 = vadd.f32 0.0, %v9021
      %v9023 = vpop.f32.mrb[0].mxu0
      %v9024 = vpop.f32.mrb[0].mxu0
      %v9025 = vadd.f32 0.0, %v9024
      %v9026 = vpop.f32.mrb[0].mxu0
      %9027 = vmatprep.mubr.bf16.mxu0 0
      %9028 = vmatmul.mubr.bf16.gmra.mrb[0].mxu0 %v8892
      %v9029 = vpop.f32.mrb[0].mxu0
      %v9030 = vadd.f32 0.0, %v9029
      %v9031 = vpop.f32.mrb[0].mxu0
      %v9032 = vpop.f32.mrb[0].mxu0
      %v9033 = vadd.f32 0.0, %v9032
      %v9034 = vpop.f32.mrb[0].mxu0
      %9035 = vmatprep.mubr.bf16.mxu0 0
      %9036 = vmatmul.mubr.bf16.gmra.mrb[0].mxu0 %v8895
      %v9037 = vpop.f32.mrb[0].mxu0
      %v9038 = vadd.f32 0.0, %v9037
      %v9039 = vpop.f32.mrb[0].mxu0
      %v9040 = vpop.f32.mrb[0].mxu0
      %v9041 = vadd.f32 0.0, %v9040
      %v9042 = vpop.f32.mrb[0].mxu0
      %9043 = vmatprep.mubr.bf16.mxu0 0
      %9044 = vmatmul.mubr.bf16.gmra.mrb[0].mxu0 %v8898
      %v9045 = vpop.f32.mrb[0].mxu0
      %v9046 = vadd.f32 0.0, %v9045
      %v9047 = vpop.f32.mrb[0].mxu0
      %v9048 = vpop.f32.mrb[0].mxu0
      %v9049 = vadd.f32 0.0, %v9048
      %v9050 = vpop.f32.mrb[0].mxu0
      %9051 = vmatprep.mubr.bf16.mxu0 0
      %9052 = vmatmul.mubr.bf16.gmra.mrb[0].mxu0 %v8901
      %v9053 = vpop.f32.mrb[0].mxu0
      %v9054 = vadd.f32 0.0, %v9053
      %v9055 = vpop.f32.mrb[0].mxu0
      %v9056 = vpop.f32.mrb[0].mxu0
      %v9057 = vadd.f32 0.0, %v9056
      %v9058 = vpop.f32.mrb[0].mxu0
      %9059 = vmatprep.mubr.bf16.mxu0 0
      %9060 = vmatmul.mubr.bf16.gmra.mrb[0].mxu0 %v8904
      %v9061 = vpop.f32.mrb[0].mxu0
      %v9062 = vadd.f32 0.0, %v9061
      %v9063 = vpop.f32.mrb[0].mxu0
      %v9064 = vpop.f32.mrb[0].mxu0
      %v9065 = vadd.f32 0.0, %v9064
      %v9066 = vpop.f32.mrb[0].mxu0
      %9067 = vmatprep.mubr.bf16.mxu0 0
      %9068 = vmatmul.mubr.bf16.gmra.mrb[0].mxu0 %v8907
      %v9069 = vpop.f32.mrb[0].mxu0
      %v9070 = vadd.f32 0.0, %v9069
      %v9071 = vpop.f32.mrb[0].mxu0
      %v9072 = vpop.f32.mrb[0].mxu0
      %v9073 = vadd.f32 0.0, %v9072
      %v9074 = vpop.f32.mrb[0].mxu0
      %9075 = vmatprep.mubr.bf16.mxu0 0
      %9076 = vmatmul.mubr.bf16.gmra.mrb[0].mxu0 %v8910
      %v9077 = vpop.f32.mrb[0].mxu0
      %v9078 = vadd.f32 0.0, %v9077
      %v9079 = vpop.f32.mrb[0].mxu0
      %v9080 = vpop.f32.mrb[0].mxu0
      %v9081 = vadd.f32 0.0, %v9080
      %v9082 = vpop.f32.mrb[0].mxu0
      %9083 = vmatprep.mubr.bf16.mxu0 0
      %9084 = vmatmul.mubr.bf16.gmra.mrb[0].mxu0 %v8913
      %v9085 = vpop.f32.mrb[0].mxu0
      %v9086 = vadd.f32 0.0, %v9085
      %v9087 = vpop.f32.mrb[0].mxu0
      %v9088 = vpop.f32.mrb[0].mxu0
      %v9089 = vadd.f32 0.0, %v9088
      %v9090 = vpop.f32.mrb[0].mxu0
      %9091 = vdwg.mxu0
      %v9092 = vld [vmem:[#allocation4] sm:$0xff]
      %v9093 = vld [vmem:[#allocation4 + $0x8] sm:$0xff]
      %v9094 = vld [vmem:[#allocation4 + $0x10] sm:$0xff]
      %v9095 = vld [vmem:[#allocation4 + $0x18] sm:$0xff]
      %v9096 = vld [vmem:[#allocation4 + $0x20] sm:$0xff]
      %v9097 = vld [vmem:[#allocation4 + $0x28] sm:$0xff]
      %v9098 = vld [vmem:[#allocation4 + $0x30] sm:$0xff]
      %v9099 = vld [vmem:[#allocation4 + $0x38] sm:$0xff]
      %v9100 = vld [vmem:[#allocation4 + $0x40] sm:$0xff]
      %v9101 = vld [vmem:[#allocation4 + $0x48] sm:$0xff]
      %v9102 = vld [vmem:[#allocation4 + $0x50] sm:$0xff]
      %v9103 = vld [vmem:[#allocation4 + $0x58] sm:$0xff]
      %v9104 = vld [vmem:[#allocation4 + $0x60] sm:$0xff]
      %v9105 = vld [vmem:[#allocation4 + $0x68] sm:$0xff]
      %v9106 = vld [vmem:[#allocation4 + $0x70] sm:$0xff]
      %v9107 = vld [vmem:[#allocation4 + $0x78] sm:$0xff]
      %v9108 = vld [vmem:[#allocation4 + $0x80] sm:$0xff]
      %v9109 = vld [vmem:[#allocation4 + $0x88] sm:$0xff]
      %v9110 = vld [vmem:[#allocation4 + $0x90] sm:$0xff]
      %v9111 = vld [vmem:[#allocation4 + $0x98] sm:$0xff]
      %v9112 = vld [vmem:[#allocation4 + $0xa0] sm:$0xff]
      %v9113 = vld [vmem:[#allocation4 + $0xa8] sm:$0xff]
      %v9114 = vld [vmem:[#allocation4 + $0xb0] sm:$0xff]
      %v9115 = vld [vmem:[#allocation4 + $0xb8] sm:$0xff]
      %v9116 = vld [vmem:[#allocation4 + $0xc0] sm:$0xff]
      %v9117 = vld [vmem:[#allocation4 + $0xc8] sm:$0xff]
      %v9118 = vld [vmem:[#allocation4 + $0xd0] sm:$0xff]
      %v9119 = vld [vmem:[#allocation4 + $0xd8] sm:$0xff]
      %v9120 = vld [vmem:[#allocation4 + $0xe0] sm:$0xff]
      %v9121 = vld [vmem:[#allocation4 + $0xe8] sm:$0xff]
      %v9122 = vld [vmem:[#allocation4 + $0xf0] sm:$0xff]
      %v9123 = vld [vmem:[#allocation4 + $0xf8] sm:$0xff]
      %v9124 = vld [vmem:[#allocation4 + $0x100] sm:$0xff]
      %v9125 = vld [vmem:[#allocation4 + $0x108] sm:$0xff]
      %v9126 = vld [vmem:[#allocation4 + $0x110] sm:$0xff]
      %v9127 = vld [vmem:[#allocation4 + $0x118] sm:$0x3f]
      %v9128 = vadd.f32 %v9092, %v8950
      %v9129 = vadd.f32 %v9093, %v8953
      %v9130 = vadd.f32 %v9094, %v8958
      %v9131 = vadd.f32 %v9095, %v8961
      %v9132 = vadd.f32 %v9096, %v8966
      %v9133 = vadd.f32 %v9097, %v8969
      %v9134 = vadd.f32 %v9098, %v8974
      %v9135 = vadd.f32 %v9099, %v8977
      %v9136 = vadd.f32 %v9100, %v8982
      %v9137 = vadd.f32 %v9101, %v8985
      %v9138 = vadd.f32 %v9102, %v8990
      %v9139 = vadd.f32 %v9103, %v8993
      %v9140 = vadd.f32 %v9104, %v8998
      %v9141 = vadd.f32 %v9105, %v9001
      %v9142 = vadd.f32 %v9106, %v9006
      %v9143 = vadd.f32 %v9107, %v9009
      %v9144 = vadd.f32 %v9108, %v9014
      %v9145 = vadd.f32 %v9109, %v9017
      %v9146 = vadd.f32 %v9110, %v9022
      %v9147 = vadd.f32 %v9111, %v9025
      %v9148 = vadd.f32 %v9112, %v9030
      %v9149 = vadd.f32 %v9113, %v9033
      %v9150 = vadd.f32 %v9114, %v9038
      %v9151 = vadd.f32 %v9115, %v9041
      %v9152 = vadd.f32 %v9116, %v9046
      %v9153 = vadd.f32 %v9117, %v9049
      %v9154 = vadd.f32 %v9118, %v9054
      %v9155 = vadd.f32 %v9119, %v9057
      %v9156 = vadd.f32 %v9120, %v9062
      %v9157 = vadd.f32 %v9121, %v9065
      %v9158 = vadd.f32 %v9122, %v9070
      %v9159 = vadd.f32 %v9123, %v9073
      %v9160 = vadd.f32 %v9124, %v9078
      %v9161 = vadd.f32 %v9125, %v9081
      %v9162 = vadd.f32 %v9126, %v9086
      %v9163 = vadd.f32 %v9127, %v9089
      %9164 = vst.msk [vmem:[#allocation4] sm:$0xff] %vm413, %v9128
      %9165 = vst.msk [vmem:[#allocation4 + $0x8] sm:$0xff] %vm413, %v9129
      %9166 = vst.msk [vmem:[#allocation4 + $0x10] sm:$0xff] %vm413, %v9130
      %9167 = vst.msk [vmem:[#allocation4 + $0x18] sm:$0xff] %vm413, %v9131
      %9168 = vst.msk [vmem:[#allocation4 + $0x20] sm:$0xff] %vm413, %v9132
      %9169 = vst.msk [vmem:[#allocation4 + $0x28] sm:$0xff] %vm413, %v9133
      %9170 = vst.msk [vmem:[#allocation4 + $0x30] sm:$0xff] %vm413, %v9134
      %9171 = vst.msk [vmem:[#allocation4 + $0x38] sm:$0xff] %vm413, %v9135
      %9172 = vst.msk [vmem:[#allocation4 + $0x40] sm:$0xff] %vm413, %v9136
      %9173 = vst.msk [vmem:[#allocation4 + $0x48] sm:$0xff] %vm413, %v9137
      %9174 = vst.msk [vmem:[#allocation4 + $0x50] sm:$0xff] %vm413, %v9138
      %9175 = vst.msk [vmem:[#allocation4 + $0x58] sm:$0xff] %vm413, %v9139
      %9176 = vst.msk [vmem:[#allocation4 + $0x60] sm:$0xff] %vm413, %v9140
      %9177 = vst.msk [vmem:[#allocation4 + $0x68] sm:$0xff] %vm413, %v9141
      %9178 = vst.msk [vmem:[#allocation4 + $0x70] sm:$0xff] %vm413, %v9142
      %9179 = vst.msk [vmem:[#allocation4 + $0x78] sm:$0xff] %vm413, %v9143
      %9180 = vst.msk [vmem:[#allocation4 + $0x80] sm:$0xff] %vm413, %v9144
      %9181 = vst.msk [vmem:[#allocation4 + $0x88] sm:$0xff] %vm413, %v9145
      %9182 = vst.msk [vmem:[#allocation4 + $0x90] sm:$0xff] %vm413, %v9146
      %9183 = vst.msk [vmem:[#allocation4 + $0x98] sm:$0xff] %vm413, %v9147
      %9184 = vst.msk [vmem:[#allocation4 + $0xa0] sm:$0xff] %vm413, %v9148
      %9185 = vst.msk [vmem:[#allocation4 + $0xa8] sm:$0xff] %vm413, %v9149
      %9186 = vst.msk [vmem:[#allocation4 + $0xb0] sm:$0xff] %vm413, %v9150
      %9187 = vst.msk [vmem:[#allocation4 + $0xb8] sm:$0xff] %vm413, %v9151
      %9188 = vst.msk [vmem:[#allocation4 + $0xc0] sm:$0xff] %vm413, %v9152
      %9189 = vst.msk [vmem:[#allocation4 + $0xc8] sm:$0xff] %vm413, %v9153
      %9190 = vst.msk [vmem:[#allocation4 + $0xd0] sm:$0xff] %vm413, %v9154
      %9191 = vst.msk [vmem:[#allocation4 + $0xd8] sm:$0xff] %vm413, %v9155
      %9192 = vst.msk [vmem:[#allocation4 + $0xe0] sm:$0xff] %vm413, %v9156
      %9193 = vst.msk [vmem:[#allocation4 + $0xe8] sm:$0xff] %vm413, %v9157
      %9194 = vst.msk [vmem:[#allocation4 + $0xf0] sm:$0xff] %vm413, %v9158
      %9195 = vst.msk [vmem:[#allocation4 + $0xf8] sm:$0xff] %vm413, %v9159
      %9196 = vst.msk [vmem:[#allocation4 + $0x100] sm:$0xff] %vm413, %v9160
      %9197 = vst.msk [vmem:[#allocation4 + $0x108] sm:$0xff] %vm413, %v9161
      %9198 = vst.msk [vmem:[#allocation4 + $0x110] sm:$0xff] %vm413, %v9162
      %9199 = vst.msk [vmem:[#allocation4 + $0x118] sm:$0x3f] %vm6887, %v9163
      %v9200 = vld [vmem:[#allocation3 + $0x8] sm:$0xc]
      %v9201 = vld [vmem:[#allocation3 + $0xc] sm:$0xf]
      %v9202 = vld [vmem:[#allocation3 + $0x10] sm:$0xf]
      %v9203 = vld [vmem:[#allocation3 + $0x14] sm:$0xf]
      %v9204 = vld [vmem:[#allocation3 + $0x18] sm:$0xf]
      %v9205 = vld [vmem:[#allocation3 + $0x1c] sm:$0xf]
      %v9206 = vld [vmem:[#allocation3 + $0x20] sm:$0xf]
      %v9207 = vld [vmem:[#allocation3 + $0x24] sm:$0xf]
      %v9208 = vld [vmem:[#allocation3 + $0x28] sm:$0xf]
      %v9209 = vld [vmem:[#allocation3 + $0x2c] sm:$0xf]
      %v9210 = vld [vmem:[#allocation3 + $0x30] sm:$0xf]
      %v9211 = vld [vmem:[#allocation3 + $0x34] sm:$0xf]
      %v9212 = vld [vmem:[#allocation3 + $0x38] sm:$0xf]
      %v9213 = vld [vmem:[#allocation3 + $0x3c] sm:$0xf]
      %v9214 = vld [vmem:[#allocation3 + $0x40] sm:$0xf]
      %v9215 = vld [vmem:[#allocation3 + $0x44] sm:$0xf]
      %v9216 = vld [vmem:[#allocation3 + $0x48] sm:$0xf]
      %v9217 = vld [vmem:[#allocation3 + $0x4c] sm:$0xf]
      %v9218 = vld [vmem:[#allocation3 + $0x50] sm:$0xf]
      %v9219 = vld [vmem:[#allocation3 + $0x54] sm:$0xf]
      %v9220 = vld [vmem:[#allocation3 + $0x58] sm:$0xf]
      %v9221 = vld [vmem:[#allocation3 + $0x5c] sm:$0xf]
      %v9222 = vld [vmem:[#allocation3 + $0x60] sm:$0xf]
      %v9223 = vld [vmem:[#allocation3 + $0x64] sm:$0xf]
      %v9224 = vld [vmem:[#allocation3 + $0x68] sm:$0xf]
      %v9225 = vld [vmem:[#allocation3 + $0x6c] sm:$0xf]
      %v9226 = vld [vmem:[#allocation3 + $0x70] sm:$0xf]
      %v9227 = vld [vmem:[#allocation3 + $0x74] sm:$0xf]
      %v9228 = vld [vmem:[#allocation3 + $0x78] sm:$0xf]
      %v9229 = vld [vmem:[#allocation3 + $0x7c] sm:$0xf]
      %v9230 = vld [vmem:[#allocation3 + $0x80] sm:$0xf]
      %v9231 = vld [vmem:[#allocation3 + $0x84] sm:$0xf]
      %v9232 = vld [vmem:[#allocation3 + $0x88] sm:$0xf]
      %v9233 = vld [vmem:[#allocation3 + $0x8c] sm:$0xf]
      %v9234 = vld [vmem:[#allocation3 + $0x90] sm:$0xf]
      %v9235 = vld [vmem:[#allocation3 + $0x94] sm:$0xf]
      %v9236 = vld [vmem:[#allocation3 + $0x98] sm:$0x1]
      %s9237 = scalar_lea.vmem %s4, 80
      %v9238 = vld [vmem:[%s9237] sm:$0xf]
      %v9239 = vld [vmem:[%s9237 + $0x4] sm:$0xf]
      %v9240 = vld [vmem:[%s9237 + $0x8] sm:$0xf]
      %v9241 = vld [vmem:[%s9237 + $0xc] sm:$0xf]
      %v9279 = vunpack.c.l.b16 %v9200
      %v9280 = vunpack.c.l.b16 %v9201
      %v9281 = vunpack.c.l.b16 %v9202
      %v9282 = vunpack.c.l.b16 %v9203
      %v9283 = vunpack.c.l.b16 %v9204
      %v9284 = vunpack.c.l.b16 %v9205
      %v9285 = vunpack.c.l.b16 %v9206
      %v9286 = vunpack.c.l.b16 %v9207
      %v9287 = vunpack.c.l.b16 %v9208
      %v9288 = vunpack.c.l.b16 %v9209
      %v9289 = vunpack.c.l.b16 %v9210
      %v9290 = vunpack.c.l.b16 %v9211
      %v9291 = vunpack.c.l.b16 %v9212
      %v9292 = vunpack.c.l.b16 %v9213
      %v9293 = vunpack.c.l.b16 %v9214
      %v9294 = vunpack.c.l.b16 %v9215
      %v9295 = vunpack.c.l.b16 %v9216
      %v9296 = vunpack.c.l.b16 %v9217
      %v9297 = vunpack.c.l.b16 %v9218
      %v9298 = vunpack.c.l.b16 %v9219
      %v9299 = vunpack.c.l.b16 %v9220
      %v9300 = vunpack.c.l.b16 %v9221
      %v9301 = vunpack.c.l.b16 %v9222
      %v9302 = vunpack.c.l.b16 %v9223
      %v9303 = vunpack.c.l.b16 %v9224
      %v9304 = vunpack.c.l.b16 %v9225
      %v9305 = vunpack.c.l.b16 %v9226
      %v9306 = vunpack.c.l.b16 %v9227
      %v9307 = vunpack.c.l.b16 %v9228
      %v9308 = vunpack.c.l.b16 %v9229
      %v9309 = vunpack.c.l.b16 %v9230
      %v9310 = vunpack.c.l.b16 %v9231
      %v9311 = vunpack.c.l.b16 %v9232
      %v9312 = vunpack.c.l.b16 %v9233
      %v9313 = vunpack.c.l.b16 %v9234
      %v9314 = vunpack.c.l.b16 %v9235
      %v9315 = vunpack.c.l.b16 %v9236
      %v9316 = vpack.c.b16 %v9280, %v9279
      %v9317 = vpack.c.b16 %v9282, %v9281
      %v9318 = vpack.c.b16 %v9284, %v9283
      %v9319 = vpack.c.b16 %v9286, %v9285
      %v9320 = vpack.c.b16 %v9288, %v9287
      %v9321 = vpack.c.b16 %v9290, %v9289
      %v9322 = vpack.c.b16 %v9292, %v9291
      %v9323 = vpack.c.b16 %v9294, %v9293
      %v9324 = vpack.c.b16 %v9296, %v9295
      %v9325 = vpack.c.b16 %v9298, %v9297
      %v9326 = vpack.c.b16 %v9300, %v9299
      %v9327 = vpack.c.b16 %v9302, %v9301
      %v9328 = vpack.c.b16 %v9304, %v9303
      %v9329 = vpack.c.b16 %v9306, %v9305
      %v9330 = vpack.c.b16 %v9308, %v9307
      %v9331 = vpack.c.b16 %v9310, %v9309
      %v9332 = vpack.c.b16 %v9312, %v9311
      %v9333 = vpack.c.b16 %v9314, %v9313
      %v9334 = vpack.c.b16 %v9315, %v9315
      %v9335 = vrot.slane %v9316, 2
      %v9336 = vrot.slane %v9317, 2
      %v9337 = vsel %vm3496, %v9335, %v9336
      %v9338 = vrot.slane %v9318, 2
      %v9339 = vsel %vm3496, %v9336, %v9338
      %v9340 = vrot.slane %v9319, 2
      %v9341 = vsel %vm3496, %v9338, %v9340
      %v9342 = vrot.slane %v9320, 2
      %v9343 = vsel %vm3496, %v9340, %v9342
      %v9344 = vrot.slane %v9321, 2
      %v9345 = vsel %vm3496, %v9342, %v9344
      %v9346 = vrot.slane %v9322, 2
      %v9347 = vsel %vm3496, %v9344, %v9346
      %v9348 = vrot.slane %v9323, 2
      %v9349 = vsel %vm3496, %v9346, %v9348
      %v9350 = vrot.slane %v9324, 2
      %v9351 = vsel %vm3496, %v9348, %v9350
      %v9352 = vrot.slane %v9325, 2
      %v9353 = vsel %vm3496, %v9350, %v9352
      %v9354 = vrot.slane %v9326, 2
      %v9355 = vsel %vm3496, %v9352, %v9354
      %v9356 = vrot.slane %v9327, 2
      %v9357 = vsel %vm3496, %v9354, %v9356
      %v9358 = vrot.slane %v9328, 2
      %v9359 = vsel %vm3496, %v9356, %v9358
      %v9360 = vrot.slane %v9329, 2
      %v9361 = vsel %vm3496, %v9358, %v9360
      %v9362 = vrot.slane %v9330, 2
      %v9363 = vsel %vm3496, %v9360, %v9362
      %v9364 = vrot.slane %v9331, 2
      %v9365 = vsel %vm3496, %v9362, %v9364
      %v9366 = vrot.slane %v9332, 2
      %v9367 = vsel %vm3496, %v9364, %v9366
      %v9368 = vrot.slane %v9333, 2
      %v9369 = vsel %vm3496, %v9366, %v9368
      %v9370 = vrot.slane %v9334, 2
      %v9371 = vsel %vm3496, %v9368, %v9370
      %v9376 = vunpack.c.l.b16 %v9238
      %v9377 = vunpack.c.l.b16 %v9239
      %v9378 = vunpack.c.l.b16 %v9240
      %v9379 = vunpack.c.l.b16 %v9241
      %v9380 = vpack.c.b16 %v9377, %v9376
      %v9381 = vpack.c.b16 %v9379, %v9378
      %v9385 = vsel %vm413, %v9337, 0
      %v9388 = vsel %vm413, %v9339, 0
      %v9391 = vsel %vm413, %v9341, 0
      %v9394 = vsel %vm413, %v9343, 0
      %v9397 = vsel %vm413, %v9345, 0
      %v9400 = vsel %vm413, %v9347, 0
      %v9403 = vsel %vm413, %v9349, 0
      %v9406 = vsel %vm413, %v9351, 0
      %v9409 = vsel %vm413, %v9353, 0
      %v9412 = vsel %vm413, %v9355, 0
      %v9415 = vsel %vm413, %v9357, 0
      %v9418 = vsel %vm413, %v9359, 0
      %v9421 = vsel %vm413, %v9361, 0
      %v9424 = vsel %vm413, %v9363, 0
      %v9427 = vsel %vm413, %v9365, 0
      %v9430 = vsel %vm413, %v9367, 0
      %v9433 = vsel %vm413, %v9369, 0
      %v9436 = vsel %vm413, %v9371, 0
      %9438 = vmatprep.subr.bf16.mxu0 0
      %9439 = vmatpush1.bf16.msra.mxu0 %v9380
      %9440 = vmatprep.subr.bf16.mxu0 0
      %9441 = vmatpush1.bf16.msra.mxu0 %v9381
      %9442 = vmatprep.subr.bf16.mxu0 0
      %9443 = vmatpush1.bf16.msra.mxu0 0
      %9444 = vmatprep.subr.bf16.mxu0 0
      %9445 = vmatpush1.bf16.msra.mxu0 0
      %9446 = vmatprep.subr.bf16.mxu0 0
      %9447 = vmatpush1.bf16.msra.mxu0 0
      %9448 = vmatprep.subr.bf16.mxu0 0
      %9449 = vmatpush1.bf16.msra.mxu0 0
      %9450 = vmatprep.subr.bf16.mxu0 0
      %9451 = vmatpush1.bf16.msra.mxu0 0
      %9452 = vmatprep.subr.bf16.mxu0 0
      %9453 = vmatpush1.bf16.msra.mxu0 0
      %9454 = vmatprep.subr.bf16.mxu0 0
      %9455 = vmatpush1.bf16.msra.mxu0 0
      %9456 = vmatprep.subr.bf16.mxu0 0
      %9457 = vmatpush1.bf16.msra.mxu0 0
      %9458 = vmatprep.subr.bf16.mxu0 0
      %9459 = vmatpush1.bf16.msra.mxu0 0
      %9460 = vmatprep.subr.bf16.mxu0 0
      %9461 = vmatpush1.bf16.msra.mxu0 0
      %9462 = vmatprep.subr.bf16.mxu0 0
      %9463 = vmatpush1.bf16.msra.mxu0 0
      %9464 = vmatprep.subr.bf16.mxu0 0
      %9465 = vmatpush1.bf16.msra.mxu0 0
      %9466 = vmatprep.subr.bf16.mxu0 0
      %9467 = vmatpush1.bf16.msra.mxu0 0
      %9468 = vmatprep.subr.bf16.mxu0 0
      %9469 = vmatpush1.bf16.msra.mxu0 0
      %9470 = vmatprep.mubr.bf16.mxu0 0
      %9471 = vmatmul.mubr.bf16.gmra.mrb[0].mxu0 %v9385
      %v9472 = vpop.f32.mrb[0].mxu0
      %v9473 = vadd.f32 0.0, %v9472
      %v9474 = vpop.f32.mrb[0].mxu0
      %v9475 = vpop.f32.mrb[0].mxu0
      %v9476 = vadd.f32 0.0, %v9475
      %v9477 = vpop.f32.mrb[0].mxu0
      %9478 = vmatprep.mubr.bf16.mxu0 0
      %9479 = vmatmul.mubr.bf16.gmra.mrb[0].mxu0 %v9388
      %v9480 = vpop.f32.mrb[0].mxu0
      %v9481 = vadd.f32 0.0, %v9480
      %v9482 = vpop.f32.mrb[0].mxu0
      %v9483 = vpop.f32.mrb[0].mxu0
      %v9484 = vadd.f32 0.0, %v9483
      %v9485 = vpop.f32.mrb[0].mxu0
      %9486 = vmatprep.mubr.bf16.mxu0 0
      %9487 = vmatmul.mubr.bf16.gmra.mrb[0].mxu0 %v9391
      %v9488 = vpop.f32.mrb[0].mxu0
      %v9489 = vadd.f32 0.0, %v9488
      %v9490 = vpop.f32.mrb[0].mxu0
      %v9491 = vpop.f32.mrb[0].mxu0
      %v9492 = vadd.f32 0.0, %v9491
      %v9493 = vpop.f32.mrb[0].mxu0
      %9494 = vmatprep.mubr.bf16.mxu0 0
      %9495 = vmatmul.mubr.bf16.gmra.mrb[0].mxu0 %v9394
      %v9496 = vpop.f32.mrb[0].mxu0
      %v9497 = vadd.f32 0.0, %v9496
      %v9498 = vpop.f32.mrb[0].mxu0
      %v9499 = vpop.f32.mrb[0].mxu0
      %v9500 = vadd.f32 0.0, %v9499
      %v9501 = vpop.f32.mrb[0].mxu0
      %9502 = vmatprep.mubr.bf16.mxu0 0
      %9503 = vmatmul.mubr.bf16.gmra.mrb[0].mxu0 %v9397
      %v9504 = vpop.f32.mrb[0].mxu0
      %v9505 = vadd.f32 0.0, %v9504
      %v9506 = vpop.f32.mrb[0].mxu0
      %v9507 = vpop.f32.mrb[0].mxu0
      %v9508 = vadd.f32 0.0, %v9507
      %v9509 = vpop.f32.mrb[0].mxu0
      %9510 = vmatprep.mubr.bf16.mxu0 0
      %9511 = vmatmul.mubr.bf16.gmra.mrb[0].mxu0 %v9400
      %v9512 = vpop.f32.mrb[0].mxu0
      %v9513 = vadd.f32 0.0, %v9512
      %v9514 = vpop.f32.mrb[0].mxu0
      %v9515 = vpop.f32.mrb[0].mxu0
      %v9516 = vadd.f32 0.0, %v9515
      %v9517 = vpop.f32.mrb[0].mxu0
      %9518 = vmatprep.mubr.bf16.mxu0 0
      %9519 = vmatmul.mubr.bf16.gmra.mrb[0].mxu0 %v9403
      %v9520 = vpop.f32.mrb[0].mxu0
      %v9521 = vadd.f32 0.0, %v9520
      %v9522 = vpop.f32.mrb[0].mxu0
      %v9523 = vpop.f32.mrb[0].mxu0
      %v9524 = vadd.f32 0.0, %v9523
      %v9525 = vpop.f32.mrb[0].mxu0
      %9526 = vmatprep.mubr.bf16.mxu0 0
      %9527 = vmatmul.mubr.bf16.gmra.mrb[0].mxu0 %v9406
      %v9528 = vpop.f32.mrb[0].mxu0
      %v9529 = vadd.f32 0.0, %v9528
      %v9530 = vpop.f32.mrb[0].mxu0
      %v9531 = vpop.f32.mrb[0].mxu0
      %v9532 = vadd.f32 0.0, %v9531
      %v9533 = vpop.f32.mrb[0].mxu0
      %9534 = vmatprep.mubr.bf16.mxu0 0
      %9535 = vmatmul.mubr.bf16.gmra.mrb[0].mxu0 %v9409
      %v9536 = vpop.f32.mrb[0].mxu0
      %v9537 = vadd.f32 0.0, %v9536
      %v9538 = vpop.f32.mrb[0].mxu0
      %v9539 = vpop.f32.mrb[0].mxu0
      %v9540 = vadd.f32 0.0, %v9539
      %v9541 = vpop.f32.mrb[0].mxu0
      %9542 = vmatprep.mubr.bf16.mxu0 0
      %9543 = vmatmul.mubr.bf16.gmra.mrb[0].mxu0 %v9412
      %v9544 = vpop.f32.mrb[0].mxu0
      %v9545 = vadd.f32 0.0, %v9544
      %v9546 = vpop.f32.mrb[0].mxu0
      %v9547 = vpop.f32.mrb[0].mxu0
      %v9548 = vadd.f32 0.0, %v9547
      %v9549 = vpop.f32.mrb[0].mxu0
      %9550 = vmatprep.mubr.bf16.mxu0 0
      %9551 = vmatmul.mubr.bf16.gmra.mrb[0].mxu0 %v9415
      %v9552 = vpop.f32.mrb[0].mxu0
      %v9553 = vadd.f32 0.0, %v9552
      %v9554 = vpop.f32.mrb[0].mxu0
      %v9555 = vpop.f32.mrb[0].mxu0
      %v9556 = vadd.f32 0.0, %v9555
      %v9557 = vpop.f32.mrb[0].mxu0
      %9558 = vmatprep.mubr.bf16.mxu0 0
      %9559 = vmatmul.mubr.bf16.gmra.mrb[0].mxu0 %v9418
      %v9560 = vpop.f32.mrb[0].mxu0
      %v9561 = vadd.f32 0.0, %v9560
      %v9562 = vpop.f32.mrb[0].mxu0
      %v9563 = vpop.f32.mrb[0].mxu0
      %v9564 = vadd.f32 0.0, %v9563
      %v9565 = vpop.f32.mrb[0].mxu0
      %9566 = vmatprep.mubr.bf16.mxu0 0
      %9567 = vmatmul.mubr.bf16.gmra.mrb[0].mxu0 %v9421
      %v9568 = vpop.f32.mrb[0].mxu0
      %v9569 = vadd.f32 0.0, %v9568
      %v9570 = vpop.f32.mrb[0].mxu0
      %v9571 = vpop.f32.mrb[0].mxu0
      %v9572 = vadd.f32 0.0, %v9571
      %v9573 = vpop.f32.mrb[0].mxu0
      %9574 = vmatprep.mubr.bf16.mxu0 0
      %9575 = vmatmul.mubr.bf16.gmra.mrb[0].mxu0 %v9424
      %v9576 = vpop.f32.mrb[0].mxu0
      %v9577 = vadd.f32 0.0, %v9576
      %v9578 = vpop.f32.mrb[0].mxu0
      %v9579 = vpop.f32.mrb[0].mxu0
      %v9580 = vadd.f32 0.0, %v9579
      %v9581 = vpop.f32.mrb[0].mxu0
      %9582 = vmatprep.mubr.bf16.mxu0 0
      %9583 = vmatmul.mubr.bf16.gmra.mrb[0].mxu0 %v9427
      %v9584 = vpop.f32.mrb[0].mxu0
      %v9585 = vadd.f32 0.0, %v9584
      %v9586 = vpop.f32.mrb[0].mxu0
      %v9587 = vpop.f32.mrb[0].mxu0
      %v9588 = vadd.f32 0.0, %v9587
      %v9589 = vpop.f32.mrb[0].mxu0
      %9590 = vmatprep.mubr.bf16.mxu0 0
      %9591 = vmatmul.mubr.bf16.gmra.mrb[0].mxu0 %v9430
      %v9592 = vpop.f32.mrb[0].mxu0
      %v9593 = vadd.f32 0.0, %v9592
      %v9594 = vpop.f32.mrb[0].mxu0
      %v9595 = vpop.f32.mrb[0].mxu0
      %v9596 = vadd.f32 0.0, %v9595
      %v9597 = vpop.f32.mrb[0].mxu0
      %9598 = vmatprep.mubr.bf16.mxu0 0
      %9599 = vmatmul.mubr.bf16.gmra.mrb[0].mxu0 %v9433
      %v9600 = vpop.f32.mrb[0].mxu0
      %v9601 = vadd.f32 0.0, %v9600
      %v9602 = vpop.f32.mrb[0].mxu0
      %v9603 = vpop.f32.mrb[0].mxu0
      %v9604 = vadd.f32 0.0, %v9603
      %v9605 = vpop.f32.mrb[0].mxu0
      %9606 = vmatprep.mubr.bf16.mxu0 0
      %9607 = vmatmul.mubr.bf16.gmra.mrb[0].mxu0 %v9436
      %v9608 = vpop.f32.mrb[0].mxu0
      %v9609 = vadd.f32 0.0, %v9608
      %v9610 = vpop.f32.mrb[0].mxu0
      %v9611 = vpop.f32.mrb[0].mxu0
      %v9612 = vadd.f32 0.0, %v9611
      %v9613 = vpop.f32.mrb[0].mxu0
      %9614 = vdwg.mxu0
      %v9615 = vld [vmem:[#allocation4] sm:$0xff]
      %v9616 = vld [vmem:[#allocation4 + $0x8] sm:$0xff]
      %v9617 = vld [vmem:[#allocation4 + $0x10] sm:$0xff]
      %v9618 = vld [vmem:[#allocation4 + $0x18] sm:$0xff]
      %v9619 = vld [vmem:[#allocation4 + $0x20] sm:$0xff]
      %v9620 = vld [vmem:[#allocation4 + $0x28] sm:$0xff]
      %v9621 = vld [vmem:[#allocation4 + $0x30] sm:$0xff]
      %v9622 = vld [vmem:[#allocation4 + $0x38] sm:$0xff]
      %v9623 = vld [vmem:[#allocation4 + $0x40] sm:$0xff]
      %v9624 = vld [vmem:[#allocation4 + $0x48] sm:$0xff]
      %v9625 = vld [vmem:[#allocation4 + $0x50] sm:$0xff]
      %v9626 = vld [vmem:[#allocation4 + $0x58] sm:$0xff]
      %v9627 = vld [vmem:[#allocation4 + $0x60] sm:$0xff]
      %v9628 = vld [vmem:[#allocation4 + $0x68] sm:$0xff]
      %v9629 = vld [vmem:[#allocation4 + $0x70] sm:$0xff]
      %v9630 = vld [vmem:[#allocation4 + $0x78] sm:$0xff]
      %v9631 = vld [vmem:[#allocation4 + $0x80] sm:$0xff]
      %v9632 = vld [vmem:[#allocation4 + $0x88] sm:$0xff]
      %v9633 = vld [vmem:[#allocation4 + $0x90] sm:$0xff]
      %v9634 = vld [vmem:[#allocation4 + $0x98] sm:$0xff]
      %v9635 = vld [vmem:[#allocation4 + $0xa0] sm:$0xff]
      %v9636 = vld [vmem:[#allocation4 + $0xa8] sm:$0xff]
      %v9637 = vld [vmem:[#allocation4 + $0xb0] sm:$0xff]
      %v9638 = vld [vmem:[#allocation4 + $0xb8] sm:$0xff]
      %v9639 = vld [vmem:[#allocation4 + $0xc0] sm:$0xff]
      %v9640 = vld [vmem:[#allocation4 + $0xc8] sm:$0xff]
      %v9641 = vld [vmem:[#allocation4 + $0xd0] sm:$0xff]
      %v9642 = vld [vmem:[#allocation4 + $0xd8] sm:$0xff]
      %v9643 = vld [vmem:[#allocation4 + $0xe0] sm:$0xff]
      %v9644 = vld [vmem:[#allocation4 + $0xe8] sm:$0xff]
      %v9645 = vld [vmem:[#allocation4 + $0xf0] sm:$0xff]
      %v9646 = vld [vmem:[#allocation4 + $0xf8] sm:$0xff]
      %v9647 = vld [vmem:[#allocation4 + $0x100] sm:$0xff]
      %v9648 = vld [vmem:[#allocation4 + $0x108] sm:$0xff]
      %v9649 = vld [vmem:[#allocation4 + $0x110] sm:$0xff]
      %v9650 = vld [vmem:[#allocation4 + $0x118] sm:$0x3f]
      %v9651 = vadd.f32 %v9615, %v9473
      %v9652 = vadd.f32 %v9616, %v9476
      %v9653 = vadd.f32 %v9617, %v9481
      %v9654 = vadd.f32 %v9618, %v9484
      %v9655 = vadd.f32 %v9619, %v9489
      %v9656 = vadd.f32 %v9620, %v9492
      %v9657 = vadd.f32 %v9621, %v9497
      %v9658 = vadd.f32 %v9622, %v9500
      %v9659 = vadd.f32 %v9623, %v9505
      %v9660 = vadd.f32 %v9624, %v9508
      %v9661 = vadd.f32 %v9625, %v9513
      %v9662 = vadd.f32 %v9626, %v9516
      %v9663 = vadd.f32 %v9627, %v9521
      %v9664 = vadd.f32 %v9628, %v9524
      %v9665 = vadd.f32 %v9629, %v9529
      %v9666 = vadd.f32 %v9630, %v9532
      %v9667 = vadd.f32 %v9631, %v9537
      %v9668 = vadd.f32 %v9632, %v9540
      %v9669 = vadd.f32 %v9633, %v9545
      %v9670 = vadd.f32 %v9634, %v9548
      %v9671 = vadd.f32 %v9635, %v9553
      %v9672 = vadd.f32 %v9636, %v9556
      %v9673 = vadd.f32 %v9637, %v9561
      %v9674 = vadd.f32 %v9638, %v9564
      %v9675 = vadd.f32 %v9639, %v9569
      %v9676 = vadd.f32 %v9640, %v9572
      %v9677 = vadd.f32 %v9641, %v9577
      %v9678 = vadd.f32 %v9642, %v9580
      %v9679 = vadd.f32 %v9643, %v9585
      %v9680 = vadd.f32 %v9644, %v9588
      %v9681 = vadd.f32 %v9645, %v9593
      %v9682 = vadd.f32 %v9646, %v9596
      %v9683 = vadd.f32 %v9647, %v9601
      %v9684 = vadd.f32 %v9648, %v9604
      %v9685 = vadd.f32 %v9649, %v9609
      %v9686 = vadd.f32 %v9650, %v9612
      %9687 = vst.msk [vmem:[#allocation4] sm:$0xff] %vm413, %v9651
      %9688 = vst.msk [vmem:[#allocation4 + $0x8] sm:$0xff] %vm413, %v9652
      %9689 = vst.msk [vmem:[#allocation4 + $0x10] sm:$0xff] %vm413, %v9653
      %9690 = vst.msk [vmem:[#allocation4 + $0x18] sm:$0xff] %vm413, %v9654
      %9691 = vst.msk [vmem:[#allocation4 + $0x20] sm:$0xff] %vm413, %v9655
      %9692 = vst.msk [vmem:[#allocation4 + $0x28] sm:$0xff] %vm413, %v9656
      %9693 = vst.msk [vmem:[#allocation4 + $0x30] sm:$0xff] %vm413, %v9657
      %9694 = vst.msk [vmem:[#allocation4 + $0x38] sm:$0xff] %vm413, %v9658
      %9695 = vst.msk [vmem:[#allocation4 + $0x40] sm:$0xff] %vm413, %v9659
      %9696 = vst.msk [vmem:[#allocation4 + $0x48] sm:$0xff] %vm413, %v9660
      %9697 = vst.msk [vmem:[#allocation4 + $0x50] sm:$0xff] %vm413, %v9661
      %9698 = vst.msk [vmem:[#allocation4 + $0x58] sm:$0xff] %vm413, %v9662
      %9699 = vst.msk [vmem:[#allocation4 + $0x60] sm:$0xff] %vm413, %v9663
      %9700 = vst.msk [vmem:[#allocation4 + $0x68] sm:$0xff] %vm413, %v9664
      %9701 = vst.msk [vmem:[#allocation4 + $0x70] sm:$0xff] %vm413, %v9665
      %9702 = vst.msk [vmem:[#allocation4 + $0x78] sm:$0xff] %vm413, %v9666
      %9703 = vst.msk [vmem:[#allocation4 + $0x80] sm:$0xff] %vm413, %v9667
      %9704 = vst.msk [vmem:[#allocation4 + $0x88] sm:$0xff] %vm413, %v9668
      %9705 = vst.msk [vmem:[#allocation4 + $0x90] sm:$0xff] %vm413, %v9669
      %9706 = vst.msk [vmem:[#allocation4 + $0x98] sm:$0xff] %vm413, %v9670
      %9707 = vst.msk [vmem:[#allocation4 + $0xa0] sm:$0xff] %vm413, %v9671
      %9708 = vst.msk [vmem:[#allocation4 + $0xa8] sm:$0xff] %vm413, %v9672
      %9709 = vst.msk [vmem:[#allocation4 + $0xb0] sm:$0xff] %vm413, %v9673
      %9710 = vst.msk [vmem:[#allocation4 + $0xb8] sm:$0xff] %vm413, %v9674
      %9711 = vst.msk [vmem:[#allocation4 + $0xc0] sm:$0xff] %vm413, %v9675
      %9712 = vst.msk [vmem:[#allocation4 + $0xc8] sm:$0xff] %vm413, %v9676
      %9713 = vst.msk [vmem:[#allocation4 + $0xd0] sm:$0xff] %vm413, %v9677
      %9714 = vst.msk [vmem:[#allocation4 + $0xd8] sm:$0xff] %vm413, %v9678
      %9715 = vst.msk [vmem:[#allocation4 + $0xe0] sm:$0xff] %vm413, %v9679
      %9716 = vst.msk [vmem:[#allocation4 + $0xe8] sm:$0xff] %vm413, %v9680
      %9717 = vst.msk [vmem:[#allocation4 + $0xf0] sm:$0xff] %vm413, %v9681
      %9718 = vst.msk [vmem:[#allocation4 + $0xf8] sm:$0xff] %vm413, %v9682
      %9719 = vst.msk [vmem:[#allocation4 + $0x100] sm:$0xff] %vm413, %v9683
      %9720 = vst.msk [vmem:[#allocation4 + $0x108] sm:$0xff] %vm413, %v9684
      %9721 = vst.msk [vmem:[#allocation4 + $0x110] sm:$0xff] %vm413, %v9685
      %9722 = vst.msk [vmem:[#allocation4 + $0x118] sm:$0x3f] %vm6887, %v9686
      %v9723 = vld [vmem:[#allocation3 + $0x10] sm:$0xc]
      %v9724 = vld [vmem:[#allocation3 + $0x14] sm:$0xf]
      %v9725 = vld [vmem:[#allocation3 + $0x18] sm:$0xf]
      %v9726 = vld [vmem:[#allocation3 + $0x1c] sm:$0xf]
      %v9727 = vld [vmem:[#allocation3 + $0x20] sm:$0xf]
      %v9728 = vld [vmem:[#allocation3 + $0x24] sm:$0xf]
      %v9729 = vld [vmem:[#allocation3 + $0x28] sm:$0xf]
      %v9730 = vld [vmem:[#allocation3 + $0x2c] sm:$0xf]
      %v9731 = vld [vmem:[#allocation3 + $0x30] sm:$0xf]
      %v9732 = vld [vmem:[#allocation3 + $0x34] sm:$0xf]
      %v9733 = vld [vmem:[#allocation3 + $0x38] sm:$0xf]
      %v9734 = vld [vmem:[#allocation3 + $0x3c] sm:$0xf]
      %v9735 = vld [vmem:[#allocation3 + $0x40] sm:$0xf]
      %v9736 = vld [vmem:[#allocation3 + $0x44] sm:$0xf]
      %v9737 = vld [vmem:[#allocation3 + $0x48] sm:$0xf]
      %v9738 = vld [vmem:[#allocation3 + $0x4c] sm:$0xf]
      %v9739 = vld [vmem:[#allocation3 + $0x50] sm:$0xf]
      %v9740 = vld [vmem:[#allocation3 + $0x54] sm:$0xf]
      %v9741 = vld [vmem:[#allocation3 + $0x58] sm:$0xf]
      %v9742 = vld [vmem:[#allocation3 + $0x5c] sm:$0xf]
      %v9743 = vld [vmem:[#allocation3 + $0x60] sm:$0xf]
      %v9744 = vld [vmem:[#allocation3 + $0x64] sm:$0xf]
      %v9745 = vld [vmem:[#allocation3 + $0x68] sm:$0xf]
      %v9746 = vld [vmem:[#allocation3 + $0x6c] sm:$0xf]
      %v9747 = vld [vmem:[#allocation3 + $0x70] sm:$0xf]
      %v9748 = vld [vmem:[#allocation3 + $0x74] sm:$0xf]
      %v9749 = vld [vmem:[#allocation3 + $0x78] sm:$0xf]
      %v9750 = vld [vmem:[#allocation3 + $0x7c] sm:$0xf]
      %v9751 = vld [vmem:[#allocation3 + $0x80] sm:$0xf]
      %v9752 = vld [vmem:[#allocation3 + $0x84] sm:$0xf]
      %v9753 = vld [vmem:[#allocation3 + $0x88] sm:$0xf]
      %v9754 = vld [vmem:[#allocation3 + $0x8c] sm:$0xf]
      %v9755 = vld [vmem:[#allocation3 + $0x90] sm:$0xf]
      %v9756 = vld [vmem:[#allocation3 + $0x94] sm:$0xf]
      %v9757 = vld [vmem:[#allocation3 + $0x98] sm:$0xf]
      %v9758 = vld [vmem:[#allocation3 + $0x9c] sm:$0xf]
      %v9759 = vld [vmem:[#allocation3 + $0xa0] sm:$0x1]
      %s9760 = scalar_lea.vmem %s4, 96
      %v9761 = vld [vmem:[%s9760] sm:$0xf]
      %v9762 = vld [vmem:[%s9760 + $0x4] sm:$0xf]
      %v9763 = vld [vmem:[%s9760 + $0x8] sm:$0xf]
      %v9764 = vld [vmem:[%s9760 + $0xc] sm:$0xf]
      %v9802 = vunpack.c.l.b16 %v9723
      %v9803 = vunpack.c.l.b16 %v9724
      %v9804 = vunpack.c.l.b16 %v9725
      %v9805 = vunpack.c.l.b16 %v9726
      %v9806 = vunpack.c.l.b16 %v9727
      %v9807 = vunpack.c.l.b16 %v9728
      %v9808 = vunpack.c.l.b16 %v9729
      %v9809 = vunpack.c.l.b16 %v9730
      %v9810 = vunpack.c.l.b16 %v9731
      %v9811 = vunpack.c.l.b16 %v9732
      %v9812 = vunpack.c.l.b16 %v9733
      %v9813 = vunpack.c.l.b16 %v9734
      %v9814 = vunpack.c.l.b16 %v9735
      %v9815 = vunpack.c.l.b16 %v9736
      %v9816 = vunpack.c.l.b16 %v9737
      %v9817 = vunpack.c.l.b16 %v9738
      %v9818 = vunpack.c.l.b16 %v9739
      %v9819 = vunpack.c.l.b16 %v9740
      %v9820 = vunpack.c.l.b16 %v9741
      %v9821 = vunpack.c.l.b16 %v9742
      %v9822 = vunpack.c.l.b16 %v9743
      %v9823 = vunpack.c.l.b16 %v9744
      %v9824 = vunpack.c.l.b16 %v9745
      %v9825 = vunpack.c.l.b16 %v9746
      %v9826 = vunpack.c.l.b16 %v9747
      %v9827 = vunpack.c.l.b16 %v9748
      %v9828 = vunpack.c.l.b16 %v9749
      %v9829 = vunpack.c.l.b16 %v9750
      %v9830 = vunpack.c.l.b16 %v9751
      %v9831 = vunpack.c.l.b16 %v9752
      %v9832 = vunpack.c.l.b16 %v9753
      %v9833 = vunpack.c.l.b16 %v9754
      %v9834 = vunpack.c.l.b16 %v9755
      %v9835 = vunpack.c.l.b16 %v9756
      %v9836 = vunpack.c.l.b16 %v9757
      %v9837 = vunpack.c.l.b16 %v9758
      %v9838 = vunpack.c.l.b16 %v9759
      %v9839 = vpack.c.b16 %v9803, %v9802
      %v9840 = vpack.c.b16 %v9805, %v9804
      %v9841 = vpack.c.b16 %v9807, %v9806
      %v9842 = vpack.c.b16 %v9809, %v9808
      %v9843 = vpack.c.b16 %v9811, %v9810
      %v9844 = vpack.c.b16 %v9813, %v9812
      %v9845 = vpack.c.b16 %v9815, %v9814
      %v9846 = vpack.c.b16 %v9817, %v9816
      %v9847 = vpack.c.b16 %v9819, %v9818
      %v9848 = vpack.c.b16 %v9821, %v9820
      %v9849 = vpack.c.b16 %v9823, %v9822
      %v9850 = vpack.c.b16 %v9825, %v9824
      %v9851 = vpack.c.b16 %v9827, %v9826
      %v9852 = vpack.c.b16 %v9829, %v9828
      %v9853 = vpack.c.b16 %v9831, %v9830
      %v9854 = vpack.c.b16 %v9833, %v9832
      %v9855 = vpack.c.b16 %v9835, %v9834
      %v9856 = vpack.c.b16 %v9837, %v9836
      %v9857 = vpack.c.b16 %v9838, %v9838
      %v9858 = vrot.slane %v9839, 2
      %v9859 = vrot.slane %v9840, 2
      %v9860 = vsel %vm3496, %v9858, %v9859
      %v9861 = vrot.slane %v9841, 2
      %v9862 = vsel %vm3496, %v9859, %v9861
      %v9863 = vrot.slane %v9842, 2
      %v9864 = vsel %vm3496, %v9861, %v9863
      %v9865 = vrot.slane %v9843, 2
      %v9866 = vsel %vm3496, %v9863, %v9865
      %v9867 = vrot.slane %v9844, 2
      %v9868 = vsel %vm3496, %v9865, %v9867
      %v9869 = vrot.slane %v9845, 2
      %v9870 = vsel %vm3496, %v9867, %v9869
      %v9871 = vrot.slane %v9846, 2
      %v9872 = vsel %vm3496, %v9869, %v9871
      %v9873 = vrot.slane %v9847, 2
      %v9874 = vsel %vm3496, %v9871, %v9873
      %v9875 = vrot.slane %v9848, 2
      %v9876 = vsel %vm3496, %v9873, %v9875
      %v9877 = vrot.slane %v9849, 2
      %v9878 = vsel %vm3496, %v9875, %v9877
      %v9879 = vrot.slane %v9850, 2
      %v9880 = vsel %vm3496, %v9877, %v9879
      %v9881 = vrot.slane %v9851, 2
      %v9882 = vsel %vm3496, %v9879, %v9881
      %v9883 = vrot.slane %v9852, 2
      %v9884 = vsel %vm3496, %v9881, %v9883
      %v9885 = vrot.slane %v9853, 2
      %v9886 = vsel %vm3496, %v9883, %v9885
      %v9887 = vrot.slane %v9854, 2
      %v9888 = vsel %vm3496, %v9885, %v9887
      %v9889 = vrot.slane %v9855, 2
      %v9890 = vsel %vm3496, %v9887, %v9889
      %v9891 = vrot.slane %v9856, 2
      %v9892 = vsel %vm3496, %v9889, %v9891
      %v9893 = vrot.slane %v9857, 2
      %v9894 = vsel %vm3496, %v9891, %v9893
      %v9899 = vunpack.c.l.b16 %v9761
      %v9900 = vunpack.c.l.b16 %v9762
      %v9901 = vunpack.c.l.b16 %v9763
      %v9902 = vunpack.c.l.b16 %v9764
      %v9903 = vpack.c.b16 %v9900, %v9899
      %v9904 = vpack.c.b16 %v9902, %v9901
      %v9908 = vsel %vm413, %v9860, 0
      %v9911 = vsel %vm413, %v9862, 0
      %v9914 = vsel %vm413, %v9864, 0
      %v9917 = vsel %vm413, %v9866, 0
      %v9920 = vsel %vm413, %v9868, 0
      %v9923 = vsel %vm413, %v9870, 0
      %v9926 = vsel %vm413, %v9872, 0
      %v9929 = vsel %vm413, %v9874, 0
      %v9932 = vsel %vm413, %v9876, 0
      %v9935 = vsel %vm413, %v9878, 0
      %v9938 = vsel %vm413, %v9880, 0
      %v9941 = vsel %vm413, %v9882, 0
      %v9944 = vsel %vm413, %v9884, 0
      %v9947 = vsel %vm413, %v9886, 0
      %v9950 = vsel %vm413, %v9888, 0
      %v9953 = vsel %vm413, %v9890, 0
      %v9956 = vsel %vm413, %v9892, 0
      %v9959 = vsel %vm413, %v9894, 0
      %9961 = vmatprep.subr.bf16.mxu0 0
      %9962 = vmatpush1.bf16.msra.mxu0 %v9903
      %9963 = vmatprep.subr.bf16.mxu0 0
      %9964 = vmatpush1.bf16.msra.mxu0 %v9904
      %9965 = vmatprep.subr.bf16.mxu0 0
      %9966 = vmatpush1.bf16.msra.mxu0 0
      %9967 = vmatprep.subr.bf16.mxu0 0
      %9968 = vmatpush1.bf16.msra.mxu0 0
      %9969 = vmatprep.subr.bf16.mxu0 0
      %9970 = vmatpush1.bf16.msra.mxu0 0
      %9971 = vmatprep.subr.bf16.mxu0 0
      %9972 = vmatpush1.bf16.msra.mxu0 0
      %9973 = vmatprep.subr.bf16.mxu0 0
      %9974 = vmatpush1.bf16.msra.mxu0 0
      %9975 = vmatprep.subr.bf16.mxu0 0
      %9976 = vmatpush1.bf16.msra.mxu0 0
      %9977 = vmatprep.subr.bf16.mxu0 0
      %9978 = vmatpush1.bf16.msra.mxu0 0
      %9979 = vmatprep.subr.bf16.mxu0 0
      %9980 = vmatpush1.bf16.msra.mxu0 0
      %9981 = vmatprep.subr.bf16.mxu0 0
      %9982 = vmatpush1.bf16.msra.mxu0 0
      %9983 = vmatprep.subr.bf16.mxu0 0
      %9984 = vmatpush1.bf16.msra.mxu0 0
      %9985 = vmatprep.subr.bf16.mxu0 0
      %9986 = vmatpush1.bf16.msra.mxu0 0
      %9987 = vmatprep.subr.bf16.mxu0 0
      %9988 = vmatpush1.bf16.msra.mxu0 0
      %9989 = vmatprep.subr.bf16.mxu0 0
      %9990 = vmatpush1.bf16.msra.mxu0 0
      %9991 = vmatprep.subr.bf16.mxu0 0
      %9992 = vmatpush1.bf16.msra.mxu0 0
      %9993 = vmatprep.mubr.bf16.mxu0 0
      %9994 = vmatmul.mubr.bf16.gmra.mrb[0].mxu0 %v9908
      %v9995 = vpop.f32.mrb[0].mxu0
      %v9996 = vadd.f32 0.0, %v9995
      %v9997 = vpop.f32.mrb[0].mxu0
      %v9998 = vpop.f32.mrb[0].mxu0
      %v9999 = vadd.f32 0.0, %v9998
      %v10000 = vpop.f32.mrb[0].mxu0
      %10001 = vmatprep.mubr.bf16.mxu0 0
      %10002 = vmatmul.mubr.bf16.gmra.mrb[0].mxu0 %v9911
      %v10003 = vpop.f32.mrb[0].mxu0
      %v10004 = vadd.f32 0.0, %v10003
      %v10005 = vpop.f32.mrb[0].mxu0
      %v10006 = vpop.f32.mrb[0].mxu0
      %v10007 = vadd.f32 0.0, %v10006
      %v10008 = vpop.f32.mrb[0].mxu0
      %10009 = vmatprep.mubr.bf16.mxu0 0
      %10010 = vmatmul.mubr.bf16.gmra.mrb[0].mxu0 %v9914
      %v10011 = vpop.f32.mrb[0].mxu0
      %v10012 = vadd.f32 0.0, %v10011
      %v10013 = vpop.f32.mrb[0].mxu0
      %v10014 = vpop.f32.mrb[0].mxu0
      %v10015 = vadd.f32 0.0, %v10014
      %v10016 = vpop.f32.mrb[0].mxu0
      %10017 = vmatprep.mubr.bf16.mxu0 0
      %10018 = vmatmul.mubr.bf16.gmra.mrb[0].mxu0 %v9917
      %v10019 = vpop.f32.mrb[0].mxu0
      %v10020 = vadd.f32 0.0, %v10019
      %v10021 = vpop.f32.mrb[0].mxu0
      %v10022 = vpop.f32.mrb[0].mxu0
      %v10023 = vadd.f32 0.0, %v10022
      %v10024 = vpop.f32.mrb[0].mxu0
      %10025 = vmatprep.mubr.bf16.mxu0 0
      %10026 = vmatmul.mubr.bf16.gmra.mrb[0].mxu0 %v9920
      %v10027 = vpop.f32.mrb[0].mxu0
      %v10028 = vadd.f32 0.0, %v10027
      %v10029 = vpop.f32.mrb[0].mxu0
      %v10030 = vpop.f32.mrb[0].mxu0
      %v10031 = vadd.f32 0.0, %v10030
      %v10032 = vpop.f32.mrb[0].mxu0
      %10033 = vmatprep.mubr.bf16.mxu0 0
      %10034 = vmatmul.mubr.bf16.gmra.mrb[0].mxu0 %v9923
      %v10035 = vpop.f32.mrb[0].mxu0
      %v10036 = vadd.f32 0.0, %v10035
      %v10037 = vpop.f32.mrb[0].mxu0
      %v10038 = vpop.f32.mrb[0].mxu0
      %v10039 = vadd.f32 0.0, %v10038
      %v10040 = vpop.f32.mrb[0].mxu0
      %10041 = vmatprep.mubr.bf16.mxu0 0
      %10042 = vmatmul.mubr.bf16.gmra.mrb[0].mxu0 %v9926
      %v10043 = vpop.f32.mrb[0].mxu0
      %v10044 = vadd.f32 0.0, %v10043
      %v10045 = vpop.f32.mrb[0].mxu0
      %v10046 = vpop.f32.mrb[0].mxu0
      %v10047 = vadd.f32 0.0, %v10046
      %v10048 = vpop.f32.mrb[0].mxu0
      %10049 = vmatprep.mubr.bf16.mxu0 0
      %10050 = vmatmul.mubr.bf16.gmra.mrb[0].mxu0 %v9929
      %v10051 = vpop.f32.mrb[0].mxu0
      %v10052 = vadd.f32 0.0, %v10051
      %v10053 = vpop.f32.mrb[0].mxu0
      %v10054 = vpop.f32.mrb[0].mxu0
      %v10055 = vadd.f32 0.0, %v10054
      %v10056 = vpop.f32.mrb[0].mxu0
      %10057 = vmatprep.mubr.bf16.mxu0 0
      %10058 = vmatmul.mubr.bf16.gmra.mrb[0].mxu0 %v9932
      %v10059 = vpop.f32.mrb[0].mxu0
      %v10060 = vadd.f32 0.0, %v10059
      %v10061 = vpop.f32.mrb[0].mxu0
      %v10062 = vpop.f32.mrb[0].mxu0
      %v10063 = vadd.f32 0.0, %v10062
      %v10064 = vpop.f32.mrb[0].mxu0
      %10065 = vmatprep.mubr.bf16.mxu0 0
      %10066 = vmatmul.mubr.bf16.gmra.mrb[0].mxu0 %v9935
      %v10067 = vpop.f32.mrb[0].mxu0
      %v10068 = vadd.f32 0.0, %v10067
      %v10069 = vpop.f32.mrb[0].mxu0
      %v10070 = vpop.f32.mrb[0].mxu0
      %v10071 = vadd.f32 0.0, %v10070
      %v10072 = vpop.f32.mrb[0].mxu0
      %10073 = vmatprep.mubr.bf16.mxu0 0
      %10074 = vmatmul.mubr.bf16.gmra.mrb[0].mxu0 %v9938
      %v10075 = vpop.f32.mrb[0].mxu0
      %v10076 = vadd.f32 0.0, %v10075
      %v10077 = vpop.f32.mrb[0].mxu0
      %v10078 = vpop.f32.mrb[0].mxu0
      %v10079 = vadd.f32 0.0, %v10078
      %v10080 = vpop.f32.mrb[0].mxu0
      %10081 = vmatprep.mubr.bf16.mxu0 0
      %10082 = vmatmul.mubr.bf16.gmra.mrb[0].mxu0 %v9941
      %v10083 = vpop.f32.mrb[0].mxu0
      %v10084 = vadd.f32 0.0, %v10083
      %v10085 = vpop.f32.mrb[0].mxu0
      %v10086 = vpop.f32.mrb[0].mxu0
      %v10087 = vadd.f32 0.0, %v10086
      %v10088 = vpop.f32.mrb[0].mxu0
      %10089 = vmatprep.mubr.bf16.mxu0 0
      %10090 = vmatmul.mubr.bf16.gmra.mrb[0].mxu0 %v9944
      %v10091 = vpop.f32.mrb[0].mxu0
      %v10092 = vadd.f32 0.0, %v10091
      %v10093 = vpop.f32.mrb[0].mxu0
      %v10094 = vpop.f32.mrb[0].mxu0
      %v10095 = vadd.f32 0.0, %v10094
      %v10096 = vpop.f32.mrb[0].mxu0
      %10097 = vmatprep.mubr.bf16.mxu0 0
      %10098 = vmatmul.mubr.bf16.gmra.mrb[0].mxu0 %v9947
      %v10099 = vpop.f32.mrb[0].mxu0
      %v10100 = vadd.f32 0.0, %v10099
      %v10101 = vpop.f32.mrb[0].mxu0
      %v10102 = vpop.f32.mrb[0].mxu0
      %v10103 = vadd.f32 0.0, %v10102
      %v10104 = vpop.f32.mrb[0].mxu0
      %10105 = vmatprep.mubr.bf16.mxu0 0
      %10106 = vmatmul.mubr.bf16.gmra.mrb[0].mxu0 %v9950
      %v10107 = vpop.f32.mrb[0].mxu0
      %v10108 = vadd.f32 0.0, %v10107
      %v10109 = vpop.f32.mrb[0].mxu0
      %v10110 = vpop.f32.mrb[0].mxu0
      %v10111 = vadd.f32 0.0, %v10110
      %v10112 = vpop.f32.mrb[0].mxu0
      %10113 = vmatprep.mubr.bf16.mxu0 0
      %10114 = vmatmul.mubr.bf16.gmra.mrb[0].mxu0 %v9953
      %v10115 = vpop.f32.mrb[0].mxu0
      %v10116 = vadd.f32 0.0, %v10115
      %v10117 = vpop.f32.mrb[0].mxu0
      %v10118 = vpop.f32.mrb[0].mxu0
      %v10119 = vadd.f32 0.0, %v10118
      %v10120 = vpop.f32.mrb[0].mxu0
      %10121 = vmatprep.mubr.bf16.mxu0 0
      %10122 = vmatmul.mubr.bf16.gmra.mrb[0].mxu0 %v9956
      %v10123 = vpop.f32.mrb[0].mxu0
      %v10124 = vadd.f32 0.0, %v10123
      %v10125 = vpop.f32.mrb[0].mxu0
      %v10126 = vpop.f32.mrb[0].mxu0
      %v10127 = vadd.f32 0.0, %v10126
      %v10128 = vpop.f32.mrb[0].mxu0
      %10129 = vmatprep.mubr.bf16.mxu0 0
      %10130 = vmatmul.mubr.bf16.gmra.mrb[0].mxu0 %v9959
      %v10131 = vpop.f32.mrb[0].mxu0
      %v10132 = vadd.f32 0.0, %v10131
      %v10133 = vpop.f32.mrb[0].mxu0
      %v10134 = vpop.f32.mrb[0].mxu0
      %v10135 = vadd.f32 0.0, %v10134
      %v10136 = vpop.f32.mrb[0].mxu0
      %10137 = vdwg.mxu0
      %v10138 = vld [vmem:[#allocation4] sm:$0xff]
      %v10139 = vld [vmem:[#allocation4 + $0x8] sm:$0xff]
      %v10140 = vld [vmem:[#allocation4 + $0x10] sm:$0xff]
      %v10141 = vld [vmem:[#allocation4 + $0x18] sm:$0xff]
      %v10142 = vld [vmem:[#allocation4 + $0x20] sm:$0xff]
      %v10143 = vld [vmem:[#allocation4 + $0x28] sm:$0xff]
      %v10144 = vld [vmem:[#allocation4 + $0x30] sm:$0xff]
      %v10145 = vld [vmem:[#allocation4 + $0x38] sm:$0xff]
      %v10146 = vld [vmem:[#allocation4 + $0x40] sm:$0xff]
      %v10147 = vld [vmem:[#allocation4 + $0x48] sm:$0xff]
      %v10148 = vld [vmem:[#allocation4 + $0x50] sm:$0xff]
      %v10149 = vld [vmem:[#allocation4 + $0x58] sm:$0xff]
      %v10150 = vld [vmem:[#allocation4 + $0x60] sm:$0xff]
      %v10151 = vld [vmem:[#allocation4 + $0x68] sm:$0xff]
      %v10152 = vld [vmem:[#allocation4 + $0x70] sm:$0xff]
      %v10153 = vld [vmem:[#allocation4 + $0x78] sm:$0xff]
      %v10154 = vld [vmem:[#allocation4 + $0x80] sm:$0xff]
      %v10155 = vld [vmem:[#allocation4 + $0x88] sm:$0xff]
      %v10156 = vld [vmem:[#allocation4 + $0x90] sm:$0xff]
      %v10157 = vld [vmem:[#allocation4 + $0x98] sm:$0xff]
      %v10158 = vld [vmem:[#allocation4 + $0xa0] sm:$0xff]
      %v10159 = vld [vmem:[#allocation4 + $0xa8] sm:$0xff]
      %v10160 = vld [vmem:[#allocation4 + $0xb0] sm:$0xff]
      %v10161 = vld [vmem:[#allocation4 + $0xb8] sm:$0xff]
      %v10162 = vld [vmem:[#allocation4 + $0xc0] sm:$0xff]
      %v10163 = vld [vmem:[#allocation4 + $0xc8] sm:$0xff]
      %v10164 = vld [vmem:[#allocation4 + $0xd0] sm:$0xff]
      %v10165 = vld [vmem:[#allocation4 + $0xd8] sm:$0xff]
      %v10166 = vld [vmem:[#allocation4 + $0xe0] sm:$0xff]
      %v10167 = vld [vmem:[#allocation4 + $0xe8] sm:$0xff]
      %v10168 = vld [vmem:[#allocation4 + $0xf0] sm:$0xff]
      %v10169 = vld [vmem:[#allocation4 + $0xf8] sm:$0xff]
      %v10170 = vld [vmem:[#allocation4 + $0x100] sm:$0xff]
      %v10171 = vld [vmem:[#allocation4 + $0x108] sm:$0xff]
      %v10172 = vld [vmem:[#allocation4 + $0x110] sm:$0xff]
      %v10173 = vld [vmem:[#allocation4 + $0x118] sm:$0x3f]
      %v10174 = vadd.f32 %v10138, %v9996
      %v10175 = vadd.f32 %v10139, %v9999
      %v10176 = vadd.f32 %v10140, %v10004
      %v10177 = vadd.f32 %v10141, %v10007
      %v10178 = vadd.f32 %v10142, %v10012
      %v10179 = vadd.f32 %v10143, %v10015
      %v10180 = vadd.f32 %v10144, %v10020
      %v10181 = vadd.f32 %v10145, %v10023
      %v10182 = vadd.f32 %v10146, %v10028
      %v10183 = vadd.f32 %v10147, %v10031
      %v10184 = vadd.f32 %v10148, %v10036
      %v10185 = vadd.f32 %v10149, %v10039
      %v10186 = vadd.f32 %v10150, %v10044
      %v10187 = vadd.f32 %v10151, %v10047
      %v10188 = vadd.f32 %v10152, %v10052
      %v10189 = vadd.f32 %v10153, %v10055
      %v10190 = vadd.f32 %v10154, %v10060
      %v10191 = vadd.f32 %v10155, %v10063
      %v10192 = vadd.f32 %v10156, %v10068
      %v10193 = vadd.f32 %v10157, %v10071
      %v10194 = vadd.f32 %v10158, %v10076
      %v10195 = vadd.f32 %v10159, %v10079
      %v10196 = vadd.f32 %v10160, %v10084
      %v10197 = vadd.f32 %v10161, %v10087
      %v10198 = vadd.f32 %v10162, %v10092
      %v10199 = vadd.f32 %v10163, %v10095
      %v10200 = vadd.f32 %v10164, %v10100
      %v10201 = vadd.f32 %v10165, %v10103
      %v10202 = vadd.f32 %v10166, %v10108
      %v10203 = vadd.f32 %v10167, %v10111
      %v10204 = vadd.f32 %v10168, %v10116
      %v10205 = vadd.f32 %v10169, %v10119
      %v10206 = vadd.f32 %v10170, %v10124
      %v10207 = vadd.f32 %v10171, %v10127
      %v10208 = vadd.f32 %v10172, %v10132
      %v10209 = vadd.f32 %v10173, %v10135
      %10210 = vst.msk [vmem:[#allocation4] sm:$0xff] %vm413, %v10174
      %10211 = vst.msk [vmem:[#allocation4 + $0x8] sm:$0xff] %vm413, %v10175
      %10212 = vst.msk [vmem:[#allocation4 + $0x10] sm:$0xff] %vm413, %v10176
      %10213 = vst.msk [vmem:[#allocation4 + $0x18] sm:$0xff] %vm413, %v10177
      %10214 = vst.msk [vmem:[#allocation4 + $0x20] sm:$0xff] %vm413, %v10178
      %10215 = vst.msk [vmem:[#allocation4 + $0x28] sm:$0xff] %vm413, %v10179
      %10216 = vst.msk [vmem:[#allocation4 + $0x30] sm:$0xff] %vm413, %v10180
      %10217 = vst.msk [vmem:[#allocation4 + $0x38] sm:$0xff] %vm413, %v10181
      %10218 = vst.msk [vmem:[#allocation4 + $0x40] sm:$0xff] %vm413, %v10182
      %10219 = vst.msk [vmem:[#allocation4 + $0x48] sm:$0xff] %vm413, %v10183
      %10220 = vst.msk [vmem:[#allocation4 + $0x50] sm:$0xff] %vm413, %v10184
      %10221 = vst.msk [vmem:[#allocation4 + $0x58] sm:$0xff] %vm413, %v10185
      %10222 = vst.msk [vmem:[#allocation4 + $0x60] sm:$0xff] %vm413, %v10186
      %10223 = vst.msk [vmem:[#allocation4 + $0x68] sm:$0xff] %vm413, %v10187
      %10224 = vst.msk [vmem:[#allocation4 + $0x70] sm:$0xff] %vm413, %v10188
      %10225 = vst.msk [vmem:[#allocation4 + $0x78] sm:$0xff] %vm413, %v10189
      %10226 = vst.msk [vmem:[#allocation4 + $0x80] sm:$0xff] %vm413, %v10190
      %10227 = vst.msk [vmem:[#allocation4 + $0x88] sm:$0xff] %vm413, %v10191
      %10228 = vst.msk [vmem:[#allocation4 + $0x90] sm:$0xff] %vm413, %v10192
      %10229 = vst.msk [vmem:[#allocation4 + $0x98] sm:$0xff] %vm413, %v10193
      %10230 = vst.msk [vmem:[#allocation4 + $0xa0] sm:$0xff] %vm413, %v10194
      %10231 = vst.msk [vmem:[#allocation4 + $0xa8] sm:$0xff] %vm413, %v10195
      %10232 = vst.msk [vmem:[#allocation4 + $0xb0] sm:$0xff] %vm413, %v10196
      %10233 = vst.msk [vmem:[#allocation4 + $0xb8] sm:$0xff] %vm413, %v10197
      %10234 = vst.msk [vmem:[#allocation4 + $0xc0] sm:$0xff] %vm413, %v10198
      %10235 = vst.msk [vmem:[#allocation4 + $0xc8] sm:$0xff] %vm413, %v10199
      %10236 = vst.msk [vmem:[#allocation4 + $0xd0] sm:$0xff] %vm413, %v10200
      %10237 = vst.msk [vmem:[#allocation4 + $0xd8] sm:$0xff] %vm413, %v10201
      %10238 = vst.msk [vmem:[#allocation4 + $0xe0] sm:$0xff] %vm413, %v10202
      %10239 = vst.msk [vmem:[#allocation4 + $0xe8] sm:$0xff] %vm413, %v10203
      %10240 = vst.msk [vmem:[#allocation4 + $0xf0] sm:$0xff] %vm413, %v10204
      %10241 = vst.msk [vmem:[#allocation4 + $0xf8] sm:$0xff] %vm413, %v10205
      %10242 = vst.msk [vmem:[#allocation4 + $0x100] sm:$0xff] %vm413, %v10206
      %10243 = vst.msk [vmem:[#allocation4 + $0x108] sm:$0xff] %vm413, %v10207
      %10244 = vst.msk [vmem:[#allocation4 + $0x110] sm:$0xff] %vm413, %v10208
      %10245 = vst.msk [vmem:[#allocation4 + $0x118] sm:$0x3f] %vm6887, %v10209
      %v10246 = vld [vmem:[#allocation3 + $0x10] sm:$0xc]
      %v10247 = vld [vmem:[#allocation3 + $0x14] sm:$0xf]
      %v10248 = vld [vmem:[#allocation3 + $0x18] sm:$0xf]
      %v10249 = vld [vmem:[#allocation3 + $0x1c] sm:$0xf]
      %v10250 = vld [vmem:[#allocation3 + $0x20] sm:$0xf]
      %v10251 = vld [vmem:[#allocation3 + $0x24] sm:$0xf]
      %v10252 = vld [vmem:[#allocation3 + $0x28] sm:$0xf]
      %v10253 = vld [vmem:[#allocation3 + $0x2c] sm:$0xf]
      %v10254 = vld [vmem:[#allocation3 + $0x30] sm:$0xf]
      %v10255 = vld [vmem:[#allocation3 + $0x34] sm:$0xf]
      %v10256 = vld [vmem:[#allocation3 + $0x38] sm:$0xf]
      %v10257 = vld [vmem:[#allocation3 + $0x3c] sm:$0xf]
      %v10258 = vld [vmem:[#allocation3 + $0x40] sm:$0xf]
      %v10259 = vld [vmem:[#allocation3 + $0x44] sm:$0xf]
      %v10260 = vld [vmem:[#allocation3 + $0x48] sm:$0xf]
      %v10261 = vld [vmem:[#allocation3 + $0x4c] sm:$0xf]
      %v10262 = vld [vmem:[#allocation3 + $0x50] sm:$0xf]
      %v10263 = vld [vmem:[#allocation3 + $0x54] sm:$0xf]
      %v10264 = vld [vmem:[#allocation3 + $0x58] sm:$0xf]
      %v10265 = vld [vmem:[#allocation3 + $0x5c] sm:$0xf]
      %v10266 = vld [vmem:[#allocation3 + $0x60] sm:$0xf]
      %v10267 = vld [vmem:[#allocation3 + $0x64] sm:$0xf]
      %v10268 = vld [vmem:[#allocation3 + $0x68] sm:$0xf]
      %v10269 = vld [vmem:[#allocation3 + $0x6c] sm:$0xf]
      %v10270 = vld [vmem:[#allocation3 + $0x70] sm:$0xf]
      %v10271 = vld [vmem:[#allocation3 + $0x74] sm:$0xf]
      %v10272 = vld [vmem:[#allocation3 + $0x78] sm:$0xf]
      %v10273 = vld [vmem:[#allocation3 + $0x7c] sm:$0xf]
      %v10274 = vld [vmem:[#allocation3 + $0x80] sm:$0xf]
      %v10275 = vld [vmem:[#allocation3 + $0x84] sm:$0xf]
      %v10276 = vld [vmem:[#allocation3 + $0x88] sm:$0xf]
      %v10277 = vld [vmem:[#allocation3 + $0x8c] sm:$0xf]
      %v10278 = vld [vmem:[#allocation3 + $0x90] sm:$0xf]
      %v10279 = vld [vmem:[#allocation3 + $0x94] sm:$0xf]
      %v10280 = vld [vmem:[#allocation3 + $0x98] sm:$0xf]
      %v10281 = vld [vmem:[#allocation3 + $0x9c] sm:$0xf]
      %v10282 = vld [vmem:[#allocation3 + $0xa0] sm:$0x3]
      %s10283 = scalar_lea.vmem %s4, 112
      %v10284 = vld [vmem:[%s10283] sm:$0xf]
      %v10285 = vld [vmem:[%s10283 + $0x4] sm:$0xf]
      %v10286 = vld [vmem:[%s10283 + $0x8] sm:$0xf]
      %v10287 = vld [vmem:[%s10283 + $0xc] sm:$0xf]
      %v10325 = vunpack.c.l.b16 %v10246
      %v10326 = vunpack.c.l.b16 %v10247
      %v10327 = vunpack.c.l.b16 %v10248
      %v10328 = vunpack.c.l.b16 %v10249
      %v10329 = vunpack.c.l.b16 %v10250
      %v10330 = vunpack.c.l.b16 %v10251
      %v10331 = vunpack.c.l.b16 %v10252
      %v10332 = vunpack.c.l.b16 %v10253
      %v10333 = vunpack.c.l.b16 %v10254
      %v10334 = vunpack.c.l.b16 %v10255
      %v10335 = vunpack.c.l.b16 %v10256
      %v10336 = vunpack.c.l.b16 %v10257
      %v10337 = vunpack.c.l.b16 %v10258
      %v10338 = vunpack.c.l.b16 %v10259
      %v10339 = vunpack.c.l.b16 %v10260
      %v10340 = vunpack.c.l.b16 %v10261
      %v10341 = vunpack.c.l.b16 %v10262
      %v10342 = vunpack.c.l.b16 %v10263
      %v10343 = vunpack.c.l.b16 %v10264
      %v10344 = vunpack.c.l.b16 %v10265
      %v10345 = vunpack.c.l.b16 %v10266
      %v10346 = vunpack.c.l.b16 %v10267
      %v10347 = vunpack.c.l.b16 %v10268
      %v10348 = vunpack.c.l.b16 %v10269
      %v10349 = vunpack.c.l.b16 %v10270
      %v10350 = vunpack.c.l.b16 %v10271
      %v10351 = vunpack.c.l.b16 %v10272
      %v10352 = vunpack.c.l.b16 %v10273
      %v10353 = vunpack.c.l.b16 %v10274
      %v10354 = vunpack.c.l.b16 %v10275
      %v10355 = vunpack.c.l.b16 %v10276
      %v10356 = vunpack.c.l.b16 %v10277
      %v10357 = vunpack.c.l.b16 %v10278
      %v10358 = vunpack.c.l.b16 %v10279
      %v10359 = vunpack.c.l.b16 %v10280
      %v10360 = vunpack.c.l.b16 %v10281
      %v10361 = vunpack.c.l.b16 %v10282
      %v10362 = vpack.c.b16 %v10326, %v10325
      %v10363 = vpack.c.b16 %v10328, %v10327
      %v10364 = vpack.c.b16 %v10330, %v10329
      %v10365 = vpack.c.b16 %v10332, %v10331
      %v10366 = vpack.c.b16 %v10334, %v10333
      %v10367 = vpack.c.b16 %v10336, %v10335
      %v10368 = vpack.c.b16 %v10338, %v10337
      %v10369 = vpack.c.b16 %v10340, %v10339
      %v10370 = vpack.c.b16 %v10342, %v10341
      %v10371 = vpack.c.b16 %v10344, %v10343
      %v10372 = vpack.c.b16 %v10346, %v10345
      %v10373 = vpack.c.b16 %v10348, %v10347
      %v10374 = vpack.c.b16 %v10350, %v10349
      %v10375 = vpack.c.b16 %v10352, %v10351
      %v10376 = vpack.c.b16 %v10354, %v10353
      %v10377 = vpack.c.b16 %v10356, %v10355
      %v10378 = vpack.c.b16 %v10358, %v10357
      %v10379 = vpack.c.b16 %v10360, %v10359
      %v10380 = vpack.c.b16 %v10361, %v10361
      %v10382 = vshrl.u32 %v10362, 16
      %v10384 = vrot.slane %v10382, 2
      %v10385 = vshll.u32 %v10362, 16
      %v10387 = vrot.slane %v10385, 3
      %v10388 = vor.u32 %v10384, %v10387
      %v10390 = vshrl.u32 %v10363, 16
      %v10392 = vrot.slane %v10390, 2
      %v10393 = vshll.u32 %v10363, 16
      %v10395 = vrot.slane %v10393, 3
      %v10396 = vor.u32 %v10392, %v10395
      %v10397 = vsel %vm4676, %v10388, %v10396
      %v10399 = vshrl.u32 %v10364, 16
      %v10401 = vrot.slane %v10399, 2
      %v10402 = vshll.u32 %v10364, 16
      %v10404 = vrot.slane %v10402, 3
      %v10405 = vor.u32 %v10401, %v10404
      %v10406 = vsel %vm4676, %v10396, %v10405
      %v10408 = vshrl.u32 %v10365, 16
      %v10410 = vrot.slane %v10408, 2
      %v10411 = vshll.u32 %v10365, 16
      %v10413 = vrot.slane %v10411, 3
      %v10414 = vor.u32 %v10410, %v10413
      %v10415 = vsel %vm4676, %v10405, %v10414
      %v10417 = vshrl.u32 %v10366, 16
      %v10419 = vrot.slane %v10417, 2
      %v10420 = vshll.u32 %v10366, 16
      %v10422 = vrot.slane %v10420, 3
      %v10423 = vor.u32 %v10419, %v10422
      %v10424 = vsel %vm4676, %v10414, %v10423
      %v10426 = vshrl.u32 %v10367, 16
      %v10428 = vrot.slane %v10426, 2
      %v10429 = vshll.u32 %v10367, 16
      %v10431 = vrot.slane %v10429, 3
      %v10432 = vor.u32 %v10428, %v10431
      %v10433 = vsel %vm4676, %v10423, %v10432
      %v10435 = vshrl.u32 %v10368, 16
      %v10437 = vrot.slane %v10435, 2
      %v10438 = vshll.u32 %v10368, 16
      %v10440 = vrot.slane %v10438, 3
      %v10441 = vor.u32 %v10437, %v10440
      %v10442 = vsel %vm4676, %v10432, %v10441
      %v10444 = vshrl.u32 %v10369, 16
      %v10446 = vrot.slane %v10444, 2
      %v10447 = vshll.u32 %v10369, 16
      %v10449 = vrot.slane %v10447, 3
      %v10450 = vor.u32 %v10446, %v10449
      %v10451 = vsel %vm4676, %v10441, %v10450
      %v10453 = vshrl.u32 %v10370, 16
      %v10455 = vrot.slane %v10453, 2
      %v10456 = vshll.u32 %v10370, 16
      %v10458 = vrot.slane %v10456, 3
      %v10459 = vor.u32 %v10455, %v10458
      %v10460 = vsel %vm4676, %v10450, %v10459
      %v10462 = vshrl.u32 %v10371, 16
      %v10464 = vrot.slane %v10462, 2
      %v10465 = vshll.u32 %v10371, 16
      %v10467 = vrot.slane %v10465, 3
      %v10468 = vor.u32 %v10464, %v10467
      %v10469 = vsel %vm4676, %v10459, %v10468
      %v10471 = vshrl.u32 %v10372, 16
      %v10473 = vrot.slane %v10471, 2
      %v10474 = vshll.u32 %v10372, 16
      %v10476 = vrot.slane %v10474, 3
      %v10477 = vor.u32 %v10473, %v10476
      %v10478 = vsel %vm4676, %v10468, %v10477
      %v10480 = vshrl.u32 %v10373, 16
      %v10482 = vrot.slane %v10480, 2
      %v10483 = vshll.u32 %v10373, 16
      %v10485 = vrot.slane %v10483, 3
      %v10486 = vor.u32 %v10482, %v10485
      %v10487 = vsel %vm4676, %v10477, %v10486
      %v10489 = vshrl.u32 %v10374, 16
      %v10491 = vrot.slane %v10489, 2
      %v10492 = vshll.u32 %v10374, 16
      %v10494 = vrot.slane %v10492, 3
      %v10495 = vor.u32 %v10491, %v10494
      %v10496 = vsel %vm4676, %v10486, %v10495
      %v10498 = vshrl.u32 %v10375, 16
      %v10500 = vrot.slane %v10498, 2
      %v10501 = vshll.u32 %v10375, 16
      %v10503 = vrot.slane %v10501, 3
      %v10504 = vor.u32 %v10500, %v10503
      %v10505 = vsel %vm4676, %v10495, %v10504
      %v10507 = vshrl.u32 %v10376, 16
      %v10509 = vrot.slane %v10507, 2
      %v10510 = vshll.u32 %v10376, 16
      %v10512 = vrot.slane %v10510, 3
      %v10513 = vor.u32 %v10509, %v10512
      %v10514 = vsel %vm4676, %v10504, %v10513
      %v10516 = vshrl.u32 %v10377, 16
      %v10518 = vrot.slane %v10516, 2
      %v10519 = vshll.u32 %v10377, 16
      %v10521 = vrot.slane %v10519, 3
      %v10522 = vor.u32 %v10518, %v10521
      %v10523 = vsel %vm4676, %v10513, %v10522
      %v10525 = vshrl.u32 %v10378, 16
      %v10527 = vrot.slane %v10525, 2
      %v10528 = vshll.u32 %v10378, 16
      %v10530 = vrot.slane %v10528, 3
      %v10531 = vor.u32 %v10527, %v10530
      %v10532 = vsel %vm4676, %v10522, %v10531
      %v10534 = vshrl.u32 %v10379, 16
      %v10536 = vrot.slane %v10534, 2
      %v10537 = vshll.u32 %v10379, 16
      %v10539 = vrot.slane %v10537, 3
      %v10540 = vor.u32 %v10536, %v10539
      %v10541 = vsel %vm4676, %v10531, %v10540
      %v10543 = vshrl.u32 %v10380, 16
      %v10545 = vrot.slane %v10543, 2
      %v10546 = vshll.u32 %v10380, 16
      %v10548 = vrot.slane %v10546, 3
      %v10549 = vor.u32 %v10545, %v10548
      %v10550 = vsel %vm4676, %v10540, %v10549
      %v10555 = vunpack.c.l.b16 %v10284
      %v10556 = vunpack.c.l.b16 %v10285
      %v10557 = vunpack.c.l.b16 %v10286
      %v10558 = vunpack.c.l.b16 %v10287
      %v10559 = vpack.c.b16 %v10556, %v10555
      %v10560 = vpack.c.b16 %v10558, %v10557
      %v10564 = vsel %vm413, %v10397, 0
      %v10567 = vsel %vm413, %v10406, 0
      %v10570 = vsel %vm413, %v10415, 0
      %v10573 = vsel %vm413, %v10424, 0
      %v10576 = vsel %vm413, %v10433, 0
      %v10579 = vsel %vm413, %v10442, 0
      %v10582 = vsel %vm413, %v10451, 0
      %v10585 = vsel %vm413, %v10460, 0
      %v10588 = vsel %vm413, %v10469, 0
      %v10591 = vsel %vm413, %v10478, 0
      %v10594 = vsel %vm413, %v10487, 0
      %v10597 = vsel %vm413, %v10496, 0
      %v10600 = vsel %vm413, %v10505, 0
      %v10603 = vsel %vm413, %v10514, 0
      %v10606 = vsel %vm413, %v10523, 0
      %v10609 = vsel %vm413, %v10532, 0
      %v10612 = vsel %vm413, %v10541, 0
      %v10615 = vsel %vm413, %v10550, 0
      %10617 = vmatprep.subr.bf16.mxu0 0
      %10618 = vmatpush1.bf16.msra.mxu0 %v10559
      %10619 = vmatprep.subr.bf16.mxu0 0
      %10620 = vmatpush1.bf16.msra.mxu0 %v10560
      %10621 = vmatprep.subr.bf16.mxu0 0
      %10622 = vmatpush1.bf16.msra.mxu0 0
      %10623 = vmatprep.subr.bf16.mxu0 0
      %10624 = vmatpush1.bf16.msra.mxu0 0
      %10625 = vmatprep.subr.bf16.mxu0 0
      %10626 = vmatpush1.bf16.msra.mxu0 0
      %10627 = vmatprep.subr.bf16.mxu0 0
      %10628 = vmatpush1.bf16.msra.mxu0 0
      %10629 = vmatprep.subr.bf16.mxu0 0
      %10630 = vmatpush1.bf16.msra.mxu0 0
      %10631 = vmatprep.subr.bf16.mxu0 0
      %10632 = vmatpush1.bf16.msra.mxu0 0
      %10633 = vmatprep.subr.bf16.mxu0 0
      %10634 = vmatpush1.bf16.msra.mxu0 0
      %10635 = vmatprep.subr.bf16.mxu0 0
      %10636 = vmatpush1.bf16.msra.mxu0 0
      %10637 = vmatprep.subr.bf16.mxu0 0
      %10638 = vmatpush1.bf16.msra.mxu0 0
      %10639 = vmatprep.subr.bf16.mxu0 0
      %10640 = vmatpush1.bf16.msra.mxu0 0
      %10641 = vmatprep.subr.bf16.mxu0 0
      %10642 = vmatpush1.bf16.msra.mxu0 0
      %10643 = vmatprep.subr.bf16.mxu0 0
      %10644 = vmatpush1.bf16.msra.mxu0 0
      %10645 = vmatprep.subr.bf16.mxu0 0
      %10646 = vmatpush1.bf16.msra.mxu0 0
      %10647 = vmatprep.subr.bf16.mxu0 0
      %10648 = vmatpush1.bf16.msra.mxu0 0
      %10649 = vmatprep.mubr.bf16.mxu0 0
      %10650 = vmatmul.mubr.bf16.gmra.mrb[0].mxu0 %v10564
      %v10651 = vpop.f32.mrb[0].mxu0
      %v10652 = vadd.f32 0.0, %v10651
      %v10653 = vpop.f32.mrb[0].mxu0
      %v10654 = vpop.f32.mrb[0].mxu0
      %v10655 = vadd.f32 0.0, %v10654
      %v10656 = vpop.f32.mrb[0].mxu0
      %10657 = vmatprep.mubr.bf16.mxu0 0
      %10658 = vmatmul.mubr.bf16.gmra.mrb[0].mxu0 %v10567
      %v10659 = vpop.f32.mrb[0].mxu0
      %v10660 = vadd.f32 0.0, %v10659
      %v10661 = vpop.f32.mrb[0].mxu0
      %v10662 = vpop.f32.mrb[0].mxu0
      %v10663 = vadd.f32 0.0, %v10662
      %v10664 = vpop.f32.mrb[0].mxu0
      %10665 = vmatprep.mubr.bf16.mxu0 0
      %10666 = vmatmul.mubr.bf16.gmra.mrb[0].mxu0 %v10570
      %v10667 = vpop.f32.mrb[0].mxu0
      %v10668 = vadd.f32 0.0, %v10667
      %v10669 = vpop.f32.mrb[0].mxu0
      %v10670 = vpop.f32.mrb[0].mxu0
      %v10671 = vadd.f32 0.0, %v10670
      %v10672 = vpop.f32.mrb[0].mxu0
      %10673 = vmatprep.mubr.bf16.mxu0 0
      %10674 = vmatmul.mubr.bf16.gmra.mrb[0].mxu0 %v10573
      %v10675 = vpop.f32.mrb[0].mxu0
      %v10676 = vadd.f32 0.0, %v10675
      %v10677 = vpop.f32.mrb[0].mxu0
      %v10678 = vpop.f32.mrb[0].mxu0
      %v10679 = vadd.f32 0.0, %v10678
      %v10680 = vpop.f32.mrb[0].mxu0
      %10681 = vmatprep.mubr.bf16.mxu0 0
      %10682 = vmatmul.mubr.bf16.gmra.mrb[0].mxu0 %v10576
      %v10683 = vpop.f32.mrb[0].mxu0
      %v10684 = vadd.f32 0.0, %v10683
      %v10685 = vpop.f32.mrb[0].mxu0
      %v10686 = vpop.f32.mrb[0].mxu0
      %v10687 = vadd.f32 0.0, %v10686
      %v10688 = vpop.f32.mrb[0].mxu0
      %10689 = vmatprep.mubr.bf16.mxu0 0
      %10690 = vmatmul.mubr.bf16.gmra.mrb[0].mxu0 %v10579
      %v10691 = vpop.f32.mrb[0].mxu0
      %v10692 = vadd.f32 0.0, %v10691
      %v10693 = vpop.f32.mrb[0].mxu0
      %v10694 = vpop.f32.mrb[0].mxu0
      %v10695 = vadd.f32 0.0, %v10694
      %v10696 = vpop.f32.mrb[0].mxu0
      %10697 = vmatprep.mubr.bf16.mxu0 0
      %10698 = vmatmul.mubr.bf16.gmra.mrb[0].mxu0 %v10582
      %v10699 = vpop.f32.mrb[0].mxu0
      %v10700 = vadd.f32 0.0, %v10699
      %v10701 = vpop.f32.mrb[0].mxu0
      %v10702 = vpop.f32.mrb[0].mxu0
      %v10703 = vadd.f32 0.0, %v10702
      %v10704 = vpop.f32.mrb[0].mxu0
      %10705 = vmatprep.mubr.bf16.mxu0 0
      %10706 = vmatmul.mubr.bf16.gmra.mrb[0].mxu0 %v10585
      %v10707 = vpop.f32.mrb[0].mxu0
      %v10708 = vadd.f32 0.0, %v10707
      %v10709 = vpop.f32.mrb[0].mxu0
      %v10710 = vpop.f32.mrb[0].mxu0
      %v10711 = vadd.f32 0.0, %v10710
      %v10712 = vpop.f32.mrb[0].mxu0
      %10713 = vmatprep.mubr.bf16.mxu0 0
      %10714 = vmatmul.mubr.bf16.gmra.mrb[0].mxu0 %v10588
      %v10715 = vpop.f32.mrb[0].mxu0
      %v10716 = vadd.f32 0.0, %v10715
      %v10717 = vpop.f32.mrb[0].mxu0
      %v10718 = vpop.f32.mrb[0].mxu0
      %v10719 = vadd.f32 0.0, %v10718
      %v10720 = vpop.f32.mrb[0].mxu0
      %10721 = vmatprep.mubr.bf16.mxu0 0
      %10722 = vmatmul.mubr.bf16.gmra.mrb[0].mxu0 %v10591
      %v10723 = vpop.f32.mrb[0].mxu0
      %v10724 = vadd.f32 0.0, %v10723
      %v10725 = vpop.f32.mrb[0].mxu0
      %v10726 = vpop.f32.mrb[0].mxu0
      %v10727 = vadd.f32 0.0, %v10726
      %v10728 = vpop.f32.mrb[0].mxu0
      %10729 = vmatprep.mubr.bf16.mxu0 0
      %10730 = vmatmul.mubr.bf16.gmra.mrb[0].mxu0 %v10594
      %v10731 = vpop.f32.mrb[0].mxu0
      %v10732 = vadd.f32 0.0, %v10731
      %v10733 = vpop.f32.mrb[0].mxu0
      %v10734 = vpop.f32.mrb[0].mxu0
      %v10735 = vadd.f32 0.0, %v10734
      %v10736 = vpop.f32.mrb[0].mxu0
      %10737 = vmatprep.mubr.bf16.mxu0 0
      %10738 = vmatmul.mubr.bf16.gmra.mrb[0].mxu0 %v10597
      %v10739 = vpop.f32.mrb[0].mxu0
      %v10740 = vadd.f32 0.0, %v10739
      %v10741 = vpop.f32.mrb[0].mxu0
      %v10742 = vpop.f32.mrb[0].mxu0
      %v10743 = vadd.f32 0.0, %v10742
      %v10744 = vpop.f32.mrb[0].mxu0
      %10745 = vmatprep.mubr.bf16.mxu0 0
      %10746 = vmatmul.mubr.bf16.gmra.mrb[0].mxu0 %v10600
      %v10747 = vpop.f32.mrb[0].mxu0
      %v10748 = vadd.f32 0.0, %v10747
      %v10749 = vpop.f32.mrb[0].mxu0
      %v10750 = vpop.f32.mrb[0].mxu0
      %v10751 = vadd.f32 0.0, %v10750
      %v10752 = vpop.f32.mrb[0].mxu0
      %10753 = vmatprep.mubr.bf16.mxu0 0
      %10754 = vmatmul.mubr.bf16.gmra.mrb[0].mxu0 %v10603
      %v10755 = vpop.f32.mrb[0].mxu0
      %v10756 = vadd.f32 0.0, %v10755
      %v10757 = vpop.f32.mrb[0].mxu0
      %v10758 = vpop.f32.mrb[0].mxu0
      %v10759 = vadd.f32 0.0, %v10758
      %v10760 = vpop.f32.mrb[0].mxu0
      %10761 = vmatprep.mubr.bf16.mxu0 0
      %10762 = vmatmul.mubr.bf16.gmra.mrb[0].mxu0 %v10606
      %v10763 = vpop.f32.mrb[0].mxu0
      %v10764 = vadd.f32 0.0, %v10763
      %v10765 = vpop.f32.mrb[0].mxu0
      %v10766 = vpop.f32.mrb[0].mxu0
      %v10767 = vadd.f32 0.0, %v10766
      %v10768 = vpop.f32.mrb[0].mxu0
      %10769 = vmatprep.mubr.bf16.mxu0 0
      %10770 = vmatmul.mubr.bf16.gmra.mrb[0].mxu0 %v10609
      %v10771 = vpop.f32.mrb[0].mxu0
      %v10772 = vadd.f32 0.0, %v10771
      %v10773 = vpop.f32.mrb[0].mxu0
      %v10774 = vpop.f32.mrb[0].mxu0
      %v10775 = vadd.f32 0.0, %v10774
      %v10776 = vpop.f32.mrb[0].mxu0
      %10777 = vmatprep.mubr.bf16.mxu0 0
      %10778 = vmatmul.mubr.bf16.gmra.mrb[0].mxu0 %v10612
      %v10779 = vpop.f32.mrb[0].mxu0
      %v10780 = vadd.f32 0.0, %v10779
      %v10781 = vpop.f32.mrb[0].mxu0
      %v10782 = vpop.f32.mrb[0].mxu0
      %v10783 = vadd.f32 0.0, %v10782
      %v10784 = vpop.f32.mrb[0].mxu0
      %10785 = vmatprep.mubr.bf16.mxu0 0
      %10786 = vmatmul.mubr.bf16.gmra.mrb[0].mxu0 %v10615
      %v10787 = vpop.f32.mrb[0].mxu0
      %v10788 = vadd.f32 0.0, %v10787
      %v10789 = vpop.f32.mrb[0].mxu0
      %v10790 = vpop.f32.mrb[0].mxu0
      %v10791 = vadd.f32 0.0, %v10790
      %v10792 = vpop.f32.mrb[0].mxu0
      %10793 = vdwg.mxu0
      %v10794 = vld [vmem:[#allocation4] sm:$0xff]
      %v10795 = vld [vmem:[#allocation4 + $0x8] sm:$0xff]
      %v10796 = vld [vmem:[#allocation4 + $0x10] sm:$0xff]
      %v10797 = vld [vmem:[#allocation4 + $0x18] sm:$0xff]
      %v10798 = vld [vmem:[#allocation4 + $0x20] sm:$0xff]
      %v10799 = vld [vmem:[#allocation4 + $0x28] sm:$0xff]
      %v10800 = vld [vmem:[#allocation4 + $0x30] sm:$0xff]
      %v10801 = vld [vmem:[#allocation4 + $0x38] sm:$0xff]
      %v10802 = vld [vmem:[#allocation4 + $0x40] sm:$0xff]
      %v10803 = vld [vmem:[#allocation4 + $0x48] sm:$0xff]
      %v10804 = vld [vmem:[#allocation4 + $0x50] sm:$0xff]
      %v10805 = vld [vmem:[#allocation4 + $0x58] sm:$0xff]
      %v10806 = vld [vmem:[#allocation4 + $0x60] sm:$0xff]
      %v10807 = vld [vmem:[#allocation4 + $0x68] sm:$0xff]
      %v10808 = vld [vmem:[#allocation4 + $0x70] sm:$0xff]
      %v10809 = vld [vmem:[#allocation4 + $0x78] sm:$0xff]
      %v10810 = vld [vmem:[#allocation4 + $0x80] sm:$0xff]
      %v10811 = vld [vmem:[#allocation4 + $0x88] sm:$0xff]
      %v10812 = vld [vmem:[#allocation4 + $0x90] sm:$0xff]
      %v10813 = vld [vmem:[#allocation4 + $0x98] sm:$0xff]
      %v10814 = vld [vmem:[#allocation4 + $0xa0] sm:$0xff]
      %v10815 = vld [vmem:[#allocation4 + $0xa8] sm:$0xff]
      %v10816 = vld [vmem:[#allocation4 + $0xb0] sm:$0xff]
      %v10817 = vld [vmem:[#allocation4 + $0xb8] sm:$0xff]
      %v10818 = vld [vmem:[#allocation4 + $0xc0] sm:$0xff]
      %v10819 = vld [vmem:[#allocation4 + $0xc8] sm:$0xff]
      %v10820 = vld [vmem:[#allocation4 + $0xd0] sm:$0xff]
      %v10821 = vld [vmem:[#allocation4 + $0xd8] sm:$0xff]
      %v10822 = vld [vmem:[#allocation4 + $0xe0] sm:$0xff]
      %v10823 = vld [vmem:[#allocation4 + $0xe8] sm:$0xff]
      %v10824 = vld [vmem:[#allocation4 + $0xf0] sm:$0xff]
      %v10825 = vld [vmem:[#allocation4 + $0xf8] sm:$0xff]
      %v10826 = vld [vmem:[#allocation4 + $0x100] sm:$0xff]
      %v10827 = vld [vmem:[#allocation4 + $0x108] sm:$0xff]
      %v10828 = vld [vmem:[#allocation4 + $0x110] sm:$0xff]
      %v10829 = vld [vmem:[#allocation4 + $0x118] sm:$0x3f]
      %v10830 = vadd.f32 %v10794, %v10652
      %v10831 = vadd.f32 %v10795, %v10655
      %v10832 = vadd.f32 %v10796, %v10660
      %v10833 = vadd.f32 %v10797, %v10663
      %v10834 = vadd.f32 %v10798, %v10668
      %v10835 = vadd.f32 %v10799, %v10671
      %v10836 = vadd.f32 %v10800, %v10676
      %v10837 = vadd.f32 %v10801, %v10679
      %v10838 = vadd.f32 %v10802, %v10684
      %v10839 = vadd.f32 %v10803, %v10687
      %v10840 = vadd.f32 %v10804, %v10692
      %v10841 = vadd.f32 %v10805, %v10695
      %v10842 = vadd.f32 %v10806, %v10700
      %v10843 = vadd.f32 %v10807, %v10703
      %v10844 = vadd.f32 %v10808, %v10708
      %v10845 = vadd.f32 %v10809, %v10711
      %v10846 = vadd.f32 %v10810, %v10716
      %v10847 = vadd.f32 %v10811, %v10719
      %v10848 = vadd.f32 %v10812, %v10724
      %v10849 = vadd.f32 %v10813, %v10727
      %v10850 = vadd.f32 %v10814, %v10732
      %v10851 = vadd.f32 %v10815, %v10735
      %v10852 = vadd.f32 %v10816, %v10740
      %v10853 = vadd.f32 %v10817, %v10743
      %v10854 = vadd.f32 %v10818, %v10748
      %v10855 = vadd.f32 %v10819, %v10751
      %v10856 = vadd.f32 %v10820, %v10756
      %v10857 = vadd.f32 %v10821, %v10759
      %v10858 = vadd.f32 %v10822, %v10764
      %v10859 = vadd.f32 %v10823, %v10767
      %v10860 = vadd.f32 %v10824, %v10772
      %v10861 = vadd.f32 %v10825, %v10775
      %v10862 = vadd.f32 %v10826, %v10780
      %v10863 = vadd.f32 %v10827, %v10783
      %v10864 = vadd.f32 %v10828, %v10788
      %v10865 = vadd.f32 %v10829, %v10791
      %10866 = vst.msk [vmem:[#allocation4] sm:$0xff] %vm413, %v10830
      %10867 = vst.msk [vmem:[#allocation4 + $0x8] sm:$0xff] %vm413, %v10831
      %10868 = vst.msk [vmem:[#allocation4 + $0x10] sm:$0xff] %vm413, %v10832
      %10869 = vst.msk [vmem:[#allocation4 + $0x18] sm:$0xff] %vm413, %v10833
      %10870 = vst.msk [vmem:[#allocation4 + $0x20] sm:$0xff] %vm413, %v10834
      %10871 = vst.msk [vmem:[#allocation4 + $0x28] sm:$0xff] %vm413, %v10835
      %10872 = vst.msk [vmem:[#allocation4 + $0x30] sm:$0xff] %vm413, %v10836
      %10873 = vst.msk [vmem:[#allocation4 + $0x38] sm:$0xff] %vm413, %v10837
      %10874 = vst.msk [vmem:[#allocation4 + $0x40] sm:$0xff] %vm413, %v10838
      %10875 = vst.msk [vmem:[#allocation4 + $0x48] sm:$0xff] %vm413, %v10839
      %10876 = vst.msk [vmem:[#allocation4 + $0x50] sm:$0xff] %vm413, %v10840
      %10877 = vst.msk [vmem:[#allocation4 + $0x58] sm:$0xff] %vm413, %v10841
      %10878 = vst.msk [vmem:[#allocation4 + $0x60] sm:$0xff] %vm413, %v10842
      %10879 = vst.msk [vmem:[#allocation4 + $0x68] sm:$0xff] %vm413, %v10843
      %10880 = vst.msk [vmem:[#allocation4 + $0x70] sm:$0xff] %vm413, %v10844
      %10881 = vst.msk [vmem:[#allocation4 + $0x78] sm:$0xff] %vm413, %v10845
      %10882 = vst.msk [vmem:[#allocation4 + $0x80] sm:$0xff] %vm413, %v10846
      %10883 = vst.msk [vmem:[#allocation4 + $0x88] sm:$0xff] %vm413, %v10847
      %10884 = vst.msk [vmem:[#allocation4 + $0x90] sm:$0xff] %vm413, %v10848
      %10885 = vst.msk [vmem:[#allocation4 + $0x98] sm:$0xff] %vm413, %v10849
      %10886 = vst.msk [vmem:[#allocation4 + $0xa0] sm:$0xff] %vm413, %v10850
      %10887 = vst.msk [vmem:[#allocation4 + $0xa8] sm:$0xff] %vm413, %v10851
      %10888 = vst.msk [vmem:[#allocation4 + $0xb0] sm:$0xff] %vm413, %v10852
      %10889 = vst.msk [vmem:[#allocation4 + $0xb8] sm:$0xff] %vm413, %v10853
      %10890 = vst.msk [vmem:[#allocation4 + $0xc0] sm:$0xff] %vm413, %v10854
      %10891 = vst.msk [vmem:[#allocation4 + $0xc8] sm:$0xff] %vm413, %v10855
      %10892 = vst.msk [vmem:[#allocation4 + $0xd0] sm:$0xff] %vm413, %v10856
      %10893 = vst.msk [vmem:[#allocation4 + $0xd8] sm:$0xff] %vm413, %v10857
      %10894 = vst.msk [vmem:[#allocation4 + $0xe0] sm:$0xff] %vm413, %v10858
      %10895 = vst.msk [vmem:[#allocation4 + $0xe8] sm:$0xff] %vm413, %v10859
      %10896 = vst.msk [vmem:[#allocation4 + $0xf0] sm:$0xff] %vm413, %v10860
      %10897 = vst.msk [vmem:[#allocation4 + $0xf8] sm:$0xff] %vm413, %v10861
      %10898 = vst.msk [vmem:[#allocation4 + $0x100] sm:$0xff] %vm413, %v10862
      %10899 = vst.msk [vmem:[#allocation4 + $0x108] sm:$0xff] %vm413, %v10863
      %10900 = vst.msk [vmem:[#allocation4 + $0x110] sm:$0xff] %vm413, %v10864
      %10901 = vst.msk [vmem:[#allocation4 + $0x118] sm:$0x3f] %vm6887, %v10865
      %v10902 = vld [vmem:[#allocation3 + $0x10] sm:$0x8]
      %v10903 = vld [vmem:[#allocation3 + $0x14] sm:$0xf]
      %v10904 = vld [vmem:[#allocation3 + $0x18] sm:$0xf]
      %v10905 = vld [vmem:[#allocation3 + $0x1c] sm:$0xf]
      %v10906 = vld [vmem:[#allocation3 + $0x20] sm:$0xf]
      %v10907 = vld [vmem:[#allocation3 + $0x24] sm:$0xf]
      %v10908 = vld [vmem:[#allocation3 + $0x28] sm:$0xf]
      %v10909 = vld [vmem:[#allocation3 + $0x2c] sm:$0xf]
      %v10910 = vld [vmem:[#allocation3 + $0x30] sm:$0xf]
      %v10911 = vld [vmem:[#allocation3 + $0x34] sm:$0xf]
      %v10912 = vld [vmem:[#allocation3 + $0x38] sm:$0xf]
      %v10913 = vld [vmem:[#allocation3 + $0x3c] sm:$0xf]
      %v10914 = vld [vmem:[#allocation3 + $0x40] sm:$0xf]
      %v10915 = vld [vmem:[#allocation3 + $0x44] sm:$0xf]
      %v10916 = vld [vmem:[#allocation3 + $0x48] sm:$0xf]
      %v10917 = vld [vmem:[#allocation3 + $0x4c] sm:$0xf]
      %v10918 = vld [vmem:[#allocation3 + $0x50] sm:$0xf]
      %v10919 = vld [vmem:[#allocation3 + $0x54] sm:$0xf]
      %v10920 = vld [vmem:[#allocation3 + $0x58] sm:$0xf]
      %v10921 = vld [vmem:[#allocation3 + $0x5c] sm:$0xf]
      %v10922 = vld [vmem:[#allocation3 + $0x60] sm:$0xf]
      %v10923 = vld [vmem:[#allocation3 + $0x64] sm:$0xf]
      %v10924 = vld [vmem:[#allocation3 + $0x68] sm:$0xf]
      %v10925 = vld [vmem:[#allocation3 + $0x6c] sm:$0xf]
      %v10926 = vld [vmem:[#allocation3 + $0x70] sm:$0xf]
      %v10927 = vld [vmem:[#allocation3 + $0x74] sm:$0xf]
      %v10928 = vld [vmem:[#allocation3 + $0x78] sm:$0xf]
      %v10929 = vld [vmem:[#allocation3 + $0x7c] sm:$0xf]
      %v10930 = vld [vmem:[#allocation3 + $0x80] sm:$0xf]
      %v10931 = vld [vmem:[#allocation3 + $0x84] sm:$0xf]
      %v10932 = vld [vmem:[#allocation3 + $0x88] sm:$0xf]
      %v10933 = vld [vmem:[#allocation3 + $0x8c] sm:$0xf]
      %v10934 = vld [vmem:[#allocation3 + $0x90] sm:$0xf]
      %v10935 = vld [vmem:[#allocation3 + $0x94] sm:$0xf]
      %v10936 = vld [vmem:[#allocation3 + $0x98] sm:$0xf]
      %v10937 = vld [vmem:[#allocation3 + $0x9c] sm:$0xf]
      %v10938 = vld [vmem:[#allocation3 + $0xa0] sm:$0x3]
      %s10939 = scalar_lea.vmem %s4, 128
      %v10940 = vld [vmem:[%s10939] sm:$0xf]
      %v10941 = vld [vmem:[%s10939 + $0x4] sm:$0xf]
      %v10942 = vld [vmem:[%s10939 + $0x8] sm:$0xf]
      %v10943 = vld [vmem:[%s10939 + $0xc] sm:$0xf]
      %v10981 = vunpack.c.l.b16 %v10902
      %v10982 = vunpack.c.l.b16 %v10903
      %v10983 = vunpack.c.l.b16 %v10904
      %v10984 = vunpack.c.l.b16 %v10905
      %v10985 = vunpack.c.l.b16 %v10906
      %v10986 = vunpack.c.l.b16 %v10907
      %v10987 = vunpack.c.l.b16 %v10908
      %v10988 = vunpack.c.l.b16 %v10909
      %v10989 = vunpack.c.l.b16 %v10910
      %v10990 = vunpack.c.l.b16 %v10911
      %v10991 = vunpack.c.l.b16 %v10912
      %v10992 = vunpack.c.l.b16 %v10913
      %v10993 = vunpack.c.l.b16 %v10914
      %v10994 = vunpack.c.l.b16 %v10915
      %v10995 = vunpack.c.l.b16 %v10916
      %v10996 = vunpack.c.l.b16 %v10917
      %v10997 = vunpack.c.l.b16 %v10918
      %v10998 = vunpack.c.l.b16 %v10919
      %v10999 = vunpack.c.l.b16 %v10920
      %v11000 = vunpack.c.l.b16 %v10921
      %v11001 = vunpack.c.l.b16 %v10922
      %v11002 = vunpack.c.l.b16 %v10923
      %v11003 = vunpack.c.l.b16 %v10924
      %v11004 = vunpack.c.l.b16 %v10925
      %v11005 = vunpack.c.l.b16 %v10926
      %v11006 = vunpack.c.l.b16 %v10927
      %v11007 = vunpack.c.l.b16 %v10928
      %v11008 = vunpack.c.l.b16 %v10929
      %v11009 = vunpack.c.l.b16 %v10930
      %v11010 = vunpack.c.l.b16 %v10931
      %v11011 = vunpack.c.l.b16 %v10932
      %v11012 = vunpack.c.l.b16 %v10933
      %v11013 = vunpack.c.l.b16 %v10934
      %v11014 = vunpack.c.l.b16 %v10935
      %v11015 = vunpack.c.l.b16 %v10936
      %v11016 = vunpack.c.l.b16 %v10937
      %v11017 = vunpack.c.l.b16 %v10938
      %v11018 = vpack.c.b16 %v10982, %v10981
      %v11019 = vpack.c.b16 %v10984, %v10983
      %v11020 = vpack.c.b16 %v10986, %v10985
      %v11021 = vpack.c.b16 %v10988, %v10987
      %v11022 = vpack.c.b16 %v10990, %v10989
      %v11023 = vpack.c.b16 %v10992, %v10991
      %v11024 = vpack.c.b16 %v10994, %v10993
      %v11025 = vpack.c.b16 %v10996, %v10995
      %v11026 = vpack.c.b16 %v10998, %v10997
      %v11027 = vpack.c.b16 %v11000, %v10999
      %v11028 = vpack.c.b16 %v11002, %v11001
      %v11029 = vpack.c.b16 %v11004, %v11003
      %v11030 = vpack.c.b16 %v11006, %v11005
      %v11031 = vpack.c.b16 %v11008, %v11007
      %v11032 = vpack.c.b16 %v11010, %v11009
      %v11033 = vpack.c.b16 %v11012, %v11011
      %v11034 = vpack.c.b16 %v11014, %v11013
      %v11035 = vpack.c.b16 %v11016, %v11015
      %v11036 = vpack.c.b16 %v11017, %v11017
      %v11037 = vrot.slane %v11018, 3
      %v11038 = vrot.slane %v11019, 3
      %v11039 = vsel %vm5415, %v11037, %v11038
      %v11040 = vrot.slane %v11020, 3
      %v11041 = vsel %vm5415, %v11038, %v11040
      %v11042 = vrot.slane %v11021, 3
      %v11043 = vsel %vm5415, %v11040, %v11042
      %v11044 = vrot.slane %v11022, 3
      %v11045 = vsel %vm5415, %v11042, %v11044
      %v11046 = vrot.slane %v11023, 3
      %v11047 = vsel %vm5415, %v11044, %v11046
      %v11048 = vrot.slane %v11024, 3
      %v11049 = vsel %vm5415, %v11046, %v11048
      %v11050 = vrot.slane %v11025, 3
      %v11051 = vsel %vm5415, %v11048, %v11050
      %v11052 = vrot.slane %v11026, 3
      %v11053 = vsel %vm5415, %v11050, %v11052
      %v11054 = vrot.slane %v11027, 3
      %v11055 = vsel %vm5415, %v11052, %v11054
      %v11056 = vrot.slane %v11028, 3
      %v11057 = vsel %vm5415, %v11054, %v11056
      %v11058 = vrot.slane %v11029, 3
      %v11059 = vsel %vm5415, %v11056, %v11058
      %v11060 = vrot.slane %v11030, 3
      %v11061 = vsel %vm5415, %v11058, %v11060
      %v11062 = vrot.slane %v11031, 3
      %v11063 = vsel %vm5415, %v11060, %v11062
      %v11064 = vrot.slane %v11032, 3
      %v11065 = vsel %vm5415, %v11062, %v11064
      %v11066 = vrot.slane %v11033, 3
      %v11067 = vsel %vm5415, %v11064, %v11066
      %v11068 = vrot.slane %v11034, 3
      %v11069 = vsel %vm5415, %v11066, %v11068
      %v11070 = vrot.slane %v11035, 3
      %v11071 = vsel %vm5415, %v11068, %v11070
      %v11072 = vrot.slane %v11036, 3
      %v11073 = vsel %vm5415, %v11070, %v11072
      %v11078 = vunpack.c.l.b16 %v10940
      %v11079 = vunpack.c.l.b16 %v10941
      %v11080 = vunpack.c.l.b16 %v10942
      %v11081 = vunpack.c.l.b16 %v10943
      %v11082 = vpack.c.b16 %v11079, %v11078
      %v11083 = vpack.c.b16 %v11081, %v11080
      %v11087 = vsel %vm413, %v11039, 0
      %v11090 = vsel %vm413, %v11041, 0
      %v11093 = vsel %vm413, %v11043, 0
      %v11096 = vsel %vm413, %v11045, 0
      %v11099 = vsel %vm413, %v11047, 0
      %v11102 = vsel %vm413, %v11049, 0
      %v11105 = vsel %vm413, %v11051, 0
      %v11108 = vsel %vm413, %v11053, 0
      %v11111 = vsel %vm413, %v11055, 0
      %v11114 = vsel %vm413, %v11057, 0
      %v11117 = vsel %vm413, %v11059, 0
      %v11120 = vsel %vm413, %v11061, 0
      %v11123 = vsel %vm413, %v11063, 0
      %v11126 = vsel %vm413, %v11065, 0
      %v11129 = vsel %vm413, %v11067, 0
      %v11132 = vsel %vm413, %v11069, 0
      %v11135 = vsel %vm413, %v11071, 0
      %v11138 = vsel %vm413, %v11073, 0
      %11140 = vmatprep.subr.bf16.mxu0 0
      %11141 = vmatpush1.bf16.msra.mxu0 %v11082
      %11142 = vmatprep.subr.bf16.mxu0 0
      %11143 = vmatpush1.bf16.msra.mxu0 %v11083
      %11144 = vmatprep.subr.bf16.mxu0 0
      %11145 = vmatpush1.bf16.msra.mxu0 0
      %11146 = vmatprep.subr.bf16.mxu0 0
      %11147 = vmatpush1.bf16.msra.mxu0 0
      %11148 = vmatprep.subr.bf16.mxu0 0
      %11149 = vmatpush1.bf16.msra.mxu0 0
      %11150 = vmatprep.subr.bf16.mxu0 0
      %11151 = vmatpush1.bf16.msra.mxu0 0
      %11152 = vmatprep.subr.bf16.mxu0 0
      %11153 = vmatpush1.bf16.msra.mxu0 0
      %11154 = vmatprep.subr.bf16.mxu0 0
      %11155 = vmatpush1.bf16.msra.mxu0 0
      %11156 = vmatprep.subr.bf16.mxu0 0
      %11157 = vmatpush1.bf16.msra.mxu0 0
      %11158 = vmatprep.subr.bf16.mxu0 0
      %11159 = vmatpush1.bf16.msra.mxu0 0
      %11160 = vmatprep.subr.bf16.mxu0 0
      %11161 = vmatpush1.bf16.msra.mxu0 0
      %11162 = vmatprep.subr.bf16.mxu0 0
      %11163 = vmatpush1.bf16.msra.mxu0 0
      %11164 = vmatprep.subr.bf16.mxu0 0
      %11165 = vmatpush1.bf16.msra.mxu0 0
      %11166 = vmatprep.subr.bf16.mxu0 0
      %11167 = vmatpush1.bf16.msra.mxu0 0
      %11168 = vmatprep.subr.bf16.mxu0 0
      %11169 = vmatpush1.bf16.msra.mxu0 0
      %11170 = vmatprep.subr.bf16.mxu0 0
      %11171 = vmatpush1.bf16.msra.mxu0 0
      %11172 = vmatprep.mubr.bf16.mxu0 0
      %11173 = vmatmul.mubr.bf16.gmra.mrb[0].mxu0 %v11087
      %v11174 = vpop.f32.mrb[0].mxu0
      %v11175 = vadd.f32 0.0, %v11174
      %v11176 = vpop.f32.mrb[0].mxu0
      %v11177 = vpop.f32.mrb[0].mxu0
      %v11178 = vadd.f32 0.0, %v11177
      %v11179 = vpop.f32.mrb[0].mxu0
      %11180 = vmatprep.mubr.bf16.mxu0 0
      %11181 = vmatmul.mubr.bf16.gmra.mrb[0].mxu0 %v11090
      %v11182 = vpop.f32.mrb[0].mxu0
      %v11183 = vadd.f32 0.0, %v11182
      %v11184 = vpop.f32.mrb[0].mxu0
      %v11185 = vpop.f32.mrb[0].mxu0
      %v11186 = vadd.f32 0.0, %v11185
      %v11187 = vpop.f32.mrb[0].mxu0
      %11188 = vmatprep.mubr.bf16.mxu0 0
      %11189 = vmatmul.mubr.bf16.gmra.mrb[0].mxu0 %v11093
      %v11190 = vpop.f32.mrb[0].mxu0
      %v11191 = vadd.f32 0.0, %v11190
      %v11192 = vpop.f32.mrb[0].mxu0
      %v11193 = vpop.f32.mrb[0].mxu0
      %v11194 = vadd.f32 0.0, %v11193
      %v11195 = vpop.f32.mrb[0].mxu0
      %11196 = vmatprep.mubr.bf16.mxu0 0
      %11197 = vmatmul.mubr.bf16.gmra.mrb[0].mxu0 %v11096
      %v11198 = vpop.f32.mrb[0].mxu0
      %v11199 = vadd.f32 0.0, %v11198
      %v11200 = vpop.f32.mrb[0].mxu0
      %v11201 = vpop.f32.mrb[0].mxu0
      %v11202 = vadd.f32 0.0, %v11201
      %v11203 = vpop.f32.mrb[0].mxu0
      %11204 = vmatprep.mubr.bf16.mxu0 0
      %11205 = vmatmul.mubr.bf16.gmra.mrb[0].mxu0 %v11099
      %v11206 = vpop.f32.mrb[0].mxu0
      %v11207 = vadd.f32 0.0, %v11206
      %v11208 = vpop.f32.mrb[0].mxu0
      %v11209 = vpop.f32.mrb[0].mxu0
      %v11210 = vadd.f32 0.0, %v11209
      %v11211 = vpop.f32.mrb[0].mxu0
      %11212 = vmatprep.mubr.bf16.mxu0 0
      %11213 = vmatmul.mubr.bf16.gmra.mrb[0].mxu0 %v11102
      %v11214 = vpop.f32.mrb[0].mxu0
      %v11215 = vadd.f32 0.0, %v11214
      %v11216 = vpop.f32.mrb[0].mxu0
      %v11217 = vpop.f32.mrb[0].mxu0
      %v11218 = vadd.f32 0.0, %v11217
      %v11219 = vpop.f32.mrb[0].mxu0
      %11220 = vmatprep.mubr.bf16.mxu0 0
      %11221 = vmatmul.mubr.bf16.gmra.mrb[0].mxu0 %v11105
      %v11222 = vpop.f32.mrb[0].mxu0
      %v11223 = vadd.f32 0.0, %v11222
      %v11224 = vpop.f32.mrb[0].mxu0
      %v11225 = vpop.f32.mrb[0].mxu0
      %v11226 = vadd.f32 0.0, %v11225
      %v11227 = vpop.f32.mrb[0].mxu0
      %11228 = vmatprep.mubr.bf16.mxu0 0
      %11229 = vmatmul.mubr.bf16.gmra.mrb[0].mxu0 %v11108
      %v11230 = vpop.f32.mrb[0].mxu0
      %v11231 = vadd.f32 0.0, %v11230
      %v11232 = vpop.f32.mrb[0].mxu0
      %v11233 = vpop.f32.mrb[0].mxu0
      %v11234 = vadd.f32 0.0, %v11233
      %v11235 = vpop.f32.mrb[0].mxu0
      %11236 = vmatprep.mubr.bf16.mxu0 0
      %11237 = vmatmul.mubr.bf16.gmra.mrb[0].mxu0 %v11111
      %v11238 = vpop.f32.mrb[0].mxu0
      %v11239 = vadd.f32 0.0, %v11238
      %v11240 = vpop.f32.mrb[0].mxu0
      %v11241 = vpop.f32.mrb[0].mxu0
      %v11242 = vadd.f32 0.0, %v11241
      %v11243 = vpop.f32.mrb[0].mxu0
      %11244 = vmatprep.mubr.bf16.mxu0 0
      %11245 = vmatmul.mubr.bf16.gmra.mrb[0].mxu0 %v11114
      %v11246 = vpop.f32.mrb[0].mxu0
      %v11247 = vadd.f32 0.0, %v11246
      %v11248 = vpop.f32.mrb[0].mxu0
      %v11249 = vpop.f32.mrb[0].mxu0
      %v11250 = vadd.f32 0.0, %v11249
      %v11251 = vpop.f32.mrb[0].mxu0
      %11252 = vmatprep.mubr.bf16.mxu0 0
      %11253 = vmatmul.mubr.bf16.gmra.mrb[0].mxu0 %v11117
      %v11254 = vpop.f32.mrb[0].mxu0
      %v11255 = vadd.f32 0.0, %v11254
      %v11256 = vpop.f32.mrb[0].mxu0
      %v11257 = vpop.f32.mrb[0].mxu0
      %v11258 = vadd.f32 0.0, %v11257
      %v11259 = vpop.f32.mrb[0].mxu0
      %11260 = vmatprep.mubr.bf16.mxu0 0
      %11261 = vmatmul.mubr.bf16.gmra.mrb[0].mxu0 %v11120
      %v11262 = vpop.f32.mrb[0].mxu0
      %v11263 = vadd.f32 0.0, %v11262
      %v11264 = vpop.f32.mrb[0].mxu0
      %v11265 = vpop.f32.mrb[0].mxu0
      %v11266 = vadd.f32 0.0, %v11265
      %v11267 = vpop.f32.mrb[0].mxu0
      %11268 = vmatprep.mubr.bf16.mxu0 0
      %11269 = vmatmul.mubr.bf16.gmra.mrb[0].mxu0 %v11123
      %v11270 = vpop.f32.mrb[0].mxu0
      %v11271 = vadd.f32 0.0, %v11270
      %v11272 = vpop.f32.mrb[0].mxu0
      %v11273 = vpop.f32.mrb[0].mxu0
      %v11274 = vadd.f32 0.0, %v11273
      %v11275 = vpop.f32.mrb[0].mxu0
      %11276 = vmatprep.mubr.bf16.mxu0 0
      %11277 = vmatmul.mubr.bf16.gmra.mrb[0].mxu0 %v11126
      %v11278 = vpop.f32.mrb[0].mxu0
      %v11279 = vadd.f32 0.0, %v11278
      %v11280 = vpop.f32.mrb[0].mxu0
      %v11281 = vpop.f32.mrb[0].mxu0
      %v11282 = vadd.f32 0.0, %v11281
      %v11283 = vpop.f32.mrb[0].mxu0
      %11284 = vmatprep.mubr.bf16.mxu0 0
      %11285 = vmatmul.mubr.bf16.gmra.mrb[0].mxu0 %v11129
      %v11286 = vpop.f32.mrb[0].mxu0
      %v11287 = vadd.f32 0.0, %v11286
      %v11288 = vpop.f32.mrb[0].mxu0
      %v11289 = vpop.f32.mrb[0].mxu0
      %v11290 = vadd.f32 0.0, %v11289
      %v11291 = vpop.f32.mrb[0].mxu0
      %11292 = vmatprep.mubr.bf16.mxu0 0
      %11293 = vmatmul.mubr.bf16.gmra.mrb[0].mxu0 %v11132
      %v11294 = vpop.f32.mrb[0].mxu0
      %v11295 = vadd.f32 0.0, %v11294
      %v11296 = vpop.f32.mrb[0].mxu0
      %v11297 = vpop.f32.mrb[0].mxu0
      %v11298 = vadd.f32 0.0, %v11297
      %v11299 = vpop.f32.mrb[0].mxu0
      %11300 = vmatprep.mubr.bf16.mxu0 0
      %11301 = vmatmul.mubr.bf16.gmra.mrb[0].mxu0 %v11135
      %v11302 = vpop.f32.mrb[0].mxu0
      %v11303 = vadd.f32 0.0, %v11302
      %v11304 = vpop.f32.mrb[0].mxu0
      %v11305 = vpop.f32.mrb[0].mxu0
      %v11306 = vadd.f32 0.0, %v11305
      %v11307 = vpop.f32.mrb[0].mxu0
      %11308 = vmatprep.mubr.bf16.mxu0 0
      %11309 = vmatmul.mubr.bf16.gmra.mrb[0].mxu0 %v11138
      %v11310 = vpop.f32.mrb[0].mxu0
      %v11311 = vadd.f32 0.0, %v11310
      %v11312 = vpop.f32.mrb[0].mxu0
      %v11313 = vpop.f32.mrb[0].mxu0
      %v11314 = vadd.f32 0.0, %v11313
      %v11315 = vpop.f32.mrb[0].mxu0
      %11316 = vdwg.mxu0
      %v11317 = vld [vmem:[#allocation4] sm:$0xff]
      %v11318 = vld [vmem:[#allocation4 + $0x8] sm:$0xff]
      %v11319 = vld [vmem:[#allocation4 + $0x10] sm:$0xff]
      %v11320 = vld [vmem:[#allocation4 + $0x18] sm:$0xff]
      %v11321 = vld [vmem:[#allocation4 + $0x20] sm:$0xff]
      %v11322 = vld [vmem:[#allocation4 + $0x28] sm:$0xff]
      %v11323 = vld [vmem:[#allocation4 + $0x30] sm:$0xff]
      %v11324 = vld [vmem:[#allocation4 + $0x38] sm:$0xff]
      %v11325 = vld [vmem:[#allocation4 + $0x40] sm:$0xff]
      %v11326 = vld [vmem:[#allocation4 + $0x48] sm:$0xff]
      %v11327 = vld [vmem:[#allocation4 + $0x50] sm:$0xff]
      %v11328 = vld [vmem:[#allocation4 + $0x58] sm:$0xff]
      %v11329 = vld [vmem:[#allocation4 + $0x60] sm:$0xff]
      %v11330 = vld [vmem:[#allocation4 + $0x68] sm:$0xff]
      %v11331 = vld [vmem:[#allocation4 + $0x70] sm:$0xff]
      %v11332 = vld [vmem:[#allocation4 + $0x78] sm:$0xff]
      %v11333 = vld [vmem:[#allocation4 + $0x80] sm:$0xff]
      %v11334 = vld [vmem:[#allocation4 + $0x88] sm:$0xff]
      %v11335 = vld [vmem:[#allocation4 + $0x90] sm:$0xff]
      %v11336 = vld [vmem:[#allocation4 + $0x98] sm:$0xff]
      %v11337 = vld [vmem:[#allocation4 + $0xa0] sm:$0xff]
      %v11338 = vld [vmem:[#allocation4 + $0xa8] sm:$0xff]
      %v11339 = vld [vmem:[#allocation4 + $0xb0] sm:$0xff]
      %v11340 = vld [vmem:[#allocation4 + $0xb8] sm:$0xff]
      %v11341 = vld [vmem:[#allocation4 + $0xc0] sm:$0xff]
      %v11342 = vld [vmem:[#allocation4 + $0xc8] sm:$0xff]
      %v11343 = vld [vmem:[#allocation4 + $0xd0] sm:$0xff]
      %v11344 = vld [vmem:[#allocation4 + $0xd8] sm:$0xff]
      %v11345 = vld [vmem:[#allocation4 + $0xe0] sm:$0xff]
      %v11346 = vld [vmem:[#allocation4 + $0xe8] sm:$0xff]
      %v11347 = vld [vmem:[#allocation4 + $0xf0] sm:$0xff]
      %v11348 = vld [vmem:[#allocation4 + $0xf8] sm:$0xff]
      %v11349 = vld [vmem:[#allocation4 + $0x100] sm:$0xff]
      %v11350 = vld [vmem:[#allocation4 + $0x108] sm:$0xff]
      %v11351 = vld [vmem:[#allocation4 + $0x110] sm:$0xff]
      %v11352 = vld [vmem:[#allocation4 + $0x118] sm:$0x3f]
      %v11353 = vadd.f32 %v11317, %v11175
      %v11354 = vadd.f32 %v11318, %v11178
      %v11355 = vadd.f32 %v11319, %v11183
      %v11356 = vadd.f32 %v11320, %v11186
      %v11357 = vadd.f32 %v11321, %v11191
      %v11358 = vadd.f32 %v11322, %v11194
      %v11359 = vadd.f32 %v11323, %v11199
      %v11360 = vadd.f32 %v11324, %v11202
      %v11361 = vadd.f32 %v11325, %v11207
      %v11362 = vadd.f32 %v11326, %v11210
      %v11363 = vadd.f32 %v11327, %v11215
      %v11364 = vadd.f32 %v11328, %v11218
      %v11365 = vadd.f32 %v11329, %v11223
      %v11366 = vadd.f32 %v11330, %v11226
      %v11367 = vadd.f32 %v11331, %v11231
      %v11368 = vadd.f32 %v11332, %v11234
      %v11369 = vadd.f32 %v11333, %v11239
      %v11370 = vadd.f32 %v11334, %v11242
      %v11371 = vadd.f32 %v11335, %v11247
      %v11372 = vadd.f32 %v11336, %v11250
      %v11373 = vadd.f32 %v11337, %v11255
      %v11374 = vadd.f32 %v11338, %v11258
      %v11375 = vadd.f32 %v11339, %v11263
      %v11376 = vadd.f32 %v11340, %v11266
      %v11377 = vadd.f32 %v11341, %v11271
      %v11378 = vadd.f32 %v11342, %v11274
      %v11379 = vadd.f32 %v11343, %v11279
      %v11380 = vadd.f32 %v11344, %v11282
      %v11381 = vadd.f32 %v11345, %v11287
      %v11382 = vadd.f32 %v11346, %v11290
      %v11383 = vadd.f32 %v11347, %v11295
      %v11384 = vadd.f32 %v11348, %v11298
      %v11385 = vadd.f32 %v11349, %v11303
      %v11386 = vadd.f32 %v11350, %v11306
      %v11387 = vadd.f32 %v11351, %v11311
      %v11388 = vadd.f32 %v11352, %v11314
      %11389 = vst.msk [vmem:[#allocation4] sm:$0xff] %vm413, %v11353
      %11390 = vst.msk [vmem:[#allocation4 + $0x8] sm:$0xff] %vm413, %v11354
      %11391 = vst.msk [vmem:[#allocation4 + $0x10] sm:$0xff] %vm413, %v11355
      %11392 = vst.msk [vmem:[#allocation4 + $0x18] sm:$0xff] %vm413, %v11356
      %11393 = vst.msk [vmem:[#allocation4 + $0x20] sm:$0xff] %vm413, %v11357
      %11394 = vst.msk [vmem:[#allocation4 + $0x28] sm:$0xff] %vm413, %v11358
      %11395 = vst.msk [vmem:[#allocation4 + $0x30] sm:$0xff] %vm413, %v11359
      %11396 = vst.msk [vmem:[#allocation4 + $0x38] sm:$0xff] %vm413, %v11360
      %11397 = vst.msk [vmem:[#allocation4 + $0x40] sm:$0xff] %vm413, %v11361
      %11398 = vst.msk [vmem:[#allocation4 + $0x48] sm:$0xff] %vm413, %v11362
      %11399 = vst.msk [vmem:[#allocation4 + $0x50] sm:$0xff] %vm413, %v11363
      %11400 = vst.msk [vmem:[#allocation4 + $0x58] sm:$0xff] %vm413, %v11364
      %11401 = vst.msk [vmem:[#allocation4 + $0x60] sm:$0xff] %vm413, %v11365
      %11402 = vst.msk [vmem:[#allocation4 + $0x68] sm:$0xff] %vm413, %v11366
      %11403 = vst.msk [vmem:[#allocation4 + $0x70] sm:$0xff] %vm413, %v11367
      %11404 = vst.msk [vmem:[#allocation4 + $0x78] sm:$0xff] %vm413, %v11368
      %11405 = vst.msk [vmem:[#allocation4 + $0x80] sm:$0xff] %vm413, %v11369
      %11406 = vst.msk [vmem:[#allocation4 + $0x88] sm:$0xff] %vm413, %v11370
      %11407 = vst.msk [vmem:[#allocation4 + $0x90] sm:$0xff] %vm413, %v11371
      %11408 = vst.msk [vmem:[#allocation4 + $0x98] sm:$0xff] %vm413, %v11372
      %11409 = vst.msk [vmem:[#allocation4 + $0xa0] sm:$0xff] %vm413, %v11373
      %11410 = vst.msk [vmem:[#allocation4 + $0xa8] sm:$0xff] %vm413, %v11374
      %11411 = vst.msk [vmem:[#allocation4 + $0xb0] sm:$0xff] %vm413, %v11375
      %11412 = vst.msk [vmem:[#allocation4 + $0xb8] sm:$0xff] %vm413, %v11376
      %11413 = vst.msk [vmem:[#allocation4 + $0xc0] sm:$0xff] %vm413, %v11377
      %11414 = vst.msk [vmem:[#allocation4 + $0xc8] sm:$0xff] %vm413, %v11378
      %11415 = vst.msk [vmem:[#allocation4 + $0xd0] sm:$0xff] %vm413, %v11379
      %11416 = vst.msk [vmem:[#allocation4 + $0xd8] sm:$0xff] %vm413, %v11380
      %11417 = vst.msk [vmem:[#allocation4 + $0xe0] sm:$0xff] %vm413, %v11381
      %11418 = vst.msk [vmem:[#allocation4 + $0xe8] sm:$0xff] %vm413, %v11382
      %11419 = vst.msk [vmem:[#allocation4 + $0xf0] sm:$0xff] %vm413, %v11383
      %11420 = vst.msk [vmem:[#allocation4 + $0xf8] sm:$0xff] %vm413, %v11384
      %11421 = vst.msk [vmem:[#allocation4 + $0x100] sm:$0xff] %vm413, %v11385
      %11422 = vst.msk [vmem:[#allocation4 + $0x108] sm:$0xff] %vm413, %v11386
      %11423 = vst.msk [vmem:[#allocation4 + $0x110] sm:$0xff] %vm413, %v11387
      %11424 = vst.msk [vmem:[#allocation4 + $0x118] sm:$0x3f] %vm6887, %v11388
      %v11425 = vld [vmem:[%s246 + $0x10] sm:$0x8]
      %v11426 = vld [vmem:[%s246 + $0x14] sm:$0xf]
      %v11427 = vld [vmem:[%s246 + $0x18] sm:$0xf]
      %v11428 = vld [vmem:[%s246 + $0x1c] sm:$0xf]
      %v11429 = vld [vmem:[%s246 + $0x20] sm:$0xf]
      %v11430 = vld [vmem:[%s246 + $0x24] sm:$0xf]
      %v11431 = vld [vmem:[%s246 + $0x28] sm:$0xf]
      %v11432 = vld [vmem:[%s246 + $0x2c] sm:$0xf]
      %v11433 = vld [vmem:[%s246 + $0x30] sm:$0xf]
      %v11434 = vld [vmem:[%s246 + $0x34] sm:$0xf]
      %v11435 = vld [vmem:[%s246 + $0x38] sm:$0xf]
      %v11436 = vld [vmem:[%s246 + $0x3c] sm:$0xf]
      %v11437 = vld [vmem:[%s246 + $0x40] sm:$0xf]
      %v11438 = vld [vmem:[%s246 + $0x44] sm:$0xf]
      %v11439 = vld [vmem:[%s246 + $0x48] sm:$0xf]
      %v11440 = vld [vmem:[%s246 + $0x4c] sm:$0xf]
      %v11441 = vld [vmem:[%s246 + $0x50] sm:$0xf]
      %v11442 = vld [vmem:[%s246 + $0x54] sm:$0xf]
      %v11443 = vld [vmem:[%s246 + $0x58] sm:$0xf]
      %v11444 = vld [vmem:[%s246 + $0x5c] sm:$0xf]
      %v11445 = vld [vmem:[%s246 + $0x60] sm:$0xf]
      %v11446 = vld [vmem:[%s246 + $0x64] sm:$0xf]
      %v11447 = vld [vmem:[%s246 + $0x68] sm:$0xf]
      %v11448 = vld [vmem:[%s246 + $0x6c] sm:$0xf]
      %v11449 = vld [vmem:[%s246 + $0x70] sm:$0xf]
      %v11450 = vld [vmem:[%s246 + $0x74] sm:$0xf]
      %v11451 = vld [vmem:[%s246 + $0x78] sm:$0xf]
      %v11452 = vld [vmem:[%s246 + $0x7c] sm:$0xf]
      %v11453 = vld [vmem:[%s246 + $0x80] sm:$0xf]
      %v11454 = vld [vmem:[%s246 + $0x84] sm:$0xf]
      %v11455 = vld [vmem:[%s246 + $0x88] sm:$0xf]
      %v11456 = vld [vmem:[%s246 + $0x8c] sm:$0xf]
      %v11457 = vld [vmem:[%s246 + $0x90] sm:$0xf]
      %v11458 = vld [vmem:[%s246 + $0x94] sm:$0xf]
      %v11459 = vld [vmem:[%s246 + $0x98] sm:$0xf]
      %v11460 = vld [vmem:[%s246 + $0x9c] sm:$0xf]
      %v11461 = vld [vmem:[%s246 + $0xa0] sm:$0x3]
      %v11462 = vunpack.c.l.bf16 %v11425
      %v11463 = vunpack.c.l.bf16 %v11426
      %v11464 = vunpack.c.l.bf16 %v11427
      %v11465 = vunpack.c.l.bf16 %v11428
      %v11466 = vunpack.c.l.bf16 %v11429
      %v11467 = vunpack.c.l.bf16 %v11430
      %v11468 = vunpack.c.l.bf16 %v11431
      %v11469 = vunpack.c.l.bf16 %v11432
      %v11470 = vunpack.c.l.bf16 %v11433
      %v11471 = vunpack.c.l.bf16 %v11434
      %v11472 = vunpack.c.l.bf16 %v11435
      %v11473 = vunpack.c.l.bf16 %v11436
      %v11474 = vunpack.c.l.bf16 %v11437
      %v11475 = vunpack.c.l.bf16 %v11438
      %v11476 = vunpack.c.l.bf16 %v11439
      %v11477 = vunpack.c.l.bf16 %v11440
      %v11478 = vunpack.c.l.bf16 %v11441
      %v11479 = vunpack.c.l.bf16 %v11442
      %v11480 = vunpack.c.l.bf16 %v11443
      %v11481 = vunpack.c.l.bf16 %v11444
      %v11482 = vunpack.c.l.bf16 %v11445
      %v11483 = vunpack.c.l.bf16 %v11446
      %v11484 = vunpack.c.l.bf16 %v11447
      %v11485 = vunpack.c.l.bf16 %v11448
      %v11486 = vunpack.c.l.bf16 %v11449
      %v11487 = vunpack.c.l.bf16 %v11450
      %v11488 = vunpack.c.l.bf16 %v11451
      %v11489 = vunpack.c.l.bf16 %v11452
      %v11490 = vunpack.c.l.bf16 %v11453
      %v11491 = vunpack.c.l.bf16 %v11454
      %v11492 = vunpack.c.l.bf16 %v11455
      %v11493 = vunpack.c.l.bf16 %v11456
      %v11494 = vunpack.c.l.bf16 %v11457
      %v11495 = vunpack.c.l.bf16 %v11458
      %v11496 = vunpack.c.l.bf16 %v11459
      %v11497 = vunpack.c.l.bf16 %v11460
      %v11498 = vunpack.c.l.bf16 %v11461
      %v11499 = vld [vmem:[#allocation4] sm:$0xff]
      %v11500 = vld [vmem:[#allocation4 + $0x8] sm:$0xff]
      %v11501 = vld [vmem:[#allocation4 + $0x10] sm:$0xff]
      %v11502 = vld [vmem:[#allocation4 + $0x18] sm:$0xff]
      %v11503 = vld [vmem:[#allocation4 + $0x20] sm:$0xff]
      %v11504 = vld [vmem:[#allocation4 + $0x28] sm:$0xff]
      %v11505 = vld [vmem:[#allocation4 + $0x30] sm:$0xff]
      %v11506 = vld [vmem:[#allocation4 + $0x38] sm:$0xff]
      %v11507 = vld [vmem:[#allocation4 + $0x40] sm:$0xff]
      %v11508 = vld [vmem:[#allocation4 + $0x48] sm:$0xff]
      %v11509 = vld [vmem:[#allocation4 + $0x50] sm:$0xff]
      %v11510 = vld [vmem:[#allocation4 + $0x58] sm:$0xff]
      %v11511 = vld [vmem:[#allocation4 + $0x60] sm:$0xff]
      %v11512 = vld [vmem:[#allocation4 + $0x68] sm:$0xff]
      %v11513 = vld [vmem:[#allocation4 + $0x70] sm:$0xff]
      %v11514 = vld [vmem:[#allocation4 + $0x78] sm:$0xff]
      %v11515 = vld [vmem:[#allocation4 + $0x80] sm:$0xff]
      %v11516 = vld [vmem:[#allocation4 + $0x88] sm:$0xff]
      %v11517 = vld [vmem:[#allocation4 + $0x90] sm:$0xff]
      %v11518 = vld [vmem:[#allocation4 + $0x98] sm:$0xff]
      %v11519 = vld [vmem:[#allocation4 + $0xa0] sm:$0xff]
      %v11520 = vld [vmem:[#allocation4 + $0xa8] sm:$0xff]
      %v11521 = vld [vmem:[#allocation4 + $0xb0] sm:$0xff]
      %v11522 = vld [vmem:[#allocation4 + $0xb8] sm:$0xff]
      %v11523 = vld [vmem:[#allocation4 + $0xc0] sm:$0xff]
      %v11524 = vld [vmem:[#allocation4 + $0xc8] sm:$0xff]
      %v11525 = vld [vmem:[#allocation4 + $0xd0] sm:$0xff]
      %v11526 = vld [vmem:[#allocation4 + $0xd8] sm:$0xff]
      %v11527 = vld [vmem:[#allocation4 + $0xe0] sm:$0xff]
      %v11528 = vld [vmem:[#allocation4 + $0xe8] sm:$0xff]
      %v11529 = vld [vmem:[#allocation4 + $0xf0] sm:$0xff]
      %v11530 = vld [vmem:[#allocation4 + $0xf8] sm:$0xff]
      %v11531 = vld [vmem:[#allocation4 + $0x100] sm:$0xff]
      %v11532 = vld [vmem:[#allocation4 + $0x108] sm:$0xff]
      %v11533 = vld [vmem:[#allocation4 + $0x110] sm:$0xff]
      %v11534 = vld [vmem:[#allocation4 + $0x118] sm:$0x3f]
      %v11535 = vld [vmem:[%s5] sm:$0x1]
      %v11537 = vlaneseq
      %v11538 = vshrl.u32 %v11537, 7
      %v11539 = vsub.s32 0, %v11538
      %v11540 = vrot.slane %v11535, %v11539
      %v11542 = vadd.f32 %v11499, %v11540
      %v11543 = vadd.f32 %v11500, %v11540
      %v11544 = vadd.f32 %v11501, %v11540
      %v11545 = vadd.f32 %v11502, %v11540
      %v11546 = vadd.f32 %v11503, %v11540
      %v11547 = vadd.f32 %v11504, %v11540
      %v11548 = vadd.f32 %v11505, %v11540
      %v11549 = vadd.f32 %v11506, %v11540
      %v11550 = vadd.f32 %v11507, %v11540
      %v11551 = vadd.f32 %v11508, %v11540
      %v11552 = vadd.f32 %v11509, %v11540
      %v11553 = vadd.f32 %v11510, %v11540
      %v11554 = vadd.f32 %v11511, %v11540
      %v11555 = vadd.f32 %v11512, %v11540
      %v11556 = vadd.f32 %v11513, %v11540
      %v11557 = vadd.f32 %v11514, %v11540
      %v11558 = vadd.f32 %v11515, %v11540
      %v11559 = vadd.f32 %v11516, %v11540
      %v11560 = vadd.f32 %v11517, %v11540
      %v11561 = vadd.f32 %v11518, %v11540
      %v11562 = vadd.f32 %v11519, %v11540
      %v11563 = vadd.f32 %v11520, %v11540
      %v11564 = vadd.f32 %v11521, %v11540
      %v11565 = vadd.f32 %v11522, %v11540
      %v11566 = vadd.f32 %v11523, %v11540
      %v11567 = vadd.f32 %v11524, %v11540
      %v11568 = vadd.f32 %v11525, %v11540
      %v11569 = vadd.f32 %v11526, %v11540
      %v11570 = vadd.f32 %v11527, %v11540
      %v11571 = vadd.f32 %v11528, %v11540
      %v11572 = vadd.f32 %v11529, %v11540
      %v11573 = vadd.f32 %v11530, %v11540
      %v11574 = vadd.f32 %v11531, %v11540
      %v11575 = vadd.f32 %v11532, %v11540
      %v11576 = vadd.f32 %v11533, %v11540
      %v11577 = vadd.f32 %v11534, %v11540
      %vm11615 = vcmask 1041408
      %v11616 = vrot.slane %v11462, 6
      %v11617 = vrot.slane %v11463, 6
      %v11618 = vsel %vm11615, %v11616, %v11617
      %v11619 = vrot.slane %v11464, 6
      %v11620 = vsel %vm11615, %v11617, %v11619
      %v11621 = vrot.slane %v11465, 6
      %v11622 = vsel %vm11615, %v11619, %v11621
      %v11623 = vrot.slane %v11466, 6
      %v11624 = vsel %vm11615, %v11621, %v11623
      %v11625 = vrot.slane %v11467, 6
      %v11626 = vsel %vm11615, %v11623, %v11625
      %v11627 = vrot.slane %v11468, 6
      %v11628 = vsel %vm11615, %v11625, %v11627
      %v11629 = vrot.slane %v11469, 6
      %v11630 = vsel %vm11615, %v11627, %v11629
      %v11631 = vrot.slane %v11470, 6
      %v11632 = vsel %vm11615, %v11629, %v11631
      %v11633 = vrot.slane %v11471, 6
      %v11634 = vsel %vm11615, %v11631, %v11633
      %v11635 = vrot.slane %v11472, 6
      %v11636 = vsel %vm11615, %v11633, %v11635
      %v11637 = vrot.slane %v11473, 6
      %v11638 = vsel %vm11615, %v11635, %v11637
      %v11639 = vrot.slane %v11474, 6
      %v11640 = vsel %vm11615, %v11637, %v11639
      %v11641 = vrot.slane %v11475, 6
      %v11642 = vsel %vm11615, %v11639, %v11641
      %v11643 = vrot.slane %v11476, 6
      %v11644 = vsel %vm11615, %v11641, %v11643
      %v11645 = vrot.slane %v11477, 6
      %v11646 = vsel %vm11615, %v11643, %v11645
      %v11647 = vrot.slane %v11478, 6
      %v11648 = vsel %vm11615, %v11645, %v11647
      %v11649 = vrot.slane %v11479, 6
      %v11650 = vsel %vm11615, %v11647, %v11649
      %v11651 = vrot.slane %v11480, 6
      %v11652 = vsel %vm11615, %v11649, %v11651
      %v11653 = vrot.slane %v11481, 6
      %v11654 = vsel %vm11615, %v11651, %v11653
      %v11655 = vrot.slane %v11482, 6
      %v11656 = vsel %vm11615, %v11653, %v11655
      %v11657 = vrot.slane %v11483, 6
      %v11658 = vsel %vm11615, %v11655, %v11657
      %v11659 = vrot.slane %v11484, 6
      %v11660 = vsel %vm11615, %v11657, %v11659
      %v11661 = vrot.slane %v11485, 6
      %v11662 = vsel %vm11615, %v11659, %v11661
      %v11663 = vrot.slane %v11486, 6
      %v11664 = vsel %vm11615, %v11661, %v11663
      %v11665 = vrot.slane %v11487, 6
      %v11666 = vsel %vm11615, %v11663, %v11665
      %v11667 = vrot.slane %v11488, 6
      %v11668 = vsel %vm11615, %v11665, %v11667
      %v11669 = vrot.slane %v11489, 6
      %v11670 = vsel %vm11615, %v11667, %v11669
      %v11671 = vrot.slane %v11490, 6
      %v11672 = vsel %vm11615, %v11669, %v11671
      %v11673 = vrot.slane %v11491, 6
      %v11674 = vsel %vm11615, %v11671, %v11673
      %v11675 = vrot.slane %v11492, 6
      %v11676 = vsel %vm11615, %v11673, %v11675
      %v11677 = vrot.slane %v11493, 6
      %v11678 = vsel %vm11615, %v11675, %v11677
      %v11679 = vrot.slane %v11494, 6
      %v11680 = vsel %vm11615, %v11677, %v11679
      %v11681 = vrot.slane %v11495, 6
      %v11682 = vsel %vm11615, %v11679, %v11681
      %v11683 = vrot.slane %v11496, 6
      %v11684 = vsel %vm11615, %v11681, %v11683
      %v11685 = vrot.slane %v11497, 6
      %v11686 = vsel %vm11615, %v11683, %v11685
      %v11687 = vrot.slane %v11498, 6
      %v11688 = vsel %vm11615, %v11685, %v11687
      %v11725 = vadd.f32 %v11542, %v11618
      %v11726 = vadd.f32 %v11543, %v11620
      %v11727 = vadd.f32 %v11544, %v11622
      %v11728 = vadd.f32 %v11545, %v11624
      %v11729 = vadd.f32 %v11546, %v11626
      %v11730 = vadd.f32 %v11547, %v11628
      %v11731 = vadd.f32 %v11548, %v11630
      %v11732 = vadd.f32 %v11549, %v11632
      %v11733 = vadd.f32 %v11550, %v11634
      %v11734 = vadd.f32 %v11551, %v11636
      %v11735 = vadd.f32 %v11552, %v11638
      %v11736 = vadd.f32 %v11553, %v11640
      %v11737 = vadd.f32 %v11554, %v11642
      %v11738 = vadd.f32 %v11555, %v11644
      %v11739 = vadd.f32 %v11556, %v11646
      %v11740 = vadd.f32 %v11557, %v11648
      %v11741 = vadd.f32 %v11558, %v11650
      %v11742 = vadd.f32 %v11559, %v11652
      %v11743 = vadd.f32 %v11560, %v11654
      %v11744 = vadd.f32 %v11561, %v11656
      %v11745 = vadd.f32 %v11562, %v11658
      %v11746 = vadd.f32 %v11563, %v11660
      %v11747 = vadd.f32 %v11564, %v11662
      %v11748 = vadd.f32 %v11565, %v11664
      %v11749 = vadd.f32 %v11566, %v11666
      %v11750 = vadd.f32 %v11567, %v11668
      %v11751 = vadd.f32 %v11568, %v11670
      %v11752 = vadd.f32 %v11569, %v11672
      %v11753 = vadd.f32 %v11570, %v11674
      %v11754 = vadd.f32 %v11571, %v11676
      %v11755 = vadd.f32 %v11572, %v11678
      %v11756 = vadd.f32 %v11573, %v11680
      %v11757 = vadd.f32 %v11574, %v11682
      %v11758 = vadd.f32 %v11575, %v11684
      %v11759 = vadd.f32 %v11576, %v11686
      %v11760 = vadd.f32 %v11577, %v11688
      %11761 = vst.msk [vmem:[%s251] sm:$0xff] %vm413, %v11725
      %11762 = vst.msk [vmem:[%s251 + $0x8] sm:$0xff] %vm413, %v11726
      %11763 = vst.msk [vmem:[%s251 + $0x10] sm:$0xff] %vm413, %v11727
      %11764 = vst.msk [vmem:[%s251 + $0x18] sm:$0xff] %vm413, %v11728
      %11765 = vst.msk [vmem:[%s251 + $0x20] sm:$0xff] %vm413, %v11729
      %11766 = vst.msk [vmem:[%s251 + $0x28] sm:$0xff] %vm413, %v11730
      %11767 = vst.msk [vmem:[%s251 + $0x30] sm:$0xff] %vm413, %v11731
      %11768 = vst.msk [vmem:[%s251 + $0x38] sm:$0xff] %vm413, %v11732
      %11769 = vst.msk [vmem:[%s251 + $0x40] sm:$0xff] %vm413, %v11733
      %11770 = vst.msk [vmem:[%s251 + $0x48] sm:$0xff] %vm413, %v11734
      %11771 = vst.msk [vmem:[%s251 + $0x50] sm:$0xff] %vm413, %v11735
      %11772 = vst.msk [vmem:[%s251 + $0x58] sm:$0xff] %vm413, %v11736
      %11773 = vst.msk [vmem:[%s251 + $0x60] sm:$0xff] %vm413, %v11737
      %11774 = vst.msk [vmem:[%s251 + $0x68] sm:$0xff] %vm413, %v11738
      %11775 = vst.msk [vmem:[%s251 + $0x70] sm:$0xff] %vm413, %v11739
      %11776 = vst.msk [vmem:[%s251 + $0x78] sm:$0xff] %vm413, %v11740
      %11777 = vst.msk [vmem:[%s251 + $0x80] sm:$0xff] %vm413, %v11741
      %11778 = vst.msk [vmem:[%s251 + $0x88] sm:$0xff] %vm413, %v11742
      %11779 = vst.msk [vmem:[%s251 + $0x90] sm:$0xff] %vm413, %v11743
      %11780 = vst.msk [vmem:[%s251 + $0x98] sm:$0xff] %vm413, %v11744
      %11781 = vst.msk [vmem:[%s251 + $0xa0] sm:$0xff] %vm413, %v11745
      %11782 = vst.msk [vmem:[%s251 + $0xa8] sm:$0xff] %vm413, %v11746
      %11783 = vst.msk [vmem:[%s251 + $0xb0] sm:$0xff] %vm413, %v11747
      %11784 = vst.msk [vmem:[%s251 + $0xb8] sm:$0xff] %vm413, %v11748
      %11785 = vst.msk [vmem:[%s251 + $0xc0] sm:$0xff] %vm413, %v11749
      %11786 = vst.msk [vmem:[%s251 + $0xc8] sm:$0xff] %vm413, %v11750
      %11787 = vst.msk [vmem:[%s251 + $0xd0] sm:$0xff] %vm413, %v11751
      %11788 = vst.msk [vmem:[%s251 + $0xd8] sm:$0xff] %vm413, %v11752
      %11789 = vst.msk [vmem:[%s251 + $0xe0] sm:$0xff] %vm413, %v11753
      %11790 = vst.msk [vmem:[%s251 + $0xe8] sm:$0xff] %vm413, %v11754
      %11791 = vst.msk [vmem:[%s251 + $0xf0] sm:$0xff] %vm413, %v11755
      %11792 = vst.msk [vmem:[%s251 + $0xf8] sm:$0xff] %vm413, %v11756
      %11793 = vst.msk [vmem:[%s251 + $0x100] sm:$0xff] %vm413, %v11757
      %11794 = vst.msk [vmem:[%s251 + $0x108] sm:$0xff] %vm413, %v11758
      %11795 = vst.msk [vmem:[%s251 + $0x110] sm:$0xff] %vm413, %v11759
      %11796 = vst.msk [vmem:[%s251 + $0x118] sm:$0x3f] %vm6887, %v11760
      %p11797 = scmp.lt.s32.totalorder %s17, 1
      %s11798 = scalar_select %p11797, %s17, 1
      %s11799 = smul.addr %s11798, 36
      %s11800 = smul.addr %s11799, 8
      %s11801 = scalar_lea.vmem %s6, %s11800
      // Predicated region
      $region45: #{basic_block_forward.1} parent=43 // pred_check
        %p11802 = pneg %p166
      $region46: #{basic_block_forward.1} parent=43 // pred_check_branch
        %11804 = sbr.rel (%p11802) target = $region48
      $region47: #{basic_block_forward.1} parent=43 // pred_region
        _
      $region48: #{basic_block_forward.1} parent=43 // pred_fallthru
        _
    $region44: #{basic_block_forward.1} parent=5 // pred_fallthru
      _
    %p11805 = scmp.le.s32.totalorder 2, %s12
    // Predicated region
    $region49: #{basic_block_forward.1} parent=5 // pred_check
      %p11806 = pneg %p11805
    $region50: #{basic_block_forward.1} parent=5 // pred_check_branch
      %11808 = sbr.rel (%p11806) target = $region52
    $region51: #{basic_block_forward.1} parent=5 // pred_region
      %s11809 = ssub.s32 %s12, 2
      // Predicated region
      $region53: #{basic_block_forward.1} parent=51 // pred_check
        %p11810 = pneg %p172
      $region54: #{basic_block_forward.1} parent=51 // pred_check_branch
        %11812 = sbr.rel (%p11810) target = $region56
      $region55: #{basic_block_forward.1} parent=51 // pred_region
        %p11813 = scmp.lt.s32.totalorder %s18, 1
        %s11814 = scalar_select %p11813, %s18, 1
        %s11815 = smul.addr %s11814, 36
        %s11816 = smul.addr %s11815, 8
        %s11817 = scalar_lea.vmem %s6, %s11816
      $region56: #{basic_block_forward.1} parent=51 // pred_fallthru
        _
    $region52: #{basic_block_forward.1} parent=5 // pred_fallthru
      _
  $region6: #{basic_block_forward.1} parent=0 // loop_footer
    %s16 = sadd.s32 1, %s12
  $region7: #{basic_block_forward.1} parent=0 // loop_footer_branch
    %11 = sbr.rel target = $region3
  $region8: #{basic_block_forward.1} parent=0 // loop_exit
    _

</llo_original>
